<compile_context>
chip_gen: v7x
topology: tpu7x:2x2x1
jax: 0.10.0
libtpu: 0.0.40
codegen_flags: <defaults>
</compile_context>

<pallas_src>
import jax
import jax.numpy as jnp
from jax import lax
from jax.experimental import pallas as pl
from jax.experimental.pallas import tpu as pltpu
import numpy as np


# --------------------------------------------------------------------------
# module config + deterministic parameter init
# --------------------------------------------------------------------------
MSCSA = dict(channels=[2, 2], head_attn_ratio=2.0, head_loc=2, head_dim_loc=16)
DIM = sum(MSCSA['channels'])                               # 4
HEADS = MSCSA['head_loc']                                  # 2
HEAD_DIM = MSCSA['head_dim_loc']                           # 16
HEAD_DIM_V = int(MSCSA['head_attn_ratio'] * HEAD_DIM)      # 32
EMBED_DIM = HEADS * HEAD_DIM                               # 32
EMBED_DIM_V = int(MSCSA['head_attn_ratio'] * EMBED_DIM)    # 64
SCALE = HEAD_DIM ** (-0.5)
EPS = 1e-5
QKV_W = 2 * EMBED_DIM + EMBED_DIM_V                        # 128 (lane-dense)

_NT = (((1,), (1,)), ((), ()))                             # A @ B^T contraction


def _bn_params(key, c):
    k1, k2, k3, k4 = jax.random.split(key, 4)
    gamma = 1.0 + 0.1 * jax.random.normal(k1, (c,), jnp.float32)
    beta = 0.1 * jax.random.normal(k2, (c,), jnp.float32)
    mean = 0.1 * jax.random.normal(k3, (c,), jnp.float32)
    var = 1.0 + 0.1 * jnp.abs(jax.random.normal(k4, (c,), jnp.float32))
    scale = gamma / jnp.sqrt(var + EPS)
    shift = beta - mean * scale
    return scale, shift


def init_params(key):
    ks = jax.random.split(key, 16)
    p = {}
    p['norm_s'], p['norm_b'] = _bn_params(ks[0], DIM)
    p['wq'] = 0.2 * jax.random.normal(ks[1], (DIM, EMBED_DIM), jnp.float32)
    p['q_s'], p['q_b'] = _bn_params(ks[2], EMBED_DIM)
    p['wk'] = 0.2 * jax.random.normal(ks[3], (DIM, EMBED_DIM), jnp.float32)
    p['k_s'], p['k_b'] = _bn_params(ks[4], EMBED_DIM)
    p['wv'] = 0.2 * jax.random.normal(ks[5], (DIM, EMBED_DIM_V), jnp.float32)
    p['v_s'], p['v_b'] = _bn_params(ks[6], EMBED_DIM_V)
    p['w_ds1'] = 0.2 * jax.random.normal(ks[7], (DIM, 1, 3, 3), jnp.float32)
    p['ds1_s'], p['ds1_b'] = _bn_params(ks[8], DIM)
    p['w_ds2'] = 0.2 * jax.random.normal(ks[9], (DIM, 1, 5, 5), jnp.float32)
    p['ds2_s'], p['ds2_b'] = _bn_params(ks[10], DIM)
    p['w_vc'] = 0.2 * jax.random.normal(ks[11], (EMBED_DIM_V, 1, 3, 3), jnp.float32)
    p['b_vc'] = 0.1 * jax.random.normal(ks[12], (EMBED_DIM_V,), jnp.float32)
    p['attn_s'], p['attn_b'] = _bn_params(ks[13], EMBED_DIM_V)
    p['wp'] = 0.2 * jax.random.normal(ks[14], (EMBED_DIM_V, DIM), jnp.float32)
    p['bp'] = 0.1 * jax.random.normal(ks[15], (DIM,), jnp.float32)
    return p


def hardswish(x):
    return x * jnp.clip(x + 3.0, 0.0, 6.0) * (1.0 / 6.0)


# --------------------------------------------------------------------------
# Pallas kernel 1: fused q|k|v 1x1 projections (BN + SCALE folded into W/b)
# --------------------------------------------------------------------------
def _proj_kernel(x0_ref, x1_ref, x2_ref, w0_ref, b0_ref, w1_ref, b1_ref,
                 w2_ref, b2_ref, o0_ref, o1_ref, o2_ref):
    # one row-block (= one batch) per grid step; three scales, rows @ W + bias.
    o0_ref[0] = jnp.dot(x0_ref[0], w0_ref[...],
                        preferred_element_type=jnp.float32) + b0_ref[...]
    o1_ref[0] = jnp.dot(x1_ref[0], w1_ref[...],
                        preferred_element_type=jnp.float32) + b1_ref[...]
    o2_ref[0] = jnp.dot(x2_ref[0], w2_ref[...],
                        preferred_element_type=jnp.float32) + b2_ref[...]


def _proj_call(xn_rows, y1_rows, y2_rows, w0, b0, w1, b1, w2, b2):
    B, n0, _ = xn_rows.shape
    n1 = y1_rows.shape[1]
    n2 = y2_rows.shape[1]
    row_spec = lambda n: pl.BlockSpec((1, n, DIM), lambda b: (b, 0, 0))
    out_spec = lambda n: pl.BlockSpec((1, n, QKV_W), lambda b: (b, 0, 0))
    w_spec = pl.BlockSpec((DIM, QKV_W), lambda b: (0, 0))
    b_spec = pl.BlockSpec((1, QKV_W), lambda b: (0, 0))
    return pl.pallas_call(
        _proj_kernel,
        grid=(B,),
        in_specs=[row_spec(n0), row_spec(n1), row_spec(n2),
                  w_spec, b_spec, w_spec, b_spec, w_spec, b_spec],
        out_specs=[out_spec(n0), out_spec(n1), out_spec(n2)],
        out_shape=(jax.ShapeDtypeStruct((B, n0, QKV_W), jnp.float32),
                   jax.ShapeDtypeStruct((B, n1, QKV_W), jnp.float32),
                   jax.ShapeDtypeStruct((B, n2, QKV_W), jnp.float32)),
        compiler_params=pltpu.CompilerParams(dimension_semantics=("parallel",)),
    )(xn_rows, y1_rows, y2_rows, w0, b0, w1, b1, w2, b2)


# --------------------------------------------------------------------------
# Pallas kernel 2: multi-scale attention + v_conv add + attn_norm + Hardswish
#                  + final 1x1 projection, output written channels-first (C, N)
# --------------------------------------------------------------------------
def _attn_out_kernel(qkv_ref, kv1_ref, kv2_ref, vc_ref, sa_ref, ba_ref,
                     wpt_ref, bp_ref, out_ref):
    qkv = qkv_ref[0]     # (N0, 128) = [q(32) | k(32) | v(64)]   (SCALE folded in q)
    kv1 = kv1_ref[0]     # (N1, 128) = [k(32) | v(64) | pad(32)]
    kv2 = kv2_ref[0]     # (N2, 128)
    vc = vc_ref[0]       # (N0, 64)

    acc = None
    for h in range(HEADS):                                     # static unroll (2)
        q_h = qkv[:, h * HEAD_DIM:(h + 1) * HEAD_DIM]
        k0 = qkv[:, EMBED_DIM + h * HEAD_DIM:EMBED_DIM + (h + 1) * HEAD_DIM]
        v0 = qkv[:, 2 * EMBED_DIM + h * HEAD_DIM_V:
                 2 * EMBED_DIM + (h + 1) * HEAD_DIM_V]
        k1 = kv1[:, h * HEAD_DIM:(h + 1) * HEAD_DIM]
        v1 = kv1[:, EMBED_DIM + h * HEAD_DIM_V:EMBED_DIM + (h + 1) * HEAD_DIM_V]
        k2 = kv2[:, h * HEAD_DIM:(h + 1) * HEAD_DIM]
        v2 = kv2[:, EMBED_DIM + h * HEAD_DIM_V:EMBED_DIM + (h + 1) * HEAD_DIM_V]

        # chunked per-scale scores -> shared softmax (global max / global sum)
        s0 = lax.dot_general(q_h, k0, _NT, preferred_element_type=jnp.float32)
        s1 = lax.dot_general(q_h, k1, _NT, preferred_element_type=jnp.float32)
        s2 = lax.dot_general(q_h, k2, _NT, preferred_element_type=jnp.float32)
        m = jnp.maximum(jnp.maximum(jnp.max(s0, axis=-1, keepdims=True),
                                    jnp.max(s1, axis=-1, keepdims=True)),
                        jnp.max(s2, axis=-1, keepdims=True))
        p0 = jnp.exp(s0 - m)
        p1 = jnp.exp(s1 - m)
        p2 = jnp.exp(s2 - m)
        denom = (jnp.sum(p0, axis=-1, keepdims=True)
                 + jnp.sum(p1, axis=-1, keepdims=True)
                 + jnp.sum(p2, axis=-1, keepdims=True))
        r = pl.reciprocal(denom, approx=True)
        r = r * (2.0 - denom * r)          # one Newton step -> ~f32 accuracy
        o = (jnp.dot(p0, v0, preferred_element_type=jnp.float32)
             + jnp.dot(p1, v1, preferred_element_type=jnp.float32)
             + jnp.dot(p2, v2, preferred_element_type=jnp.float32)) * r  # (N0, 32)

        # + v_conv, attn_norm affine, Hardswish, then partial (transposed) 1x1 proj
        x2 = o + vc[:, h * HEAD_DIM_V:(h + 1) * HEAD_DIM_V]
        x3 = (x2 * sa_ref[:, h * HEAD_DIM_V:(h + 1) * HEAD_DIM_V]
              + ba_ref[:, h * HEAD_DIM_V:(h + 1) * HEAD_DIM_V])
        x3 = x3 * jnp.clip(x3 + 3.0, 0.0, 6.0) * (1.0 / 6.0)
        c = lax.dot_general(wpt_ref[:, h * HEAD_DIM_V:(h + 1) * HEAD_DIM_V], x3,
                            _NT, preferred_element_type=jnp.float32)     # (4, N0)
        acc = c if acc is None else acc + c

    out_ref[0] = acc + bp_ref[...]         # (4, N0), lane-dense store


def _attn_out_call(qkv0, kv1, kv2, vc_rows, sa, ba, wpT, bp_cf):
    B, n0, _ = qkv0.shape
    n1, n2 = kv1.shape[1], kv2.shape[1]
    const = lambda shape: pl.BlockSpec(shape, lambda b: (0, 0))
    return pl.pallas_call(
        _attn_out_kernel,
        grid=(B,),
        in_specs=[pl.BlockSpec((1, n0, QKV_W), lambda b: (b, 0, 0)),
                  pl.BlockSpec((1, n1, QKV_W), lambda b: (b, 0, 0)),
                  pl.BlockSpec((1, n2, QKV_W), lambda b: (b, 0, 0)),
                  pl.BlockSpec((1, n0, EMBED_DIM_V), lambda b: (b, 0, 0)),
                  const((1, EMBED_DIM_V)), const((1, EMBED_DIM_V)),
                  const((DIM, EMBED_DIM_V)), const((DIM, 1))],
        out_specs=pl.BlockSpec((1, DIM, n0), lambda b: (b, 0, 0)),
        out_shape=jax.ShapeDtypeStruct((B, DIM, n0), jnp.float32),
        compiler_params=pltpu.CompilerParams(dimension_semantics=("parallel",)),
    )(qkv0, kv1, kv2, vc_rows, sa, ba, wpT, bp_cf)


# --------------------------------------------------------------------------
# trace-time parameter folding (BatchNorm eval affines + attention SCALE)
# --------------------------------------------------------------------------
def _fold_params(p):
    sq, bq = p['q_s'], p['q_b']
    sk, bk = p['k_s'], p['k_b']
    sv, bv = p['v_s'], p['v_b']

    # full-res scale: fold the output BNs into the 1x1 weights; fold the softmax
    # SCALE into the q columns (scale commutes through q @ k^T).
    wq = p['wq'] * (sq * SCALE)[None, :]
    wk = p['wk'] * sk[None, :]
    wv = p['wv'] * sv[None, :]
    w0 = jnp.concatenate([wq, wk, wv], axis=1)                     # (4, 128)
    b0 = jnp.concatenate([bq * SCALE, bk, bv])[None, :]            # (1, 128)

    pad_w = QKV_W - (EMBED_DIM + EMBED_DIM_V)

    def ds_fold(s_i, b_i):
        # k_i = BN_k((y * s_i + b_i) @ Wk) ; fold both BNs into W / bias.
        wki = (s_i[:, None] * p['wk']) * sk[None, :]
        wvi = (s_i[:, None] * p['wv']) * sv[None, :]
        bki = (b_i @ p['wk']) * sk + bk
        bvi = (b_i @ p['wv']) * sv + bv
        wi = jnp.concatenate(
            [wki, wvi, jnp.zeros((DIM, pad_w), jnp.float32)], axis=1)
        bi = jnp.concatenate(
            [bki, bvi, jnp.zeros((pad_w,), jnp.float32)])[None, :]
        return wi, bi

    w1, b1 = ds_fold(p['ds1_s'], p['ds1_b'])
    w2, b2 = ds_fold(p['ds2_s'], p['ds2_b'])

    sa = p['attn_s'][None, :]              # (1, 64)
    ba = p['attn_b'][None, :]
    wpT = p['wp'].T                        # (4, 64)
    bp_cf = p['bp'][:, None]               # (4, 1)  (channels-first bias)
    return w0, b0, w1, b1, w2, b2, sa, ba, wpT, bp_cf


# --------------------------------------------------------------------------
# Pallas forward (module boundary NCHW, like the PyTorch reference)
# --------------------------------------------------------------------------
@jax.jit
def forward_pallas(x, p):
    B, _, H, W = x.shape
    n0 = H * W

    w0, b0, w1, b1, w2, b2, sa, ba, wpT, bp_cf = _fold_params(p)

    # norm (BatchNorm eval == per-channel affine), single NCHW -> NHWC transpose.
    # NOTE: the norm shift cannot be folded into the zero-padded depthwise convs,
    #       so it is applied once here (fuses with the transpose / conv in XLA).
    x_nhwc = jnp.transpose(x, (0, 2, 3, 1))
    xn_nhwc = x_nhwc * p['norm_s'] + p['norm_b']
    xn_rows = xn_nhwc.reshape(B, n0, DIM)

    # multi-scale strided depthwise downsamples (XLA, NHWC).
    wd1 = jnp.transpose(p['w_ds1'], (2, 3, 1, 0))
    wd2 = jnp.transpose(p['w_ds2'], (2, 3, 1, 0))
    y1 = lax.conv_general_dilated(
        xn_nhwc, wd1, (2, 2), [(1, 1), (1, 1)],
        dimension_numbers=('NHWC', 'HWIO', 'NHWC'),
        feature_group_count=DIM, precision=lax.Precision.HIGHEST)
    y2 = lax.conv_general_dilated(
        xn_nhwc, wd2, (3, 3), [(2, 2), (2, 2)],
        dimension_numbers=('NHWC', 'HWIO', 'NHWC'),
        feature_group_count=DIM, precision=lax.Precision.HIGHEST)
    y1_rows = y1.reshape(B, y1.shape[1] * y1.shape[2], DIM)
    y2_rows = y2.reshape(B, y2.shape[1] * y2.shape[2], DIM)

    # Pallas kernel 1: fused q|k|v projections for all three scales.
    qkv0, kv1, kv2 = _proj_call(xn_rows, y1_rows, y2_rows,
                                w0, b0, w1, b1, w2, b2)

    # v_conv = depthwise 3x3 over hardswish(v[0])  (XLA, NHWC).
    v0 = qkv0[:, :, 2 * EMBED_DIM:]
    vh = hardswish(v0).reshape(B, H, W, EMBED_DIM_V)
    wvc = jnp.transpose(p['w_vc'], (2, 3, 1, 0))
    vconv = lax.conv_general_dilated(
        vh, wvc, (1, 1), [(1, 1), (1, 1)],
        dimension_numbers=('NHWC', 'HWIO', 'NHWC'),
        feature_group_count=EMBED_DIM_V, precision=lax.Precision.HIGHEST)
    vc_rows = (vconv + p['b_vc']).reshape(B, n0, EMBED_DIM_V)

    # Pallas kernel 2: attention + v_conv add + attn_norm + Hardswish + proj.
    out_cf = _attn_out_call(qkv0, kv1, kv2, vc_rows, sa, ba, wpT, bp_cf)
    return out_cf.reshape(B, DIM, H, W)          # pure reshape to NCHW


# --------------------------------------------------------------------------
# pure-JAX reference (mirrors the PyTorch forward, NCHW throughout)
# --------------------------------------------------------------------------
def depthwise_conv_nchw(x, w, b, stride, pad):
    out = lax.conv_general_dilated(
        x, w, window_strides=(stride, stride),
        padding=[(pad, pad), (pad, pad)],
        dimension_numbers=('NCHW', 'OIHW', 'NCHW'),
        feature_group_count=x.shape[1], precision=lax.Precision.HIGHEST)
    if b is not None:
        out = out + b.reshape(1, -1, 1, 1)
    return out


def _bn_nchw(x, s, b):
    return x * s.reshape(1, -1, 1, 1) + b.reshape(1, -1, 1, 1)


def _conv1x1_nchw(x, w):
    return jnp.einsum('bchw,co->bohw', x, w, precision=lax.Precision.HIGHEST)


def forward_reference(x, p):
    B, _, H, W = x.shape
    xn = _bn_nchw(x, p['norm_s'], p['norm_b'])
    q = _bn_nchw(_conv1x1_nchw(xn, p['wq']), p['q_s'], p['q_b'])
    ds1 = _bn_nchw(depthwise_conv_nchw(xn, p['w_ds1'], None, 2, 1),
                   p['ds1_s'], p['ds1_b'])
    ds2 = _bn_nchw(depthwise_conv_nchw(xn, p['w_ds2'], None, 3, 2),
                   p['ds2_s'], p['ds2_b'])
    xs = [xn, ds1, ds2]
    vs = [_bn_nchw(_conv1x1_nchw(xi, p['wv']), p['v_s'], p['v_b']) for xi in xs]
    ks_ = [_bn_nchw(_conv1x1_nchw(xi, p['wk']), p['k_s'], p['k_b']) for xi in xs]
    v_conv = depthwise_conv_nchw(hardswish(vs[0]), p['w_vc'], p['b_vc'], 1, 1)

    q = q.reshape(B, HEADS, HEAD_DIM, -1)
    k = jnp.concatenate([ki.reshape(B, HEADS, HEAD_DIM, -1) for ki in ks_],
                        axis=-1)
    v = jnp.concatenate([vi.reshape(B, HEADS, HEAD_DIM_V, -1) for vi in vs],
                        axis=-1)
    q = q.transpose(0, 1, 3, 2)
    v = v.transpose(0, 1, 3, 2)
    attn = jnp.einsum('bhnd,bhdm->bhnm', q, k,
                      precision=lax.Precision.HIGHEST) * SCALE
    attn = jax.nn.softmax(attn, axis=-1)
    out = jnp.einsum('bhnm,bhmd->bhnd', attn, v,
                     precision=lax.Precision.HIGHEST)
    out = out.transpose(0, 1, 3, 2).reshape(B, EMBED_DIM_V, H, W)
    out = out + v_conv
    out = hardswish(_bn_nchw(out, p['attn_s'], p['attn_b']))
    out = _conv1x1_nchw(out, p['wp']) + p['bp'].reshape(1, -1, 1, 1)
    return out


# --------------------------------------------------------------------------
if __name__ == "__main__":
    key = jax.random.PRNGKey(0)
    kx, kp = jax.random.split(key)
    x = jax.random.normal(kx, (2, DIM, 16, 16), jnp.float32)   # (B, dim, H, W)
    params = init_params(kp)

    out = forward_pallas(x, params)
    out = jax.block_until_ready(out)

    ref = forward_reference(x, params)
    np.testing.assert_allclose(np.asarray(out), np.asarray(ref),
                               rtol=1e-4, atol=1e-4)
    assert out.shape == (2, DIM, 16, 16)
    print("KERNEL_OK")
</pallas_src>

<mosaic_0001>
module attributes {stable_mosaic.version = 11 : i64} {
  func.func @_proj_kernel(%arg0: i32, %arg1: memref<1x256x4xf32, #tpu.memory_space<vmem>>, %arg2: memref<1x64x4xf32, #tpu.memory_space<vmem>>, %arg3: memref<1x36x4xf32, #tpu.memory_space<vmem>>, %arg4: memref<4x128xf32, #tpu.memory_space<vmem>>, %arg5: memref<1x128xf32, #tpu.memory_space<vmem>>, %arg6: memref<4x128xf32, #tpu.memory_space<vmem>>, %arg7: memref<1x128xf32, #tpu.memory_space<vmem>>, %arg8: memref<4x128xf32, #tpu.memory_space<vmem>>, %arg9: memref<1x128xf32, #tpu.memory_space<vmem>>, %arg10: memref<1x256x128xf32, #tpu.memory_space<vmem>>, %arg11: memref<1x64x128xf32, #tpu.memory_space<vmem>>, %arg12: memref<1x36x128xf32, #tpu.memory_space<vmem>>) attributes {dimension_semantics = [#tpu.dimension_semantics<parallel>], iteration_bounds = array<i64: 2>, scalar_prefetch = 0 : i64, scratch_operands = 0 : i64, tpu.core_type = #tpu.core_type<tc>, window_params = [{transform_indices = @transform_0, window_bounds = array<i64: 1, 256, 4>}, {transform_indices = @transform_1, window_bounds = array<i64: 1, 64, 4>}, {transform_indices = @transform_2, window_bounds = array<i64: 1, 36, 4>}, {pipeline_mode = #tpu.pipeline_mode<synchronous>, transform_indices = @transform_3, window_bounds = array<i64: 4, 128>}, {pipeline_mode = #tpu.pipeline_mode<synchronous>, transform_indices = @transform_4, window_bounds = array<i64: 1, 128>}, {pipeline_mode = #tpu.pipeline_mode<synchronous>, transform_indices = @transform_5, window_bounds = array<i64: 4, 128>}, {pipeline_mode = #tpu.pipeline_mode<synchronous>, transform_indices = @transform_6, window_bounds = array<i64: 1, 128>}, {pipeline_mode = #tpu.pipeline_mode<synchronous>, transform_indices = @transform_7, window_bounds = array<i64: 4, 128>}, {pipeline_mode = #tpu.pipeline_mode<synchronous>, transform_indices = @transform_8, window_bounds = array<i64: 1, 128>}, {transform_indices = @transform_9, window_bounds = array<i64: 1, 256, 128>}, {transform_indices = @transform_10, window_bounds = array<i64: 1, 64, 128>}, {transform_indices = @transform_11, window_bounds = array<i64: 1, 36, 128>}]} {
    %c0 = arith.constant 0 : index
    %c0_0 = arith.constant 0 : index
    %c0_1 = arith.constant 0 : index
    %0 = vector.load %arg1[%c0, %c0_0, %c0_1] : memref<1x256x4xf32, #tpu.memory_space<vmem>>, vector<1x256x4xf32>
    %1 = vector.shape_cast %0 : vector<1x256x4xf32> to vector<256x4xf32>
    %c0_2 = arith.constant 0 : index
    %c0_3 = arith.constant 0 : index
    %2 = vector.load %arg4[%c0_2, %c0_3] : memref<4x128xf32, #tpu.memory_space<vmem>>, vector<4x128xf32>
    %cst = arith.constant dense<0.000000e+00> : vector<256x128xf32>
    %3 = tpu.matmul %1, %2, %cst {dimension_numbers = #tpu.dot_dimension_numbers<[1], [0], [0], [1], [0, 0, 1, 1], [], []>} : vector<256x4xf32>, vector<4x128xf32>, vector<256x128xf32> -> vector<256x128xf32>
    %c0_4 = arith.constant 0 : index
    %c0_5 = arith.constant 0 : index
    %4 = vector.load %arg5[%c0_4, %c0_5] : memref<1x128xf32, #tpu.memory_space<vmem>>, vector<1x128xf32>
    %5 = vector.broadcast %4 : vector<1x128xf32> to vector<256x128xf32>
    %6 = arith.addf %3, %5 : vector<256x128xf32>
    %c0_6 = arith.constant 0 : index
    %c0_7 = arith.constant 0 : index
    %c0_8 = arith.constant 0 : index
    %7 = vector.load %arg10[%c0_6, %c0_7, %c0_8] : memref<1x256x128xf32, #tpu.memory_space<vmem>>, vector<1x256x128xf32>
    %8 = vector.shape_cast %7 : vector<1x256x128xf32> to vector<256x128xf32>
    %9 = vector.shape_cast %6 : vector<256x128xf32> to vector<1x256x128xf32>
    tpu.vector_store %arg10[%c0_6, %c0_7, %c0_8], %9 {strides = array<i32>} : memref<1x256x128xf32, #tpu.memory_space<vmem>>, vector<1x256x128xf32>,
    %c0_9 = arith.constant 0 : index
    %c0_10 = arith.constant 0 : index
    %c0_11 = arith.constant 0 : index
    %10 = vector.load %arg2[%c0_9, %c0_10, %c0_11] : memref<1x64x4xf32, #tpu.memory_space<vmem>>, vector<1x64x4xf32>
    %11 = vector.shape_cast %10 : vector<1x64x4xf32> to vector<64x4xf32>
    %c0_12 = arith.constant 0 : index
    %c0_13 = arith.constant 0 : index
    %12 = vector.load %arg6[%c0_12, %c0_13] : memref<4x128xf32, #tpu.memory_space<vmem>>, vector<4x128xf32>
    %cst_14 = arith.constant dense<0.000000e+00> : vector<64x128xf32>
    %13 = tpu.matmul %11, %12, %cst_14 {dimension_numbers = #tpu.dot_dimension_numbers<[1], [0], [0], [1], [0, 0, 1, 1], [], []>} : vector<64x4xf32>, vector<4x128xf32>, vector<64x128xf32> -> vector<64x128xf32>
    %c0_15 = arith.constant 0 : index
    %c0_16 = arith.constant 0 : index
    %14 = vector.load %arg7[%c0_15, %c0_16] : memref<1x128xf32, #tpu.memory_space<vmem>>, vector<1x128xf32>
    %15 = vector.broadcast %14 : vector<1x128xf32> to vector<64x128xf32>
    %16 = arith.addf %13, %15 : vector<64x128xf32>
    %c0_17 = arith.constant 0 : index
    %c0_18 = arith.constant 0 : index
    %c0_19 = arith.constant 0 : index
    %17 = vector.load %arg11[%c0_17, %c0_18, %c0_19] : memref<1x64x128xf32, #tpu.memory_space<vmem>>, vector<1x64x128xf32>
    %18 = vector.shape_cast %17 : vector<1x64x128xf32> to vector<64x128xf32>
    %19 = vector.shape_cast %16 : vector<64x128xf32> to vector<1x64x128xf32>
    tpu.vector_store %arg11[%c0_17, %c0_18, %c0_19], %19 {strides = array<i32>} : memref<1x64x128xf32, #tpu.memory_space<vmem>>, vector<1x64x128xf32>,
    %c0_20 = arith.constant 0 : index
    %c0_21 = arith.constant 0 : index
    %c0_22 = arith.constant 0 : index
    %20 = vector.load %arg3[%c0_20, %c0_21, %c0_22] : memref<1x36x4xf32, #tpu.memory_space<vmem>>, vector<1x36x4xf32>
    %21 = vector.shape_cast %20 : vector<1x36x4xf32> to vector<36x4xf32>
    %c0_23 = arith.constant 0 : index
    %c0_24 = arith.constant 0 : index
    %22 = vector.load %arg8[%c0_23, %c0_24] : memref<4x128xf32, #tpu.memory_space<vmem>>, vector<4x128xf32>
    %cst_25 = arith.constant dense<0.000000e+00> : vector<36x128xf32>
    %23 = tpu.matmul %21, %22, %cst_25 {dimension_numbers = #tpu.dot_dimension_numbers<[1], [0], [0], [1], [0, 0, 1, 1], [], []>} : vector<36x4xf32>, vector<4x128xf32>, vector<36x128xf32> -> vector<36x128xf32>
    %c0_26 = arith.constant 0 : index
    %c0_27 = arith.constant 0 : index
    %24 = vector.load %arg9[%c0_26, %c0_27] : memref<1x128xf32, #tpu.memory_space<vmem>>, vector<1x128xf32>
    %25 = vector.broadcast %24 : vector<1x128xf32> to vector<36x128xf32>
    %26 = arith.addf %23, %25 : vector<36x128xf32>
    %c0_28 = arith.constant 0 : index
    %c0_29 = arith.constant 0 : index
    %c0_30 = arith.constant 0 : index
    %27 = vector.load %arg12[%c0_28, %c0_29, %c0_30] : memref<1x36x128xf32, #tpu.memory_space<vmem>>, vector<1x36x128xf32>
    %28 = vector.shape_cast %27 : vector<1x36x128xf32> to vector<36x128xf32>
    %29 = vector.shape_cast %26 : vector<36x128xf32> to vector<1x36x128xf32>
    tpu.vector_store %arg12[%c0_28, %c0_29, %c0_30], %29 {strides = array<i32>} : memref<1x36x128xf32, #tpu.memory_space<vmem>>, vector<1x36x128xf32>,
    return
  }
  func.func @transform_0(%arg0: i32) -> (i32, i32, i32) {
    %c0_i32 = arith.constant 0 : i32
    %c0_i32_0 = arith.constant 0 : i32
    %c0_i32_1 = arith.constant 0 : i32
    return %arg0, %c0_i32, %c0_i32_0 : i32, i32, i32
  }
  func.func @transform_1(%arg0: i32) -> (i32, i32, i32) {
    %c0_i32 = arith.constant 0 : i32
    %c0_i32_0 = arith.constant 0 : i32
    %c0_i32_1 = arith.constant 0 : i32
    return %arg0, %c0_i32, %c0_i32_0 : i32, i32, i32
  }
  func.func @transform_2(%arg0: i32) -> (i32, i32, i32) {
    %c0_i32 = arith.constant 0 : i32
    %c0_i32_0 = arith.constant 0 : i32
    %c0_i32_1 = arith.constant 0 : i32
    return %arg0, %c0_i32, %c0_i32_0 : i32, i32, i32
  }
  func.func @transform_3(%arg0: i32) -> (i32, i32) {
    %c0_i32 = arith.constant 0 : i32
    %c0_i32_0 = arith.constant 0 : i32
    %c0_i32_1 = arith.constant 0 : i32
    return %c0_i32, %c0_i32_0 : i32, i32
  }
  func.func @transform_4(%arg0: i32) -> (i32, i32) {
    %c0_i32 = arith.constant 0 : i32
    %c0_i32_0 = arith.constant 0 : i32
    %c0_i32_1 = arith.constant 0 : i32
    return %c0_i32, %c0_i32_0 : i32, i32
  }
  func.func @transform_5(%arg0: i32) -> (i32, i32) {
    %c0_i32 = arith.constant 0 : i32
    %c0_i32_0 = arith.constant 0 : i32
    %c0_i32_1 = arith.constant 0 : i32
    return %c0_i32, %c0_i32_0 : i32, i32
  }
  func.func @transform_6(%arg0: i32) -> (i32, i32) {
    %c0_i32 = arith.constant 0 : i32
    %c0_i32_0 = arith.constant 0 : i32
    %c0_i32_1 = arith.constant 0 : i32
    return %c0_i32, %c0_i32_0 : i32, i32
  }
  func.func @transform_7(%arg0: i32) -> (i32, i32) {
    %c0_i32 = arith.constant 0 : i32
    %c0_i32_0 = arith.constant 0 : i32
    %c0_i32_1 = arith.constant 0 : i32
    return %c0_i32, %c0_i32_0 : i32, i32
  }
  func.func @transform_8(%arg0: i32) -> (i32, i32) {
    %c0_i32 = arith.constant 0 : i32
    %c0_i32_0 = arith.constant 0 : i32
    %c0_i32_1 = arith.constant 0 : i32
    return %c0_i32, %c0_i32_0 : i32, i32
  }
  func.func @transform_9(%arg0: i32) -> (i32, i32, i32) {
    %c0_i32 = arith.constant 0 : i32
    %c0_i32_0 = arith.constant 0 : i32
    %c0_i32_1 = arith.constant 0 : i32
    return %arg0, %c0_i32, %c0_i32_0 : i32, i32, i32
  }
  func.func @transform_10(%arg0: i32) -> (i32, i32, i32) {
    %c0_i32 = arith.constant 0 : i32
    %c0_i32_0 = arith.constant 0 : i32
    %c0_i32_1 = arith.constant 0 : i32
    return %arg0, %c0_i32, %c0_i32_0 : i32, i32, i32
  }
  func.func @transform_11(%arg0: i32) -> (i32, i32, i32) {
    %c0_i32 = arith.constant 0 : i32
    %c0_i32_0 = arith.constant 0 : i32
    %c0_i32_1 = arith.constant 0 : i32
    return %arg0, %c0_i32, %c0_i32_0 : i32, i32, i32
  }
}

module attributes {stable_mosaic.version = 11 : i64} {
  func.func @_attn_out_kernel(%arg0: i32, %arg1: memref<1x256x128xf32, #tpu.memory_space<vmem>>, %arg2: memref<1x64x128xf32, #tpu.memory_space<vmem>>, %arg3: memref<1x36x128xf32, #tpu.memory_space<vmem>>, %arg4: memref<1x256x64xf32, #tpu.memory_space<vmem>>, %arg5: memref<1x64xf32, #tpu.memory_space<vmem>>, %arg6: memref<1x64xf32, #tpu.memory_space<vmem>>, %arg7: memref<4x64xf32, #tpu.memory_space<vmem>>, %arg8: memref<4x1xf32, #tpu.memory_space<vmem>>, %arg9: memref<1x4x256xf32, #tpu.memory_space<vmem>>) attributes {dimension_semantics = [#tpu.dimension_semantics<parallel>], iteration_bounds = array<i64: 2>, scalar_prefetch = 0 : i64, scratch_operands = 0 : i64, tpu.core_type = #tpu.core_type<tc>, window_params = [{transform_indices = @transform_0, window_bounds = array<i64: 1, 256, 128>}, {transform_indices = @transform_1, window_bounds = array<i64: 1, 64, 128>}, {transform_indices = @transform_2, window_bounds = array<i64: 1, 36, 128>}, {transform_indices = @transform_3, window_bounds = array<i64: 1, 256, 64>}, {pipeline_mode = #tpu.pipeline_mode<synchronous>, transform_indices = @transform_4, window_bounds = array<i64: 1, 64>}, {pipeline_mode = #tpu.pipeline_mode<synchronous>, transform_indices = @transform_5, window_bounds = array<i64: 1, 64>}, {pipeline_mode = #tpu.pipeline_mode<synchronous>, transform_indices = @transform_6, window_bounds = array<i64: 4, 64>}, {pipeline_mode = #tpu.pipeline_mode<synchronous>, transform_indices = @transform_7, window_bounds = array<i64: 4, 1>}, {transform_indices = @transform_8, window_bounds = array<i64: 1, 4, 256>}]} {
    %c0 = arith.constant 0 : index
    %c0_0 = arith.constant 0 : index
    %c0_1 = arith.constant 0 : index
    %0 = vector.load %arg1[%c0, %c0_0, %c0_1] : memref<1x256x128xf32, #tpu.memory_space<vmem>>, vector<1x256x128xf32>
    %1 = vector.shape_cast %0 : vector<1x256x128xf32> to vector<256x128xf32>
    %c0_2 = arith.constant 0 : index
    %c0_3 = arith.constant 0 : index
    %c0_4 = arith.constant 0 : index
    %2 = vector.load %arg2[%c0_2, %c0_3, %c0_4] : memref<1x64x128xf32, #tpu.memory_space<vmem>>, vector<1x64x128xf32>
    %3 = vector.shape_cast %2 : vector<1x64x128xf32> to vector<64x128xf32>
    %c0_5 = arith.constant 0 : index
    %c0_6 = arith.constant 0 : index
    %c0_7 = arith.constant 0 : index
    %4 = vector.load %arg3[%c0_5, %c0_6, %c0_7] : memref<1x36x128xf32, #tpu.memory_space<vmem>>, vector<1x36x128xf32>
    %5 = vector.shape_cast %4 : vector<1x36x128xf32> to vector<36x128xf32>
    %c0_8 = arith.constant 0 : index
    %c0_9 = arith.constant 0 : index
    %c0_10 = arith.constant 0 : index
    %6 = vector.load %arg4[%c0_8, %c0_9, %c0_10] : memref<1x256x64xf32, #tpu.memory_space<vmem>>, vector<1x256x64xf32>
    %7 = vector.shape_cast %6 : vector<1x256x64xf32> to vector<256x64xf32>
    %8 = vector.extract_strided_slice %1 {offsets = [0, 0], sizes = [256, 16], strides = [1, 1]} : vector<256x128xf32> to vector<256x16xf32>
    %9 = vector.extract_strided_slice %1 {offsets = [0, 32], sizes = [256, 16], strides = [1, 1]} : vector<256x128xf32> to vector<256x16xf32>
    %10 = vector.extract_strided_slice %1 {offsets = [0, 64], sizes = [256, 32], strides = [1, 1]} : vector<256x128xf32> to vector<256x32xf32>
    %11 = vector.extract_strided_slice %3 {offsets = [0, 0], sizes = [64, 16], strides = [1, 1]} : vector<64x128xf32> to vector<64x16xf32>
    %12 = vector.extract_strided_slice %3 {offsets = [0, 32], sizes = [64, 32], strides = [1, 1]} : vector<64x128xf32> to vector<64x32xf32>
    %13 = vector.extract_strided_slice %5 {offsets = [0, 0], sizes = [36, 16], strides = [1, 1]} : vector<36x128xf32> to vector<36x16xf32>
    %14 = vector.extract_strided_slice %5 {offsets = [0, 32], sizes = [36, 32], strides = [1, 1]} : vector<36x128xf32> to vector<36x32xf32>
    %cst = arith.constant dense<0.000000e+00> : vector<256x256xf32>
    %15 = tpu.matmul %8, %9, %cst {dimension_numbers = #tpu.dot_dimension_numbers<[1], [1], [0], [0], [0, 0, 1, 0], [], []>} : vector<256x16xf32>, vector<256x16xf32>, vector<256x256xf32> -> vector<256x256xf32>
    %cst_11 = arith.constant dense<0.000000e+00> : vector<256x64xf32>
    %16 = tpu.matmul %8, %11, %cst_11 {dimension_numbers = #tpu.dot_dimension_numbers<[1], [1], [0], [0], [0, 0, 1, 0], [], []>} : vector<256x16xf32>, vector<64x16xf32>, vector<256x64xf32> -> vector<256x64xf32>
    %cst_12 = arith.constant dense<0.000000e+00> : vector<256x36xf32>
    %17 = tpu.matmul %8, %13, %cst_12 {dimension_numbers = #tpu.dot_dimension_numbers<[1], [1], [0], [0], [0, 0, 1, 0], [], []>} : vector<256x16xf32>, vector<36x16xf32>, vector<256x36xf32> -> vector<256x36xf32>
    %cst_13 = arith.constant dense<0xFF800000> : vector<256xf32>
    %18 = vector.multi_reduction <maximumf>, %15, %cst_13 [1] : vector<256x256xf32> to vector<256xf32>
    %19 = vector.shape_cast %18 : vector<256xf32> to vector<256x1xf32>
    %cst_14 = arith.constant dense<0xFF800000> : vector<256xf32>
    %20 = vector.multi_reduction <maximumf>, %16, %cst_14 [1] : vector<256x64xf32> to vector<256xf32>
    %21 = vector.shape_cast %20 : vector<256xf32> to vector<256x1xf32>
    %22 = arith.maximumf %19, %21 : vector<256x1xf32>
    %cst_15 = arith.constant dense<0xFF800000> : vector<256xf32>
    %23 = vector.multi_reduction <maximumf>, %17, %cst_15 [1] : vector<256x36xf32> to vector<256xf32>
    %24 = vector.shape_cast %23 : vector<256xf32> to vector<256x1xf32>
    %25 = arith.maximumf %22, %24 : vector<256x1xf32>
    %26 = vector.broadcast %25 : vector<256x1xf32> to vector<256x256xf32>
    %27 = arith.subf %15, %26 : vector<256x256xf32>
    %28 = math.exp %27 : vector<256x256xf32>
    %29 = vector.broadcast %25 : vector<256x1xf32> to vector<256x64xf32>
    %30 = arith.subf %16, %29 : vector<256x64xf32>
    %31 = math.exp %30 : vector<256x64xf32>
    %32 = vector.broadcast %25 : vector<256x1xf32> to vector<256x36xf32>
    %33 = arith.subf %17, %32 : vector<256x36xf32>
    %34 = math.exp %33 : vector<256x36xf32>
    %cst_16 = arith.constant dense<0.000000e+00> : vector<256xf32>
    %35 = vector.multi_reduction <add>, %28, %cst_16 [1] : vector<256x256xf32> to vector<256xf32>
    %36 = vector.shape_cast %35 : vector<256xf32> to vector<256x1xf32>
    %cst_17 = arith.constant dense<0.000000e+00> : vector<256xf32>
    %37 = vector.multi_reduction <add>, %31, %cst_17 [1] : vector<256x64xf32> to vector<256xf32>
    %38 = vector.shape_cast %37 : vector<256xf32> to vector<256x1xf32>
    %39 = arith.addf %36, %38 : vector<256x1xf32>
    %cst_18 = arith.constant dense<0.000000e+00> : vector<256xf32>
    %40 = vector.multi_reduction <add>, %34, %cst_18 [1] : vector<256x36xf32> to vector<256xf32>
    %41 = vector.shape_cast %40 : vector<256xf32> to vector<256x1xf32>
    %42 = arith.addf %39, %41 : vector<256x1xf32>
    %43 = tpu.reciprocal %42 {approx = true} : vector<256x1xf32> -> vector<256x1xf32>
    %44 = arith.mulf %42, %43 : vector<256x1xf32>
    %cst_19 = arith.constant 2.000000e+00 : f32
    %45 = vector.broadcast %cst_19 : f32 to vector<256x1xf32>
    %46 = arith.subf %45, %44 : vector<256x1xf32>
    %47 = arith.mulf %43, %46 : vector<256x1xf32>
    %cst_20 = arith.constant dense<0.000000e+00> : vector<256x32xf32>
    %48 = tpu.matmul %28, %10, %cst_20 {dimension_numbers = #tpu.dot_dimension_numbers<[1], [0], [0], [1], [0, 0, 1, 1], [], []>} : vector<256x256xf32>, vector<256x32xf32>, vector<256x32xf32> -> vector<256x32xf32>
    %cst_21 = arith.constant dense<0.000000e+00> : vector<256x32xf32>
    %49 = tpu.matmul %31, %12, %cst_21 {dimension_numbers = #tpu.dot_dimension_numbers<[1], [0], [0], [1], [0, 0, 1, 1], [], []>} : vector<256x64xf32>, vector<64x32xf32>, vector<256x32xf32> -> vector<256x32xf32>
    %50 = arith.addf %48, %49 : vector<256x32xf32>
    %cst_22 = arith.constant dense<0.000000e+00> : vector<256x32xf32>
    %51 = tpu.matmul %34, %14, %cst_22 {dimension_numbers = #tpu.dot_dimension_numbers<[1], [0], [0], [1], [0, 0, 1, 1], [], []>} : vector<256x36xf32>, vector<36x32xf32>, vector<256x32xf32> -> vector<256x32xf32>
    %52 = arith.addf %50, %51 : vector<256x32xf32>
    %53 = vector.broadcast %47 : vector<256x1xf32> to vector<256x32xf32>
    %54 = arith.mulf %52, %53 : vector<256x32xf32>
    %55 = vector.extract_strided_slice %7 {offsets = [0, 0], sizes = [256, 32], strides = [1, 1]} : vector<256x64xf32> to vector<256x32xf32>
    %56 = arith.addf %54, %55 : vector<256x32xf32>
    %c0_23 = arith.constant 0 : index
    %c0_24 = arith.constant 0 : index
    %57 = vector.load %arg5[%c0_23, %c0_24] : memref<1x64xf32, #tpu.memory_space<vmem>>, vector<1x32xf32>
    %58 = vector.broadcast %57 : vector<1x32xf32> to vector<256x32xf32>
    %59 = arith.mulf %56, %58 : vector<256x32xf32>
    %c0_25 = arith.constant 0 : index
    %c0_26 = arith.constant 0 : index
    %60 = vector.load %arg6[%c0_25, %c0_26] : memref<1x64xf32, #tpu.memory_space<vmem>>, vector<1x32xf32>
    %61 = vector.broadcast %60 : vector<1x32xf32> to vector<256x32xf32>
    %62 = arith.addf %59, %61 : vector<256x32xf32>
    %cst_27 = arith.constant 3.000000e+00 : f32
    %63 = vector.broadcast %cst_27 : f32 to vector<256x32xf32>
    %64 = arith.addf %62, %63 : vector<256x32xf32>
    %cst_28 = arith.constant 0.000000e+00 : f32
    %cst_29 = arith.constant 6.000000e+00 : f32
    %65 = vector.broadcast %cst_28 : f32 to vector<256x32xf32>
    %66 = arith.maximumf %65, %64 : vector<256x32xf32>
    %67 = vector.broadcast %cst_29 : f32 to vector<256x32xf32>
    %68 = arith.minimumf %67, %66 : vector<256x32xf32>
    %69 = arith.mulf %62, %68 : vector<256x32xf32>
    %cst_30 = arith.constant 0.166666672 : f32
    %70 = vector.broadcast %cst_30 : f32 to vector<256x32xf32>
    %71 = arith.mulf %69, %70 : vector<256x32xf32>
    %c0_31 = arith.constant 0 : index
    %c0_32 = arith.constant 0 : index
    %72 = vector.load %arg7[%c0_31, %c0_32] : memref<4x64xf32, #tpu.memory_space<vmem>>, vector<4x32xf32>
    %cst_33 = arith.constant dense<0.000000e+00> : vector<4x256xf32>
    %73 = tpu.matmul %72, %71, %cst_33 {dimension_numbers = #tpu.dot_dimension_numbers<[1], [1], [0], [0], [0, 0, 1, 0], [], []>} : vector<4x32xf32>, vector<256x32xf32>, vector<4x256xf32> -> vector<4x256xf32>
    %74 = vector.extract_strided_slice %1 {offsets = [0, 16], sizes = [256, 16], strides = [1, 1]} : vector<256x128xf32> to vector<256x16xf32>
    %75 = vector.extract_strided_slice %1 {offsets = [0, 48], sizes = [256, 16], strides = [1, 1]} : vector<256x128xf32> to vector<256x16xf32>
    %76 = vector.extract_strided_slice %1 {offsets = [0, 96], sizes = [256, 32], strides = [1, 1]} : vector<256x128xf32> to vector<256x32xf32>
    %77 = vector.extract_strided_slice %3 {offsets = [0, 16], sizes = [64, 16], strides = [1, 1]} : vector<64x128xf32> to vector<64x16xf32>
    %78 = vector.extract_strided_slice %3 {offsets = [0, 64], sizes = [64, 32], strides = [1, 1]} : vector<64x128xf32> to vector<64x32xf32>
    %79 = vector.extract_strided_slice %5 {offsets = [0, 16], sizes = [36, 16], strides = [1, 1]} : vector<36x128xf32> to vector<36x16xf32>
    %80 = vector.extract_strided_slice %5 {offsets = [0, 64], sizes = [36, 32], strides = [1, 1]} : vector<36x128xf32> to vector<36x32xf32>
    %cst_34 = arith.constant dense<0.000000e+00> : vector<256x256xf32>
    %81 = tpu.matmul %74, %75, %cst_34 {dimension_numbers = #tpu.dot_dimension_numbers<[1], [1], [0], [0], [0, 0, 1, 0], [], []>} : vector<256x16xf32>, vector<256x16xf32>, vector<256x256xf32> -> vector<256x256xf32>
    %cst_35 = arith.constant dense<0.000000e+00> : vector<256x64xf32>
    %82 = tpu.matmul %74, %77, %cst_35 {dimension_numbers = #tpu.dot_dimension_numbers<[1], [1], [0], [0], [0, 0, 1, 0], [], []>} : vector<256x16xf32>, vector<64x16xf32>, vector<256x64xf32> -> vector<256x64xf32>
    %cst_36 = arith.constant dense<0.000000e+00> : vector<256x36xf32>
    %83 = tpu.matmul %74, %79, %cst_36 {dimension_numbers = #tpu.dot_dimension_numbers<[1], [1], [0], [0], [0, 0, 1, 0], [], []>} : vector<256x16xf32>, vector<36x16xf32>, vector<256x36xf32> -> vector<256x36xf32>
    %cst_37 = arith.constant dense<0xFF800000> : vector<256xf32>
    %84 = vector.multi_reduction <maximumf>, %81, %cst_37 [1] : vector<256x256xf32> to vector<256xf32>
    %85 = vector.shape_cast %84 : vector<256xf32> to vector<256x1xf32>
    %cst_38 = arith.constant dense<0xFF800000> : vector<256xf32>
    %86 = vector.multi_reduction <maximumf>, %82, %cst_38 [1] : vector<256x64xf32> to vector<256xf32>
    %87 = vector.shape_cast %86 : vector<256xf32> to vector<256x1xf32>
    %88 = arith.maximumf %85, %87 : vector<256x1xf32>
    %cst_39 = arith.constant dense<0xFF800000> : vector<256xf32>
    %89 = vector.multi_reduction <maximumf>, %83, %cst_39 [1] : vector<256x36xf32> to vector<256xf32>
    %90 = vector.shape_cast %89 : vector<256xf32> to vector<256x1xf32>
    %91 = arith.maximumf %88, %90 : vector<256x1xf32>
    %92 = vector.broadcast %91 : vector<256x1xf32> to vector<256x256xf32>
    %93 = arith.subf %81, %92 : vector<256x256xf32>
    %94 = math.exp %93 : vector<256x256xf32>
    %95 = vector.broadcast %91 : vector<256x1xf32> to vector<256x64xf32>
    %96 = arith.subf %82, %95 : vector<256x64xf32>
    %97 = math.exp %96 : vector<256x64xf32>
    %98 = vector.broadcast %91 : vector<256x1xf32> to vector<256x36xf32>
    %99 = arith.subf %83, %98 : vector<256x36xf32>
    %100 = math.exp %99 : vector<256x36xf32>
    %cst_40 = arith.constant dense<0.000000e+00> : vector<256xf32>
    %101 = vector.multi_reduction <add>, %94, %cst_40 [1] : vector<256x256xf32> to vector<256xf32>
    %102 = vector.shape_cast %101 : vector<256xf32> to vector<256x1xf32>
    %cst_41 = arith.constant dense<0.000000e+00> : vector<256xf32>
    %103 = vector.multi_reduction <add>, %97, %cst_41 [1] : vector<256x64xf32> to vector<256xf32>
    %104 = vector.shape_cast %103 : vector<256xf32> to vector<256x1xf32>
    %105 = arith.addf %102, %104 : vector<256x1xf32>
    %cst_42 = arith.constant dense<0.000000e+00> : vector<256xf32>
    %106 = vector.multi_reduction <add>, %100, %cst_42 [1] : vector<256x36xf32> to vector<256xf32>
    %107 = vector.shape_cast %106 : vector<256xf32> to vector<256x1xf32>
    %108 = arith.addf %105, %107 : vector<256x1xf32>
    %109 = tpu.reciprocal %108 {approx = true} : vector<256x1xf32> -> vector<256x1xf32>
    %110 = arith.mulf %108, %109 : vector<256x1xf32>
    %cst_43 = arith.constant 2.000000e+00 : f32
    %111 = vector.broadcast %cst_43 : f32 to vector<256x1xf32>
    %112 = arith.subf %111, %110 : vector<256x1xf32>
    %113 = arith.mulf %109, %112 : vector<256x1xf32>
    %cst_44 = arith.constant dense<0.000000e+00> : vector<256x32xf32>
    %114 = tpu.matmul %94, %76, %cst_44 {dimension_numbers = #tpu.dot_dimension_numbers<[1], [0], [0], [1], [0, 0, 1, 1], [], []>} : vector<256x256xf32>, vector<256x32xf32>, vector<256x32xf32> -> vector<256x32xf32>
    %cst_45 = arith.constant dense<0.000000e+00> : vector<256x32xf32>
    %115 = tpu.matmul %97, %78, %cst_45 {dimension_numbers = #tpu.dot_dimension_numbers<[1], [0], [0], [1], [0, 0, 1, 1], [], []>} : vector<256x64xf32>, vector<64x32xf32>, vector<256x32xf32> -> vector<256x32xf32>
    %116 = arith.addf %114, %115 : vector<256x32xf32>
    %cst_46 = arith.constant dense<0.000000e+00> : vector<256x32xf32>
    %117 = tpu.matmul %100, %80, %cst_46 {dimension_numbers = #tpu.dot_dimension_numbers<[1], [0], [0], [1], [0, 0, 1, 1], [], []>} : vector<256x36xf32>, vector<36x32xf32>, vector<256x32xf32> -> vector<256x32xf32>
    %118 = arith.addf %116, %117 : vector<256x32xf32>
    %119 = vector.broadcast %113 : vector<256x1xf32> to vector<256x32xf32>
    %120 = arith.mulf %118, %119 : vector<256x32xf32>
    %121 = vector.extract_strided_slice %7 {offsets = [0, 32], sizes = [256, 32], strides = [1, 1]} : vector<256x64xf32> to vector<256x32xf32>
    %122 = arith.addf %120, %121 : vector<256x32xf32>
    %c0_47 = arith.constant 0 : index
    %c32 = arith.constant 32 : index
    %123 = vector.load %arg5[%c0_47, %c32] : memref<1x64xf32, #tpu.memory_space<vmem>>, vector<1x32xf32>
    %124 = vector.broadcast %123 : vector<1x32xf32> to vector<256x32xf32>
    %125 = arith.mulf %122, %124 : vector<256x32xf32>
    %c0_48 = arith.constant 0 : index
    %c32_49 = arith.constant 32 : index
    %126 = vector.load %arg6[%c0_48, %c32_49] : memref<1x64xf32, #tpu.memory_space<vmem>>, vector<1x32xf32>
    %127 = vector.broadcast %126 : vector<1x32xf32> to vector<256x32xf32>
    %128 = arith.addf %125, %127 : vector<256x32xf32>
    %cst_50 = arith.constant 3.000000e+00 : f32
    %129 = vector.broadcast %cst_50 : f32 to vector<256x32xf32>
    %130 = arith.addf %128, %129 : vector<256x32xf32>
    %cst_51 = arith.constant 0.000000e+00 : f32
    %cst_52 = arith.constant 6.000000e+00 : f32
    %131 = vector.broadcast %cst_51 : f32 to vector<256x32xf32>
    %132 = arith.maximumf %131, %130 : vector<256x32xf32>
    %133 = vector.broadcast %cst_52 : f32 to vector<256x32xf32>
    %134 = arith.minimumf %133, %132 : vector<256x32xf32>
    %135 = arith.mulf %128, %134 : vector<256x32xf32>
    %cst_53 = arith.constant 0.166666672 : f32
    %136 = vector.broadcast %cst_53 : f32 to vector<256x32xf32>
    %137 = arith.mulf %135, %136 : vector<256x32xf32>
    %c0_54 = arith.constant 0 : index
    %c32_55 = arith.constant 32 : index
    %138 = vector.load %arg7[%c0_54, %c32_55] : memref<4x64xf32, #tpu.memory_space<vmem>>, vector<4x32xf32>
    %cst_56 = arith.constant dense<0.000000e+00> : vector<4x256xf32>
    %139 = tpu.matmul %138, %137, %cst_56 {dimension_numbers = #tpu.dot_dimension_numbers<[1], [1], [0], [0], [0, 0, 1, 0], [], []>} : vector<4x32xf32>, vector<256x32xf32>, vector<4x256xf32> -> vector<4x256xf32>
    %140 = arith.addf %73, %139 : vector<4x256xf32>
    %c0_57 = arith.constant 0 : index
    %c0_58 = arith.constant 0 : index
    %141 = vector.load %arg8[%c0_57, %c0_58] : memref<4x1xf32, #tpu.memory_space<vmem>>, vector<4x1xf32>
    %142 = vector.broadcast %141 : vector<4x1xf32> to vector<4x256xf32>
    %143 = arith.addf %140, %142 : vector<4x256xf32>
    %c0_59 = arith.constant 0 : index
    %c0_60 = arith.constant 0 : index
    %c0_61 = arith.constant 0 : index
    %144 = vector.load %arg9[%c0_59, %c0_60, %c0_61] : memref<1x4x256xf32, #tpu.memory_space<vmem>>, vector<1x4x256xf32>
    %145 = vector.shape_cast %144 : vector<1x4x256xf32> to vector<4x256xf32>
    %146 = vector.shape_cast %143 : vector<4x256xf32> to vector<1x4x256xf32>
    tpu.vector_store %arg9[%c0_59, %c0_60, %c0_61], %146 {strides = array<i32>} : memref<1x4x256xf32, #tpu.memory_space<vmem>>, vector<1x4x256xf32>,
    return
  }
  func.func @transform_0(%arg0: i32) -> (i32, i32, i32) {
    %c0_i32 = arith.constant 0 : i32
    %c0_i32_0 = arith.constant 0 : i32
    %c0_i32_1 = arith.constant 0 : i32
    return %arg0, %c0_i32, %c0_i32_0 : i32, i32, i32
  }
  func.func @transform_1(%arg0: i32) -> (i32, i32, i32) {
    %c0_i32 = arith.constant 0 : i32
    %c0_i32_0 = arith.constant 0 : i32
    %c0_i32_1 = arith.constant 0 : i32
    return %arg0, %c0_i32, %c0_i32_0 : i32, i32, i32
  }
  func.func @transform_2(%arg0: i32) -> (i32, i32, i32) {
    %c0_i32 = arith.constant 0 : i32
    %c0_i32_0 = arith.constant 0 : i32
    %c0_i32_1 = arith.constant 0 : i32
    return %arg0, %c0_i32, %c0_i32_0 : i32, i32, i32
  }
  func.func @transform_3(%arg0: i32) -> (i32, i32, i32) {
    %c0_i32 = arith.constant 0 : i32
    %c0_i32_0 = arith.constant 0 : i32
    %c0_i32_1 = arith.constant 0 : i32
    return %arg0, %c0_i32, %c0_i32_0 : i32, i32, i32
  }
  func.func @transform_4(%arg0: i32) -> (i32, i32) {
    %c0_i32 = arith.constant 0 : i32
    %c0_i32_0 = arith.constant 0 : i32
    %c0_i32_1 = arith.constant 0 : i32
    return %c0_i32, %c0_i32_0 : i32, i32
  }
  func.func @transform_5(%arg0: i32) -> (i32, i32) {
    %c0_i32 = arith.constant 0 : i32
    %c0_i32_0 = arith.constant 0 : i32
    %c0_i32_1 = arith.constant 0 : i32
    return %c0_i32, %c0_i32_0 : i32, i32
  }
  func.func @transform_6(%arg0: i32) -> (i32, i32) {
    %c0_i32 = arith.constant 0 : i32
    %c0_i32_0 = arith.constant 0 : i32
    %c0_i32_1 = arith.constant 0 : i32
    return %c0_i32, %c0_i32_0 : i32, i32
  }
  func.func @transform_7(%arg0: i32) -> (i32, i32) {
    %c0_i32 = arith.constant 0 : i32
    %c0_i32_0 = arith.constant 0 : i32
    %c0_i32_1 = arith.constant 0 : i32
    return %c0_i32, %c0_i32_0 : i32, i32
  }
  func.func @transform_8(%arg0: i32) -> (i32, i32, i32) {
    %c0_i32 = arith.constant 0 : i32
    %c0_i32_0 = arith.constant 0 : i32
    %c0_i32_1 = arith.constant 0 : i32
    return %arg0, %c0_i32, %c0_i32_0 : i32, i32, i32
  }
}

</mosaic_0001>

<llo_original>
// kernel: forward_pallas.2
$region0: #{forward_pallas.2}
  #allocation0 [shape = 'u32[]', space=smem, size = 0x4, offset = 0x4, fixed_abs, tag = 'smem constant byte address 0x4 - core index']
  #allocation1 [shape = 'u32[144,128]{1,0:T(1,128)}', space=vmem, size = 0x12000, scoped, tag = 'internal scratch']
  %s0 = inlined_call_operand.vmem [shape: f32[2,256,4], index: 0, kind: input, shape index: {}]
  %s1 = inlined_call_operand.vmem [shape: f32[2,64,4], index: 1, kind: input, shape index: {}]
  %s2 = inlined_call_operand.vmem [shape: f32[2,36,4], index: 2, kind: input, shape index: {}]
  %s3 = inlined_call_operand.vmem [shape: f32[4,128], index: 3, kind: input, shape index: {}]
  %s4 = inlined_call_operand.vmem [shape: f32[1,128], index: 4, kind: input, shape index: {}]
  %s5 = inlined_call_operand.vmem [shape: f32[4,128], index: 5, kind: input, shape index: {}]
  %s6 = inlined_call_operand.vmem [shape: f32[1,128], index: 6, kind: input, shape index: {}]
  %s7 = inlined_call_operand.vmem [shape: f32[4,128], index: 7, kind: input, shape index: {}]
  %s8 = inlined_call_operand.vmem [shape: f32[1,128], index: 8, kind: input, shape index: {}]
  %s9 = inlined_call_operand.vmem [shape: f32[2,256,128], index: 9, kind: output, shape index: {0}]
  %s10 = inlined_call_operand.vmem [shape: f32[2,64,128], index: 10, kind: output, shape index: {1}]
  %s11 = inlined_call_operand.vmem [shape: f32[2,36,128], index: 11, kind: output, shape index: {2}]
  %12 = xla_tuple %s9, %s10, %s11
  %s13 = sld [smem:[#allocation0]]
  $region85: #{forward_pallas.2} parent=0
    _
  %s15 = ssub.s32 1, %s13
  %s16 = scalar_select 0, %s15, %s13
  loop: start=0, step=1, limit=4
  $region2: #{forward_pallas.2} parent=0 // loop_pre_header
    _
  $region3: #{forward_pallas.2} parent=0 // loop_header
    %s18 = sphi 0, %s22
    %p19 = scmp.ge.s32.totalorder %s18, 4
    %s28 = sphi 0, %s30
    %s31 = sphi 0, %s28
    %s32 = sphi 0, %s31
    %s48 = sphi 0, %s32
    %s54 = sphi 0, %s56
    %s57 = sphi 0, %s54
    %s58 = sphi 0, %s57
    %s74 = sphi 0, %s58
    %s80 = sphi 0, %s82
    %s83 = sphi 0, %s80
    %s84 = sphi 0, %s83
    %s100 = sphi 0, %s84
    %s104 = sphi 0, %s104
    %s106 = sphi 0, %s104
    %s107 = sphi 0, %s106
    %s121 = sphi 0, %s107
    %s125 = sphi 0, %s125
    %s127 = sphi 0, %s125
    %s128 = sphi 0, %s127
    %s142 = sphi 0, %s128
    %s146 = sphi 0, %s146
    %s148 = sphi 0, %s146
    %s149 = sphi 0, %s148
    %s163 = sphi 0, %s149
    %s167 = sphi 0, %s167
    %s169 = sphi 0, %s167
    %s170 = sphi 0, %s169
    %s184 = sphi 0, %s170
    %s188 = sphi 0, %s188
    %s190 = sphi 0, %s188
    %s191 = sphi 0, %s190
    %s205 = sphi 0, %s191
    %s209 = sphi 0, %s209
    %s211 = sphi 0, %s209
    %s212 = sphi 0, %s211
    %s226 = sphi 0, %s212
    %s232 = sphi 0, %s234
    %s235 = sphi 0, %s232
    %s236 = sphi 0, %s235
    %s252 = sphi 0, %s236
    %s258 = sphi 0, %s260
    %s261 = sphi 0, %s258
    %s262 = sphi 0, %s261
    %s278 = sphi 0, %s262
    %s284 = sphi 0, %s286
    %s287 = sphi 0, %s284
    %s288 = sphi 0, %s287
    %s304 = sphi 0, %s288
  $region4: #{forward_pallas.2} parent=0 // loop_header_branch
    %21 = sbr.rel (%p19) target = $region8
  $region5: #{forward_pallas.2} parent=0 // loop_body
    %s23 = ssub.s32 %s18, 1
    %s24 = ssub.s32 %s18, 2
    %s25 = sadd.s32 %s18, 1
    %s26 = ssub.s32 %s18, %s25
    %p27 = scmp.eq.s32.totalorder %s26, 0
    %s29 = sadd.s32 %s28, 1
    %s30 = scalar_select %p27, %s28, %s29
    %p33 = pneg %p27
    %p34 = scmp.eq.s32.totalorder %s18, 1
    %p35 = por %p33, %p34
    %p36 = scmp.ne.s32.totalorder %s28, %s31
    %p37 = scmp.eq.s32.totalorder %s18, 0
    %p38 = por %p36, %p37
    %p39 = scmp.ne.s32.totalorder %s28, %s31
    %p40 = scmp.eq.s32.totalorder %s23, 1
    %p41 = por %p39, %p40
    %p42 = scmp.ne.s32.totalorder %s31, %s32
    %p43 = scmp.eq.s32.totalorder %s23, 0
    %p44 = por %p42, %p43
    %p45 = scmp.ne.s32.totalorder %s31, %s32
    %p46 = scmp.eq.s32.totalorder %s24, 1
    %p47 = por %p45, %p46
    %p49 = scmp.ne.s32.totalorder %s32, %s48
    %p50 = scmp.eq.s32.totalorder %s24, 0
    %p51 = por %p49, %p50
    %s52 = ssub.s32 %s18, %s25
    %p53 = scmp.eq.s32.totalorder %s52, 0
    %s55 = sadd.s32 %s54, 1
    %s56 = scalar_select %p53, %s54, %s55
    %p59 = pneg %p53
    %p60 = scmp.eq.s32.totalorder %s18, 1
    %p61 = por %p59, %p60
    %p62 = scmp.ne.s32.totalorder %s54, %s57
    %p63 = scmp.eq.s32.totalorder %s18, 0
    %p64 = por %p62, %p63
    %p65 = scmp.ne.s32.totalorder %s54, %s57
    %p66 = scmp.eq.s32.totalorder %s23, 1
    %p67 = por %p65, %p66
    %p68 = scmp.ne.s32.totalorder %s57, %s58
    %p69 = scmp.eq.s32.totalorder %s23, 0
    %p70 = por %p68, %p69
    %p71 = scmp.ne.s32.totalorder %s57, %s58
    %p72 = scmp.eq.s32.totalorder %s24, 1
    %p73 = por %p71, %p72
    %p75 = scmp.ne.s32.totalorder %s58, %s74
    %p76 = scmp.eq.s32.totalorder %s24, 0
    %p77 = por %p75, %p76
    %s78 = ssub.s32 %s18, %s25
    %p79 = scmp.eq.s32.totalorder %s78, 0
    %s81 = sadd.s32 %s80, 1
    %s82 = scalar_select %p79, %s80, %s81
    %p85 = pneg %p79
    %p86 = scmp.eq.s32.totalorder %s18, 1
    %p87 = por %p85, %p86
    %p88 = scmp.ne.s32.totalorder %s80, %s83
    %p89 = scmp.eq.s32.totalorder %s18, 0
    %p90 = por %p88, %p89
    %p91 = scmp.ne.s32.totalorder %s80, %s83
    %p92 = scmp.eq.s32.totalorder %s23, 1
    %p93 = por %p91, %p92
    %p94 = scmp.ne.s32.totalorder %s83, %s84
    %p95 = scmp.eq.s32.totalorder %s23, 0
    %p96 = por %p94, %p95
    %p97 = scmp.ne.s32.totalorder %s83, %s84
    %p98 = scmp.eq.s32.totalorder %s24, 1
    %p99 = por %p97, %p98
    %p101 = scmp.ne.s32.totalorder %s84, %s100
    %p102 = scmp.eq.s32.totalorder %s24, 0
    %p103 = por %p101, %p102
    %s105 = sadd.s32 %s104, 1
    %p108 = scmp.eq.s32.totalorder %s18, 1
    %p109 = scmp.ne.s32.totalorder %s104, %s106
    %p110 = scmp.eq.s32.totalorder %s18, 0
    %p111 = por %p109, %p110
    %p112 = scmp.ne.s32.totalorder %s104, %s106
    %p113 = scmp.eq.s32.totalorder %s23, 1
    %p114 = por %p112, %p113
    %p115 = scmp.ne.s32.totalorder %s106, %s107
    %p116 = scmp.eq.s32.totalorder %s23, 0
    %p117 = por %p115, %p116
    %p118 = scmp.ne.s32.totalorder %s106, %s107
    %p119 = scmp.eq.s32.totalorder %s24, 1
    %p120 = por %p118, %p119
    %p122 = scmp.ne.s32.totalorder %s107, %s121
    %p123 = scmp.eq.s32.totalorder %s24, 0
    %p124 = por %p122, %p123
    %s126 = sadd.s32 %s125, 1
    %p129 = scmp.eq.s32.totalorder %s18, 1
    %p130 = scmp.ne.s32.totalorder %s125, %s127
    %p131 = scmp.eq.s32.totalorder %s18, 0
    %p132 = por %p130, %p131
    %p133 = scmp.ne.s32.totalorder %s125, %s127
    %p134 = scmp.eq.s32.totalorder %s23, 1
    %p135 = por %p133, %p134
    %p136 = scmp.ne.s32.totalorder %s127, %s128
    %p137 = scmp.eq.s32.totalorder %s23, 0
    %p138 = por %p136, %p137
    %p139 = scmp.ne.s32.totalorder %s127, %s128
    %p140 = scmp.eq.s32.totalorder %s24, 1
    %p141 = por %p139, %p140
    %p143 = scmp.ne.s32.totalorder %s128, %s142
    %p144 = scmp.eq.s32.totalorder %s24, 0
    %p145 = por %p143, %p144
    %s147 = sadd.s32 %s146, 1
    %p150 = scmp.eq.s32.totalorder %s18, 1
    %p151 = scmp.ne.s32.totalorder %s146, %s148
    %p152 = scmp.eq.s32.totalorder %s18, 0
    %p153 = por %p151, %p152
    %p154 = scmp.ne.s32.totalorder %s146, %s148
    %p155 = scmp.eq.s32.totalorder %s23, 1
    %p156 = por %p154, %p155
    %p157 = scmp.ne.s32.totalorder %s148, %s149
    %p158 = scmp.eq.s32.totalorder %s23, 0
    %p159 = por %p157, %p158
    %p160 = scmp.ne.s32.totalorder %s148, %s149
    %p161 = scmp.eq.s32.totalorder %s24, 1
    %p162 = por %p160, %p161
    %p164 = scmp.ne.s32.totalorder %s149, %s163
    %p165 = scmp.eq.s32.totalorder %s24, 0
    %p166 = por %p164, %p165
    %s168 = sadd.s32 %s167, 1
    %p171 = scmp.eq.s32.totalorder %s18, 1
    %p172 = scmp.ne.s32.totalorder %s167, %s169
    %p173 = scmp.eq.s32.totalorder %s18, 0
    %p174 = por %p172, %p173
    %p175 = scmp.ne.s32.totalorder %s167, %s169
    %p176 = scmp.eq.s32.totalorder %s23, 1
    %p177 = por %p175, %p176
    %p178 = scmp.ne.s32.totalorder %s169, %s170
    %p179 = scmp.eq.s32.totalorder %s23, 0
    %p180 = por %p178, %p179
    %p181 = scmp.ne.s32.totalorder %s169, %s170
    %p182 = scmp.eq.s32.totalorder %s24, 1
    %p183 = por %p181, %p182
    %p185 = scmp.ne.s32.totalorder %s170, %s184
    %p186 = scmp.eq.s32.totalorder %s24, 0
    %p187 = por %p185, %p186
    %s189 = sadd.s32 %s188, 1
    %p192 = scmp.eq.s32.totalorder %s18, 1
    %p193 = scmp.ne.s32.totalorder %s188, %s190
    %p194 = scmp.eq.s32.totalorder %s18, 0
    %p195 = por %p193, %p194
    %p196 = scmp.ne.s32.totalorder %s188, %s190
    %p197 = scmp.eq.s32.totalorder %s23, 1
    %p198 = por %p196, %p197
    %p199 = scmp.ne.s32.totalorder %s190, %s191
    %p200 = scmp.eq.s32.totalorder %s23, 0
    %p201 = por %p199, %p200
    %p202 = scmp.ne.s32.totalorder %s190, %s191
    %p203 = scmp.eq.s32.totalorder %s24, 1
    %p204 = por %p202, %p203
    %p206 = scmp.ne.s32.totalorder %s191, %s205
    %p207 = scmp.eq.s32.totalorder %s24, 0
    %p208 = por %p206, %p207
    %s210 = sadd.s32 %s209, 1
    %p213 = scmp.eq.s32.totalorder %s18, 1
    %p214 = scmp.ne.s32.totalorder %s209, %s211
    %p215 = scmp.eq.s32.totalorder %s18, 0
    %p216 = por %p214, %p215
    %p217 = scmp.ne.s32.totalorder %s209, %s211
    %p218 = scmp.eq.s32.totalorder %s23, 1
    %p219 = por %p217, %p218
    %p220 = scmp.ne.s32.totalorder %s211, %s212
    %p221 = scmp.eq.s32.totalorder %s23, 0
    %p222 = por %p220, %p221
    %p223 = scmp.ne.s32.totalorder %s211, %s212
    %p224 = scmp.eq.s32.totalorder %s24, 1
    %p225 = por %p223, %p224
    %p227 = scmp.ne.s32.totalorder %s212, %s226
    %p228 = scmp.eq.s32.totalorder %s24, 0
    %p229 = por %p227, %p228
    %s230 = ssub.s32 %s18, %s25
    %p231 = scmp.eq.s32.totalorder %s230, 0
    %s233 = sadd.s32 %s232, 1
    %s234 = scalar_select %p231, %s232, %s233
    %p237 = pneg %p231
    %p238 = scmp.eq.s32.totalorder %s18, 1
    %p239 = por %p237, %p238
    %p240 = scmp.ne.s32.totalorder %s232, %s235
    %p241 = scmp.eq.s32.totalorder %s18, 0
    %p242 = por %p240, %p241
    %p243 = scmp.ne.s32.totalorder %s232, %s235
    %p244 = scmp.eq.s32.totalorder %s23, 1
    %p245 = por %p243, %p244
    %p246 = scmp.ne.s32.totalorder %s235, %s236
    %p247 = scmp.eq.s32.totalorder %s23, 0
    %p248 = por %p246, %p247
    %p249 = scmp.ne.s32.totalorder %s235, %s236
    %p250 = scmp.eq.s32.totalorder %s24, 1
    %p251 = por %p249, %p250
    %p253 = scmp.ne.s32.totalorder %s236, %s252
    %p254 = scmp.eq.s32.totalorder %s24, 0
    %p255 = por %p253, %p254
    %s256 = ssub.s32 %s18, %s25
    %p257 = scmp.eq.s32.totalorder %s256, 0
    %s259 = sadd.s32 %s258, 1
    %s260 = scalar_select %p257, %s258, %s259
    %p263 = pneg %p257
    %p264 = scmp.eq.s32.totalorder %s18, 1
    %p265 = por %p263, %p264
    %p266 = scmp.ne.s32.totalorder %s258, %s261
    %p267 = scmp.eq.s32.totalorder %s18, 0
    %p268 = por %p266, %p267
    %p269 = scmp.ne.s32.totalorder %s258, %s261
    %p270 = scmp.eq.s32.totalorder %s23, 1
    %p271 = por %p269, %p270
    %p272 = scmp.ne.s32.totalorder %s261, %s262
    %p273 = scmp.eq.s32.totalorder %s23, 0
    %p274 = por %p272, %p273
    %p275 = scmp.ne.s32.totalorder %s261, %s262
    %p276 = scmp.eq.s32.totalorder %s24, 1
    %p277 = por %p275, %p276
    %p279 = scmp.ne.s32.totalorder %s262, %s278
    %p280 = scmp.eq.s32.totalorder %s24, 0
    %p281 = por %p279, %p280
    %s282 = ssub.s32 %s18, %s25
    %p283 = scmp.eq.s32.totalorder %s282, 0
    %s285 = sadd.s32 %s284, 1
    %s286 = scalar_select %p283, %s284, %s285
    %p289 = pneg %p283
    %p290 = scmp.eq.s32.totalorder %s18, 1
    %p291 = por %p289, %p290
    %p292 = scmp.ne.s32.totalorder %s284, %s287
    %p293 = scmp.eq.s32.totalorder %s18, 0
    %p294 = por %p292, %p293
    %p295 = scmp.ne.s32.totalorder %s284, %s287
    %p296 = scmp.eq.s32.totalorder %s23, 1
    %p297 = por %p295, %p296
    %p298 = scmp.ne.s32.totalorder %s287, %s288
    %p299 = scmp.eq.s32.totalorder %s23, 0
    %p300 = por %p298, %p299
    %p301 = scmp.ne.s32.totalorder %s287, %s288
    %p302 = scmp.eq.s32.totalorder %s24, 1
    %p303 = por %p301, %p302
    %p305 = scmp.ne.s32.totalorder %s288, %s304
    %p306 = scmp.eq.s32.totalorder %s24, 0
    %p307 = por %p305, %p306
    %p308 = scmp.le.s32.totalorder 1, %s18
    %p309 = scmp.lt.s32.totalorder %s18, 3
    %p310 = pnand %p308, %p309
    %p311 = pneg %p310
    // Predicated region
    $region9: #{forward_pallas.2} parent=5 // pred_check
      _
    $region10: #{forward_pallas.2} parent=5 // pred_check_branch
      %313 = sbr.rel (%p310) target = $region12
    $region11: #{forward_pallas.2} parent=5 // pred_region
      %s314 = ssub.s32 %s18, 1
      // Predicated region
      $region13: #{forward_pallas.2} parent=11 // pred_check
        %p315 = pneg %p117
      $region14: #{forward_pallas.2} parent=11 // pred_check_branch
        %317 = sbr.rel (%p315) target = $region16
      $region15: #{forward_pallas.2} parent=11 // pred_region
        _
      $region16: #{forward_pallas.2} parent=11 // pred_fallthru
        _
      // Predicated region
      $region17: #{forward_pallas.2} parent=11 // pred_check
        %p318 = pneg %p138
      $region18: #{forward_pallas.2} parent=11 // pred_check_branch
        %320 = sbr.rel (%p318) target = $region20
      $region19: #{forward_pallas.2} parent=11 // pred_region
        _
      $region20: #{forward_pallas.2} parent=11 // pred_fallthru
        _
      // Predicated region
      $region21: #{forward_pallas.2} parent=11 // pred_check
        %p321 = pneg %p159
      $region22: #{forward_pallas.2} parent=11 // pred_check_branch
        %323 = sbr.rel (%p321) target = $region24
      $region23: #{forward_pallas.2} parent=11 // pred_region
        _
      $region24: #{forward_pallas.2} parent=11 // pred_fallthru
        _
      // Predicated region
      $region25: #{forward_pallas.2} parent=11 // pred_check
        %p324 = pneg %p180
      $region26: #{forward_pallas.2} parent=11 // pred_check_branch
        %326 = sbr.rel (%p324) target = $region28
      $region27: #{forward_pallas.2} parent=11 // pred_region
        _
      $region28: #{forward_pallas.2} parent=11 // pred_fallthru
        _
      // Predicated region
      $region29: #{forward_pallas.2} parent=11 // pred_check
        %p327 = pneg %p201
      $region30: #{forward_pallas.2} parent=11 // pred_check_branch
        %329 = sbr.rel (%p327) target = $region32
      $region31: #{forward_pallas.2} parent=11 // pred_region
        _
      $region32: #{forward_pallas.2} parent=11 // pred_fallthru
        _
      // Predicated region
      $region33: #{forward_pallas.2} parent=11 // pred_check
        %p330 = pneg %p222
      $region34: #{forward_pallas.2} parent=11 // pred_check_branch
        %332 = sbr.rel (%p330) target = $region36
      $region35: #{forward_pallas.2} parent=11 // pred_region
        _
      $region36: #{forward_pallas.2} parent=11 // pred_fallthru
        _
    $region12: #{forward_pallas.2} parent=5 // pred_fallthru
      _
    %p333 = scmp.lt.s32.totalorder %s18, 2
    // Predicated region
    $region37: #{forward_pallas.2} parent=5 // pred_check
      %p334 = pneg %p333
    $region38: #{forward_pallas.2} parent=5 // pred_check_branch
      %336 = sbr.rel (%p334) target = $region40
    $region39: #{forward_pallas.2} parent=5 // pred_region
      // Predicated region
      $region41: #{forward_pallas.2} parent=39 // pred_check
        %p337 = pneg %p38
      $region42: #{forward_pallas.2} parent=39 // pred_check_branch
        %339 = sbr.rel (%p337) target = $region44
      $region43: #{forward_pallas.2} parent=39 // pred_region
        %p340 = scmp.lt.s32.totalorder %s18, 1
        %s341 = scalar_select %p340, %s18, 1
        %s342 = smul.addr %s341, 32
        %s343 = smul.addr %s342, 8
        %s344 = scalar_lea.vmem %s0, %s343
      $region44: #{forward_pallas.2} parent=39 // pred_fallthru
        _
      // Predicated region
      $region45: #{forward_pallas.2} parent=39 // pred_check
        %p345 = pneg %p64
      $region46: #{forward_pallas.2} parent=39 // pred_check_branch
        %347 = sbr.rel (%p345) target = $region48
      $region47: #{forward_pallas.2} parent=39 // pred_region
        %p348 = scmp.lt.s32.totalorder %s18, 1
        %s349 = scalar_select %p348, %s18, 1
        %s350 = smul.addr %s349, 8
        %s351 = smul.addr %s350, 8
        %s352 = scalar_lea.vmem %s1, %s351
      $region48: #{forward_pallas.2} parent=39 // pred_fallthru
        _
      // Predicated region
      $region49: #{forward_pallas.2} parent=39 // pred_check
        %p353 = pneg %p90
      $region50: #{forward_pallas.2} parent=39 // pred_check_branch
        %355 = sbr.rel (%p353) target = $region52
      $region51: #{forward_pallas.2} parent=39 // pred_region
        %p356 = scmp.lt.s32.totalorder %s18, 1
        %s357 = scalar_select %p356, %s18, 1
        %s358 = smul.addr %s357, 5
        %s359 = smul.addr %s358, 8
        %s360 = scalar_lea.vmem %s2, %s359
      $region52: #{forward_pallas.2} parent=39 // pred_fallthru
        _
    $region40: #{forward_pallas.2} parent=5 // pred_fallthru
      _
    %p361 = scmp.le.s32.totalorder 1, %s18
    %p362 = scmp.lt.s32.totalorder %s18, 3
    %p363 = pnand %p361, %p362
    %p364 = pneg %p363
    // Predicated region
    $region53: #{forward_pallas.2} parent=5 // pred_check
      _
    $region54: #{forward_pallas.2} parent=5 // pred_check_branch
      %366 = sbr.rel (%p363) target = $region56
    $region55: #{forward_pallas.2} parent=5 // pred_region
      %s367 = ssub.s32 %s18, 1
      %p368 = scmp.lt.s32.totalorder %s23, 1
      %s369 = scalar_select %p368, %s23, 1
      %s370 = smul.addr %s369, 32
      %s371 = smul.addr %s370, 8
      %s372 = scalar_lea.vmem %s0, %s371
      %p373 = pneg %p44
      %p374 = pneg %p41
      %p375 = scmp.lt.s32.totalorder %s23, 1
      %s376 = scalar_select %p375, %s23, 1
      %s377 = smul.addr %s376, 8
      %s378 = smul.addr %s377, 8
      %s379 = scalar_lea.vmem %s1, %s378
      %p380 = pneg %p70
      %p381 = pneg %p67
      %p382 = scmp.lt.s32.totalorder %s23, 1
      %s383 = scalar_select %p382, %s23, 1
      %s384 = smul.addr %s383, 5
      %s385 = smul.addr %s384, 8
      %s386 = scalar_lea.vmem %s2, %s385
      %p387 = pneg %p96
      %p388 = pneg %p93
      %p389 = pneg %p117
      %p390 = pneg %p114
      %p391 = pneg %p138
      %p392 = pneg %p135
      %p393 = pneg %p159
      %p394 = pneg %p156
      %p395 = pneg %p180
      %p396 = pneg %p177
      %p397 = pneg %p201
      %p398 = pneg %p198
      %p399 = pneg %p222
      %p400 = pneg %p219
      %p401 = pneg %p248
      %p402 = pneg %p245
      %p403 = scmp.lt.s32.totalorder %s23, 1
      %s404 = scalar_select %p403, %s23, 1
      %s405 = smul.addr %s404, 32
      %s406 = smul.addr %s405, 8
      %s407 = scalar_lea.vmem %s9, %s406
      %p408 = pneg %p274
      %p409 = pneg %p271
      %p410 = scmp.lt.s32.totalorder %s23, 1
      %s411 = scalar_select %p410, %s23, 1
      %s412 = smul.addr %s411, 8
      %s413 = smul.addr %s412, 8
      %s414 = scalar_lea.vmem %s10, %s413
      %p415 = pneg %p300
      %p416 = pneg %p297
      %p417 = scmp.lt.s32.totalorder %s23, 1
      %s418 = scalar_select %p417, %s23, 1
      %s419 = smul.addr %s418, 5
      %s420 = smul.addr %s419, 8
      %s421 = scalar_lea.vmem %s11, %s420
      %p422 = scmp.lt.s32.totalorder %s23, 1
      %s423 = scalar_select %p422, %s23, 1
      %s424 = smul.addr %s423, 32
      %s425 = smul.addr %s424, 8
      %s426 = scalar_lea.vmem %s0, %s425
      %p427 = scmp.lt.s32.totalorder %s23, 1
      %s428 = scalar_select %p427, %s23, 1
      %s429 = smul.addr %s428, 8
      %s430 = smul.addr %s429, 8
      %s431 = scalar_lea.vmem %s1, %s430
      %p432 = scmp.lt.s32.totalorder %s23, 1
      %s433 = scalar_select %p432, %s23, 1
      %s434 = smul.addr %s433, 5
      %s435 = smul.addr %s434, 8
      %s436 = scalar_lea.vmem %s2, %s435
      %p437 = scmp.lt.s32.totalorder %s23, 1
      %s438 = scalar_select %p437, %s23, 1
      %s439 = smul.addr %s438, 32
      %s440 = smul.addr %s439, 8
      %s441 = scalar_lea.vmem %s9, %s440
      %p442 = scmp.lt.s32.totalorder %s23, 1
      %s443 = scalar_select %p442, %s23, 1
      %s444 = smul.addr %s443, 8
      %s445 = smul.addr %s444, 8
      %s446 = scalar_lea.vmem %s10, %s445
      %p447 = scmp.lt.s32.totalorder %s23, 1
      %s448 = scalar_select %p447, %s23, 1
      %s449 = smul.addr %s448, 5
      %s450 = smul.addr %s449, 8
      %s451 = scalar_lea.vmem %s11, %s450
      %v452 = vld [vmem:[%s426] sm:$0xff]
      %v453 = vld [vmem:[%s426 + $0x8] sm:$0xff]
      %v454 = vld [vmem:[%s426 + $0x10] sm:$0xff]
      %v455 = vld [vmem:[%s426 + $0x18] sm:$0xff]
      %v456 = vld [vmem:[%s426 + $0x20] sm:$0xff]
      %v457 = vld [vmem:[%s426 + $0x28] sm:$0xff]
      %v458 = vld [vmem:[%s426 + $0x30] sm:$0xff]
      %v459 = vld [vmem:[%s426 + $0x38] sm:$0xff]
      %v460 = vld [vmem:[%s426 + $0x40] sm:$0xff]
      %v461 = vld [vmem:[%s426 + $0x48] sm:$0xff]
      %v462 = vld [vmem:[%s426 + $0x50] sm:$0xff]
      %v463 = vld [vmem:[%s426 + $0x58] sm:$0xff]
      %v464 = vld [vmem:[%s426 + $0x60] sm:$0xff]
      %v465 = vld [vmem:[%s426 + $0x68] sm:$0xff]
      %v466 = vld [vmem:[%s426 + $0x70] sm:$0xff]
      %v467 = vld [vmem:[%s426 + $0x78] sm:$0xff]
      %v468 = vld [vmem:[%s426 + $0x80] sm:$0xff]
      %v469 = vld [vmem:[%s426 + $0x88] sm:$0xff]
      %v470 = vld [vmem:[%s426 + $0x90] sm:$0xff]
      %v471 = vld [vmem:[%s426 + $0x98] sm:$0xff]
      %v472 = vld [vmem:[%s426 + $0xa0] sm:$0xff]
      %v473 = vld [vmem:[%s426 + $0xa8] sm:$0xff]
      %v474 = vld [vmem:[%s426 + $0xb0] sm:$0xff]
      %v475 = vld [vmem:[%s426 + $0xb8] sm:$0xff]
      %v476 = vld [vmem:[%s426 + $0xc0] sm:$0xff]
      %v477 = vld [vmem:[%s426 + $0xc8] sm:$0xff]
      %v478 = vld [vmem:[%s426 + $0xd0] sm:$0xff]
      %v479 = vld [vmem:[%s426 + $0xd8] sm:$0xff]
      %v480 = vld [vmem:[%s426 + $0xe0] sm:$0xff]
      %v481 = vld [vmem:[%s426 + $0xe8] sm:$0xff]
      %v482 = vld [vmem:[%s426 + $0xf0] sm:$0xff]
      %v483 = vld [vmem:[%s426 + $0xf8] sm:$0xff]
      %v484 = vld [vmem:[%s3] sm:$0xf]
      %v485 = vld [vmem:[%s4] sm:$0x1]
      %v487 = vlaneseq
      %v488 = vshrl.u32 %v487, 7
      %v489 = vsub.s32 0, %v488
      %v490 = vrot.slane %v485, %v489
      %vm492 = vcmask 31744
      %v494 = vsel %vm492, %v452, 0
      %v497 = vsel %vm492, %v453, 0
      %v500 = vsel %vm492, %v454, 0
      %v503 = vsel %vm492, %v455, 0
      %v506 = vsel %vm492, %v456, 0
      %v509 = vsel %vm492, %v457, 0
      %v512 = vsel %vm492, %v458, 0
      %v515 = vsel %vm492, %v459, 0
      %v518 = vsel %vm492, %v460, 0
      %v521 = vsel %vm492, %v461, 0
      %v524 = vsel %vm492, %v462, 0
      %v527 = vsel %vm492, %v463, 0
      %v530 = vsel %vm492, %v464, 0
      %v533 = vsel %vm492, %v465, 0
      %v536 = vsel %vm492, %v466, 0
      %v539 = vsel %vm492, %v467, 0
      %v542 = vsel %vm492, %v468, 0
      %v545 = vsel %vm492, %v469, 0
      %v548 = vsel %vm492, %v470, 0
      %v551 = vsel %vm492, %v471, 0
      %v554 = vsel %vm492, %v472, 0
      %v557 = vsel %vm492, %v473, 0
      %v560 = vsel %vm492, %v474, 0
      %v563 = vsel %vm492, %v475, 0
      %v566 = vsel %vm492, %v476, 0
      %v569 = vsel %vm492, %v477, 0
      %v572 = vsel %vm492, %v478, 0
      %v575 = vsel %vm492, %v479, 0
      %v578 = vsel %vm492, %v480, 0
      %v581 = vsel %vm492, %v481, 0
      %v584 = vsel %vm492, %v482, 0
      %v587 = vsel %vm492, %v483, 0
      %vm589 = vcmask 1043456
      %v591 = vsel %vm589, %v484, 0
      %593 = vmatprep.subr.mxu0 0.0
      %594 = vmatpush1.msra.mxu0 %v591
      %595 = vmatprep.subr.mxu0 0.0
      %596 = vmatpush1.msra.mxu0 0.0
      %597 = vmatprep.subr.mxu0 0.0
      %598 = vmatpush1.msra.mxu0 0.0
      %599 = vmatprep.subr.mxu0 0.0
      %600 = vmatpush1.msra.mxu0 0.0
      %601 = vmatprep.subr.mxu0 0.0
      %602 = vmatpush1.msra.mxu0 0.0
      %603 = vmatprep.subr.mxu0 0.0
      %604 = vmatpush1.msra.mxu0 0.0
      %605 = vmatprep.subr.mxu0 0.0
      %606 = vmatpush1.msra.mxu0 0.0
      %607 = vmatprep.subr.mxu0 0.0
      %608 = vmatpush1.msra.mxu0 0.0
      %609 = vmatprep.subr.mxu0 0.0
      %610 = vmatpush1.msra.mxu0 0.0
      %611 = vmatprep.subr.mxu0 0.0
      %612 = vmatpush1.msra.mxu0 0.0
      %613 = vmatprep.subr.mxu0 0.0
      %614 = vmatpush1.msra.mxu0 0.0
      %615 = vmatprep.subr.mxu0 0.0
      %616 = vmatpush1.msra.mxu0 0.0
      %617 = vmatprep.subr.mxu0 0.0
      %618 = vmatpush1.msra.mxu0 0.0
      %619 = vmatprep.subr.mxu0 0.0
      %620 = vmatpush1.msra.mxu0 0.0
      %621 = vmatprep.subr.mxu0 0.0
      %622 = vmatpush1.msra.mxu0 0.0
      %623 = vmatprep.subr.mxu0 0.0
      %624 = vmatpush1.msra.mxu0 0.0
      %625 = vmatprep.subr.mxu0 0.0
      %626 = vmatpush1.msra.mxu0 0.0
      %627 = vmatprep.subr.mxu0 0.0
      %628 = vmatpush1.msra.mxu0 0.0
      %629 = vmatprep.subr.mxu0 0.0
      %630 = vmatpush1.msra.mxu0 0.0
      %631 = vmatprep.subr.mxu0 0.0
      %632 = vmatpush1.msra.mxu0 0.0
      %633 = vmatprep.subr.mxu0 0.0
      %634 = vmatpush1.msra.mxu0 0.0
      %635 = vmatprep.subr.mxu0 0.0
      %636 = vmatpush1.msra.mxu0 0.0
      %637 = vmatprep.subr.mxu0 0.0
      %638 = vmatpush1.msra.mxu0 0.0
      %639 = vmatprep.subr.mxu0 0.0
      %640 = vmatpush1.msra.mxu0 0.0
      %641 = vmatprep.subr.mxu0 0.0
      %642 = vmatpush1.msra.mxu0 0.0
      %643 = vmatprep.subr.mxu0 0.0
      %644 = vmatpush1.msra.mxu0 0.0
      %645 = vmatprep.subr.mxu0 0.0
      %646 = vmatpush1.msra.mxu0 0.0
      %647 = vmatprep.subr.mxu0 0.0
      %648 = vmatpush1.msra.mxu0 0.0
      %649 = vmatprep.subr.mxu0 0.0
      %650 = vmatpush1.msra.mxu0 0.0
      %651 = vmatprep.subr.mxu0 0.0
      %652 = vmatpush1.msra.mxu0 0.0
      %653 = vmatprep.subr.mxu0 0.0
      %654 = vmatpush1.msra.mxu0 0.0
      %655 = vmatprep.subr.mxu0 0.0
      %656 = vmatpush1.msra.mxu0 0.0
      %657 = vmatprep.mubr.f32.mxu0 0.0
      %658 = vmatmul.mubr.f32.gmra.mrb[0].mxu0 %v494
      %v659 = vpop.f32.mrb[0].mxu0
      %v660 = vadd.f32 %v490, %v659
      %v661 = vpop.f32.mrb[0].mxu0
      %662 = vmatprep.mubr.f32.mxu0 0.0
      %663 = vmatmul.mubr.f32.gmra.mrb[0].mxu0 %v497
      %v664 = vpop.f32.mrb[0].mxu0
      %v665 = vadd.f32 %v490, %v664
      %v666 = vpop.f32.mrb[0].mxu0
      %667 = vmatprep.mubr.f32.mxu0 0.0
      %668 = vmatmul.mubr.f32.gmra.mrb[0].mxu0 %v500
      %v669 = vpop.f32.mrb[0].mxu0
      %v670 = vadd.f32 %v490, %v669
      %v671 = vpop.f32.mrb[0].mxu0
      %672 = vmatprep.mubr.f32.mxu0 0.0
      %673 = vmatmul.mubr.f32.gmra.mrb[0].mxu0 %v503
      %v674 = vpop.f32.mrb[0].mxu0
      %v675 = vadd.f32 %v490, %v674
      %v676 = vpop.f32.mrb[0].mxu0
      %677 = vmatprep.mubr.f32.mxu0 0.0
      %678 = vmatmul.mubr.f32.gmra.mrb[0].mxu0 %v506
      %v679 = vpop.f32.mrb[0].mxu0
      %v680 = vadd.f32 %v490, %v679
      %v681 = vpop.f32.mrb[0].mxu0
      %682 = vmatprep.mubr.f32.mxu0 0.0
      %683 = vmatmul.mubr.f32.gmra.mrb[0].mxu0 %v509
      %v684 = vpop.f32.mrb[0].mxu0
      %v685 = vadd.f32 %v490, %v684
      %v686 = vpop.f32.mrb[0].mxu0
      %687 = vmatprep.mubr.f32.mxu0 0.0
      %688 = vmatmul.mubr.f32.gmra.mrb[0].mxu0 %v512
      %v689 = vpop.f32.mrb[0].mxu0
      %v690 = vadd.f32 %v490, %v689
      %v691 = vpop.f32.mrb[0].mxu0
      %692 = vmatprep.mubr.f32.mxu0 0.0
      %693 = vmatmul.mubr.f32.gmra.mrb[0].mxu0 %v515
      %v694 = vpop.f32.mrb[0].mxu0
      %v695 = vadd.f32 %v490, %v694
      %v696 = vpop.f32.mrb[0].mxu0
      %697 = vmatprep.mubr.f32.mxu0 0.0
      %698 = vmatmul.mubr.f32.gmra.mrb[0].mxu0 %v518
      %v699 = vpop.f32.mrb[0].mxu0
      %v700 = vadd.f32 %v490, %v699
      %v701 = vpop.f32.mrb[0].mxu0
      %702 = vmatprep.mubr.f32.mxu0 0.0
      %703 = vmatmul.mubr.f32.gmra.mrb[0].mxu0 %v521
      %v704 = vpop.f32.mrb[0].mxu0
      %v705 = vadd.f32 %v490, %v704
      %v706 = vpop.f32.mrb[0].mxu0
      %707 = vmatprep.mubr.f32.mxu0 0.0
      %708 = vmatmul.mubr.f32.gmra.mrb[0].mxu0 %v524
      %v709 = vpop.f32.mrb[0].mxu0
      %v710 = vadd.f32 %v490, %v709
      %v711 = vpop.f32.mrb[0].mxu0
      %712 = vmatprep.mubr.f32.mxu0 0.0
      %713 = vmatmul.mubr.f32.gmra.mrb[0].mxu0 %v527
      %v714 = vpop.f32.mrb[0].mxu0
      %v715 = vadd.f32 %v490, %v714
      %v716 = vpop.f32.mrb[0].mxu0
      %717 = vmatprep.mubr.f32.mxu0 0.0
      %718 = vmatmul.mubr.f32.gmra.mrb[0].mxu0 %v530
      %v719 = vpop.f32.mrb[0].mxu0
      %v720 = vadd.f32 %v490, %v719
      %v721 = vpop.f32.mrb[0].mxu0
      %722 = vmatprep.mubr.f32.mxu0 0.0
      %723 = vmatmul.mubr.f32.gmra.mrb[0].mxu0 %v533
      %v724 = vpop.f32.mrb[0].mxu0
      %v725 = vadd.f32 %v490, %v724
      %v726 = vpop.f32.mrb[0].mxu0
      %727 = vmatprep.mubr.f32.mxu0 0.0
      %728 = vmatmul.mubr.f32.gmra.mrb[0].mxu0 %v536
      %v729 = vpop.f32.mrb[0].mxu0
      %v730 = vadd.f32 %v490, %v729
      %v731 = vpop.f32.mrb[0].mxu0
      %732 = vmatprep.mubr.f32.mxu0 0.0
      %733 = vmatmul.mubr.f32.gmra.mrb[0].mxu0 %v539
      %v734 = vpop.f32.mrb[0].mxu0
      %v735 = vadd.f32 %v490, %v734
      %v736 = vpop.f32.mrb[0].mxu0
      %737 = vmatprep.mubr.f32.mxu0 0.0
      %738 = vmatmul.mubr.f32.gmra.mrb[0].mxu0 %v542
      %v739 = vpop.f32.mrb[0].mxu0
      %v740 = vadd.f32 %v490, %v739
      %v741 = vpop.f32.mrb[0].mxu0
      %742 = vmatprep.mubr.f32.mxu0 0.0
      %743 = vmatmul.mubr.f32.gmra.mrb[0].mxu0 %v545
      %v744 = vpop.f32.mrb[0].mxu0
      %v745 = vadd.f32 %v490, %v744
      %v746 = vpop.f32.mrb[0].mxu0
      %747 = vmatprep.mubr.f32.mxu0 0.0
      %748 = vmatmul.mubr.f32.gmra.mrb[0].mxu0 %v548
      %v749 = vpop.f32.mrb[0].mxu0
      %v750 = vadd.f32 %v490, %v749
      %v751 = vpop.f32.mrb[0].mxu0
      %752 = vmatprep.mubr.f32.mxu0 0.0
      %753 = vmatmul.mubr.f32.gmra.mrb[0].mxu0 %v551
      %v754 = vpop.f32.mrb[0].mxu0
      %v755 = vadd.f32 %v490, %v754
      %v756 = vpop.f32.mrb[0].mxu0
      %757 = vmatprep.mubr.f32.mxu0 0.0
      %758 = vmatmul.mubr.f32.gmra.mrb[0].mxu0 %v554
      %v759 = vpop.f32.mrb[0].mxu0
      %v760 = vadd.f32 %v490, %v759
      %v761 = vpop.f32.mrb[0].mxu0
      %762 = vmatprep.mubr.f32.mxu0 0.0
      %763 = vmatmul.mubr.f32.gmra.mrb[0].mxu0 %v557
      %v764 = vpop.f32.mrb[0].mxu0
      %v765 = vadd.f32 %v490, %v764
      %v766 = vpop.f32.mrb[0].mxu0
      %767 = vmatprep.mubr.f32.mxu0 0.0
      %768 = vmatmul.mubr.f32.gmra.mrb[0].mxu0 %v560
      %v769 = vpop.f32.mrb[0].mxu0
      %v770 = vadd.f32 %v490, %v769
      %v771 = vpop.f32.mrb[0].mxu0
      %772 = vmatprep.mubr.f32.mxu0 0.0
      %773 = vmatmul.mubr.f32.gmra.mrb[0].mxu0 %v563
      %v774 = vpop.f32.mrb[0].mxu0
      %v775 = vadd.f32 %v490, %v774
      %v776 = vpop.f32.mrb[0].mxu0
      %777 = vmatprep.mubr.f32.mxu0 0.0
      %778 = vmatmul.mubr.f32.gmra.mrb[0].mxu0 %v566
      %v779 = vpop.f32.mrb[0].mxu0
      %v780 = vadd.f32 %v490, %v779
      %v781 = vpop.f32.mrb[0].mxu0
      %782 = vmatprep.mubr.f32.mxu0 0.0
      %783 = vmatmul.mubr.f32.gmra.mrb[0].mxu0 %v569
      %v784 = vpop.f32.mrb[0].mxu0
      %v785 = vadd.f32 %v490, %v784
      %v786 = vpop.f32.mrb[0].mxu0
      %787 = vmatprep.mubr.f32.mxu0 0.0
      %788 = vmatmul.mubr.f32.gmra.mrb[0].mxu0 %v572
      %v789 = vpop.f32.mrb[0].mxu0
      %v790 = vadd.f32 %v490, %v789
      %v791 = vpop.f32.mrb[0].mxu0
      %792 = vmatprep.mubr.f32.mxu0 0.0
      %793 = vmatmul.mubr.f32.gmra.mrb[0].mxu0 %v575
      %v794 = vpop.f32.mrb[0].mxu0
      %v795 = vadd.f32 %v490, %v794
      %v796 = vpop.f32.mrb[0].mxu0
      %797 = vmatprep.mubr.f32.mxu0 0.0
      %798 = vmatmul.mubr.f32.gmra.mrb[0].mxu0 %v578
      %v799 = vpop.f32.mrb[0].mxu0
      %v800 = vadd.f32 %v490, %v799
      %v801 = vpop.f32.mrb[0].mxu0
      %802 = vmatprep.mubr.f32.mxu0 0.0
      %803 = vmatmul.mubr.f32.gmra.mrb[0].mxu0 %v581
      %v804 = vpop.f32.mrb[0].mxu0
      %v805 = vadd.f32 %v490, %v804
      %v806 = vpop.f32.mrb[0].mxu0
      %807 = vmatprep.mubr.f32.mxu0 0.0
      %808 = vmatmul.mubr.f32.gmra.mrb[0].mxu0 %v584
      %v809 = vpop.f32.mrb[0].mxu0
      %v810 = vadd.f32 %v490, %v809
      %v811 = vpop.f32.mrb[0].mxu0
      %812 = vmatprep.mubr.f32.mxu0 0.0
      %813 = vmatmul.mubr.f32.gmra.mrb[0].mxu0 %v587
      %v814 = vpop.f32.mrb[0].mxu0
      %v815 = vadd.f32 %v490, %v814
      %v816 = vpop.f32.mrb[0].mxu0
      %817 = vdwg.mxu0
      %818 = vst [vmem:[%s441] sm:$0xff] %v660
      %819 = vst [vmem:[%s441 + $0x8] sm:$0xff] %v665
      %820 = vst [vmem:[%s441 + $0x10] sm:$0xff] %v670
      %821 = vst [vmem:[%s441 + $0x18] sm:$0xff] %v675
      %822 = vst [vmem:[%s441 + $0x20] sm:$0xff] %v680
      %823 = vst [vmem:[%s441 + $0x28] sm:$0xff] %v685
      %824 = vst [vmem:[%s441 + $0x30] sm:$0xff] %v690
      %825 = vst [vmem:[%s441 + $0x38] sm:$0xff] %v695
      %826 = vst [vmem:[%s441 + $0x40] sm:$0xff] %v700
      %827 = vst [vmem:[%s441 + $0x48] sm:$0xff] %v705
      %828 = vst [vmem:[%s441 + $0x50] sm:$0xff] %v710
      %829 = vst [vmem:[%s441 + $0x58] sm:$0xff] %v715
      %830 = vst [vmem:[%s441 + $0x60] sm:$0xff] %v720
      %831 = vst [vmem:[%s441 + $0x68] sm:$0xff] %v725
      %832 = vst [vmem:[%s441 + $0x70] sm:$0xff] %v730
      %833 = vst [vmem:[%s441 + $0x78] sm:$0xff] %v735
      %834 = vst [vmem:[%s441 + $0x80] sm:$0xff] %v740
      %835 = vst [vmem:[%s441 + $0x88] sm:$0xff] %v745
      %836 = vst [vmem:[%s441 + $0x90] sm:$0xff] %v750
      %837 = vst [vmem:[%s441 + $0x98] sm:$0xff] %v755
      %838 = vst [vmem:[%s441 + $0xa0] sm:$0xff] %v760
      %839 = vst [vmem:[%s441 + $0xa8] sm:$0xff] %v765
      %840 = vst [vmem:[%s441 + $0xb0] sm:$0xff] %v770
      %841 = vst [vmem:[%s441 + $0xb8] sm:$0xff] %v775
      %842 = vst [vmem:[%s441 + $0xc0] sm:$0xff] %v780
      %843 = vst [vmem:[%s441 + $0xc8] sm:$0xff] %v785
      %844 = vst [vmem:[%s441 + $0xd0] sm:$0xff] %v790
      %845 = vst [vmem:[%s441 + $0xd8] sm:$0xff] %v795
      %846 = vst [vmem:[%s441 + $0xe0] sm:$0xff] %v800
      %847 = vst [vmem:[%s441 + $0xe8] sm:$0xff] %v805
      %848 = vst [vmem:[%s441 + $0xf0] sm:$0xff] %v810
      %849 = vst [vmem:[%s441 + $0xf8] sm:$0xff] %v815
      %v850 = vld [vmem:[%s431] sm:$0xff]
      %v851 = vld [vmem:[%s431 + $0x8] sm:$0xff]
      %v852 = vld [vmem:[%s431 + $0x10] sm:$0xff]
      %v853 = vld [vmem:[%s431 + $0x18] sm:$0xff]
      %v854 = vld [vmem:[%s431 + $0x20] sm:$0xff]
      %v855 = vld [vmem:[%s431 + $0x28] sm:$0xff]
      %v856 = vld [vmem:[%s431 + $0x30] sm:$0xff]
      %v857 = vld [vmem:[%s431 + $0x38] sm:$0xff]
      %v858 = vld [vmem:[%s5] sm:$0xf]
      %v859 = vld [vmem:[%s6] sm:$0x1]
      %v861 = vlaneseq
      %v862 = vshrl.u32 %v861, 7
      %v863 = vsub.s32 0, %v862
      %v864 = vrot.slane %v859, %v863
      %v867 = vsel %vm492, %v850, 0
      %v870 = vsel %vm492, %v851, 0
      %v873 = vsel %vm492, %v852, 0
      %v876 = vsel %vm492, %v853, 0
      %v879 = vsel %vm492, %v854, 0
      %v882 = vsel %vm492, %v855, 0
      %v885 = vsel %vm492, %v856, 0
      %v888 = vsel %vm492, %v857, 0
      %v891 = vsel %vm589, %v858, 0
      %893 = vmatprep.subr.mxu0 0.0
      %894 = vmatpush1.msra.mxu0 %v891
      %895 = vmatprep.subr.mxu0 0.0
      %896 = vmatpush1.msra.mxu0 0.0
      %897 = vmatprep.subr.mxu0 0.0
      %898 = vmatpush1.msra.mxu0 0.0
      %899 = vmatprep.subr.mxu0 0.0
      %900 = vmatpush1.msra.mxu0 0.0
      %901 = vmatprep.subr.mxu0 0.0
      %902 = vmatpush1.msra.mxu0 0.0
      %903 = vmatprep.subr.mxu0 0.0
      %904 = vmatpush1.msra.mxu0 0.0
      %905 = vmatprep.subr.mxu0 0.0
      %906 = vmatpush1.msra.mxu0 0.0
      %907 = vmatprep.subr.mxu0 0.0
      %908 = vmatpush1.msra.mxu0 0.0
      %909 = vmatprep.subr.mxu0 0.0
      %910 = vmatpush1.msra.mxu0 0.0
      %911 = vmatprep.subr.mxu0 0.0
      %912 = vmatpush1.msra.mxu0 0.0
      %913 = vmatprep.subr.mxu0 0.0
      %914 = vmatpush1.msra.mxu0 0.0
      %915 = vmatprep.subr.mxu0 0.0
      %916 = vmatpush1.msra.mxu0 0.0
      %917 = vmatprep.subr.mxu0 0.0
      %918 = vmatpush1.msra.mxu0 0.0
      %919 = vmatprep.subr.mxu0 0.0
      %920 = vmatpush1.msra.mxu0 0.0
      %921 = vmatprep.subr.mxu0 0.0
      %922 = vmatpush1.msra.mxu0 0.0
      %923 = vmatprep.subr.mxu0 0.0
      %924 = vmatpush1.msra.mxu0 0.0
      %925 = vmatprep.subr.mxu0 0.0
      %926 = vmatpush1.msra.mxu0 0.0
      %927 = vmatprep.subr.mxu0 0.0
      %928 = vmatpush1.msra.mxu0 0.0
      %929 = vmatprep.subr.mxu0 0.0
      %930 = vmatpush1.msra.mxu0 0.0
      %931 = vmatprep.subr.mxu0 0.0
      %932 = vmatpush1.msra.mxu0 0.0
      %933 = vmatprep.subr.mxu0 0.0
      %934 = vmatpush1.msra.mxu0 0.0
      %935 = vmatprep.subr.mxu0 0.0
      %936 = vmatpush1.msra.mxu0 0.0
      %937 = vmatprep.subr.mxu0 0.0
      %938 = vmatpush1.msra.mxu0 0.0
      %939 = vmatprep.subr.mxu0 0.0
      %940 = vmatpush1.msra.mxu0 0.0
      %941 = vmatprep.subr.mxu0 0.0
      %942 = vmatpush1.msra.mxu0 0.0
      %943 = vmatprep.subr.mxu0 0.0
      %944 = vmatpush1.msra.mxu0 0.0
      %945 = vmatprep.subr.mxu0 0.0
      %946 = vmatpush1.msra.mxu0 0.0
      %947 = vmatprep.subr.mxu0 0.0
      %948 = vmatpush1.msra.mxu0 0.0
      %949 = vmatprep.subr.mxu0 0.0
      %950 = vmatpush1.msra.mxu0 0.0
      %951 = vmatprep.subr.mxu0 0.0
      %952 = vmatpush1.msra.mxu0 0.0
      %953 = vmatprep.subr.mxu0 0.0
      %954 = vmatpush1.msra.mxu0 0.0
      %955 = vmatprep.subr.mxu0 0.0
      %956 = vmatpush1.msra.mxu0 0.0
      %957 = vmatprep.mubr.f32.mxu0 0.0
      %958 = vmatmul.mubr.f32.gmra.mrb[0].mxu0 %v867
      %v959 = vpop.f32.mrb[0].mxu0
      %v960 = vadd.f32 %v864, %v959
      %v961 = vpop.f32.mrb[0].mxu0
      %962 = vmatprep.mubr.f32.mxu0 0.0
      %963 = vmatmul.mubr.f32.gmra.mrb[0].mxu0 %v870
      %v964 = vpop.f32.mrb[0].mxu0
      %v965 = vadd.f32 %v864, %v964
      %v966 = vpop.f32.mrb[0].mxu0
      %967 = vmatprep.mubr.f32.mxu0 0.0
      %968 = vmatmul.mubr.f32.gmra.mrb[0].mxu0 %v873
      %v969 = vpop.f32.mrb[0].mxu0
      %v970 = vadd.f32 %v864, %v969
      %v971 = vpop.f32.mrb[0].mxu0
      %972 = vmatprep.mubr.f32.mxu0 0.0
      %973 = vmatmul.mubr.f32.gmra.mrb[0].mxu0 %v876
      %v974 = vpop.f32.mrb[0].mxu0
      %v975 = vadd.f32 %v864, %v974
      %v976 = vpop.f32.mrb[0].mxu0
      %977 = vmatprep.mubr.f32.mxu0 0.0
      %978 = vmatmul.mubr.f32.gmra.mrb[0].mxu0 %v879
      %v979 = vpop.f32.mrb[0].mxu0
      %v980 = vadd.f32 %v864, %v979
      %v981 = vpop.f32.mrb[0].mxu0
      %982 = vmatprep.mubr.f32.mxu0 0.0
      %983 = vmatmul.mubr.f32.gmra.mrb[0].mxu0 %v882
      %v984 = vpop.f32.mrb[0].mxu0
      %v985 = vadd.f32 %v864, %v984
      %v986 = vpop.f32.mrb[0].mxu0
      %987 = vmatprep.mubr.f32.mxu0 0.0
      %988 = vmatmul.mubr.f32.gmra.mrb[0].mxu0 %v885
      %v989 = vpop.f32.mrb[0].mxu0
      %v990 = vadd.f32 %v864, %v989
      %v991 = vpop.f32.mrb[0].mxu0
      %992 = vmatprep.mubr.f32.mxu0 0.0
      %993 = vmatmul.mubr.f32.gmra.mrb[0].mxu0 %v888
      %v994 = vpop.f32.mrb[0].mxu0
      %v995 = vadd.f32 %v864, %v994
      %v996 = vpop.f32.mrb[0].mxu0
      %997 = vdwg.mxu0
      %998 = vst [vmem:[%s446] sm:$0xff] %v960
      %999 = vst [vmem:[%s446 + $0x8] sm:$0xff] %v965
      %1000 = vst [vmem:[%s446 + $0x10] sm:$0xff] %v970
      %1001 = vst [vmem:[%s446 + $0x18] sm:$0xff] %v975
      %1002 = vst [vmem:[%s446 + $0x20] sm:$0xff] %v980
      %1003 = vst [vmem:[%s446 + $0x28] sm:$0xff] %v985
      %1004 = vst [vmem:[%s446 + $0x30] sm:$0xff] %v990
      %1005 = vst [vmem:[%s446 + $0x38] sm:$0xff] %v995
      %v1006 = vld [vmem:[%s436] sm:$0xff]
      %v1007 = vld [vmem:[%s436 + $0x8] sm:$0xff]
      %v1008 = vld [vmem:[%s436 + $0x10] sm:$0xff]
      %v1009 = vld [vmem:[%s436 + $0x18] sm:$0xff]
      %v1010 = vld [vmem:[%s436 + $0x20] sm:$0xf]
      %v1011 = vld [vmem:[%s7] sm:$0xf]
      %v1012 = vld [vmem:[%s8] sm:$0x1]
      %v1014 = vlaneseq
      %v1015 = vshrl.u32 %v1014, 7
      %v1016 = vsub.s32 0, %v1015
      %v1017 = vrot.slane %v1012, %v1016
      %v1020 = vsel %vm492, %v1006, 0
      %v1023 = vsel %vm492, %v1007, 0
      %v1026 = vsel %vm492, %v1008, 0
      %v1029 = vsel %vm492, %v1009, 0
      %v1032 = vsel %vm492, %v1010, 0
      %v1035 = vsel %vm589, %v1011, 0
      %1037 = vmatprep.subr.mxu0 0.0
      %1038 = vmatpush1.msra.mxu0 %v1035
      %1039 = vmatprep.subr.mxu0 0.0
      %1040 = vmatpush1.msra.mxu0 0.0
      %1041 = vmatprep.subr.mxu0 0.0
      %1042 = vmatpush1.msra.mxu0 0.0
      %1043 = vmatprep.subr.mxu0 0.0
      %1044 = vmatpush1.msra.mxu0 0.0
      %1045 = vmatprep.subr.mxu0 0.0
      %1046 = vmatpush1.msra.mxu0 0.0
      %1047 = vmatprep.subr.mxu0 0.0
      %1048 = vmatpush1.msra.mxu0 0.0
      %1049 = vmatprep.subr.mxu0 0.0
      %1050 = vmatpush1.msra.mxu0 0.0
      %1051 = vmatprep.subr.mxu0 0.0
      %1052 = vmatpush1.msra.mxu0 0.0
      %1053 = vmatprep.subr.mxu0 0.0
      %1054 = vmatpush1.msra.mxu0 0.0
      %1055 = vmatprep.subr.mxu0 0.0
      %1056 = vmatpush1.msra.mxu0 0.0
      %1057 = vmatprep.subr.mxu0 0.0
      %1058 = vmatpush1.msra.mxu0 0.0
      %1059 = vmatprep.subr.mxu0 0.0
      %1060 = vmatpush1.msra.mxu0 0.0
      %1061 = vmatprep.subr.mxu0 0.0
      %1062 = vmatpush1.msra.mxu0 0.0
      %1063 = vmatprep.subr.mxu0 0.0
      %1064 = vmatpush1.msra.mxu0 0.0
      %1065 = vmatprep.subr.mxu0 0.0
      %1066 = vmatpush1.msra.mxu0 0.0
      %1067 = vmatprep.subr.mxu0 0.0
      %1068 = vmatpush1.msra.mxu0 0.0
      %1069 = vmatprep.subr.mxu0 0.0
      %1070 = vmatpush1.msra.mxu0 0.0
      %1071 = vmatprep.subr.mxu0 0.0
      %1072 = vmatpush1.msra.mxu0 0.0
      %1073 = vmatprep.subr.mxu0 0.0
      %1074 = vmatpush1.msra.mxu0 0.0
      %1075 = vmatprep.subr.mxu0 0.0
      %1076 = vmatpush1.msra.mxu0 0.0
      %1077 = vmatprep.subr.mxu0 0.0
      %1078 = vmatpush1.msra.mxu0 0.0
      %1079 = vmatprep.subr.mxu0 0.0
      %1080 = vmatpush1.msra.mxu0 0.0
      %1081 = vmatprep.subr.mxu0 0.0
      %1082 = vmatpush1.msra.mxu0 0.0
      %1083 = vmatprep.subr.mxu0 0.0
      %1084 = vmatpush1.msra.mxu0 0.0
      %1085 = vmatprep.subr.mxu0 0.0
      %1086 = vmatpush1.msra.mxu0 0.0
      %1087 = vmatprep.subr.mxu0 0.0
      %1088 = vmatpush1.msra.mxu0 0.0
      %1089 = vmatprep.subr.mxu0 0.0
      %1090 = vmatpush1.msra.mxu0 0.0
      %1091 = vmatprep.subr.mxu0 0.0
      %1092 = vmatpush1.msra.mxu0 0.0
      %1093 = vmatprep.subr.mxu0 0.0
      %1094 = vmatpush1.msra.mxu0 0.0
      %1095 = vmatprep.subr.mxu0 0.0
      %1096 = vmatpush1.msra.mxu0 0.0
      %1097 = vmatprep.subr.mxu0 0.0
      %1098 = vmatpush1.msra.mxu0 0.0
      %1099 = vmatprep.subr.mxu0 0.0
      %1100 = vmatpush1.msra.mxu0 0.0
      %1101 = vmatprep.mubr.f32.mxu0 0.0
      %1102 = vmatmul.mubr.f32.gmra.mrb[0].mxu0 %v1020
      %v1103 = vpop.f32.mrb[0].mxu0
      %v1104 = vadd.f32 %v1017, %v1103
      %v1105 = vpop.f32.mrb[0].mxu0
      %1106 = vmatprep.mubr.f32.mxu0 0.0
      %1107 = vmatmul.mubr.f32.gmra.mrb[0].mxu0 %v1023
      %v1108 = vpop.f32.mrb[0].mxu0
      %v1109 = vadd.f32 %v1017, %v1108
      %v1110 = vpop.f32.mrb[0].mxu0
      %1111 = vmatprep.mubr.f32.mxu0 0.0
      %1112 = vmatmul.mubr.f32.gmra.mrb[0].mxu0 %v1026
      %v1113 = vpop.f32.mrb[0].mxu0
      %v1114 = vadd.f32 %v1017, %v1113
      %v1115 = vpop.f32.mrb[0].mxu0
      %1116 = vmatprep.mubr.f32.mxu0 0.0
      %1117 = vmatmul.mubr.f32.gmra.mrb[0].mxu0 %v1029
      %v1118 = vpop.f32.mrb[0].mxu0
      %v1119 = vadd.f32 %v1017, %v1118
      %v1120 = vpop.f32.mrb[0].mxu0
      %1121 = vmatprep.mubr.f32.mxu0 0.0
      %1122 = vmatmul.mubr.f32.gmra.mrb[0].mxu0 %v1032
      %v1123 = vpop.f32.mrb[0].mxu0
      %v1124 = vadd.f32 %v1017, %v1123
      %v1125 = vpop.f32.mrb[0].mxu0
      %1126 = vdwg.mxu0
      %1127 = vst [vmem:[%s451] sm:$0xff] %v1104
      %1128 = vst [vmem:[%s451 + $0x8] sm:$0xff] %v1109
      %1129 = vst [vmem:[%s451 + $0x10] sm:$0xff] %v1114
      %1130 = vst [vmem:[%s451 + $0x18] sm:$0xff] %v1119
      %1131 = vst [vmem:[%s451 + $0x20] sm:$0xf] %v1124
      %p1132 = scmp.lt.s32.totalorder %s23, 1
      %s1133 = scalar_select %p1132, %s23, 1
      %s1134 = smul.addr %s1133, 32
      %s1135 = smul.addr %s1134, 8
      %s1136 = scalar_lea.vmem %s9, %s1135
      %p1137 = scmp.lt.s32.totalorder %s23, 1
      %s1138 = scalar_select %p1137, %s23, 1
      %s1139 = smul.addr %s1138, 8
      %s1140 = smul.addr %s1139, 8
      %s1141 = scalar_lea.vmem %s10, %s1140
      %p1142 = scmp.lt.s32.totalorder %s23, 1
      %s1143 = scalar_select %p1142, %s23, 1
      %s1144 = smul.addr %s1143, 5
      %s1145 = smul.addr %s1144, 8
      %s1146 = scalar_lea.vmem %s11, %s1145
      // Predicated region
      $region57: #{forward_pallas.2} parent=55 // pred_check
        %p1147 = pneg %p245
      $region58: #{forward_pallas.2} parent=55 // pred_check_branch
        %1149 = sbr.rel (%p1147) target = $region60
      $region59: #{forward_pallas.2} parent=55 // pred_region
        _
      $region60: #{forward_pallas.2} parent=55 // pred_fallthru
        _
      // Predicated region
      $region61: #{forward_pallas.2} parent=55 // pred_check
        %p1150 = pneg %p271
      $region62: #{forward_pallas.2} parent=55 // pred_check_branch
        %1152 = sbr.rel (%p1150) target = $region64
      $region63: #{forward_pallas.2} parent=55 // pred_region
        _
      $region64: #{forward_pallas.2} parent=55 // pred_fallthru
        _
      // Predicated region
      $region65: #{forward_pallas.2} parent=55 // pred_check
        %p1153 = pneg %p297
      $region66: #{forward_pallas.2} parent=55 // pred_check_branch
        %1155 = sbr.rel (%p1153) target = $region68
      $region67: #{forward_pallas.2} parent=55 // pred_region
        _
      $region68: #{forward_pallas.2} parent=55 // pred_fallthru
        _
    $region56: #{forward_pallas.2} parent=5 // pred_fallthru
      _
    %p1156 = scmp.le.s32.totalorder 2, %s18
    // Predicated region
    $region69: #{forward_pallas.2} parent=5 // pred_check
      %p1157 = pneg %p1156
    $region70: #{forward_pallas.2} parent=5 // pred_check_branch
      %1159 = sbr.rel (%p1157) target = $region72
    $region71: #{forward_pallas.2} parent=5 // pred_region
      %s1160 = ssub.s32 %s18, 2
      // Predicated region
      $region73: #{forward_pallas.2} parent=71 // pred_check
        %p1161 = pneg %p251
      $region74: #{forward_pallas.2} parent=71 // pred_check_branch
        %1163 = sbr.rel (%p1161) target = $region76
      $region75: #{forward_pallas.2} parent=71 // pred_region
        %p1164 = scmp.lt.s32.totalorder %s24, 1
        %s1165 = scalar_select %p1164, %s24, 1
        %s1166 = smul.addr %s1165, 32
        %s1167 = smul.addr %s1166, 8
        %s1168 = scalar_lea.vmem %s9, %s1167
      $region76: #{forward_pallas.2} parent=71 // pred_fallthru
        _
      // Predicated region
      $region77: #{forward_pallas.2} parent=71 // pred_check
        %p1169 = pneg %p277
      $region78: #{forward_pallas.2} parent=71 // pred_check_branch
        %1171 = sbr.rel (%p1169) target = $region80
      $region79: #{forward_pallas.2} parent=71 // pred_region
        %p1172 = scmp.lt.s32.totalorder %s24, 1
        %s1173 = scalar_select %p1172, %s24, 1
        %s1174 = smul.addr %s1173, 8
        %s1175 = smul.addr %s1174, 8
        %s1176 = scalar_lea.vmem %s10, %s1175
      $region80: #{forward_pallas.2} parent=71 // pred_fallthru
        _
      // Predicated region
      $region81: #{forward_pallas.2} parent=71 // pred_check
        %p1177 = pneg %p303
      $region82: #{forward_pallas.2} parent=71 // pred_check_branch
        %1179 = sbr.rel (%p1177) target = $region84
      $region83: #{forward_pallas.2} parent=71 // pred_region
        %p1180 = scmp.lt.s32.totalorder %s24, 1
        %s1181 = scalar_select %p1180, %s24, 1
        %s1182 = smul.addr %s1181, 5
        %s1183 = smul.addr %s1182, 8
        %s1184 = scalar_lea.vmem %s11, %s1183
      $region84: #{forward_pallas.2} parent=71 // pred_fallthru
        _
    $region72: #{forward_pallas.2} parent=5 // pred_fallthru
      _
  $region6: #{forward_pallas.2} parent=0 // loop_footer
    %s22 = sadd.s32 1, %s18
  $region7: #{forward_pallas.2} parent=0 // loop_footer_branch
    %17 = sbr.rel target = $region3
  $region8: #{forward_pallas.2} parent=0 // loop_exit
    _

// kernel: forward_pallas.3
$region0: #{forward_pallas.3}
  #allocation0 [shape = 'u32[]', space=smem, size = 0x4, offset = 0x4, fixed_abs, tag = 'smem constant byte address 0x4 - core index']
  #allocation1 [shape = 'u32[144,128]{1,0:T(1,128)}', space=vmem, size = 0x12000, scoped, tag = 'internal scratch']
  %s0 = inlined_call_operand.vmem [shape: f32[2,256,128], index: 0, kind: input, shape index: {}]
  %s1 = inlined_call_operand.vmem [shape: f32[2,64,128], index: 1, kind: input, shape index: {}]
  %s2 = inlined_call_operand.vmem [shape: f32[2,36,128], index: 2, kind: input, shape index: {}]
  %s3 = inlined_call_operand.vmem [shape: f32[2,256,64], index: 3, kind: input, shape index: {}]
  %s4 = inlined_call_operand.vmem [shape: f32[1,64], index: 4, kind: input, shape index: {}]
  %s5 = inlined_call_operand.vmem [shape: f32[1,64], index: 5, kind: input, shape index: {}]
  %s6 = inlined_call_operand.vmem [shape: f32[4,64], index: 6, kind: input, shape index: {}]
  %s7 = inlined_call_operand.vmem [shape: f32[4,1], index: 7, kind: input, shape index: {}]
  %s8 = inlined_call_operand.vmem [shape: f32[2,4,256], index: 8, kind: output, shape index: {}]
  %s9 = sld [smem:[#allocation0]]
  $region65: #{forward_pallas.3} parent=0
    _
  %s11 = ssub.s32 1, %s9
  %s12 = scalar_select 0, %s11, %s9
  loop: start=0, step=1, limit=4
  $region2: #{forward_pallas.3} parent=0 // loop_pre_header
    _
  $region3: #{forward_pallas.3} parent=0 // loop_header
    %s14 = sphi 0, %s18
    %p15 = scmp.ge.s32.totalorder %s14, 4
    %s24 = sphi 0, %s26
    %s27 = sphi 0, %s24
    %s28 = sphi 0, %s27
    %s44 = sphi 0, %s28
    %s50 = sphi 0, %s52
    %s53 = sphi 0, %s50
    %s54 = sphi 0, %s53
    %s70 = sphi 0, %s54
    %s76 = sphi 0, %s78
    %s79 = sphi 0, %s76
    %s80 = sphi 0, %s79
    %s96 = sphi 0, %s80
    %s102 = sphi 0, %s104
    %s105 = sphi 0, %s102
    %s106 = sphi 0, %s105
    %s122 = sphi 0, %s106
    %s126 = sphi 0, %s126
    %s128 = sphi 0, %s126
    %s129 = sphi 0, %s128
    %s143 = sphi 0, %s129
    %s147 = sphi 0, %s147
    %s149 = sphi 0, %s147
    %s150 = sphi 0, %s149
    %s164 = sphi 0, %s150
    %s168 = sphi 0, %s168
    %s170 = sphi 0, %s168
    %s171 = sphi 0, %s170
    %s185 = sphi 0, %s171
    %s189 = sphi 0, %s189
    %s191 = sphi 0, %s189
    %s192 = sphi 0, %s191
    %s206 = sphi 0, %s192
    %s212 = sphi 0, %s214
    %s215 = sphi 0, %s212
    %s216 = sphi 0, %s215
    %s232 = sphi 0, %s216
  $region4: #{forward_pallas.3} parent=0 // loop_header_branch
    %17 = sbr.rel (%p15) target = $region8
  $region5: #{forward_pallas.3} parent=0 // loop_body
    %s19 = ssub.s32 %s14, 1
    %s20 = ssub.s32 %s14, 2
    %s21 = sadd.s32 %s14, 1
    %s22 = ssub.s32 %s14, %s21
    %p23 = scmp.eq.s32.totalorder %s22, 0
    %s25 = sadd.s32 %s24, 1
    %s26 = scalar_select %p23, %s24, %s25
    %p29 = pneg %p23
    %p30 = scmp.eq.s32.totalorder %s14, 1
    %p31 = por %p29, %p30
    %p32 = scmp.ne.s32.totalorder %s24, %s27
    %p33 = scmp.eq.s32.totalorder %s14, 0
    %p34 = por %p32, %p33
    %p35 = scmp.ne.s32.totalorder %s24, %s27
    %p36 = scmp.eq.s32.totalorder %s19, 1
    %p37 = por %p35, %p36
    %p38 = scmp.ne.s32.totalorder %s27, %s28
    %p39 = scmp.eq.s32.totalorder %s19, 0
    %p40 = por %p38, %p39
    %p41 = scmp.ne.s32.totalorder %s27, %s28
    %p42 = scmp.eq.s32.totalorder %s20, 1
    %p43 = por %p41, %p42
    %p45 = scmp.ne.s32.totalorder %s28, %s44
    %p46 = scmp.eq.s32.totalorder %s20, 0
    %p47 = por %p45, %p46
    %s48 = ssub.s32 %s14, %s21
    %p49 = scmp.eq.s32.totalorder %s48, 0
    %s51 = sadd.s32 %s50, 1
    %s52 = scalar_select %p49, %s50, %s51
    %p55 = pneg %p49
    %p56 = scmp.eq.s32.totalorder %s14, 1
    %p57 = por %p55, %p56
    %p58 = scmp.ne.s32.totalorder %s50, %s53
    %p59 = scmp.eq.s32.totalorder %s14, 0
    %p60 = por %p58, %p59
    %p61 = scmp.ne.s32.totalorder %s50, %s53
    %p62 = scmp.eq.s32.totalorder %s19, 1
    %p63 = por %p61, %p62
    %p64 = scmp.ne.s32.totalorder %s53, %s54
    %p65 = scmp.eq.s32.totalorder %s19, 0
    %p66 = por %p64, %p65
    %p67 = scmp.ne.s32.totalorder %s53, %s54
    %p68 = scmp.eq.s32.totalorder %s20, 1
    %p69 = por %p67, %p68
    %p71 = scmp.ne.s32.totalorder %s54, %s70
    %p72 = scmp.eq.s32.totalorder %s20, 0
    %p73 = por %p71, %p72
    %s74 = ssub.s32 %s14, %s21
    %p75 = scmp.eq.s32.totalorder %s74, 0
    %s77 = sadd.s32 %s76, 1
    %s78 = scalar_select %p75, %s76, %s77
    %p81 = pneg %p75
    %p82 = scmp.eq.s32.totalorder %s14, 1
    %p83 = por %p81, %p82
    %p84 = scmp.ne.s32.totalorder %s76, %s79
    %p85 = scmp.eq.s32.totalorder %s14, 0
    %p86 = por %p84, %p85
    %p87 = scmp.ne.s32.totalorder %s76, %s79
    %p88 = scmp.eq.s32.totalorder %s19, 1
    %p89 = por %p87, %p88
    %p90 = scmp.ne.s32.totalorder %s79, %s80
    %p91 = scmp.eq.s32.totalorder %s19, 0
    %p92 = por %p90, %p91
    %p93 = scmp.ne.s32.totalorder %s79, %s80
    %p94 = scmp.eq.s32.totalorder %s20, 1
    %p95 = por %p93, %p94
    %p97 = scmp.ne.s32.totalorder %s80, %s96
    %p98 = scmp.eq.s32.totalorder %s20, 0
    %p99 = por %p97, %p98
    %s100 = ssub.s32 %s14, %s21
    %p101 = scmp.eq.s32.totalorder %s100, 0
    %s103 = sadd.s32 %s102, 1
    %s104 = scalar_select %p101, %s102, %s103
    %p107 = pneg %p101
    %p108 = scmp.eq.s32.totalorder %s14, 1
    %p109 = por %p107, %p108
    %p110 = scmp.ne.s32.totalorder %s102, %s105
    %p111 = scmp.eq.s32.totalorder %s14, 0
    %p112 = por %p110, %p111
    %p113 = scmp.ne.s32.totalorder %s102, %s105
    %p114 = scmp.eq.s32.totalorder %s19, 1
    %p115 = por %p113, %p114
    %p116 = scmp.ne.s32.totalorder %s105, %s106
    %p117 = scmp.eq.s32.totalorder %s19, 0
    %p118 = por %p116, %p117
    %p119 = scmp.ne.s32.totalorder %s105, %s106
    %p120 = scmp.eq.s32.totalorder %s20, 1
    %p121 = por %p119, %p120
    %p123 = scmp.ne.s32.totalorder %s106, %s122
    %p124 = scmp.eq.s32.totalorder %s20, 0
    %p125 = por %p123, %p124
    %s127 = sadd.s32 %s126, 1
    %p130 = scmp.eq.s32.totalorder %s14, 1
    %p131 = scmp.ne.s32.totalorder %s126, %s128
    %p132 = scmp.eq.s32.totalorder %s14, 0
    %p133 = por %p131, %p132
    %p134 = scmp.ne.s32.totalorder %s126, %s128
    %p135 = scmp.eq.s32.totalorder %s19, 1
    %p136 = por %p134, %p135
    %p137 = scmp.ne.s32.totalorder %s128, %s129
    %p138 = scmp.eq.s32.totalorder %s19, 0
    %p139 = por %p137, %p138
    %p140 = scmp.ne.s32.totalorder %s128, %s129
    %p141 = scmp.eq.s32.totalorder %s20, 1
    %p142 = por %p140, %p141
    %p144 = scmp.ne.s32.totalorder %s129, %s143
    %p145 = scmp.eq.s32.totalorder %s20, 0
    %p146 = por %p144, %p145
    %s148 = sadd.s32 %s147, 1
    %p151 = scmp.eq.s32.totalorder %s14, 1
    %p152 = scmp.ne.s32.totalorder %s147, %s149
    %p153 = scmp.eq.s32.totalorder %s14, 0
    %p154 = por %p152, %p153
    %p155 = scmp.ne.s32.totalorder %s147, %s149
    %p156 = scmp.eq.s32.totalorder %s19, 1
    %p157 = por %p155, %p156
    %p158 = scmp.ne.s32.totalorder %s149, %s150
    %p159 = scmp.eq.s32.totalorder %s19, 0
    %p160 = por %p158, %p159
    %p161 = scmp.ne.s32.totalorder %s149, %s150
    %p162 = scmp.eq.s32.totalorder %s20, 1
    %p163 = por %p161, %p162
    %p165 = scmp.ne.s32.totalorder %s150, %s164
    %p166 = scmp.eq.s32.totalorder %s20, 0
    %p167 = por %p165, %p166
    %s169 = sadd.s32 %s168, 1
    %p172 = scmp.eq.s32.totalorder %s14, 1
    %p173 = scmp.ne.s32.totalorder %s168, %s170
    %p174 = scmp.eq.s32.totalorder %s14, 0
    %p175 = por %p173, %p174
    %p176 = scmp.ne.s32.totalorder %s168, %s170
    %p177 = scmp.eq.s32.totalorder %s19, 1
    %p178 = por %p176, %p177
    %p179 = scmp.ne.s32.totalorder %s170, %s171
    %p180 = scmp.eq.s32.totalorder %s19, 0
    %p181 = por %p179, %p180
    %p182 = scmp.ne.s32.totalorder %s170, %s171
    %p183 = scmp.eq.s32.totalorder %s20, 1
    %p184 = por %p182, %p183
    %p186 = scmp.ne.s32.totalorder %s171, %s185
    %p187 = scmp.eq.s32.totalorder %s20, 0
    %p188 = por %p186, %p187
    %s190 = sadd.s32 %s189, 1
    %p193 = scmp.eq.s32.totalorder %s14, 1
    %p194 = scmp.ne.s32.totalorder %s189, %s191
    %p195 = scmp.eq.s32.totalorder %s14, 0
    %p196 = por %p194, %p195
    %p197 = scmp.ne.s32.totalorder %s189, %s191
    %p198 = scmp.eq.s32.totalorder %s19, 1
    %p199 = por %p197, %p198
    %p200 = scmp.ne.s32.totalorder %s191, %s192
    %p201 = scmp.eq.s32.totalorder %s19, 0
    %p202 = por %p200, %p201
    %p203 = scmp.ne.s32.totalorder %s191, %s192
    %p204 = scmp.eq.s32.totalorder %s20, 1
    %p205 = por %p203, %p204
    %p207 = scmp.ne.s32.totalorder %s192, %s206
    %p208 = scmp.eq.s32.totalorder %s20, 0
    %p209 = por %p207, %p208
    %s210 = ssub.s32 %s14, %s21
    %p211 = scmp.eq.s32.totalorder %s210, 0
    %s213 = sadd.s32 %s212, 1
    %s214 = scalar_select %p211, %s212, %s213
    %p217 = pneg %p211
    %p218 = scmp.eq.s32.totalorder %s14, 1
    %p219 = por %p217, %p218
    %p220 = scmp.ne.s32.totalorder %s212, %s215
    %p221 = scmp.eq.s32.totalorder %s14, 0
    %p222 = por %p220, %p221
    %p223 = scmp.ne.s32.totalorder %s212, %s215
    %p224 = scmp.eq.s32.totalorder %s19, 1
    %p225 = por %p223, %p224
    %p226 = scmp.ne.s32.totalorder %s215, %s216
    %p227 = scmp.eq.s32.totalorder %s19, 0
    %p228 = por %p226, %p227
    %p229 = scmp.ne.s32.totalorder %s215, %s216
    %p230 = scmp.eq.s32.totalorder %s20, 1
    %p231 = por %p229, %p230
    %p233 = scmp.ne.s32.totalorder %s216, %s232
    %p234 = scmp.eq.s32.totalorder %s20, 0
    %p235 = por %p233, %p234
    %p236 = scmp.le.s32.totalorder 1, %s14
    %p237 = scmp.lt.s32.totalorder %s14, 3
    %p238 = pnand %p236, %p237
    %p239 = pneg %p238
    // Predicated region
    $region9: #{forward_pallas.3} parent=5 // pred_check
      _
    $region10: #{forward_pallas.3} parent=5 // pred_check_branch
      %241 = sbr.rel (%p238) target = $region12
    $region11: #{forward_pallas.3} parent=5 // pred_region
      %s242 = ssub.s32 %s14, 1
      // Predicated region
      $region13: #{forward_pallas.3} parent=11 // pred_check
        %p243 = pneg %p139
      $region14: #{forward_pallas.3} parent=11 // pred_check_branch
        %245 = sbr.rel (%p243) target = $region16
      $region15: #{forward_pallas.3} parent=11 // pred_region
        _
      $region16: #{forward_pallas.3} parent=11 // pred_fallthru
        _
      // Predicated region
      $region17: #{forward_pallas.3} parent=11 // pred_check
        %p246 = pneg %p160
      $region18: #{forward_pallas.3} parent=11 // pred_check_branch
        %248 = sbr.rel (%p246) target = $region20
      $region19: #{forward_pallas.3} parent=11 // pred_region
        _
      $region20: #{forward_pallas.3} parent=11 // pred_fallthru
        _
      // Predicated region
      $region21: #{forward_pallas.3} parent=11 // pred_check
        %p249 = pneg %p181
      $region22: #{forward_pallas.3} parent=11 // pred_check_branch
        %251 = sbr.rel (%p249) target = $region24
      $region23: #{forward_pallas.3} parent=11 // pred_region
        _
      $region24: #{forward_pallas.3} parent=11 // pred_fallthru
        _
      // Predicated region
      $region25: #{forward_pallas.3} parent=11 // pred_check
        %p252 = pneg %p202
      $region26: #{forward_pallas.3} parent=11 // pred_check_branch
        %254 = sbr.rel (%p252) target = $region28
      $region27: #{forward_pallas.3} parent=11 // pred_region
        _
      $region28: #{forward_pallas.3} parent=11 // pred_fallthru
        _
    $region12: #{forward_pallas.3} parent=5 // pred_fallthru
      _
    %p255 = scmp.lt.s32.totalorder %s14, 2
    // Predicated region
    $region29: #{forward_pallas.3} parent=5 // pred_check
      %p256 = pneg %p255
    $region30: #{forward_pallas.3} parent=5 // pred_check_branch
      %258 = sbr.rel (%p256) target = $region32
    $region31: #{forward_pallas.3} parent=5 // pred_region
      // Predicated region
      $region33: #{forward_pallas.3} parent=31 // pred_check
        %p259 = pneg %p34
      $region34: #{forward_pallas.3} parent=31 // pred_check_branch
        %261 = sbr.rel (%p259) target = $region36
      $region35: #{forward_pallas.3} parent=31 // pred_region
        %p262 = scmp.lt.s32.totalorder %s14, 1
        %s263 = scalar_select %p262, %s14, 1
        %s264 = smul.addr %s263, 32
        %s265 = smul.addr %s264, 8
        %s266 = scalar_lea.vmem %s0, %s265
      $region36: #{forward_pallas.3} parent=31 // pred_fallthru
        _
      // Predicated region
      $region37: #{forward_pallas.3} parent=31 // pred_check
        %p267 = pneg %p60
      $region38: #{forward_pallas.3} parent=31 // pred_check_branch
        %269 = sbr.rel (%p267) target = $region40
      $region39: #{forward_pallas.3} parent=31 // pred_region
        %p270 = scmp.lt.s32.totalorder %s14, 1
        %s271 = scalar_select %p270, %s14, 1
        %s272 = smul.addr %s271, 8
        %s273 = smul.addr %s272, 8
        %s274 = scalar_lea.vmem %s1, %s273
      $region40: #{forward_pallas.3} parent=31 // pred_fallthru
        _
      // Predicated region
      $region41: #{forward_pallas.3} parent=31 // pred_check
        %p275 = pneg %p86
      $region42: #{forward_pallas.3} parent=31 // pred_check_branch
        %277 = sbr.rel (%p275) target = $region44
      $region43: #{forward_pallas.3} parent=31 // pred_region
        %p278 = scmp.lt.s32.totalorder %s14, 1
        %s279 = scalar_select %p278, %s14, 1
        %s280 = smul.addr %s279, 5
        %s281 = smul.addr %s280, 8
        %s282 = scalar_lea.vmem %s2, %s281
      $region44: #{forward_pallas.3} parent=31 // pred_fallthru
        _
      // Predicated region
      $region45: #{forward_pallas.3} parent=31 // pred_check
        %p283 = pneg %p112
      $region46: #{forward_pallas.3} parent=31 // pred_check_branch
        %285 = sbr.rel (%p283) target = $region48
      $region47: #{forward_pallas.3} parent=31 // pred_region
        %p286 = scmp.lt.s32.totalorder %s14, 1
        %s287 = scalar_select %p286, %s14, 1
        %s288 = smul.addr %s287, 32
        %s289 = smul.addr %s288, 8
        %s290 = scalar_lea.vmem %s3, %s289
      $region48: #{forward_pallas.3} parent=31 // pred_fallthru
        _
    $region32: #{forward_pallas.3} parent=5 // pred_fallthru
      _
    %p291 = scmp.le.s32.totalorder 1, %s14
    %p292 = scmp.lt.s32.totalorder %s14, 3
    %p293 = pnand %p291, %p292
    %p294 = pneg %p293
    // Predicated region
    $region49: #{forward_pallas.3} parent=5 // pred_check
      _
    $region50: #{forward_pallas.3} parent=5 // pred_check_branch
      %296 = sbr.rel (%p293) target = $region52
    $region51: #{forward_pallas.3} parent=5 // pred_region
      %s297 = ssub.s32 %s14, 1
      %p298 = scmp.lt.s32.totalorder %s19, 1
      %s299 = scalar_select %p298, %s19, 1
      %s300 = smul.addr %s299, 32
      %s301 = smul.addr %s300, 8
      %s302 = scalar_lea.vmem %s0, %s301
      %p303 = pneg %p40
      %p304 = pneg %p37
      %p305 = scmp.lt.s32.totalorder %s19, 1
      %s306 = scalar_select %p305, %s19, 1
      %s307 = smul.addr %s306, 8
      %s308 = smul.addr %s307, 8
      %s309 = scalar_lea.vmem %s1, %s308
      %p310 = pneg %p66
      %p311 = pneg %p63
      %p312 = scmp.lt.s32.totalorder %s19, 1
      %s313 = scalar_select %p312, %s19, 1
      %s314 = smul.addr %s313, 5
      %s315 = smul.addr %s314, 8
      %s316 = scalar_lea.vmem %s2, %s315
      %p317 = pneg %p92
      %p318 = pneg %p89
      %p319 = scmp.lt.s32.totalorder %s19, 1
      %s320 = scalar_select %p319, %s19, 1
      %s321 = smul.addr %s320, 32
      %s322 = smul.addr %s321, 8
      %s323 = scalar_lea.vmem %s3, %s322
      %p324 = pneg %p118
      %p325 = pneg %p115
      %p326 = pneg %p139
      %p327 = pneg %p136
      %p328 = pneg %p160
      %p329 = pneg %p157
      %p330 = pneg %p181
      %p331 = pneg %p178
      %p332 = pneg %p202
      %p333 = pneg %p199
      %p334 = pneg %p228
      %p335 = pneg %p225
      %p336 = scmp.lt.s32.totalorder %s19, 1
      %s337 = scalar_select %p336, %s19, 1
      %s338 = smul.addr %s337, 2
      %s339 = smul.addr %s338, 4
      %s340 = scalar_lea.vmem %s8, %s339
      %p341 = scmp.lt.s32.totalorder %s19, 1
      %s342 = scalar_select %p341, %s19, 1
      %s343 = smul.addr %s342, 32
      %s344 = smul.addr %s343, 8
      %s345 = scalar_lea.vmem %s0, %s344
      %p346 = scmp.lt.s32.totalorder %s19, 1
      %s347 = scalar_select %p346, %s19, 1
      %s348 = smul.addr %s347, 8
      %s349 = smul.addr %s348, 8
      %s350 = scalar_lea.vmem %s1, %s349
      %p351 = scmp.lt.s32.totalorder %s19, 1
      %s352 = scalar_select %p351, %s19, 1
      %s353 = smul.addr %s352, 5
      %s354 = smul.addr %s353, 8
      %s355 = scalar_lea.vmem %s2, %s354
      %p356 = scmp.lt.s32.totalorder %s19, 1
      %s357 = scalar_select %p356, %s19, 1
      %s358 = smul.addr %s357, 32
      %s359 = smul.addr %s358, 8
      %s360 = scalar_lea.vmem %s3, %s359
      %p361 = scmp.lt.s32.totalorder %s19, 1
      %s362 = scalar_select %p361, %s19, 1
      %s363 = smul.addr %s362, 2
      %s364 = smul.addr %s363, 4
      %s365 = scalar_lea.vmem %s8, %s364
      %v366 = vld [vmem:[%s345] sm:$0xff]
      %v367 = vld [vmem:[%s345 + $0x8] sm:$0xff]
      %v368 = vld [vmem:[%s345 + $0x10] sm:$0xff]
      %v369 = vld [vmem:[%s345 + $0x18] sm:$0xff]
      %v370 = vld [vmem:[%s345 + $0x20] sm:$0xff]
      %v371 = vld [vmem:[%s345 + $0x28] sm:$0xff]
      %v372 = vld [vmem:[%s345 + $0x30] sm:$0xff]
      %v373 = vld [vmem:[%s345 + $0x38] sm:$0xff]
      %v374 = vld [vmem:[%s345 + $0x40] sm:$0xff]
      %v375 = vld [vmem:[%s345 + $0x48] sm:$0xff]
      %v376 = vld [vmem:[%s345 + $0x50] sm:$0xff]
      %v377 = vld [vmem:[%s345 + $0x58] sm:$0xff]
      %v378 = vld [vmem:[%s345 + $0x60] sm:$0xff]
      %v379 = vld [vmem:[%s345 + $0x68] sm:$0xff]
      %v380 = vld [vmem:[%s345 + $0x70] sm:$0xff]
      %v381 = vld [vmem:[%s345 + $0x78] sm:$0xff]
      %v382 = vld [vmem:[%s345 + $0x80] sm:$0xff]
      %v383 = vld [vmem:[%s345 + $0x88] sm:$0xff]
      %v384 = vld [vmem:[%s345 + $0x90] sm:$0xff]
      %v385 = vld [vmem:[%s345 + $0x98] sm:$0xff]
      %v386 = vld [vmem:[%s345 + $0xa0] sm:$0xff]
      %v387 = vld [vmem:[%s345 + $0xa8] sm:$0xff]
      %v388 = vld [vmem:[%s345 + $0xb0] sm:$0xff]
      %v389 = vld [vmem:[%s345 + $0xb8] sm:$0xff]
      %v390 = vld [vmem:[%s345 + $0xc0] sm:$0xff]
      %v391 = vld [vmem:[%s345 + $0xc8] sm:$0xff]
      %v392 = vld [vmem:[%s345 + $0xd0] sm:$0xff]
      %v393 = vld [vmem:[%s345 + $0xd8] sm:$0xff]
      %v394 = vld [vmem:[%s345 + $0xe0] sm:$0xff]
      %v395 = vld [vmem:[%s345 + $0xe8] sm:$0xff]
      %v396 = vld [vmem:[%s345 + $0xf0] sm:$0xff]
      %v397 = vld [vmem:[%s345 + $0xf8] sm:$0xff]
      %v398 = vld [vmem:[%s350] sm:$0xff]
      %v399 = vld [vmem:[%s350 + $0x8] sm:$0xff]
      %v400 = vld [vmem:[%s350 + $0x10] sm:$0xff]
      %v401 = vld [vmem:[%s350 + $0x18] sm:$0xff]
      %v402 = vld [vmem:[%s350 + $0x20] sm:$0xff]
      %v403 = vld [vmem:[%s350 + $0x28] sm:$0xff]
      %v404 = vld [vmem:[%s350 + $0x30] sm:$0xff]
      %v405 = vld [vmem:[%s350 + $0x38] sm:$0xff]
      %v406 = vld [vmem:[%s355] sm:$0xff]
      %v407 = vld [vmem:[%s355 + $0x8] sm:$0xff]
      %v408 = vld [vmem:[%s355 + $0x10] sm:$0xff]
      %v409 = vld [vmem:[%s355 + $0x18] sm:$0xff]
      %v410 = vld [vmem:[%s355 + $0x20] sm:$0xf]
      %v411 = vld [vmem:[%s360] sm:$0xff]
      %v412 = vld [vmem:[%s360 + $0x8] sm:$0xff]
      %v413 = vld [vmem:[%s360 + $0x10] sm:$0xff]
      %v414 = vld [vmem:[%s360 + $0x18] sm:$0xff]
      %v415 = vld [vmem:[%s360 + $0x20] sm:$0xff]
      %v416 = vld [vmem:[%s360 + $0x28] sm:$0xff]
      %v417 = vld [vmem:[%s360 + $0x30] sm:$0xff]
      %v418 = vld [vmem:[%s360 + $0x38] sm:$0xff]
      %v419 = vld [vmem:[%s360 + $0x40] sm:$0xff]
      %v420 = vld [vmem:[%s360 + $0x48] sm:$0xff]
      %v421 = vld [vmem:[%s360 + $0x50] sm:$0xff]
      %v422 = vld [vmem:[%s360 + $0x58] sm:$0xff]
      %v423 = vld [vmem:[%s360 + $0x60] sm:$0xff]
      %v424 = vld [vmem:[%s360 + $0x68] sm:$0xff]
      %v425 = vld [vmem:[%s360 + $0x70] sm:$0xff]
      %v426 = vld [vmem:[%s360 + $0x78] sm:$0xff]
      %v427 = vld [vmem:[%s360 + $0x80] sm:$0xff]
      %v428 = vld [vmem:[%s360 + $0x88] sm:$0xff]
      %v429 = vld [vmem:[%s360 + $0x90] sm:$0xff]
      %v430 = vld [vmem:[%s360 + $0x98] sm:$0xff]
      %v431 = vld [vmem:[%s360 + $0xa0] sm:$0xff]
      %v432 = vld [vmem:[%s360 + $0xa8] sm:$0xff]
      %v433 = vld [vmem:[%s360 + $0xb0] sm:$0xff]
      %v434 = vld [vmem:[%s360 + $0xb8] sm:$0xff]
      %v435 = vld [vmem:[%s360 + $0xc0] sm:$0xff]
      %v436 = vld [vmem:[%s360 + $0xc8] sm:$0xff]
      %v437 = vld [vmem:[%s360 + $0xd0] sm:$0xff]
      %v438 = vld [vmem:[%s360 + $0xd8] sm:$0xff]
      %v439 = vld [vmem:[%s360 + $0xe0] sm:$0xff]
      %v440 = vld [vmem:[%s360 + $0xe8] sm:$0xff]
      %v441 = vld [vmem:[%s360 + $0xf0] sm:$0xff]
      %v442 = vld [vmem:[%s360 + $0xf8] sm:$0xff]
      %475 = vrot.lane.b32.xlu0 %v366, 96
      %v476 = vpop.permute.xlu0 %475
      %477 = vrot.lane.b32.xlu0 %v367, 96
      %v478 = vpop.permute.xlu0 %477
      %479 = vrot.lane.b32.xlu0 %v368, 96
      %v480 = vpop.permute.xlu0 %479
      %481 = vrot.lane.b32.xlu0 %v369, 96
      %v482 = vpop.permute.xlu0 %481
      %483 = vrot.lane.b32.xlu0 %v370, 96
      %v484 = vpop.permute.xlu0 %483
      %485 = vrot.lane.b32.xlu0 %v371, 96
      %v486 = vpop.permute.xlu0 %485
      %487 = vrot.lane.b32.xlu0 %v372, 96
      %v488 = vpop.permute.xlu0 %487
      %489 = vrot.lane.b32.xlu0 %v373, 96
      %v490 = vpop.permute.xlu0 %489
      %491 = vrot.lane.b32.xlu0 %v374, 96
      %v492 = vpop.permute.xlu0 %491
      %493 = vrot.lane.b32.xlu0 %v375, 96
      %v494 = vpop.permute.xlu0 %493
      %495 = vrot.lane.b32.xlu0 %v376, 96
      %v496 = vpop.permute.xlu0 %495
      %497 = vrot.lane.b32.xlu0 %v377, 96
      %v498 = vpop.permute.xlu0 %497
      %499 = vrot.lane.b32.xlu0 %v378, 96
      %v500 = vpop.permute.xlu0 %499
      %501 = vrot.lane.b32.xlu0 %v379, 96
      %v502 = vpop.permute.xlu0 %501
      %503 = vrot.lane.b32.xlu0 %v380, 96
      %v504 = vpop.permute.xlu0 %503
      %505 = vrot.lane.b32.xlu0 %v381, 96
      %v506 = vpop.permute.xlu0 %505
      %507 = vrot.lane.b32.xlu0 %v382, 96
      %v508 = vpop.permute.xlu0 %507
      %509 = vrot.lane.b32.xlu0 %v383, 96
      %v510 = vpop.permute.xlu0 %509
      %511 = vrot.lane.b32.xlu0 %v384, 96
      %v512 = vpop.permute.xlu0 %511
      %513 = vrot.lane.b32.xlu0 %v385, 96
      %v514 = vpop.permute.xlu0 %513
      %515 = vrot.lane.b32.xlu0 %v386, 96
      %v516 = vpop.permute.xlu0 %515
      %517 = vrot.lane.b32.xlu0 %v387, 96
      %v518 = vpop.permute.xlu0 %517
      %519 = vrot.lane.b32.xlu0 %v388, 96
      %v520 = vpop.permute.xlu0 %519
      %521 = vrot.lane.b32.xlu0 %v389, 96
      %v522 = vpop.permute.xlu0 %521
      %523 = vrot.lane.b32.xlu0 %v390, 96
      %v524 = vpop.permute.xlu0 %523
      %525 = vrot.lane.b32.xlu0 %v391, 96
      %v526 = vpop.permute.xlu0 %525
      %527 = vrot.lane.b32.xlu0 %v392, 96
      %v528 = vpop.permute.xlu0 %527
      %529 = vrot.lane.b32.xlu0 %v393, 96
      %v530 = vpop.permute.xlu0 %529
      %531 = vrot.lane.b32.xlu0 %v394, 96
      %v532 = vpop.permute.xlu0 %531
      %533 = vrot.lane.b32.xlu0 %v395, 96
      %v534 = vpop.permute.xlu0 %533
      %535 = vrot.lane.b32.xlu0 %v396, 96
      %v536 = vpop.permute.xlu0 %535
      %537 = vrot.lane.b32.xlu0 %v397, 96
      %v538 = vpop.permute.xlu0 %537
      %vm539 = vcmask 130048
      %v540 = vsel %vm539, %v366, 0
      %v542 = vsel %vm539, %v367, 0
      %v544 = vsel %vm539, %v368, 0
      %v546 = vsel %vm539, %v369, 0
      %v548 = vsel %vm539, %v370, 0
      %v550 = vsel %vm539, %v371, 0
      %v552 = vsel %vm539, %v372, 0
      %v554 = vsel %vm539, %v373, 0
      %v556 = vsel %vm539, %v374, 0
      %v558 = vsel %vm539, %v375, 0
      %v560 = vsel %vm539, %v376, 0
      %v562 = vsel %vm539, %v377, 0
      %v564 = vsel %vm539, %v378, 0
      %v566 = vsel %vm539, %v379, 0
      %v568 = vsel %vm539, %v380, 0
      %v570 = vsel %vm539, %v381, 0
      %v572 = vsel %vm539, %v382, 0
      %v574 = vsel %vm539, %v383, 0
      %v576 = vsel %vm539, %v384, 0
      %v578 = vsel %vm539, %v385, 0
      %v580 = vsel %vm539, %v386, 0
      %v582 = vsel %vm539, %v387, 0
      %v584 = vsel %vm539, %v388, 0
      %v586 = vsel %vm539, %v389, 0
      %v588 = vsel %vm539, %v390, 0
      %v590 = vsel %vm539, %v391, 0
      %v592 = vsel %vm539, %v392, 0
      %v594 = vsel %vm539, %v393, 0
      %v596 = vsel %vm539, %v394, 0
      %v598 = vsel %vm539, %v395, 0
      %v600 = vsel %vm539, %v396, 0
      %v602 = vsel %vm539, %v397, 0
      %v604 = vsel %vm539, %v476, 0
      %v606 = vsel %vm539, %v478, 0
      %v608 = vsel %vm539, %v480, 0
      %v610 = vsel %vm539, %v482, 0
      %v612 = vsel %vm539, %v484, 0
      %v614 = vsel %vm539, %v486, 0
      %v616 = vsel %vm539, %v488, 0
      %v618 = vsel %vm539, %v490, 0
      %v620 = vsel %vm539, %v492, 0
      %v622 = vsel %vm539, %v494, 0
      %v624 = vsel %vm539, %v496, 0
      %v626 = vsel %vm539, %v498, 0
      %v628 = vsel %vm539, %v500, 0
      %v630 = vsel %vm539, %v502, 0
      %v632 = vsel %vm539, %v504, 0
      %v634 = vsel %vm539, %v506, 0
      %v636 = vsel %vm539, %v508, 0
      %v638 = vsel %vm539, %v510, 0
      %v640 = vsel %vm539, %v512, 0
      %v642 = vsel %vm539, %v514, 0
      %v644 = vsel %vm539, %v516, 0
      %v646 = vsel %vm539, %v518, 0
      %v648 = vsel %vm539, %v520, 0
      %v650 = vsel %vm539, %v522, 0
      %v652 = vsel %vm539, %v524, 0
      %v654 = vsel %vm539, %v526, 0
      %v656 = vsel %vm539, %v528, 0
      %v658 = vsel %vm539, %v530, 0
      %v660 = vsel %vm539, %v532, 0
      %v662 = vsel %vm539, %v534, 0
      %v664 = vsel %vm539, %v536, 0
      %v666 = vsel %vm539, %v538, 0
      %668 = vmatprep.subr.mxu0 0.0
      %669 = vmatpush1.xpose.msra.mxu0 %v604
      %670 = vmatprep.subr.mxu0 0.0
      %671 = vmatpush1.xpose.msra.mxu0 %v606
      %672 = vmatprep.subr.mxu0 0.0
      %673 = vmatpush1.xpose.msra.mxu0 %v608
      %674 = vmatprep.subr.mxu0 0.0
      %675 = vmatpush1.xpose.msra.mxu0 %v610
      %676 = vmatprep.subr.mxu0 0.0
      %677 = vmatpush1.xpose.msra.mxu0 %v612
      %678 = vmatprep.subr.mxu0 0.0
      %679 = vmatpush1.xpose.msra.mxu0 %v614
      %680 = vmatprep.subr.mxu0 0.0
      %681 = vmatpush1.xpose.msra.mxu0 %v616
      %682 = vmatprep.subr.mxu0 0.0
      %683 = vmatpush1.xpose.msra.mxu0 %v618
      %684 = vmatprep.subr.mxu0 0.0
      %685 = vmatpush1.xpose.msra.mxu0 %v620
      %686 = vmatprep.subr.mxu0 0.0
      %687 = vmatpush1.xpose.msra.mxu0 %v622
      %688 = vmatprep.subr.mxu0 0.0
      %689 = vmatpush1.xpose.msra.mxu0 %v624
      %690 = vmatprep.subr.mxu0 0.0
      %691 = vmatpush1.xpose.msra.mxu0 %v626
      %692 = vmatprep.subr.mxu0 0.0
      %693 = vmatpush1.xpose.msra.mxu0 %v628
      %694 = vmatprep.subr.mxu0 0.0
      %695 = vmatpush1.xpose.msra.mxu0 %v630
      %696 = vmatprep.subr.mxu0 0.0
      %697 = vmatpush1.xpose.msra.mxu0 %v632
      %698 = vmatprep.subr.mxu0 0.0
      %699 = vmatpush1.xpose.msra.mxu0 %v634
      %700 = vmatprep.subr.mxu0 0.0
      %701 = vmatpush1.xpose.msra.mxu0 %v636
      %702 = vmatprep.subr.mxu0 0.0
      %703 = vmatpush1.xpose.msra.mxu0 %v638
      %704 = vmatprep.subr.mxu0 0.0
      %705 = vmatpush1.xpose.msra.mxu0 %v640
      %706 = vmatprep.subr.mxu0 0.0
      %707 = vmatpush1.xpose.msra.mxu0 %v642
      %708 = vmatprep.subr.mxu0 0.0
      %709 = vmatpush1.xpose.msra.mxu0 %v644
      %710 = vmatprep.subr.mxu0 0.0
      %711 = vmatpush1.xpose.msra.mxu0 %v646
      %712 = vmatprep.subr.mxu0 0.0
      %713 = vmatpush1.xpose.msra.mxu0 %v648
      %714 = vmatprep.subr.mxu0 0.0
      %715 = vmatpush1.xpose.msra.mxu0 %v650
      %716 = vmatprep.subr.mxu0 0.0
      %717 = vmatpush1.xpose.msra.mxu0 %v652
      %718 = vmatprep.subr.mxu0 0.0
      %719 = vmatpush1.xpose.msra.mxu0 %v654
      %720 = vmatprep.subr.mxu0 0.0
      %721 = vmatpush1.xpose.msra.mxu0 %v656
      %722 = vmatprep.subr.mxu0 0.0
      %723 = vmatpush1.xpose.msra.mxu0 %v658
      %724 = vmatprep.subr.mxu0 0.0
      %725 = vmatpush1.xpose.msra.mxu0 %v660
      %726 = vmatprep.subr.mxu0 0.0
      %727 = vmatpush1.xpose.msra.mxu0 %v662
      %728 = vmatprep.subr.mxu0 0.0
      %729 = vmatpush1.xpose.msra.mxu0 %v664
      %730 = vmatprep.subr.mxu0 0.0
      %731 = vmatpush1.xpose.msra.mxu0 %v666
      %732 = vmatprep.mubr.f32.mxu0 0.0
      %733 = vmatmul.mubr.f32.gmra.mrb[0].mxu0 %v540
      %v734 = vpop.f32.mrb[0].mxu0
      %v735 = vadd.f32 0.0, %v734
      %v736 = vpop.f32.mrb[0].mxu0
      %v737 = vadd.f32 0.0, %v736
      %738 = vmatprep.mubr.f32.mxu0 0.0
      %739 = vmatmul.mubr.f32.gmra.mrb[0].mxu0 %v542
      %v740 = vpop.f32.mrb[0].mxu0
      %v741 = vadd.f32 0.0, %v740
      %v742 = vpop.f32.mrb[0].mxu0
      %v743 = vadd.f32 0.0, %v742
      %744 = vmatprep.mubr.f32.mxu0 0.0
      %745 = vmatmul.mubr.f32.gmra.mrb[0].mxu0 %v544
      %v746 = vpop.f32.mrb[0].mxu0
      %v747 = vadd.f32 0.0, %v746
      %v748 = vpop.f32.mrb[0].mxu0
      %v749 = vadd.f32 0.0, %v748
      %750 = vmatprep.mubr.f32.mxu0 0.0
      %751 = vmatmul.mubr.f32.gmra.mrb[0].mxu0 %v546
      %v752 = vpop.f32.mrb[0].mxu0
      %v753 = vadd.f32 0.0, %v752
      %v754 = vpop.f32.mrb[0].mxu0
      %v755 = vadd.f32 0.0, %v754
      %756 = vmatprep.mubr.f32.mxu0 0.0
      %757 = vmatmul.mubr.f32.gmra.mrb[0].mxu0 %v548
      %v758 = vpop.f32.mrb[0].mxu0
      %v759 = vadd.f32 0.0, %v758
      %v760 = vpop.f32.mrb[0].mxu0
      %v761 = vadd.f32 0.0, %v760
      %762 = vmatprep.mubr.f32.mxu0 0.0
      %763 = vmatmul.mubr.f32.gmra.mrb[0].mxu0 %v550
      %v764 = vpop.f32.mrb[0].mxu0
      %v765 = vadd.f32 0.0, %v764
      %v766 = vpop.f32.mrb[0].mxu0
      %v767 = vadd.f32 0.0, %v766
      %768 = vmatprep.mubr.f32.mxu0 0.0
      %769 = vmatmul.mubr.f32.gmra.mrb[0].mxu0 %v552
      %v770 = vpop.f32.mrb[0].mxu0
      %v771 = vadd.f32 0.0, %v770
      %v772 = vpop.f32.mrb[0].mxu0
      %v773 = vadd.f32 0.0, %v772
      %774 = vmatprep.mubr.f32.mxu0 0.0
      %775 = vmatmul.mubr.f32.gmra.mrb[0].mxu0 %v554
      %v776 = vpop.f32.mrb[0].mxu0
      %v777 = vadd.f32 0.0, %v776
      %v778 = vpop.f32.mrb[0].mxu0
      %v779 = vadd.f32 0.0, %v778
      %780 = vmatprep.mubr.f32.mxu0 0.0
      %781 = vmatmul.mubr.f32.gmra.mrb[0].mxu0 %v556
      %v782 = vpop.f32.mrb[0].mxu0
      %v783 = vadd.f32 0.0, %v782
      %v784 = vpop.f32.mrb[0].mxu0
      %v785 = vadd.f32 0.0, %v784
      %786 = vmatprep.mubr.f32.mxu0 0.0
      %787 = vmatmul.mubr.f32.gmra.mrb[0].mxu0 %v558
      %v788 = vpop.f32.mrb[0].mxu0
      %v789 = vadd.f32 0.0, %v788
      %v790 = vpop.f32.mrb[0].mxu0
      %v791 = vadd.f32 0.0, %v790
      %792 = vmatprep.mubr.f32.mxu0 0.0
      %793 = vmatmul.mubr.f32.gmra.mrb[0].mxu0 %v560
      %v794 = vpop.f32.mrb[0].mxu0
      %v795 = vadd.f32 0.0, %v794
      %v796 = vpop.f32.mrb[0].mxu0
      %v797 = vadd.f32 0.0, %v796
      %798 = vmatprep.mubr.f32.mxu0 0.0
      %799 = vmatmul.mubr.f32.gmra.mrb[0].mxu0 %v562
      %v800 = vpop.f32.mrb[0].mxu0
      %v801 = vadd.f32 0.0, %v800
      %v802 = vpop.f32.mrb[0].mxu0
      %v803 = vadd.f32 0.0, %v802
      %804 = vmatprep.mubr.f32.mxu0 0.0
      %805 = vmatmul.mubr.f32.gmra.mrb[0].mxu0 %v564
      %v806 = vpop.f32.mrb[0].mxu0
      %v807 = vadd.f32 0.0, %v806
      %v808 = vpop.f32.mrb[0].mxu0
      %v809 = vadd.f32 0.0, %v808
      %810 = vmatprep.mubr.f32.mxu0 0.0
      %811 = vmatmul.mubr.f32.gmra.mrb[0].mxu0 %v566
      %v812 = vpop.f32.mrb[0].mxu0
      %v813 = vadd.f32 0.0, %v812
      %v814 = vpop.f32.mrb[0].mxu0
      %v815 = vadd.f32 0.0, %v814
      %816 = vmatprep.mubr.f32.mxu0 0.0
      %817 = vmatmul.mubr.f32.gmra.mrb[0].mxu0 %v568
      %v818 = vpop.f32.mrb[0].mxu0
      %v819 = vadd.f32 0.0, %v818
      %v820 = vpop.f32.mrb[0].mxu0
      %v821 = vadd.f32 0.0, %v820
      %822 = vmatprep.mubr.f32.mxu0 0.0
      %823 = vmatmul.mubr.f32.gmra.mrb[0].mxu0 %v570
      %v824 = vpop.f32.mrb[0].mxu0
      %v825 = vadd.f32 0.0, %v824
      %v826 = vpop.f32.mrb[0].mxu0
      %v827 = vadd.f32 0.0, %v826
      %828 = vmatprep.mubr.f32.mxu0 0.0
      %829 = vmatmul.mubr.f32.gmra.mrb[0].mxu0 %v572
      %v830 = vpop.f32.mrb[0].mxu0
      %v831 = vadd.f32 0.0, %v830
      %v832 = vpop.f32.mrb[0].mxu0
      %v833 = vadd.f32 0.0, %v832
      %834 = vmatprep.mubr.f32.mxu0 0.0
      %835 = vmatmul.mubr.f32.gmra.mrb[0].mxu0 %v574
      %v836 = vpop.f32.mrb[0].mxu0
      %v837 = vadd.f32 0.0, %v836
      %v838 = vpop.f32.mrb[0].mxu0
      %v839 = vadd.f32 0.0, %v838
      %840 = vmatprep.mubr.f32.mxu0 0.0
      %841 = vmatmul.mubr.f32.gmra.mrb[0].mxu0 %v576
      %v842 = vpop.f32.mrb[0].mxu0
      %v843 = vadd.f32 0.0, %v842
      %v844 = vpop.f32.mrb[0].mxu0
      %v845 = vadd.f32 0.0, %v844
      %846 = vmatprep.mubr.f32.mxu0 0.0
      %847 = vmatmul.mubr.f32.gmra.mrb[0].mxu0 %v578
      %v848 = vpop.f32.mrb[0].mxu0
      %v849 = vadd.f32 0.0, %v848
      %v850 = vpop.f32.mrb[0].mxu0
      %v851 = vadd.f32 0.0, %v850
      %852 = vmatprep.mubr.f32.mxu0 0.0
      %853 = vmatmul.mubr.f32.gmra.mrb[0].mxu0 %v580
      %v854 = vpop.f32.mrb[0].mxu0
      %v855 = vadd.f32 0.0, %v854
      %v856 = vpop.f32.mrb[0].mxu0
      %v857 = vadd.f32 0.0, %v856
      %858 = vmatprep.mubr.f32.mxu0 0.0
      %859 = vmatmul.mubr.f32.gmra.mrb[0].mxu0 %v582
      %v860 = vpop.f32.mrb[0].mxu0
      %v861 = vadd.f32 0.0, %v860
      %v862 = vpop.f32.mrb[0].mxu0
      %v863 = vadd.f32 0.0, %v862
      %864 = vmatprep.mubr.f32.mxu0 0.0
      %865 = vmatmul.mubr.f32.gmra.mrb[0].mxu0 %v584
      %v866 = vpop.f32.mrb[0].mxu0
      %v867 = vadd.f32 0.0, %v866
      %v868 = vpop.f32.mrb[0].mxu0
      %v869 = vadd.f32 0.0, %v868
      %870 = vmatprep.mubr.f32.mxu0 0.0
      %871 = vmatmul.mubr.f32.gmra.mrb[0].mxu0 %v586
      %v872 = vpop.f32.mrb[0].mxu0
      %v873 = vadd.f32 0.0, %v872
      %v874 = vpop.f32.mrb[0].mxu0
      %v875 = vadd.f32 0.0, %v874
      %876 = vmatprep.mubr.f32.mxu0 0.0
      %877 = vmatmul.mubr.f32.gmra.mrb[0].mxu0 %v588
      %v878 = vpop.f32.mrb[0].mxu0
      %v879 = vadd.f32 0.0, %v878
      %v880 = vpop.f32.mrb[0].mxu0
      %v881 = vadd.f32 0.0, %v880
      %882 = vmatprep.mubr.f32.mxu0 0.0
      %883 = vmatmul.mubr.f32.gmra.mrb[0].mxu0 %v590
      %v884 = vpop.f32.mrb[0].mxu0
      %v885 = vadd.f32 0.0, %v884
      %v886 = vpop.f32.mrb[0].mxu0
      %v887 = vadd.f32 0.0, %v886
      %888 = vmatprep.mubr.f32.mxu0 0.0
      %889 = vmatmul.mubr.f32.gmra.mrb[0].mxu0 %v592
      %v890 = vpop.f32.mrb[0].mxu0
      %v891 = vadd.f32 0.0, %v890
      %v892 = vpop.f32.mrb[0].mxu0
      %v893 = vadd.f32 0.0, %v892
      %894 = vmatprep.mubr.f32.mxu0 0.0
      %895 = vmatmul.mubr.f32.gmra.mrb[0].mxu0 %v594
      %v896 = vpop.f32.mrb[0].mxu0
      %v897 = vadd.f32 0.0, %v896
      %v898 = vpop.f32.mrb[0].mxu0
      %v899 = vadd.f32 0.0, %v898
      %900 = vmatprep.mubr.f32.mxu0 0.0
      %901 = vmatmul.mubr.f32.gmra.mrb[0].mxu0 %v596
      %v902 = vpop.f32.mrb[0].mxu0
      %v903 = vadd.f32 0.0, %v902
      %v904 = vpop.f32.mrb[0].mxu0
      %v905 = vadd.f32 0.0, %v904
      %906 = vmatprep.mubr.f32.mxu0 0.0
      %907 = vmatmul.mubr.f32.gmra.mrb[0].mxu0 %v598
      %v908 = vpop.f32.mrb[0].mxu0
      %v909 = vadd.f32 0.0, %v908
      %v910 = vpop.f32.mrb[0].mxu0
      %v911 = vadd.f32 0.0, %v910
      %912 = vmatprep.mubr.f32.mxu0 0.0
      %913 = vmatmul.mubr.f32.gmra.mrb[0].mxu0 %v600
      %v914 = vpop.f32.mrb[0].mxu0
      %v915 = vadd.f32 0.0, %v914
      %v916 = vpop.f32.mrb[0].mxu0
      %v917 = vadd.f32 0.0, %v916
      %918 = vmatprep.mubr.f32.mxu0 0.0
      %919 = vmatmul.mubr.f32.gmra.mrb[0].mxu0 %v602
      %v920 = vpop.f32.mrb[0].mxu0
      %v921 = vadd.f32 0.0, %v920
      %v922 = vpop.f32.mrb[0].mxu0
      %v923 = vadd.f32 0.0, %v922
      %924 = vdwg.mxu0
      %v926 = vsel %vm539, %v398, 0
      %v929 = vsel %vm539, %v399, 0
      %v932 = vsel %vm539, %v400, 0
      %v935 = vsel %vm539, %v401, 0
      %v938 = vsel %vm539, %v402, 0
      %v941 = vsel %vm539, %v403, 0
      %v944 = vsel %vm539, %v404, 0
      %v947 = vsel %vm539, %v405, 0
      %949 = vmatprep.subr.mxu0 0.0
      %950 = vmatpush1.xpose.msra.mxu0 %v926
      %951 = vmatprep.subr.mxu0 0.0
      %952 = vmatpush1.xpose.msra.mxu0 %v929
      %953 = vmatprep.subr.mxu0 0.0
      %954 = vmatpush1.xpose.msra.mxu0 %v932
      %955 = vmatprep.subr.mxu0 0.0
      %956 = vmatpush1.xpose.msra.mxu0 %v935
      %957 = vmatprep.subr.mxu0 0.0
      %958 = vmatpush1.xpose.msra.mxu0 %v938
      %959 = vmatprep.subr.mxu0 0.0
      %960 = vmatpush1.xpose.msra.mxu0 %v941
      %961 = vmatprep.subr.mxu0 0.0
      %962 = vmatpush1.xpose.msra.mxu0 %v944
      %963 = vmatprep.subr.mxu0 0.0
      %964 = vmatpush1.xpose.msra.mxu0 %v947
      %965 = vmatprep.subr.mxu0 0.0
      %966 = vmatpush1.xpose.msra.mxu0 0.0
      %967 = vmatprep.subr.mxu0 0.0
      %968 = vmatpush1.xpose.msra.mxu0 0.0
      %969 = vmatprep.subr.mxu0 0.0
      %970 = vmatpush1.xpose.msra.mxu0 0.0
      %971 = vmatprep.subr.mxu0 0.0
      %972 = vmatpush1.xpose.msra.mxu0 0.0
      %973 = vmatprep.subr.mxu0 0.0
      %974 = vmatpush1.xpose.msra.mxu0 0.0
      %975 = vmatprep.subr.mxu0 0.0
      %976 = vmatpush1.xpose.msra.mxu0 0.0
      %977 = vmatprep.subr.mxu0 0.0
      %978 = vmatpush1.xpose.msra.mxu0 0.0
      %979 = vmatprep.subr.mxu0 0.0
      %980 = vmatpush1.xpose.msra.mxu0 0.0
      %981 = vmatprep.subr.mxu0 0.0
      %982 = vmatpush1.xpose.msra.mxu0 0.0
      %983 = vmatprep.subr.mxu0 0.0
      %984 = vmatpush1.xpose.msra.mxu0 0.0
      %985 = vmatprep.subr.mxu0 0.0
      %986 = vmatpush1.xpose.msra.mxu0 0.0
      %987 = vmatprep.subr.mxu0 0.0
      %988 = vmatpush1.xpose.msra.mxu0 0.0
      %989 = vmatprep.subr.mxu0 0.0
      %990 = vmatpush1.xpose.msra.mxu0 0.0
      %991 = vmatprep.subr.mxu0 0.0
      %992 = vmatpush1.xpose.msra.mxu0 0.0
      %993 = vmatprep.subr.mxu0 0.0
      %994 = vmatpush1.xpose.msra.mxu0 0.0
      %995 = vmatprep.subr.mxu0 0.0
      %996 = vmatpush1.xpose.msra.mxu0 0.0
      %997 = vmatprep.subr.mxu0 0.0
      %998 = vmatpush1.xpose.msra.mxu0 0.0
      %999 = vmatprep.subr.mxu0 0.0
      %1000 = vmatpush1.xpose.msra.mxu0 0.0
      %1001 = vmatprep.subr.mxu0 0.0
      %1002 = vmatpush1.xpose.msra.mxu0 0.0
      %1003 = vmatprep.subr.mxu0 0.0
      %1004 = vmatpush1.xpose.msra.mxu0 0.0
      %1005 = vmatprep.subr.mxu0 0.0
      %1006 = vmatpush1.xpose.msra.mxu0 0.0
      %1007 = vmatprep.subr.mxu0 0.0
      %1008 = vmatpush1.xpose.msra.mxu0 0.0
      %1009 = vmatprep.subr.mxu0 0.0
      %1010 = vmatpush1.xpose.msra.mxu0 0.0
      %1011 = vmatprep.subr.mxu0 0.0
      %1012 = vmatpush1.xpose.msra.mxu0 0.0
      %1013 = vmatprep.mubr.f32.mxu0 0.0
      %1014 = vmatmul.mubr.f32.gmra.mrb[0].mxu0 %v540
      %v1015 = vpop.f32.mrb[0].mxu0
      %v1016 = vadd.f32 0.0, %v1015
      %v1017 = vpop.f32.mrb[0].mxu0
      %1018 = vmatprep.mubr.f32.mxu0 0.0
      %1019 = vmatmul.mubr.f32.gmra.mrb[0].mxu0 %v542
      %v1020 = vpop.f32.mrb[0].mxu0
      %v1021 = vadd.f32 0.0, %v1020
      %v1022 = vpop.f32.mrb[0].mxu0
      %1023 = vmatprep.mubr.f32.mxu0 0.0
      %1024 = vmatmul.mubr.f32.gmra.mrb[0].mxu0 %v544
      %v1025 = vpop.f32.mrb[0].mxu0
      %v1026 = vadd.f32 0.0, %v1025
      %v1027 = vpop.f32.mrb[0].mxu0
      %1028 = vmatprep.mubr.f32.mxu0 0.0
      %1029 = vmatmul.mubr.f32.gmra.mrb[0].mxu0 %v546
      %v1030 = vpop.f32.mrb[0].mxu0
      %v1031 = vadd.f32 0.0, %v1030
      %v1032 = vpop.f32.mrb[0].mxu0
      %1033 = vmatprep.mubr.f32.mxu0 0.0
      %1034 = vmatmul.mubr.f32.gmra.mrb[0].mxu0 %v548
      %v1035 = vpop.f32.mrb[0].mxu0
      %v1036 = vadd.f32 0.0, %v1035
      %v1037 = vpop.f32.mrb[0].mxu0
      %1038 = vmatprep.mubr.f32.mxu0 0.0
      %1039 = vmatmul.mubr.f32.gmra.mrb[0].mxu0 %v550
      %v1040 = vpop.f32.mrb[0].mxu0
      %v1041 = vadd.f32 0.0, %v1040
      %v1042 = vpop.f32.mrb[0].mxu0
      %1043 = vmatprep.mubr.f32.mxu0 0.0
      %1044 = vmatmul.mubr.f32.gmra.mrb[0].mxu0 %v552
      %v1045 = vpop.f32.mrb[0].mxu0
      %v1046 = vadd.f32 0.0, %v1045
      %v1047 = vpop.f32.mrb[0].mxu0
      %1048 = vmatprep.mubr.f32.mxu0 0.0
      %1049 = vmatmul.mubr.f32.gmra.mrb[0].mxu0 %v554
      %v1050 = vpop.f32.mrb[0].mxu0
      %v1051 = vadd.f32 0.0, %v1050
      %v1052 = vpop.f32.mrb[0].mxu0
      %1053 = vmatprep.mubr.f32.mxu0 0.0
      %1054 = vmatmul.mubr.f32.gmra.mrb[0].mxu0 %v556
      %v1055 = vpop.f32.mrb[0].mxu0
      %v1056 = vadd.f32 0.0, %v1055
      %v1057 = vpop.f32.mrb[0].mxu0
      %1058 = vmatprep.mubr.f32.mxu0 0.0
      %1059 = vmatmul.mubr.f32.gmra.mrb[0].mxu0 %v558
      %v1060 = vpop.f32.mrb[0].mxu0
      %v1061 = vadd.f32 0.0, %v1060
      %v1062 = vpop.f32.mrb[0].mxu0
      %1063 = vmatprep.mubr.f32.mxu0 0.0
      %1064 = vmatmul.mubr.f32.gmra.mrb[0].mxu0 %v560
      %v1065 = vpop.f32.mrb[0].mxu0
      %v1066 = vadd.f32 0.0, %v1065
      %v1067 = vpop.f32.mrb[0].mxu0
      %1068 = vmatprep.mubr.f32.mxu0 0.0
      %1069 = vmatmul.mubr.f32.gmra.mrb[0].mxu0 %v562
      %v1070 = vpop.f32.mrb[0].mxu0
      %v1071 = vadd.f32 0.0, %v1070
      %v1072 = vpop.f32.mrb[0].mxu0
      %1073 = vmatprep.mubr.f32.mxu0 0.0
      %1074 = vmatmul.mubr.f32.gmra.mrb[0].mxu0 %v564
      %v1075 = vpop.f32.mrb[0].mxu0
      %v1076 = vadd.f32 0.0, %v1075
      %v1077 = vpop.f32.mrb[0].mxu0
      %1078 = vmatprep.mubr.f32.mxu0 0.0
      %1079 = vmatmul.mubr.f32.gmra.mrb[0].mxu0 %v566
      %v1080 = vpop.f32.mrb[0].mxu0
      %v1081 = vadd.f32 0.0, %v1080
      %v1082 = vpop.f32.mrb[0].mxu0
      %1083 = vmatprep.mubr.f32.mxu0 0.0
      %1084 = vmatmul.mubr.f32.gmra.mrb[0].mxu0 %v568
      %v1085 = vpop.f32.mrb[0].mxu0
      %v1086 = vadd.f32 0.0, %v1085
      %v1087 = vpop.f32.mrb[0].mxu0
      %1088 = vmatprep.mubr.f32.mxu0 0.0
      %1089 = vmatmul.mubr.f32.gmra.mrb[0].mxu0 %v570
      %v1090 = vpop.f32.mrb[0].mxu0
      %v1091 = vadd.f32 0.0, %v1090
      %v1092 = vpop.f32.mrb[0].mxu0
      %1093 = vmatprep.mubr.f32.mxu0 0.0
      %1094 = vmatmul.mubr.f32.gmra.mrb[0].mxu0 %v572
      %v1095 = vpop.f32.mrb[0].mxu0
      %v1096 = vadd.f32 0.0, %v1095
      %v1097 = vpop.f32.mrb[0].mxu0
      %1098 = vmatprep.mubr.f32.mxu0 0.0
      %1099 = vmatmul.mubr.f32.gmra.mrb[0].mxu0 %v574
      %v1100 = vpop.f32.mrb[0].mxu0
      %v1101 = vadd.f32 0.0, %v1100
      %v1102 = vpop.f32.mrb[0].mxu0
      %1103 = vmatprep.mubr.f32.mxu0 0.0
      %1104 = vmatmul.mubr.f32.gmra.mrb[0].mxu0 %v576
      %v1105 = vpop.f32.mrb[0].mxu0
      %v1106 = vadd.f32 0.0, %v1105
      %v1107 = vpop.f32.mrb[0].mxu0
      %1108 = vmatprep.mubr.f32.mxu0 0.0
      %1109 = vmatmul.mubr.f32.gmra.mrb[0].mxu0 %v578
      %v1110 = vpop.f32.mrb[0].mxu0
      %v1111 = vadd.f32 0.0, %v1110
      %v1112 = vpop.f32.mrb[0].mxu0
      %1113 = vmatprep.mubr.f32.mxu0 0.0
      %1114 = vmatmul.mubr.f32.gmra.mrb[0].mxu0 %v580
      %v1115 = vpop.f32.mrb[0].mxu0
      %v1116 = vadd.f32 0.0, %v1115
      %v1117 = vpop.f32.mrb[0].mxu0
      %1118 = vmatprep.mubr.f32.mxu0 0.0
      %1119 = vmatmul.mubr.f32.gmra.mrb[0].mxu0 %v582
      %v1120 = vpop.f32.mrb[0].mxu0
      %v1121 = vadd.f32 0.0, %v1120
      %v1122 = vpop.f32.mrb[0].mxu0
      %1123 = vmatprep.mubr.f32.mxu0 0.0
      %1124 = vmatmul.mubr.f32.gmra.mrb[0].mxu0 %v584
      %v1125 = vpop.f32.mrb[0].mxu0
      %v1126 = vadd.f32 0.0, %v1125
      %v1127 = vpop.f32.mrb[0].mxu0
      %1128 = vmatprep.mubr.f32.mxu0 0.0
      %1129 = vmatmul.mubr.f32.gmra.mrb[0].mxu0 %v586
      %v1130 = vpop.f32.mrb[0].mxu0
      %v1131 = vadd.f32 0.0, %v1130
      %v1132 = vpop.f32.mrb[0].mxu0
      %1133 = vmatprep.mubr.f32.mxu0 0.0
      %1134 = vmatmul.mubr.f32.gmra.mrb[0].mxu0 %v588
      %v1135 = vpop.f32.mrb[0].mxu0
      %v1136 = vadd.f32 0.0, %v1135
      %v1137 = vpop.f32.mrb[0].mxu0
      %1138 = vmatprep.mubr.f32.mxu0 0.0
      %1139 = vmatmul.mubr.f32.gmra.mrb[0].mxu0 %v590
      %v1140 = vpop.f32.mrb[0].mxu0
      %v1141 = vadd.f32 0.0, %v1140
      %v1142 = vpop.f32.mrb[0].mxu0
      %1143 = vmatprep.mubr.f32.mxu0 0.0
      %1144 = vmatmul.mubr.f32.gmra.mrb[0].mxu0 %v592
      %v1145 = vpop.f32.mrb[0].mxu0
      %v1146 = vadd.f32 0.0, %v1145
      %v1147 = vpop.f32.mrb[0].mxu0
      %1148 = vmatprep.mubr.f32.mxu0 0.0
      %1149 = vmatmul.mubr.f32.gmra.mrb[0].mxu0 %v594
      %v1150 = vpop.f32.mrb[0].mxu0
      %v1151 = vadd.f32 0.0, %v1150
      %v1152 = vpop.f32.mrb[0].mxu0
      %1153 = vmatprep.mubr.f32.mxu0 0.0
      %1154 = vmatmul.mubr.f32.gmra.mrb[0].mxu0 %v596
      %v1155 = vpop.f32.mrb[0].mxu0
      %v1156 = vadd.f32 0.0, %v1155
      %v1157 = vpop.f32.mrb[0].mxu0
      %1158 = vmatprep.mubr.f32.mxu0 0.0
      %1159 = vmatmul.mubr.f32.gmra.mrb[0].mxu0 %v598
      %v1160 = vpop.f32.mrb[0].mxu0
      %v1161 = vadd.f32 0.0, %v1160
      %v1162 = vpop.f32.mrb[0].mxu0
      %1163 = vmatprep.mubr.f32.mxu0 0.0
      %1164 = vmatmul.mubr.f32.gmra.mrb[0].mxu0 %v600
      %v1165 = vpop.f32.mrb[0].mxu0
      %v1166 = vadd.f32 0.0, %v1165
      %v1167 = vpop.f32.mrb[0].mxu0
      %1168 = vmatprep.mubr.f32.mxu0 0.0
      %1169 = vmatmul.mubr.f32.gmra.mrb[0].mxu0 %v602
      %v1170 = vpop.f32.mrb[0].mxu0
      %v1171 = vadd.f32 0.0, %v1170
      %v1172 = vpop.f32.mrb[0].mxu0
      %1173 = vdwg.mxu0
      %v1175 = vsel %vm539, %v406, 0
      %v1178 = vsel %vm539, %v407, 0
      %v1181 = vsel %vm539, %v408, 0
      %v1184 = vsel %vm539, %v409, 0
      %v1187 = vsel %vm539, %v410, 0
      %1189 = vmatprep.subr.mxu0 0.0
      %1190 = vmatpush1.xpose.msra.mxu0 %v1175
      %1191 = vmatprep.subr.mxu0 0.0
      %1192 = vmatpush1.xpose.msra.mxu0 %v1178
      %1193 = vmatprep.subr.mxu0 0.0
      %1194 = vmatpush1.xpose.msra.mxu0 %v1181
      %1195 = vmatprep.subr.mxu0 0.0
      %1196 = vmatpush1.xpose.msra.mxu0 %v1184
      %1197 = vmatprep.subr.mxu0 0.0
      %1198 = vmatpush1.xpose.msra.mxu0 %v1187
      %1199 = vmatprep.subr.mxu0 0.0
      %1200 = vmatpush1.xpose.msra.mxu0 0.0
      %1201 = vmatprep.subr.mxu0 0.0
      %1202 = vmatpush1.xpose.msra.mxu0 0.0
      %1203 = vmatprep.subr.mxu0 0.0
      %1204 = vmatpush1.xpose.msra.mxu0 0.0
      %1205 = vmatprep.subr.mxu0 0.0
      %1206 = vmatpush1.xpose.msra.mxu0 0.0
      %1207 = vmatprep.subr.mxu0 0.0
      %1208 = vmatpush1.xpose.msra.mxu0 0.0
      %1209 = vmatprep.subr.mxu0 0.0
      %1210 = vmatpush1.xpose.msra.mxu0 0.0
      %1211 = vmatprep.subr.mxu0 0.0
      %1212 = vmatpush1.xpose.msra.mxu0 0.0
      %1213 = vmatprep.subr.mxu0 0.0
      %1214 = vmatpush1.xpose.msra.mxu0 0.0
      %1215 = vmatprep.subr.mxu0 0.0
      %1216 = vmatpush1.xpose.msra.mxu0 0.0
      %1217 = vmatprep.subr.mxu0 0.0
      %1218 = vmatpush1.xpose.msra.mxu0 0.0
      %1219 = vmatprep.subr.mxu0 0.0
      %1220 = vmatpush1.xpose.msra.mxu0 0.0
      %1221 = vmatprep.subr.mxu0 0.0
      %1222 = vmatpush1.xpose.msra.mxu0 0.0
      %1223 = vmatprep.subr.mxu0 0.0
      %1224 = vmatpush1.xpose.msra.mxu0 0.0
      %1225 = vmatprep.subr.mxu0 0.0
      %1226 = vmatpush1.xpose.msra.mxu0 0.0
      %1227 = vmatprep.subr.mxu0 0.0
      %1228 = vmatpush1.xpose.msra.mxu0 0.0
      %1229 = vmatprep.subr.mxu0 0.0
      %1230 = vmatpush1.xpose.msra.mxu0 0.0
      %1231 = vmatprep.subr.mxu0 0.0
      %1232 = vmatpush1.xpose.msra.mxu0 0.0
      %1233 = vmatprep.subr.mxu0 0.0
      %1234 = vmatpush1.xpose.msra.mxu0 0.0
      %1235 = vmatprep.subr.mxu0 0.0
      %1236 = vmatpush1.xpose.msra.mxu0 0.0
      %1237 = vmatprep.subr.mxu0 0.0
      %1238 = vmatpush1.xpose.msra.mxu0 0.0
      %1239 = vmatprep.subr.mxu0 0.0
      %1240 = vmatpush1.xpose.msra.mxu0 0.0
      %1241 = vmatprep.subr.mxu0 0.0
      %1242 = vmatpush1.xpose.msra.mxu0 0.0
      %1243 = vmatprep.subr.mxu0 0.0
      %1244 = vmatpush1.xpose.msra.mxu0 0.0
      %1245 = vmatprep.subr.mxu0 0.0
      %1246 = vmatpush1.xpose.msra.mxu0 0.0
      %1247 = vmatprep.subr.mxu0 0.0
      %1248 = vmatpush1.xpose.msra.mxu0 0.0
      %1249 = vmatprep.subr.mxu0 0.0
      %1250 = vmatpush1.xpose.msra.mxu0 0.0
      %1251 = vmatprep.subr.mxu0 0.0
      %1252 = vmatpush1.xpose.msra.mxu0 0.0
      %1253 = vmatprep.mubr.f32.mxu0 0.0
      %1254 = vmatmul.mubr.f32.gmra.mrb[0].mxu0 %v540
      %v1255 = vpop.f32.mrb[0].mxu0
      %v1256 = vadd.f32 0.0, %v1255
      %v1257 = vpop.f32.mrb[0].mxu0
      %1258 = vmatprep.mubr.f32.mxu0 0.0
      %1259 = vmatmul.mubr.f32.gmra.mrb[0].mxu0 %v542
      %v1260 = vpop.f32.mrb[0].mxu0
      %v1261 = vadd.f32 0.0, %v1260
      %v1262 = vpop.f32.mrb[0].mxu0
      %1263 = vmatprep.mubr.f32.mxu0 0.0
      %1264 = vmatmul.mubr.f32.gmra.mrb[0].mxu0 %v544
      %v1265 = vpop.f32.mrb[0].mxu0
      %v1266 = vadd.f32 0.0, %v1265
      %v1267 = vpop.f32.mrb[0].mxu0
      %1268 = vmatprep.mubr.f32.mxu0 0.0
      %1269 = vmatmul.mubr.f32.gmra.mrb[0].mxu0 %v546
      %v1270 = vpop.f32.mrb[0].mxu0
      %v1271 = vadd.f32 0.0, %v1270
      %v1272 = vpop.f32.mrb[0].mxu0
      %1273 = vmatprep.mubr.f32.mxu0 0.0
      %1274 = vmatmul.mubr.f32.gmra.mrb[0].mxu0 %v548
      %v1275 = vpop.f32.mrb[0].mxu0
      %v1276 = vadd.f32 0.0, %v1275
      %v1277 = vpop.f32.mrb[0].mxu0
      %1278 = vmatprep.mubr.f32.mxu0 0.0
      %1279 = vmatmul.mubr.f32.gmra.mrb[0].mxu0 %v550
      %v1280 = vpop.f32.mrb[0].mxu0
      %v1281 = vadd.f32 0.0, %v1280
      %v1282 = vpop.f32.mrb[0].mxu0
      %1283 = vmatprep.mubr.f32.mxu0 0.0
      %1284 = vmatmul.mubr.f32.gmra.mrb[0].mxu0 %v552
      %v1285 = vpop.f32.mrb[0].mxu0
      %v1286 = vadd.f32 0.0, %v1285
      %v1287 = vpop.f32.mrb[0].mxu0
      %1288 = vmatprep.mubr.f32.mxu0 0.0
      %1289 = vmatmul.mubr.f32.gmra.mrb[0].mxu0 %v554
      %v1290 = vpop.f32.mrb[0].mxu0
      %v1291 = vadd.f32 0.0, %v1290
      %v1292 = vpop.f32.mrb[0].mxu0
      %1293 = vmatprep.mubr.f32.mxu0 0.0
      %1294 = vmatmul.mubr.f32.gmra.mrb[0].mxu0 %v556
      %v1295 = vpop.f32.mrb[0].mxu0
      %v1296 = vadd.f32 0.0, %v1295
      %v1297 = vpop.f32.mrb[0].mxu0
      %1298 = vmatprep.mubr.f32.mxu0 0.0
      %1299 = vmatmul.mubr.f32.gmra.mrb[0].mxu0 %v558
      %v1300 = vpop.f32.mrb[0].mxu0
      %v1301 = vadd.f32 0.0, %v1300
      %v1302 = vpop.f32.mrb[0].mxu0
      %1303 = vmatprep.mubr.f32.mxu0 0.0
      %1304 = vmatmul.mubr.f32.gmra.mrb[0].mxu0 %v560
      %v1305 = vpop.f32.mrb[0].mxu0
      %v1306 = vadd.f32 0.0, %v1305
      %v1307 = vpop.f32.mrb[0].mxu0
      %1308 = vmatprep.mubr.f32.mxu0 0.0
      %1309 = vmatmul.mubr.f32.gmra.mrb[0].mxu0 %v562
      %v1310 = vpop.f32.mrb[0].mxu0
      %v1311 = vadd.f32 0.0, %v1310
      %v1312 = vpop.f32.mrb[0].mxu0
      %1313 = vmatprep.mubr.f32.mxu0 0.0
      %1314 = vmatmul.mubr.f32.gmra.mrb[0].mxu0 %v564
      %v1315 = vpop.f32.mrb[0].mxu0
      %v1316 = vadd.f32 0.0, %v1315
      %v1317 = vpop.f32.mrb[0].mxu0
      %1318 = vmatprep.mubr.f32.mxu0 0.0
      %1319 = vmatmul.mubr.f32.gmra.mrb[0].mxu0 %v566
      %v1320 = vpop.f32.mrb[0].mxu0
      %v1321 = vadd.f32 0.0, %v1320
      %v1322 = vpop.f32.mrb[0].mxu0
      %1323 = vmatprep.mubr.f32.mxu0 0.0
      %1324 = vmatmul.mubr.f32.gmra.mrb[0].mxu0 %v568
      %v1325 = vpop.f32.mrb[0].mxu0
      %v1326 = vadd.f32 0.0, %v1325
      %v1327 = vpop.f32.mrb[0].mxu0
      %1328 = vmatprep.mubr.f32.mxu0 0.0
      %1329 = vmatmul.mubr.f32.gmra.mrb[0].mxu0 %v570
      %v1330 = vpop.f32.mrb[0].mxu0
      %v1331 = vadd.f32 0.0, %v1330
      %v1332 = vpop.f32.mrb[0].mxu0
      %1333 = vmatprep.mubr.f32.mxu0 0.0
      %1334 = vmatmul.mubr.f32.gmra.mrb[0].mxu0 %v572
      %v1335 = vpop.f32.mrb[0].mxu0
      %v1336 = vadd.f32 0.0, %v1335
      %v1337 = vpop.f32.mrb[0].mxu0
      %1338 = vmatprep.mubr.f32.mxu0 0.0
      %1339 = vmatmul.mubr.f32.gmra.mrb[0].mxu0 %v574
      %v1340 = vpop.f32.mrb[0].mxu0
      %v1341 = vadd.f32 0.0, %v1340
      %v1342 = vpop.f32.mrb[0].mxu0
      %1343 = vmatprep.mubr.f32.mxu0 0.0
      %1344 = vmatmul.mubr.f32.gmra.mrb[0].mxu0 %v576
      %v1345 = vpop.f32.mrb[0].mxu0
      %v1346 = vadd.f32 0.0, %v1345
      %v1347 = vpop.f32.mrb[0].mxu0
      %1348 = vmatprep.mubr.f32.mxu0 0.0
      %1349 = vmatmul.mubr.f32.gmra.mrb[0].mxu0 %v578
      %v1350 = vpop.f32.mrb[0].mxu0
      %v1351 = vadd.f32 0.0, %v1350
      %v1352 = vpop.f32.mrb[0].mxu0
      %1353 = vmatprep.mubr.f32.mxu0 0.0
      %1354 = vmatmul.mubr.f32.gmra.mrb[0].mxu0 %v580
      %v1355 = vpop.f32.mrb[0].mxu0
      %v1356 = vadd.f32 0.0, %v1355
      %v1357 = vpop.f32.mrb[0].mxu0
      %1358 = vmatprep.mubr.f32.mxu0 0.0
      %1359 = vmatmul.mubr.f32.gmra.mrb[0].mxu0 %v582
      %v1360 = vpop.f32.mrb[0].mxu0
      %v1361 = vadd.f32 0.0, %v1360
      %v1362 = vpop.f32.mrb[0].mxu0
      %1363 = vmatprep.mubr.f32.mxu0 0.0
      %1364 = vmatmul.mubr.f32.gmra.mrb[0].mxu0 %v584
      %v1365 = vpop.f32.mrb[0].mxu0
      %v1366 = vadd.f32 0.0, %v1365
      %v1367 = vpop.f32.mrb[0].mxu0
      %1368 = vmatprep.mubr.f32.mxu0 0.0
      %1369 = vmatmul.mubr.f32.gmra.mrb[0].mxu0 %v586
      %v1370 = vpop.f32.mrb[0].mxu0
      %v1371 = vadd.f32 0.0, %v1370
      %v1372 = vpop.f32.mrb[0].mxu0
      %1373 = vmatprep.mubr.f32.mxu0 0.0
      %1374 = vmatmul.mubr.f32.gmra.mrb[0].mxu0 %v588
      %v1375 = vpop.f32.mrb[0].mxu0
      %v1376 = vadd.f32 0.0, %v1375
      %v1377 = vpop.f32.mrb[0].mxu0
      %1378 = vmatprep.mubr.f32.mxu0 0.0
      %1379 = vmatmul.mubr.f32.gmra.mrb[0].mxu0 %v590
      %v1380 = vpop.f32.mrb[0].mxu0
      %v1381 = vadd.f32 0.0, %v1380
      %v1382 = vpop.f32.mrb[0].mxu0
      %1383 = vmatprep.mubr.f32.mxu0 0.0
      %1384 = vmatmul.mubr.f32.gmra.mrb[0].mxu0 %v592
      %v1385 = vpop.f32.mrb[0].mxu0
      %v1386 = vadd.f32 0.0, %v1385
      %v1387 = vpop.f32.mrb[0].mxu0
      %1388 = vmatprep.mubr.f32.mxu0 0.0
      %1389 = vmatmul.mubr.f32.gmra.mrb[0].mxu0 %v594
      %v1390 = vpop.f32.mrb[0].mxu0
      %v1391 = vadd.f32 0.0, %v1390
      %v1392 = vpop.f32.mrb[0].mxu0
      %1393 = vmatprep.mubr.f32.mxu0 0.0
      %1394 = vmatmul.mubr.f32.gmra.mrb[0].mxu0 %v596
      %v1395 = vpop.f32.mrb[0].mxu0
      %v1396 = vadd.f32 0.0, %v1395
      %v1397 = vpop.f32.mrb[0].mxu0
      %1398 = vmatprep.mubr.f32.mxu0 0.0
      %1399 = vmatmul.mubr.f32.gmra.mrb[0].mxu0 %v598
      %v1400 = vpop.f32.mrb[0].mxu0
      %v1401 = vadd.f32 0.0, %v1400
      %v1402 = vpop.f32.mrb[0].mxu0
      %1403 = vmatprep.mubr.f32.mxu0 0.0
      %1404 = vmatmul.mubr.f32.gmra.mrb[0].mxu0 %v600
      %v1405 = vpop.f32.mrb[0].mxu0
      %v1406 = vadd.f32 0.0, %v1405
      %v1407 = vpop.f32.mrb[0].mxu0
      %1408 = vmatprep.mubr.f32.mxu0 0.0
      %1409 = vmatmul.mubr.f32.gmra.mrb[0].mxu0 %v602
      %v1410 = vpop.f32.mrb[0].mxu0
      %v1411 = vadd.f32 0.0, %v1410
      %v1412 = vpop.f32.mrb[0].mxu0
      %1413 = vdwg.mxu0
      %v1414 = vmax.f32 %v735, %v737
      %1415 = vmax.xlane.f32.xlu0 %v1414
      %v1416 = vpop.xlane.xlu0 %1415
      %v1417 = vmax.f32 %v741, %v743
      %1418 = vmax.xlane.f32.xlu0 %v1417
      %v1419 = vpop.xlane.xlu0 %1418
      %v1420 = vmax.f32 %v747, %v749
      %1421 = vmax.xlane.f32.xlu0 %v1420
      %v1422 = vpop.xlane.xlu0 %1421
      %v1423 = vmax.f32 %v753, %v755
      %1424 = vmax.xlane.f32.xlu0 %v1423
      %v1425 = vpop.xlane.xlu0 %1424
      %v1426 = vmax.f32 %v759, %v761
      %1427 = vmax.xlane.f32.xlu0 %v1426
      %v1428 = vpop.xlane.xlu0 %1427
      %v1429 = vmax.f32 %v765, %v767
      %1430 = vmax.xlane.f32.xlu0 %v1429
      %v1431 = vpop.xlane.xlu0 %1430
      %v1432 = vmax.f32 %v771, %v773
      %1433 = vmax.xlane.f32.xlu0 %v1432
      %v1434 = vpop.xlane.xlu0 %1433
      %v1435 = vmax.f32 %v777, %v779
      %1436 = vmax.xlane.f32.xlu0 %v1435
      %v1437 = vpop.xlane.xlu0 %1436
      %v1438 = vmax.f32 %v783, %v785
      %1439 = vmax.xlane.f32.xlu0 %v1438
      %v1440 = vpop.xlane.xlu0 %1439
      %v1441 = vmax.f32 %v789, %v791
      %1442 = vmax.xlane.f32.xlu0 %v1441
      %v1443 = vpop.xlane.xlu0 %1442
      %v1444 = vmax.f32 %v795, %v797
      %1445 = vmax.xlane.f32.xlu0 %v1444
      %v1446 = vpop.xlane.xlu0 %1445
      %v1447 = vmax.f32 %v801, %v803
      %1448 = vmax.xlane.f32.xlu0 %v1447
      %v1449 = vpop.xlane.xlu0 %1448
      %v1450 = vmax.f32 %v807, %v809
      %1451 = vmax.xlane.f32.xlu0 %v1450
      %v1452 = vpop.xlane.xlu0 %1451
      %v1453 = vmax.f32 %v813, %v815
      %1454 = vmax.xlane.f32.xlu0 %v1453
      %v1455 = vpop.xlane.xlu0 %1454
      %v1456 = vmax.f32 %v819, %v821
      %1457 = vmax.xlane.f32.xlu0 %v1456
      %v1458 = vpop.xlane.xlu0 %1457
      %v1459 = vmax.f32 %v825, %v827
      %1460 = vmax.xlane.f32.xlu0 %v1459
      %v1461 = vpop.xlane.xlu0 %1460
      %v1462 = vmax.f32 %v831, %v833
      %1463 = vmax.xlane.f32.xlu0 %v1462
      %v1464 = vpop.xlane.xlu0 %1463
      %v1465 = vmax.f32 %v837, %v839
      %1466 = vmax.xlane.f32.xlu0 %v1465
      %v1467 = vpop.xlane.xlu0 %1466
      %v1468 = vmax.f32 %v843, %v845
      %1469 = vmax.xlane.f32.xlu0 %v1468
      %v1470 = vpop.xlane.xlu0 %1469
      %v1471 = vmax.f32 %v849, %v851
      %1472 = vmax.xlane.f32.xlu0 %v1471
      %v1473 = vpop.xlane.xlu0 %1472
      %v1474 = vmax.f32 %v855, %v857
      %1475 = vmax.xlane.f32.xlu0 %v1474
      %v1476 = vpop.xlane.xlu0 %1475
      %v1477 = vmax.f32 %v861, %v863
      %1478 = vmax.xlane.f32.xlu0 %v1477
      %v1479 = vpop.xlane.xlu0 %1478
      %v1480 = vmax.f32 %v867, %v869
      %1481 = vmax.xlane.f32.xlu0 %v1480
      %v1482 = vpop.xlane.xlu0 %1481
      %v1483 = vmax.f32 %v873, %v875
      %1484 = vmax.xlane.f32.xlu0 %v1483
      %v1485 = vpop.xlane.xlu0 %1484
      %v1486 = vmax.f32 %v879, %v881
      %1487 = vmax.xlane.f32.xlu0 %v1486
      %v1488 = vpop.xlane.xlu0 %1487
      %v1489 = vmax.f32 %v885, %v887
      %1490 = vmax.xlane.f32.xlu0 %v1489
      %v1491 = vpop.xlane.xlu0 %1490
      %v1492 = vmax.f32 %v891, %v893
      %1493 = vmax.xlane.f32.xlu0 %v1492
      %v1494 = vpop.xlane.xlu0 %1493
      %v1495 = vmax.f32 %v897, %v899
      %1496 = vmax.xlane.f32.xlu0 %v1495
      %v1497 = vpop.xlane.xlu0 %1496
      %v1498 = vmax.f32 %v903, %v905
      %1499 = vmax.xlane.f32.xlu0 %v1498
      %v1500 = vpop.xlane.xlu0 %1499
      %v1501 = vmax.f32 %v909, %v911
      %1502 = vmax.xlane.f32.xlu0 %v1501
      %v1503 = vpop.xlane.xlu0 %1502
      %v1504 = vmax.f32 %v915, %v917
      %1505 = vmax.xlane.f32.xlu0 %v1504
      %v1506 = vpop.xlane.xlu0 %1505
      %v1507 = vmax.f32 %v921, %v923
      %1508 = vmax.xlane.f32.xlu0 %v1507
      %v1509 = vpop.xlane.xlu0 %1508
      %vm1510 = vcmask 523264
      %v1511 = vsel %vm1510, %v1016, -inf
      %1512 = vmax.xlane.f32.xlu0 %v1511
      %v1513 = vpop.xlane.xlu0 %1512
      %v1514 = vsel %vm1510, %v1021, -inf
      %1515 = vmax.xlane.f32.xlu0 %v1514
      %v1516 = vpop.xlane.xlu0 %1515
      %v1517 = vsel %vm1510, %v1026, -inf
      %1518 = vmax.xlane.f32.xlu0 %v1517
      %v1519 = vpop.xlane.xlu0 %1518
      %v1520 = vsel %vm1510, %v1031, -inf
      %1521 = vmax.xlane.f32.xlu0 %v1520
      %v1522 = vpop.xlane.xlu0 %1521
      %v1523 = vsel %vm1510, %v1036, -inf
      %1524 = vmax.xlane.f32.xlu0 %v1523
      %v1525 = vpop.xlane.xlu0 %1524
      %v1526 = vsel %vm1510, %v1041, -inf
      %1527 = vmax.xlane.f32.xlu0 %v1526
      %v1528 = vpop.xlane.xlu0 %1527
      %v1529 = vsel %vm1510, %v1046, -inf
      %1530 = vmax.xlane.f32.xlu0 %v1529
      %v1531 = vpop.xlane.xlu0 %1530
      %v1532 = vsel %vm1510, %v1051, -inf
      %1533 = vmax.xlane.f32.xlu0 %v1532
      %v1534 = vpop.xlane.xlu0 %1533
      %v1535 = vsel %vm1510, %v1056, -inf
      %1536 = vmax.xlane.f32.xlu0 %v1535
      %v1537 = vpop.xlane.xlu0 %1536
      %v1538 = vsel %vm1510, %v1061, -inf
      %1539 = vmax.xlane.f32.xlu0 %v1538
      %v1540 = vpop.xlane.xlu0 %1539
      %v1541 = vsel %vm1510, %v1066, -inf
      %1542 = vmax.xlane.f32.xlu0 %v1541
      %v1543 = vpop.xlane.xlu0 %1542
      %v1544 = vsel %vm1510, %v1071, -inf
      %1545 = vmax.xlane.f32.xlu0 %v1544
      %v1546 = vpop.xlane.xlu0 %1545
      %v1547 = vsel %vm1510, %v1076, -inf
      %1548 = vmax.xlane.f32.xlu0 %v1547
      %v1549 = vpop.xlane.xlu0 %1548
      %v1550 = vsel %vm1510, %v1081, -inf
      %1551 = vmax.xlane.f32.xlu0 %v1550
      %v1552 = vpop.xlane.xlu0 %1551
      %v1553 = vsel %vm1510, %v1086, -inf
      %1554 = vmax.xlane.f32.xlu0 %v1553
      %v1555 = vpop.xlane.xlu0 %1554
      %v1556 = vsel %vm1510, %v1091, -inf
      %1557 = vmax.xlane.f32.xlu0 %v1556
      %v1558 = vpop.xlane.xlu0 %1557
      %v1559 = vsel %vm1510, %v1096, -inf
      %1560 = vmax.xlane.f32.xlu0 %v1559
      %v1561 = vpop.xlane.xlu0 %1560
      %v1562 = vsel %vm1510, %v1101, -inf
      %1563 = vmax.xlane.f32.xlu0 %v1562
      %v1564 = vpop.xlane.xlu0 %1563
      %v1565 = vsel %vm1510, %v1106, -inf
      %1566 = vmax.xlane.f32.xlu0 %v1565
      %v1567 = vpop.xlane.xlu0 %1566
      %v1568 = vsel %vm1510, %v1111, -inf
      %1569 = vmax.xlane.f32.xlu0 %v1568
      %v1570 = vpop.xlane.xlu0 %1569
      %v1571 = vsel %vm1510, %v1116, -inf
      %1572 = vmax.xlane.f32.xlu0 %v1571
      %v1573 = vpop.xlane.xlu0 %1572
      %v1574 = vsel %vm1510, %v1121, -inf
      %1575 = vmax.xlane.f32.xlu0 %v1574
      %v1576 = vpop.xlane.xlu0 %1575
      %v1577 = vsel %vm1510, %v1126, -inf
      %1578 = vmax.xlane.f32.xlu0 %v1577
      %v1579 = vpop.xlane.xlu0 %1578
      %v1580 = vsel %vm1510, %v1131, -inf
      %1581 = vmax.xlane.f32.xlu0 %v1580
      %v1582 = vpop.xlane.xlu0 %1581
      %v1583 = vsel %vm1510, %v1136, -inf
      %1584 = vmax.xlane.f32.xlu0 %v1583
      %v1585 = vpop.xlane.xlu0 %1584
      %v1586 = vsel %vm1510, %v1141, -inf
      %1587 = vmax.xlane.f32.xlu0 %v1586
      %v1588 = vpop.xlane.xlu0 %1587
      %v1589 = vsel %vm1510, %v1146, -inf
      %1590 = vmax.xlane.f32.xlu0 %v1589
      %v1591 = vpop.xlane.xlu0 %1590
      %v1592 = vsel %vm1510, %v1151, -inf
      %1593 = vmax.xlane.f32.xlu0 %v1592
      %v1594 = vpop.xlane.xlu0 %1593
      %v1595 = vsel %vm1510, %v1156, -inf
      %1596 = vmax.xlane.f32.xlu0 %v1595
      %v1597 = vpop.xlane.xlu0 %1596
      %v1598 = vsel %vm1510, %v1161, -inf
      %1599 = vmax.xlane.f32.xlu0 %v1598
      %v1600 = vpop.xlane.xlu0 %1599
      %v1601 = vsel %vm1510, %v1166, -inf
      %1602 = vmax.xlane.f32.xlu0 %v1601
      %v1603 = vpop.xlane.xlu0 %1602
      %v1604 = vsel %vm1510, %v1171, -inf
      %1605 = vmax.xlane.f32.xlu0 %v1604
      %v1606 = vpop.xlane.xlu0 %1605
      %v1607 = vmax.f32 %v1416, %v1513
      %v1608 = vmax.f32 %v1419, %v1516
      %v1609 = vmax.f32 %v1422, %v1519
      %v1610 = vmax.f32 %v1425, %v1522
      %v1611 = vmax.f32 %v1428, %v1525
      %v1612 = vmax.f32 %v1431, %v1528
      %v1613 = vmax.f32 %v1434, %v1531
      %v1614 = vmax.f32 %v1437, %v1534
      %v1615 = vmax.f32 %v1440, %v1537
      %v1616 = vmax.f32 %v1443, %v1540
      %v1617 = vmax.f32 %v1446, %v1543
      %v1618 = vmax.f32 %v1449, %v1546
      %v1619 = vmax.f32 %v1452, %v1549
      %v1620 = vmax.f32 %v1455, %v1552
      %v1621 = vmax.f32 %v1458, %v1555
      %v1622 = vmax.f32 %v1461, %v1558
      %v1623 = vmax.f32 %v1464, %v1561
      %v1624 = vmax.f32 %v1467, %v1564
      %v1625 = vmax.f32 %v1470, %v1567
      %v1626 = vmax.f32 %v1473, %v1570
      %v1627 = vmax.f32 %v1476, %v1573
      %v1628 = vmax.f32 %v1479, %v1576
      %v1629 = vmax.f32 %v1482, %v1579
      %v1630 = vmax.f32 %v1485, %v1582
      %v1631 = vmax.f32 %v1488, %v1585
      %v1632 = vmax.f32 %v1491, %v1588
      %v1633 = vmax.f32 %v1494, %v1591
      %v1634 = vmax.f32 %v1497, %v1594
      %v1635 = vmax.f32 %v1500, %v1597
      %v1636 = vmax.f32 %v1503, %v1600
      %v1637 = vmax.f32 %v1506, %v1603
      %v1638 = vmax.f32 %v1509, %v1606
      %vm1639 = vcmask 293888
      %v1640 = vsel %vm1639, %v1256, -inf
      %1641 = vmax.xlane.f32.xlu0 %v1640
      %v1642 = vpop.xlane.xlu0 %1641
      %v1643 = vsel %vm1639, %v1261, -inf
      %1644 = vmax.xlane.f32.xlu0 %v1643
      %v1645 = vpop.xlane.xlu0 %1644
      %v1646 = vsel %vm1639, %v1266, -inf
      %1647 = vmax.xlane.f32.xlu0 %v1646
      %v1648 = vpop.xlane.xlu0 %1647
      %v1649 = vsel %vm1639, %v1271, -inf
      %1650 = vmax.xlane.f32.xlu0 %v1649
      %v1651 = vpop.xlane.xlu0 %1650
      %v1652 = vsel %vm1639, %v1276, -inf
      %1653 = vmax.xlane.f32.xlu0 %v1652
      %v1654 = vpop.xlane.xlu0 %1653
      %v1655 = vsel %vm1639, %v1281, -inf
      %1656 = vmax.xlane.f32.xlu0 %v1655
      %v1657 = vpop.xlane.xlu0 %1656
      %v1658 = vsel %vm1639, %v1286, -inf
      %1659 = vmax.xlane.f32.xlu0 %v1658
      %v1660 = vpop.xlane.xlu0 %1659
      %v1661 = vsel %vm1639, %v1291, -inf
      %1662 = vmax.xlane.f32.xlu0 %v1661
      %v1663 = vpop.xlane.xlu0 %1662
      %v1664 = vsel %vm1639, %v1296, -inf
      %1665 = vmax.xlane.f32.xlu0 %v1664
      %v1666 = vpop.xlane.xlu0 %1665
      %v1667 = vsel %vm1639, %v1301, -inf
      %1668 = vmax.xlane.f32.xlu0 %v1667
      %v1669 = vpop.xlane.xlu0 %1668
      %v1670 = vsel %vm1639, %v1306, -inf
      %1671 = vmax.xlane.f32.xlu0 %v1670
      %v1672 = vpop.xlane.xlu0 %1671
      %v1673 = vsel %vm1639, %v1311, -inf
      %1674 = vmax.xlane.f32.xlu0 %v1673
      %v1675 = vpop.xlane.xlu0 %1674
      %v1676 = vsel %vm1639, %v1316, -inf
      %1677 = vmax.xlane.f32.xlu0 %v1676
      %v1678 = vpop.xlane.xlu0 %1677
      %v1679 = vsel %vm1639, %v1321, -inf
      %1680 = vmax.xlane.f32.xlu0 %v1679
      %v1681 = vpop.xlane.xlu0 %1680
      %v1682 = vsel %vm1639, %v1326, -inf
      %1683 = vmax.xlane.f32.xlu0 %v1682
      %v1684 = vpop.xlane.xlu0 %1683
      %v1685 = vsel %vm1639, %v1331, -inf
      %1686 = vmax.xlane.f32.xlu0 %v1685
      %v1687 = vpop.xlane.xlu0 %1686
      %v1688 = vsel %vm1639, %v1336, -inf
      %1689 = vmax.xlane.f32.xlu0 %v1688
      %v1690 = vpop.xlane.xlu0 %1689
      %v1691 = vsel %vm1639, %v1341, -inf
      %1692 = vmax.xlane.f32.xlu0 %v1691
      %v1693 = vpop.xlane.xlu0 %1692
      %v1694 = vsel %vm1639, %v1346, -inf
      %1695 = vmax.xlane.f32.xlu0 %v1694
      %v1696 = vpop.xlane.xlu0 %1695
      %v1697 = vsel %vm1639, %v1351, -inf
      %1698 = vmax.xlane.f32.xlu0 %v1697
      %v1699 = vpop.xlane.xlu0 %1698
      %v1700 = vsel %vm1639, %v1356, -inf
      %1701 = vmax.xlane.f32.xlu0 %v1700
      %v1702 = vpop.xlane.xlu0 %1701
      %v1703 = vsel %vm1639, %v1361, -inf
      %1704 = vmax.xlane.f32.xlu0 %v1703
      %v1705 = vpop.xlane.xlu0 %1704
      %v1706 = vsel %vm1639, %v1366, -inf
      %1707 = vmax.xlane.f32.xlu0 %v1706
      %v1708 = vpop.xlane.xlu0 %1707
      %v1709 = vsel %vm1639, %v1371, -inf
      %1710 = vmax.xlane.f32.xlu0 %v1709
      %v1711 = vpop.xlane.xlu0 %1710
      %v1712 = vsel %vm1639, %v1376, -inf
      %1713 = vmax.xlane.f32.xlu0 %v1712
      %v1714 = vpop.xlane.xlu0 %1713
      %v1715 = vsel %vm1639, %v1381, -inf
      %1716 = vmax.xlane.f32.xlu0 %v1715
      %v1717 = vpop.xlane.xlu0 %1716
      %v1718 = vsel %vm1639, %v1386, -inf
      %1719 = vmax.xlane.f32.xlu0 %v1718
      %v1720 = vpop.xlane.xlu0 %1719
      %v1721 = vsel %vm1639, %v1391, -inf
      %1722 = vmax.xlane.f32.xlu0 %v1721
      %v1723 = vpop.xlane.xlu0 %1722
      %v1724 = vsel %vm1639, %v1396, -inf
      %1725 = vmax.xlane.f32.xlu0 %v1724
      %v1726 = vpop.xlane.xlu0 %1725
      %v1727 = vsel %vm1639, %v1401, -inf
      %1728 = vmax.xlane.f32.xlu0 %v1727
      %v1729 = vpop.xlane.xlu0 %1728
      %v1730 = vsel %vm1639, %v1406, -inf
      %1731 = vmax.xlane.f32.xlu0 %v1730
      %v1732 = vpop.xlane.xlu0 %1731
      %v1733 = vsel %vm1639, %v1411, -inf
      %1734 = vmax.xlane.f32.xlu0 %v1733
      %v1735 = vpop.xlane.xlu0 %1734
      %v1736 = vmax.f32 %v1607, %v1642
      %v1737 = vmax.f32 %v1608, %v1645
      %v1738 = vmax.f32 %v1609, %v1648
      %v1739 = vmax.f32 %v1610, %v1651
      %v1740 = vmax.f32 %v1611, %v1654
      %v1741 = vmax.f32 %v1612, %v1657
      %v1742 = vmax.f32 %v1613, %v1660
      %v1743 = vmax.f32 %v1614, %v1663
      %v1744 = vmax.f32 %v1615, %v1666
      %v1745 = vmax.f32 %v1616, %v1669
      %v1746 = vmax.f32 %v1617, %v1672
      %v1747 = vmax.f32 %v1618, %v1675
      %v1748 = vmax.f32 %v1619, %v1678
      %v1749 = vmax.f32 %v1620, %v1681
      %v1750 = vmax.f32 %v1621, %v1684
      %v1751 = vmax.f32 %v1622, %v1687
      %v1752 = vmax.f32 %v1623, %v1690
      %v1753 = vmax.f32 %v1624, %v1693
      %v1754 = vmax.f32 %v1625, %v1696
      %v1755 = vmax.f32 %v1626, %v1699
      %v1756 = vmax.f32 %v1627, %v1702
      %v1757 = vmax.f32 %v1628, %v1705
      %v1758 = vmax.f32 %v1629, %v1708
      %v1759 = vmax.f32 %v1630, %v1711
      %v1760 = vmax.f32 %v1631, %v1714
      %v1761 = vmax.f32 %v1632, %v1717
      %v1762 = vmax.f32 %v1633, %v1720
      %v1763 = vmax.f32 %v1634, %v1723
      %v1764 = vmax.f32 %v1635, %v1726
      %v1765 = vmax.f32 %v1636, %v1729
      %v1766 = vmax.f32 %v1637, %v1732
      %v1767 = vmax.f32 %v1638, %v1735
      %v1768 = vsub.f32 %v735, %v1736
      %v1769 = vsub.f32 %v737, %v1736
      %v1770 = vsub.f32 %v741, %v1737
      %v1771 = vsub.f32 %v743, %v1737
      %v1772 = vsub.f32 %v747, %v1738
      %v1773 = vsub.f32 %v749, %v1738
      %v1774 = vsub.f32 %v753, %v1739
      %v1775 = vsub.f32 %v755, %v1739
      %v1776 = vsub.f32 %v759, %v1740
      %v1777 = vsub.f32 %v761, %v1740
      %v1778 = vsub.f32 %v765, %v1741
      %v1779 = vsub.f32 %v767, %v1741
      %v1780 = vsub.f32 %v771, %v1742
      %v1781 = vsub.f32 %v773, %v1742
      %v1782 = vsub.f32 %v777, %v1743
      %v1783 = vsub.f32 %v779, %v1743
      %v1784 = vsub.f32 %v783, %v1744
      %v1785 = vsub.f32 %v785, %v1744
      %v1786 = vsub.f32 %v789, %v1745
      %v1787 = vsub.f32 %v791, %v1745
      %v1788 = vsub.f32 %v795, %v1746
      %v1789 = vsub.f32 %v797, %v1746
      %v1790 = vsub.f32 %v801, %v1747
      %v1791 = vsub.f32 %v803, %v1747
      %v1792 = vsub.f32 %v807, %v1748
      %v1793 = vsub.f32 %v809, %v1748
      %v1794 = vsub.f32 %v813, %v1749
      %v1795 = vsub.f32 %v815, %v1749
      %v1796 = vsub.f32 %v819, %v1750
      %v1797 = vsub.f32 %v821, %v1750
      %v1798 = vsub.f32 %v825, %v1751
      %v1799 = vsub.f32 %v827, %v1751
      %v1800 = vsub.f32 %v831, %v1752
      %v1801 = vsub.f32 %v833, %v1752
      %v1802 = vsub.f32 %v837, %v1753
      %v1803 = vsub.f32 %v839, %v1753
      %v1804 = vsub.f32 %v843, %v1754
      %v1805 = vsub.f32 %v845, %v1754
      %v1806 = vsub.f32 %v849, %v1755
      %v1807 = vsub.f32 %v851, %v1755
      %v1808 = vsub.f32 %v855, %v1756
      %v1809 = vsub.f32 %v857, %v1756
      %v1810 = vsub.f32 %v861, %v1757
      %v1811 = vsub.f32 %v863, %v1757
      %v1812 = vsub.f32 %v867, %v1758
      %v1813 = vsub.f32 %v869, %v1758
      %v1814 = vsub.f32 %v873, %v1759
      %v1815 = vsub.f32 %v875, %v1759
      %v1816 = vsub.f32 %v879, %v1760
      %v1817 = vsub.f32 %v881, %v1760
      %v1818 = vsub.f32 %v885, %v1761
      %v1819 = vsub.f32 %v887, %v1761
      %v1820 = vsub.f32 %v891, %v1762
      %v1821 = vsub.f32 %v893, %v1762
      %v1822 = vsub.f32 %v897, %v1763
      %v1823 = vsub.f32 %v899, %v1763
      %v1824 = vsub.f32 %v903, %v1764
      %v1825 = vsub.f32 %v905, %v1764
      %v1826 = vsub.f32 %v909, %v1765
      %v1827 = vsub.f32 %v911, %v1765
      %v1828 = vsub.f32 %v915, %v1766
      %v1829 = vsub.f32 %v917, %v1766
      %v1830 = vsub.f32 %v921, %v1767
      %v1831 = vsub.f32 %v923, %v1767
      %v1832 = vmul.f32 %v1768, 1.442695
      %v1833 = vpow.pop %v1832
      %v1834 = vmul.f32 %v1769, 1.442695
      %v1835 = vpow.pop %v1834
      %v1836 = vmul.f32 %v1770, 1.442695
      %v1837 = vpow.pop %v1836
      %v1838 = vmul.f32 %v1771, 1.442695
      %v1839 = vpow.pop %v1838
      %v1840 = vmul.f32 %v1772, 1.442695
      %v1841 = vpow.pop %v1840
      %v1842 = vmul.f32 %v1773, 1.442695
      %v1843 = vpow.pop %v1842
      %v1844 = vmul.f32 %v1774, 1.442695
      %v1845 = vpow.pop %v1844
      %v1846 = vmul.f32 %v1775, 1.442695
      %v1847 = vpow.pop %v1846
      %v1848 = vmul.f32 %v1776, 1.442695
      %v1849 = vpow.pop %v1848
      %v1850 = vmul.f32 %v1777, 1.442695
      %v1851 = vpow.pop %v1850
      %v1852 = vmul.f32 %v1778, 1.442695
      %v1853 = vpow.pop %v1852
      %v1854 = vmul.f32 %v1779, 1.442695
      %v1855 = vpow.pop %v1854
      %v1856 = vmul.f32 %v1780, 1.442695
      %v1857 = vpow.pop %v1856
      %v1858 = vmul.f32 %v1781, 1.442695
      %v1859 = vpow.pop %v1858
      %v1860 = vmul.f32 %v1782, 1.442695
      %v1861 = vpow.pop %v1860
      %v1862 = vmul.f32 %v1783, 1.442695
      %v1863 = vpow.pop %v1862
      %v1864 = vmul.f32 %v1784, 1.442695
      %v1865 = vpow.pop %v1864
      %v1866 = vmul.f32 %v1785, 1.442695
      %v1867 = vpow.pop %v1866
      %v1868 = vmul.f32 %v1786, 1.442695
      %v1869 = vpow.pop %v1868
      %v1870 = vmul.f32 %v1787, 1.442695
      %v1871 = vpow.pop %v1870
      %v1872 = vmul.f32 %v1788, 1.442695
      %v1873 = vpow.pop %v1872
      %v1874 = vmul.f32 %v1789, 1.442695
      %v1875 = vpow.pop %v1874
      %v1876 = vmul.f32 %v1790, 1.442695
      %v1877 = vpow.pop %v1876
      %v1878 = vmul.f32 %v1791, 1.442695
      %v1879 = vpow.pop %v1878
      %v1880 = vmul.f32 %v1792, 1.442695
      %v1881 = vpow.pop %v1880
      %v1882 = vmul.f32 %v1793, 1.442695
      %v1883 = vpow.pop %v1882
      %v1884 = vmul.f32 %v1794, 1.442695
      %v1885 = vpow.pop %v1884
      %v1886 = vmul.f32 %v1795, 1.442695
      %v1887 = vpow.pop %v1886
      %v1888 = vmul.f32 %v1796, 1.442695
      %v1889 = vpow.pop %v1888
      %v1890 = vmul.f32 %v1797, 1.442695
      %v1891 = vpow.pop %v1890
      %v1892 = vmul.f32 %v1798, 1.442695
      %v1893 = vpow.pop %v1892
      %v1894 = vmul.f32 %v1799, 1.442695
      %v1895 = vpow.pop %v1894
      %v1896 = vmul.f32 %v1800, 1.442695
      %v1897 = vpow.pop %v1896
      %v1898 = vmul.f32 %v1801, 1.442695
      %v1899 = vpow.pop %v1898
      %v1900 = vmul.f32 %v1802, 1.442695
      %v1901 = vpow.pop %v1900
      %v1902 = vmul.f32 %v1803, 1.442695
      %v1903 = vpow.pop %v1902
      %v1904 = vmul.f32 %v1804, 1.442695
      %v1905 = vpow.pop %v1904
      %v1906 = vmul.f32 %v1805, 1.442695
      %v1907 = vpow.pop %v1906
      %v1908 = vmul.f32 %v1806, 1.442695
      %v1909 = vpow.pop %v1908
      %v1910 = vmul.f32 %v1807, 1.442695
      %v1911 = vpow.pop %v1910
      %v1912 = vmul.f32 %v1808, 1.442695
      %v1913 = vpow.pop %v1912
      %v1914 = vmul.f32 %v1809, 1.442695
      %v1915 = vpow.pop %v1914
      %v1916 = vmul.f32 %v1810, 1.442695
      %v1917 = vpow.pop %v1916
      %v1918 = vmul.f32 %v1811, 1.442695
      %v1919 = vpow.pop %v1918
      %v1920 = vmul.f32 %v1812, 1.442695
      %v1921 = vpow.pop %v1920
      %v1922 = vmul.f32 %v1813, 1.442695
      %v1923 = vpow.pop %v1922
      %v1924 = vmul.f32 %v1814, 1.442695
      %v1925 = vpow.pop %v1924
      %v1926 = vmul.f32 %v1815, 1.442695
      %v1927 = vpow.pop %v1926
      %v1928 = vmul.f32 %v1816, 1.442695
      %v1929 = vpow.pop %v1928
      %v1930 = vmul.f32 %v1817, 1.442695
      %v1931 = vpow.pop %v1930
      %v1932 = vmul.f32 %v1818, 1.442695
      %v1933 = vpow.pop %v1932
      %v1934 = vmul.f32 %v1819, 1.442695
      %v1935 = vpow.pop %v1934
      %v1936 = vmul.f32 %v1820, 1.442695
      %v1937 = vpow.pop %v1936
      %v1938 = vmul.f32 %v1821, 1.442695
      %v1939 = vpow.pop %v1938
      %v1940 = vmul.f32 %v1822, 1.442695
      %v1941 = vpow.pop %v1940
      %v1942 = vmul.f32 %v1823, 1.442695
      %v1943 = vpow.pop %v1942
      %v1944 = vmul.f32 %v1824, 1.442695
      %v1945 = vpow.pop %v1944
      %v1946 = vmul.f32 %v1825, 1.442695
      %v1947 = vpow.pop %v1946
      %v1948 = vmul.f32 %v1826, 1.442695
      %v1949 = vpow.pop %v1948
      %v1950 = vmul.f32 %v1827, 1.442695
      %v1951 = vpow.pop %v1950
      %v1952 = vmul.f32 %v1828, 1.442695
      %v1953 = vpow.pop %v1952
      %v1954 = vmul.f32 %v1829, 1.442695
      %v1955 = vpow.pop %v1954
      %v1956 = vmul.f32 %v1830, 1.442695
      %v1957 = vpow.pop %v1956
      %v1958 = vmul.f32 %v1831, 1.442695
      %v1959 = vpow.pop %v1958
      %v1960 = vsub.f32 %v1016, %v1736
      %v1961 = vsub.f32 %v1021, %v1737
      %v1962 = vsub.f32 %v1026, %v1738
      %v1963 = vsub.f32 %v1031, %v1739
      %v1964 = vsub.f32 %v1036, %v1740
      %v1965 = vsub.f32 %v1041, %v1741
      %v1966 = vsub.f32 %v1046, %v1742
      %v1967 = vsub.f32 %v1051, %v1743
      %v1968 = vsub.f32 %v1056, %v1744
      %v1969 = vsub.f32 %v1061, %v1745
      %v1970 = vsub.f32 %v1066, %v1746
      %v1971 = vsub.f32 %v1071, %v1747
      %v1972 = vsub.f32 %v1076, %v1748
      %v1973 = vsub.f32 %v1081, %v1749
      %v1974 = vsub.f32 %v1086, %v1750
      %v1975 = vsub.f32 %v1091, %v1751
      %v1976 = vsub.f32 %v1096, %v1752
      %v1977 = vsub.f32 %v1101, %v1753
      %v1978 = vsub.f32 %v1106, %v1754
      %v1979 = vsub.f32 %v1111, %v1755
      %v1980 = vsub.f32 %v1116, %v1756
      %v1981 = vsub.f32 %v1121, %v1757
      %v1982 = vsub.f32 %v1126, %v1758
      %v1983 = vsub.f32 %v1131, %v1759
      %v1984 = vsub.f32 %v1136, %v1760
      %v1985 = vsub.f32 %v1141, %v1761
      %v1986 = vsub.f32 %v1146, %v1762
      %v1987 = vsub.f32 %v1151, %v1763
      %v1988 = vsub.f32 %v1156, %v1764
      %v1989 = vsub.f32 %v1161, %v1765
      %v1990 = vsub.f32 %v1166, %v1766
      %v1991 = vsub.f32 %v1171, %v1767
      %v1992 = vmul.f32 %v1960, 1.442695
      %v1993 = vpow.pop %v1992
      %v1994 = vmul.f32 %v1961, 1.442695
      %v1995 = vpow.pop %v1994
      %v1996 = vmul.f32 %v1962, 1.442695
      %v1997 = vpow.pop %v1996
      %v1998 = vmul.f32 %v1963, 1.442695
      %v1999 = vpow.pop %v1998
      %v2000 = vmul.f32 %v1964, 1.442695
      %v2001 = vpow.pop %v2000
      %v2002 = vmul.f32 %v1965, 1.442695
      %v2003 = vpow.pop %v2002
      %v2004 = vmul.f32 %v1966, 1.442695
      %v2005 = vpow.pop %v2004
      %v2006 = vmul.f32 %v1967, 1.442695
      %v2007 = vpow.pop %v2006
      %v2008 = vmul.f32 %v1968, 1.442695
      %v2009 = vpow.pop %v2008
      %v2010 = vmul.f32 %v1969, 1.442695
      %v2011 = vpow.pop %v2010
      %v2012 = vmul.f32 %v1970, 1.442695
      %v2013 = vpow.pop %v2012
      %v2014 = vmul.f32 %v1971, 1.442695
      %v2015 = vpow.pop %v2014
      %v2016 = vmul.f32 %v1972, 1.442695
      %v2017 = vpow.pop %v2016
      %v2018 = vmul.f32 %v1973, 1.442695
      %v2019 = vpow.pop %v2018
      %v2020 = vmul.f32 %v1974, 1.442695
      %v2021 = vpow.pop %v2020
      %v2022 = vmul.f32 %v1975, 1.442695
      %v2023 = vpow.pop %v2022
      %v2024 = vmul.f32 %v1976, 1.442695
      %v2025 = vpow.pop %v2024
      %v2026 = vmul.f32 %v1977, 1.442695
      %v2027 = vpow.pop %v2026
      %v2028 = vmul.f32 %v1978, 1.442695
      %v2029 = vpow.pop %v2028
      %v2030 = vmul.f32 %v1979, 1.442695
      %v2031 = vpow.pop %v2030
      %v2032 = vmul.f32 %v1980, 1.442695
      %v2033 = vpow.pop %v2032
      %v2034 = vmul.f32 %v1981, 1.442695
      %v2035 = vpow.pop %v2034
      %v2036 = vmul.f32 %v1982, 1.442695
      %v2037 = vpow.pop %v2036
      %v2038 = vmul.f32 %v1983, 1.442695
      %v2039 = vpow.pop %v2038
      %v2040 = vmul.f32 %v1984, 1.442695
      %v2041 = vpow.pop %v2040
      %v2042 = vmul.f32 %v1985, 1.442695
      %v2043 = vpow.pop %v2042
      %v2044 = vmul.f32 %v1986, 1.442695
      %v2045 = vpow.pop %v2044
      %v2046 = vmul.f32 %v1987, 1.442695
      %v2047 = vpow.pop %v2046
      %v2048 = vmul.f32 %v1988, 1.442695
      %v2049 = vpow.pop %v2048
      %v2050 = vmul.f32 %v1989, 1.442695
      %v2051 = vpow.pop %v2050
      %v2052 = vmul.f32 %v1990, 1.442695
      %v2053 = vpow.pop %v2052
      %v2054 = vmul.f32 %v1991, 1.442695
      %v2055 = vpow.pop %v2054
      %v2056 = vsub.f32 %v1256, %v1736
      %v2057 = vsub.f32 %v1261, %v1737
      %v2058 = vsub.f32 %v1266, %v1738
      %v2059 = vsub.f32 %v1271, %v1739
      %v2060 = vsub.f32 %v1276, %v1740
      %v2061 = vsub.f32 %v1281, %v1741
      %v2062 = vsub.f32 %v1286, %v1742
      %v2063 = vsub.f32 %v1291, %v1743
      %v2064 = vsub.f32 %v1296, %v1744
      %v2065 = vsub.f32 %v1301, %v1745
      %v2066 = vsub.f32 %v1306, %v1746
      %v2067 = vsub.f32 %v1311, %v1747
      %v2068 = vsub.f32 %v1316, %v1748
      %v2069 = vsub.f32 %v1321, %v1749
      %v2070 = vsub.f32 %v1326, %v1750
      %v2071 = vsub.f32 %v1331, %v1751
      %v2072 = vsub.f32 %v1336, %v1752
      %v2073 = vsub.f32 %v1341, %v1753
      %v2074 = vsub.f32 %v1346, %v1754
      %v2075 = vsub.f32 %v1351, %v1755
      %v2076 = vsub.f32 %v1356, %v1756
      %v2077 = vsub.f32 %v1361, %v1757
      %v2078 = vsub.f32 %v1366, %v1758
      %v2079 = vsub.f32 %v1371, %v1759
      %v2080 = vsub.f32 %v1376, %v1760
      %v2081 = vsub.f32 %v1381, %v1761
      %v2082 = vsub.f32 %v1386, %v1762
      %v2083 = vsub.f32 %v1391, %v1763
      %v2084 = vsub.f32 %v1396, %v1764
      %v2085 = vsub.f32 %v1401, %v1765
      %v2086 = vsub.f32 %v1406, %v1766
      %v2087 = vsub.f32 %v1411, %v1767
      %v2088 = vmul.f32 %v2056, 1.442695
      %v2089 = vpow.pop %v2088
      %v2090 = vmul.f32 %v2057, 1.442695
      %v2091 = vpow.pop %v2090
      %v2092 = vmul.f32 %v2058, 1.442695
      %v2093 = vpow.pop %v2092
      %v2094 = vmul.f32 %v2059, 1.442695
      %v2095 = vpow.pop %v2094
      %v2096 = vmul.f32 %v2060, 1.442695
      %v2097 = vpow.pop %v2096
      %v2098 = vmul.f32 %v2061, 1.442695
      %v2099 = vpow.pop %v2098
      %v2100 = vmul.f32 %v2062, 1.442695
      %v2101 = vpow.pop %v2100
      %v2102 = vmul.f32 %v2063, 1.442695
      %v2103 = vpow.pop %v2102
      %v2104 = vmul.f32 %v2064, 1.442695
      %v2105 = vpow.pop %v2104
      %v2106 = vmul.f32 %v2065, 1.442695
      %v2107 = vpow.pop %v2106
      %v2108 = vmul.f32 %v2066, 1.442695
      %v2109 = vpow.pop %v2108
      %v2110 = vmul.f32 %v2067, 1.442695
      %v2111 = vpow.pop %v2110
      %v2112 = vmul.f32 %v2068, 1.442695
      %v2113 = vpow.pop %v2112
      %v2114 = vmul.f32 %v2069, 1.442695
      %v2115 = vpow.pop %v2114
      %v2116 = vmul.f32 %v2070, 1.442695
      %v2117 = vpow.pop %v2116
      %v2118 = vmul.f32 %v2071, 1.442695
      %v2119 = vpow.pop %v2118
      %v2120 = vmul.f32 %v2072, 1.442695
      %v2121 = vpow.pop %v2120
      %v2122 = vmul.f32 %v2073, 1.442695
      %v2123 = vpow.pop %v2122
      %v2124 = vmul.f32 %v2074, 1.442695
      %v2125 = vpow.pop %v2124
      %v2126 = vmul.f32 %v2075, 1.442695
      %v2127 = vpow.pop %v2126
      %v2128 = vmul.f32 %v2076, 1.442695
      %v2129 = vpow.pop %v2128
      %v2130 = vmul.f32 %v2077, 1.442695
      %v2131 = vpow.pop %v2130
      %v2132 = vmul.f32 %v2078, 1.442695
      %v2133 = vpow.pop %v2132
      %v2134 = vmul.f32 %v2079, 1.442695
      %v2135 = vpow.pop %v2134
      %v2136 = vmul.f32 %v2080, 1.442695
      %v2137 = vpow.pop %v2136
      %v2138 = vmul.f32 %v2081, 1.442695
      %v2139 = vpow.pop %v2138
      %v2140 = vmul.f32 %v2082, 1.442695
      %v2141 = vpow.pop %v2140
      %v2142 = vmul.f32 %v2083, 1.442695
      %v2143 = vpow.pop %v2142
      %v2144 = vmul.f32 %v2084, 1.442695
      %v2145 = vpow.pop %v2144
      %v2146 = vmul.f32 %v2085, 1.442695
      %v2147 = vpow.pop %v2146
      %v2148 = vmul.f32 %v2086, 1.442695
      %v2149 = vpow.pop %v2148
      %v2150 = vmul.f32 %v2087, 1.442695
      %v2151 = vpow.pop %v2150
      %v2152 = vadd.f32 %v1833, %v1835
      %2153 = vadd.xlane.f32.xlu0 %v2152
      %v2154 = vpop.xlane.xlu0 %2153
      %v2155 = vadd.f32 %v1837, %v1839
      %2156 = vadd.xlane.f32.xlu0 %v2155
      %v2157 = vpop.xlane.xlu0 %2156
      %v2158 = vadd.f32 %v1841, %v1843
      %2159 = vadd.xlane.f32.xlu0 %v2158
      %v2160 = vpop.xlane.xlu0 %2159
      %v2161 = vadd.f32 %v1845, %v1847
      %2162 = vadd.xlane.f32.xlu0 %v2161
      %v2163 = vpop.xlane.xlu0 %2162
      %v2164 = vadd.f32 %v1849, %v1851
      %2165 = vadd.xlane.f32.xlu0 %v2164
      %v2166 = vpop.xlane.xlu0 %2165
      %v2167 = vadd.f32 %v1853, %v1855
      %2168 = vadd.xlane.f32.xlu0 %v2167
      %v2169 = vpop.xlane.xlu0 %2168
      %v2170 = vadd.f32 %v1857, %v1859
      %2171 = vadd.xlane.f32.xlu0 %v2170
      %v2172 = vpop.xlane.xlu0 %2171
      %v2173 = vadd.f32 %v1861, %v1863
      %2174 = vadd.xlane.f32.xlu0 %v2173
      %v2175 = vpop.xlane.xlu0 %2174
      %v2176 = vadd.f32 %v1865, %v1867
      %2177 = vadd.xlane.f32.xlu0 %v2176
      %v2178 = vpop.xlane.xlu0 %2177
      %v2179 = vadd.f32 %v1869, %v1871
      %2180 = vadd.xlane.f32.xlu0 %v2179
      %v2181 = vpop.xlane.xlu0 %2180
      %v2182 = vadd.f32 %v1873, %v1875
      %2183 = vadd.xlane.f32.xlu0 %v2182
      %v2184 = vpop.xlane.xlu0 %2183
      %v2185 = vadd.f32 %v1877, %v1879
      %2186 = vadd.xlane.f32.xlu0 %v2185
      %v2187 = vpop.xlane.xlu0 %2186
      %v2188 = vadd.f32 %v1881, %v1883
      %2189 = vadd.xlane.f32.xlu0 %v2188
      %v2190 = vpop.xlane.xlu0 %2189
      %v2191 = vadd.f32 %v1885, %v1887
      %2192 = vadd.xlane.f32.xlu0 %v2191
      %v2193 = vpop.xlane.xlu0 %2192
      %v2194 = vadd.f32 %v1889, %v1891
      %2195 = vadd.xlane.f32.xlu0 %v2194
      %v2196 = vpop.xlane.xlu0 %2195
      %v2197 = vadd.f32 %v1893, %v1895
      %2198 = vadd.xlane.f32.xlu0 %v2197
      %v2199 = vpop.xlane.xlu0 %2198
      %v2200 = vadd.f32 %v1897, %v1899
      %2201 = vadd.xlane.f32.xlu0 %v2200
      %v2202 = vpop.xlane.xlu0 %2201
      %v2203 = vadd.f32 %v1901, %v1903
      %2204 = vadd.xlane.f32.xlu0 %v2203
      %v2205 = vpop.xlane.xlu0 %2204
      %v2206 = vadd.f32 %v1905, %v1907
      %2207 = vadd.xlane.f32.xlu0 %v2206
      %v2208 = vpop.xlane.xlu0 %2207
      %v2209 = vadd.f32 %v1909, %v1911
      %2210 = vadd.xlane.f32.xlu0 %v2209
      %v2211 = vpop.xlane.xlu0 %2210
      %v2212 = vadd.f32 %v1913, %v1915
      %2213 = vadd.xlane.f32.xlu0 %v2212
      %v2214 = vpop.xlane.xlu0 %2213
      %v2215 = vadd.f32 %v1917, %v1919
      %2216 = vadd.xlane.f32.xlu0 %v2215
      %v2217 = vpop.xlane.xlu0 %2216
      %v2218 = vadd.f32 %v1921, %v1923
      %2219 = vadd.xlane.f32.xlu0 %v2218
      %v2220 = vpop.xlane.xlu0 %2219
      %v2221 = vadd.f32 %v1925, %v1927
      %2222 = vadd.xlane.f32.xlu0 %v2221
      %v2223 = vpop.xlane.xlu0 %2222
      %v2224 = vadd.f32 %v1929, %v1931
      %2225 = vadd.xlane.f32.xlu0 %v2224
      %v2226 = vpop.xlane.xlu0 %2225
      %v2227 = vadd.f32 %v1933, %v1935
      %2228 = vadd.xlane.f32.xlu0 %v2227
      %v2229 = vpop.xlane.xlu0 %2228
      %v2230 = vadd.f32 %v1937, %v1939
      %2231 = vadd.xlane.f32.xlu0 %v2230
      %v2232 = vpop.xlane.xlu0 %2231
      %v2233 = vadd.f32 %v1941, %v1943
      %2234 = vadd.xlane.f32.xlu0 %v2233
      %v2235 = vpop.xlane.xlu0 %2234
      %v2236 = vadd.f32 %v1945, %v1947
      %2237 = vadd.xlane.f32.xlu0 %v2236
      %v2238 = vpop.xlane.xlu0 %2237
      %v2239 = vadd.f32 %v1949, %v1951
      %2240 = vadd.xlane.f32.xlu0 %v2239
      %v2241 = vpop.xlane.xlu0 %2240
      %v2242 = vadd.f32 %v1953, %v1955
      %2243 = vadd.xlane.f32.xlu0 %v2242
      %v2244 = vpop.xlane.xlu0 %2243
      %v2245 = vadd.f32 %v1957, %v1959
      %2246 = vadd.xlane.f32.xlu0 %v2245
      %v2247 = vpop.xlane.xlu0 %2246
      %v2248 = vsel %vm1510, %v1993, 0.0
      %2249 = vadd.xlane.f32.xlu0 %v2248
      %v2250 = vpop.xlane.xlu0 %2249
      %v2251 = vsel %vm1510, %v1995, 0.0
      %2252 = vadd.xlane.f32.xlu0 %v2251
      %v2253 = vpop.xlane.xlu0 %2252
      %v2254 = vsel %vm1510, %v1997, 0.0
      %2255 = vadd.xlane.f32.xlu0 %v2254
      %v2256 = vpop.xlane.xlu0 %2255
      %v2257 = vsel %vm1510, %v1999, 0.0
      %2258 = vadd.xlane.f32.xlu0 %v2257
      %v2259 = vpop.xlane.xlu0 %2258
      %v2260 = vsel %vm1510, %v2001, 0.0
      %2261 = vadd.xlane.f32.xlu0 %v2260
      %v2262 = vpop.xlane.xlu0 %2261
      %v2263 = vsel %vm1510, %v2003, 0.0
      %2264 = vadd.xlane.f32.xlu0 %v2263
      %v2265 = vpop.xlane.xlu0 %2264
      %v2266 = vsel %vm1510, %v2005, 0.0
      %2267 = vadd.xlane.f32.xlu0 %v2266
      %v2268 = vpop.xlane.xlu0 %2267
      %v2269 = vsel %vm1510, %v2007, 0.0
      %2270 = vadd.xlane.f32.xlu0 %v2269
      %v2271 = vpop.xlane.xlu0 %2270
      %v2272 = vsel %vm1510, %v2009, 0.0
      %2273 = vadd.xlane.f32.xlu0 %v2272
      %v2274 = vpop.xlane.xlu0 %2273
      %v2275 = vsel %vm1510, %v2011, 0.0
      %2276 = vadd.xlane.f32.xlu0 %v2275
      %v2277 = vpop.xlane.xlu0 %2276
      %v2278 = vsel %vm1510, %v2013, 0.0
      %2279 = vadd.xlane.f32.xlu0 %v2278
      %v2280 = vpop.xlane.xlu0 %2279
      %v2281 = vsel %vm1510, %v2015, 0.0
      %2282 = vadd.xlane.f32.xlu0 %v2281
      %v2283 = vpop.xlane.xlu0 %2282
      %v2284 = vsel %vm1510, %v2017, 0.0
      %2285 = vadd.xlane.f32.xlu0 %v2284
      %v2286 = vpop.xlane.xlu0 %2285
      %v2287 = vsel %vm1510, %v2019, 0.0
      %2288 = vadd.xlane.f32.xlu0 %v2287
      %v2289 = vpop.xlane.xlu0 %2288
      %v2290 = vsel %vm1510, %v2021, 0.0
      %2291 = vadd.xlane.f32.xlu0 %v2290
      %v2292 = vpop.xlane.xlu0 %2291
      %v2293 = vsel %vm1510, %v2023, 0.0
      %2294 = vadd.xlane.f32.xlu0 %v2293
      %v2295 = vpop.xlane.xlu0 %2294
      %v2296 = vsel %vm1510, %v2025, 0.0
      %2297 = vadd.xlane.f32.xlu0 %v2296
      %v2298 = vpop.xlane.xlu0 %2297
      %v2299 = vsel %vm1510, %v2027, 0.0
      %2300 = vadd.xlane.f32.xlu0 %v2299
      %v2301 = vpop.xlane.xlu0 %2300
      %v2302 = vsel %vm1510, %v2029, 0.0
      %2303 = vadd.xlane.f32.xlu0 %v2302
      %v2304 = vpop.xlane.xlu0 %2303
      %v2305 = vsel %vm1510, %v2031, 0.0
      %2306 = vadd.xlane.f32.xlu0 %v2305
      %v2307 = vpop.xlane.xlu0 %2306
      %v2308 = vsel %vm1510, %v2033, 0.0
      %2309 = vadd.xlane.f32.xlu0 %v2308
      %v2310 = vpop.xlane.xlu0 %2309
      %v2311 = vsel %vm1510, %v2035, 0.0
      %2312 = vadd.xlane.f32.xlu0 %v2311
      %v2313 = vpop.xlane.xlu0 %2312
      %v2314 = vsel %vm1510, %v2037, 0.0
      %2315 = vadd.xlane.f32.xlu0 %v2314
      %v2316 = vpop.xlane.xlu0 %2315
      %v2317 = vsel %vm1510, %v2039, 0.0
      %2318 = vadd.xlane.f32.xlu0 %v2317
      %v2319 = vpop.xlane.xlu0 %2318
      %v2320 = vsel %vm1510, %v2041, 0.0
      %2321 = vadd.xlane.f32.xlu0 %v2320
      %v2322 = vpop.xlane.xlu0 %2321
      %v2323 = vsel %vm1510, %v2043, 0.0
      %2324 = vadd.xlane.f32.xlu0 %v2323
      %v2325 = vpop.xlane.xlu0 %2324
      %v2326 = vsel %vm1510, %v2045, 0.0
      %2327 = vadd.xlane.f32.xlu0 %v2326
      %v2328 = vpop.xlane.xlu0 %2327
      %v2329 = vsel %vm1510, %v2047, 0.0
      %2330 = vadd.xlane.f32.xlu0 %v2329
      %v2331 = vpop.xlane.xlu0 %2330
      %v2332 = vsel %vm1510, %v2049, 0.0
      %2333 = vadd.xlane.f32.xlu0 %v2332
      %v2334 = vpop.xlane.xlu0 %2333
      %v2335 = vsel %vm1510, %v2051, 0.0
      %2336 = vadd.xlane.f32.xlu0 %v2335
      %v2337 = vpop.xlane.xlu0 %2336
      %v2338 = vsel %vm1510, %v2053, 0.0
      %2339 = vadd.xlane.f32.xlu0 %v2338
      %v2340 = vpop.xlane.xlu0 %2339
      %v2341 = vsel %vm1510, %v2055, 0.0
      %2342 = vadd.xlane.f32.xlu0 %v2341
      %v2343 = vpop.xlane.xlu0 %2342
      %v2344 = vadd.f32 %v2154, %v2250
      %v2345 = vadd.f32 %v2157, %v2253
      %v2346 = vadd.f32 %v2160, %v2256
      %v2347 = vadd.f32 %v2163, %v2259
      %v2348 = vadd.f32 %v2166, %v2262
      %v2349 = vadd.f32 %v2169, %v2265
      %v2350 = vadd.f32 %v2172, %v2268
      %v2351 = vadd.f32 %v2175, %v2271
      %v2352 = vadd.f32 %v2178, %v2274
      %v2353 = vadd.f32 %v2181, %v2277
      %v2354 = vadd.f32 %v2184, %v2280
      %v2355 = vadd.f32 %v2187, %v2283
      %v2356 = vadd.f32 %v2190, %v2286
      %v2357 = vadd.f32 %v2193, %v2289
      %v2358 = vadd.f32 %v2196, %v2292
      %v2359 = vadd.f32 %v2199, %v2295
      %v2360 = vadd.f32 %v2202, %v2298
      %v2361 = vadd.f32 %v2205, %v2301
      %v2362 = vadd.f32 %v2208, %v2304
      %v2363 = vadd.f32 %v2211, %v2307
      %v2364 = vadd.f32 %v2214, %v2310
      %v2365 = vadd.f32 %v2217, %v2313
      %v2366 = vadd.f32 %v2220, %v2316
      %v2367 = vadd.f32 %v2223, %v2319
      %v2368 = vadd.f32 %v2226, %v2322
      %v2369 = vadd.f32 %v2229, %v2325
      %v2370 = vadd.f32 %v2232, %v2328
      %v2371 = vadd.f32 %v2235, %v2331
      %v2372 = vadd.f32 %v2238, %v2334
      %v2373 = vadd.f32 %v2241, %v2337
      %v2374 = vadd.f32 %v2244, %v2340
      %v2375 = vadd.f32 %v2247, %v2343
      %v2376 = vsel %vm1639, %v2089, 0.0
      %2377 = vadd.xlane.f32.xlu0 %v2376
      %v2378 = vpop.xlane.xlu0 %2377
      %v2379 = vsel %vm1639, %v2091, 0.0
      %2380 = vadd.xlane.f32.xlu0 %v2379
      %v2381 = vpop.xlane.xlu0 %2380
      %v2382 = vsel %vm1639, %v2093, 0.0
      %2383 = vadd.xlane.f32.xlu0 %v2382
      %v2384 = vpop.xlane.xlu0 %2383
      %v2385 = vsel %vm1639, %v2095, 0.0
      %2386 = vadd.xlane.f32.xlu0 %v2385
      %v2387 = vpop.xlane.xlu0 %2386
      %v2388 = vsel %vm1639, %v2097, 0.0
      %2389 = vadd.xlane.f32.xlu0 %v2388
      %v2390 = vpop.xlane.xlu0 %2389
      %v2391 = vsel %vm1639, %v2099, 0.0
      %2392 = vadd.xlane.f32.xlu0 %v2391
      %v2393 = vpop.xlane.xlu0 %2392
      %v2394 = vsel %vm1639, %v2101, 0.0
      %2395 = vadd.xlane.f32.xlu0 %v2394
      %v2396 = vpop.xlane.xlu0 %2395
      %v2397 = vsel %vm1639, %v2103, 0.0
      %2398 = vadd.xlane.f32.xlu0 %v2397
      %v2399 = vpop.xlane.xlu0 %2398
      %v2400 = vsel %vm1639, %v2105, 0.0
      %2401 = vadd.xlane.f32.xlu0 %v2400
      %v2402 = vpop.xlane.xlu0 %2401
      %v2403 = vsel %vm1639, %v2107, 0.0
      %2404 = vadd.xlane.f32.xlu0 %v2403
      %v2405 = vpop.xlane.xlu0 %2404
      %v2406 = vsel %vm1639, %v2109, 0.0
      %2407 = vadd.xlane.f32.xlu0 %v2406
      %v2408 = vpop.xlane.xlu0 %2407
      %v2409 = vsel %vm1639, %v2111, 0.0
      %2410 = vadd.xlane.f32.xlu0 %v2409
      %v2411 = vpop.xlane.xlu0 %2410
      %v2412 = vsel %vm1639, %v2113, 0.0
      %2413 = vadd.xlane.f32.xlu0 %v2412
      %v2414 = vpop.xlane.xlu0 %2413
      %v2415 = vsel %vm1639, %v2115, 0.0
      %2416 = vadd.xlane.f32.xlu0 %v2415
      %v2417 = vpop.xlane.xlu0 %2416
      %v2418 = vsel %vm1639, %v2117, 0.0
      %2419 = vadd.xlane.f32.xlu0 %v2418
      %v2420 = vpop.xlane.xlu0 %2419
      %v2421 = vsel %vm1639, %v2119, 0.0
      %2422 = vadd.xlane.f32.xlu0 %v2421
      %v2423 = vpop.xlane.xlu0 %2422
      %v2424 = vsel %vm1639, %v2121, 0.0
      %2425 = vadd.xlane.f32.xlu0 %v2424
      %v2426 = vpop.xlane.xlu0 %2425
      %v2427 = vsel %vm1639, %v2123, 0.0
      %2428 = vadd.xlane.f32.xlu0 %v2427
      %v2429 = vpop.xlane.xlu0 %2428
      %v2430 = vsel %vm1639, %v2125, 0.0
      %2431 = vadd.xlane.f32.xlu0 %v2430
      %v2432 = vpop.xlane.xlu0 %2431
      %v2433 = vsel %vm1639, %v2127, 0.0
      %2434 = vadd.xlane.f32.xlu0 %v2433
      %v2435 = vpop.xlane.xlu0 %2434
      %v2436 = vsel %vm1639, %v2129, 0.0
      %2437 = vadd.xlane.f32.xlu0 %v2436
      %v2438 = vpop.xlane.xlu0 %2437
      %v2439 = vsel %vm1639, %v2131, 0.0
      %2440 = vadd.xlane.f32.xlu0 %v2439
      %v2441 = vpop.xlane.xlu0 %2440
      %v2442 = vsel %vm1639, %v2133, 0.0
      %2443 = vadd.xlane.f32.xlu0 %v2442
      %v2444 = vpop.xlane.xlu0 %2443
      %v2445 = vsel %vm1639, %v2135, 0.0
      %2446 = vadd.xlane.f32.xlu0 %v2445
      %v2447 = vpop.xlane.xlu0 %2446
      %v2448 = vsel %vm1639, %v2137, 0.0
      %2449 = vadd.xlane.f32.xlu0 %v2448
      %v2450 = vpop.xlane.xlu0 %2449
      %v2451 = vsel %vm1639, %v2139, 0.0
      %2452 = vadd.xlane.f32.xlu0 %v2451
      %v2453 = vpop.xlane.xlu0 %2452
      %v2454 = vsel %vm1639, %v2141, 0.0
      %2455 = vadd.xlane.f32.xlu0 %v2454
      %v2456 = vpop.xlane.xlu0 %2455
      %v2457 = vsel %vm1639, %v2143, 0.0
      %2458 = vadd.xlane.f32.xlu0 %v2457
      %v2459 = vpop.xlane.xlu0 %2458
      %v2460 = vsel %vm1639, %v2145, 0.0
      %2461 = vadd.xlane.f32.xlu0 %v2460
      %v2462 = vpop.xlane.xlu0 %2461
      %v2463 = vsel %vm1639, %v2147, 0.0
      %2464 = vadd.xlane.f32.xlu0 %v2463
      %v2465 = vpop.xlane.xlu0 %2464
      %v2466 = vsel %vm1639, %v2149, 0.0
      %2467 = vadd.xlane.f32.xlu0 %v2466
      %v2468 = vpop.xlane.xlu0 %2467
      %v2469 = vsel %vm1639, %v2151, 0.0
      %2470 = vadd.xlane.f32.xlu0 %v2469
      %v2471 = vpop.xlane.xlu0 %2470
      %v2472 = vadd.f32 %v2344, %v2378
      %v2473 = vadd.f32 %v2345, %v2381
      %v2474 = vadd.f32 %v2346, %v2384
      %v2475 = vadd.f32 %v2347, %v2387
      %v2476 = vadd.f32 %v2348, %v2390
      %v2477 = vadd.f32 %v2349, %v2393
      %v2478 = vadd.f32 %v2350, %v2396
      %v2479 = vadd.f32 %v2351, %v2399
      %v2480 = vadd.f32 %v2352, %v2402
      %v2481 = vadd.f32 %v2353, %v2405
      %v2482 = vadd.f32 %v2354, %v2408
      %v2483 = vadd.f32 %v2355, %v2411
      %v2484 = vadd.f32 %v2356, %v2414
      %v2485 = vadd.f32 %v2357, %v2417
      %v2486 = vadd.f32 %v2358, %v2420
      %v2487 = vadd.f32 %v2359, %v2423
      %v2488 = vadd.f32 %v2360, %v2426
      %v2489 = vadd.f32 %v2361, %v2429
      %v2490 = vadd.f32 %v2362, %v2432
      %v2491 = vadd.f32 %v2363, %v2435
      %v2492 = vadd.f32 %v2364, %v2438
      %v2493 = vadd.f32 %v2365, %v2441
      %v2494 = vadd.f32 %v2366, %v2444
      %v2495 = vadd.f32 %v2367, %v2447
      %v2496 = vadd.f32 %v2368, %v2450
      %v2497 = vadd.f32 %v2369, %v2453
      %v2498 = vadd.f32 %v2370, %v2456
      %v2499 = vadd.f32 %v2371, %v2459
      %v2500 = vadd.f32 %v2372, %v2462
      %v2501 = vadd.f32 %v2373, %v2465
      %v2502 = vadd.f32 %v2374, %v2468
      %v2503 = vadd.f32 %v2375, %v2471
      %v2504 = vrcp.pop %v2472
      %v2505 = vrcp.pop %v2473
      %v2506 = vrcp.pop %v2474
      %v2507 = vrcp.pop %v2475
      %v2508 = vrcp.pop %v2476
      %v2509 = vrcp.pop %v2477
      %v2510 = vrcp.pop %v2478
      %v2511 = vrcp.pop %v2479
      %v2512 = vrcp.pop %v2480
      %v2513 = vrcp.pop %v2481
      %v2514 = vrcp.pop %v2482
      %v2515 = vrcp.pop %v2483
      %v2516 = vrcp.pop %v2484
      %v2517 = vrcp.pop %v2485
      %v2518 = vrcp.pop %v2486
      %v2519 = vrcp.pop %v2487
      %v2520 = vrcp.pop %v2488
      %v2521 = vrcp.pop %v2489
      %v2522 = vrcp.pop %v2490
      %v2523 = vrcp.pop %v2491
      %v2524 = vrcp.pop %v2492
      %v2525 = vrcp.pop %v2493
      %v2526 = vrcp.pop %v2494
      %v2527 = vrcp.pop %v2495
      %v2528 = vrcp.pop %v2496
      %v2529 = vrcp.pop %v2497
      %v2530 = vrcp.pop %v2498
      %v2531 = vrcp.pop %v2499
      %v2532 = vrcp.pop %v2500
      %v2533 = vrcp.pop %v2501
      %v2534 = vrcp.pop %v2502
      %v2535 = vrcp.pop %v2503
      %v2536 = vmul.f32 %v2472, %v2504
      %v2537 = vmul.f32 %v2473, %v2505
      %v2538 = vmul.f32 %v2474, %v2506
      %v2539 = vmul.f32 %v2475, %v2507
      %v2540 = vmul.f32 %v2476, %v2508
      %v2541 = vmul.f32 %v2477, %v2509
      %v2542 = vmul.f32 %v2478, %v2510
      %v2543 = vmul.f32 %v2479, %v2511
      %v2544 = vmul.f32 %v2480, %v2512
      %v2545 = vmul.f32 %v2481, %v2513
      %v2546 = vmul.f32 %v2482, %v2514
      %v2547 = vmul.f32 %v2483, %v2515
      %v2548 = vmul.f32 %v2484, %v2516
      %v2549 = vmul.f32 %v2485, %v2517
      %v2550 = vmul.f32 %v2486, %v2518
      %v2551 = vmul.f32 %v2487, %v2519
      %v2552 = vmul.f32 %v2488, %v2520
      %v2553 = vmul.f32 %v2489, %v2521
      %v2554 = vmul.f32 %v2490, %v2522
      %v2555 = vmul.f32 %v2491, %v2523
      %v2556 = vmul.f32 %v2492, %v2524
      %v2557 = vmul.f32 %v2493, %v2525
      %v2558 = vmul.f32 %v2494, %v2526
      %v2559 = vmul.f32 %v2495, %v2527
      %v2560 = vmul.f32 %v2496, %v2528
      %v2561 = vmul.f32 %v2497, %v2529
      %v2562 = vmul.f32 %v2498, %v2530
      %v2563 = vmul.f32 %v2499, %v2531
      %v2564 = vmul.f32 %v2500, %v2532
      %v2565 = vmul.f32 %v2501, %v2533
      %v2566 = vmul.f32 %v2502, %v2534
      %v2567 = vmul.f32 %v2503, %v2535
      %v2568 = vsub.f32 2.0, %v2536
      %v2569 = vsub.f32 2.0, %v2537
      %v2570 = vsub.f32 2.0, %v2538
      %v2571 = vsub.f32 2.0, %v2539
      %v2572 = vsub.f32 2.0, %v2540
      %v2573 = vsub.f32 2.0, %v2541
      %v2574 = vsub.f32 2.0, %v2542
      %v2575 = vsub.f32 2.0, %v2543
      %v2576 = vsub.f32 2.0, %v2544
      %v2577 = vsub.f32 2.0, %v2545
      %v2578 = vsub.f32 2.0, %v2546
      %v2579 = vsub.f32 2.0, %v2547
      %v2580 = vsub.f32 2.0, %v2548
      %v2581 = vsub.f32 2.0, %v2549
      %v2582 = vsub.f32 2.0, %v2550
      %v2583 = vsub.f32 2.0, %v2551
      %v2584 = vsub.f32 2.0, %v2552
      %v2585 = vsub.f32 2.0, %v2553
      %v2586 = vsub.f32 2.0, %v2554
      %v2587 = vsub.f32 2.0, %v2555
      %v2588 = vsub.f32 2.0, %v2556
      %v2589 = vsub.f32 2.0, %v2557
      %v2590 = vsub.f32 2.0, %v2558
      %v2591 = vsub.f32 2.0, %v2559
      %v2592 = vsub.f32 2.0, %v2560
      %v2593 = vsub.f32 2.0, %v2561
      %v2594 = vsub.f32 2.0, %v2562
      %v2595 = vsub.f32 2.0, %v2563
      %v2596 = vsub.f32 2.0, %v2564
      %v2597 = vsub.f32 2.0, %v2565
      %v2598 = vsub.f32 2.0, %v2566
      %v2599 = vsub.f32 2.0, %v2567
      %v2600 = vmul.f32 %v2504, %v2568
      %v2601 = vmul.f32 %v2505, %v2569
      %v2602 = vmul.f32 %v2506, %v2570
      %v2603 = vmul.f32 %v2507, %v2571
      %v2604 = vmul.f32 %v2508, %v2572
      %v2605 = vmul.f32 %v2509, %v2573
      %v2606 = vmul.f32 %v2510, %v2574
      %v2607 = vmul.f32 %v2511, %v2575
      %v2608 = vmul.f32 %v2512, %v2576
      %v2609 = vmul.f32 %v2513, %v2577
      %v2610 = vmul.f32 %v2514, %v2578
      %v2611 = vmul.f32 %v2515, %v2579
      %v2612 = vmul.f32 %v2516, %v2580
      %v2613 = vmul.f32 %v2517, %v2581
      %v2614 = vmul.f32 %v2518, %v2582
      %v2615 = vmul.f32 %v2519, %v2583
      %v2616 = vmul.f32 %v2520, %v2584
      %v2617 = vmul.f32 %v2521, %v2585
      %v2618 = vmul.f32 %v2522, %v2586
      %v2619 = vmul.f32 %v2523, %v2587
      %v2620 = vmul.f32 %v2524, %v2588
      %v2621 = vmul.f32 %v2525, %v2589
      %v2622 = vmul.f32 %v2526, %v2590
      %v2623 = vmul.f32 %v2527, %v2591
      %v2624 = vmul.f32 %v2528, %v2592
      %v2625 = vmul.f32 %v2529, %v2593
      %v2626 = vmul.f32 %v2530, %v2594
      %v2627 = vmul.f32 %v2531, %v2595
      %v2628 = vmul.f32 %v2532, %v2596
      %v2629 = vmul.f32 %v2533, %v2597
      %v2630 = vmul.f32 %v2534, %v2598
      %v2631 = vmul.f32 %v2535, %v2599
      %2632 = vrot.lane.b32.xlu0 %v398, 96
      %v2633 = vpop.permute.xlu0 %2632
      %2634 = vrot.lane.b32.xlu0 %v399, 96
      %v2635 = vpop.permute.xlu0 %2634
      %2636 = vrot.lane.b32.xlu0 %v400, 96
      %v2637 = vpop.permute.xlu0 %2636
      %2638 = vrot.lane.b32.xlu0 %v401, 96
      %v2639 = vpop.permute.xlu0 %2638
      %2640 = vrot.lane.b32.xlu0 %v402, 96
      %v2641 = vpop.permute.xlu0 %2640
      %2642 = vrot.lane.b32.xlu0 %v403, 96
      %v2643 = vpop.permute.xlu0 %2642
      %2644 = vrot.lane.b32.xlu0 %v404, 96
      %v2645 = vpop.permute.xlu0 %2644
      %2646 = vrot.lane.b32.xlu0 %v405, 96
      %v2647 = vpop.permute.xlu0 %2646
      %v2657 = vsel %vm1510, %v1993, 0
      %v2660 = vsel %vm1510, %v1995, 0
      %v2663 = vsel %vm1510, %v1997, 0
      %v2666 = vsel %vm1510, %v1999, 0
      %v2669 = vsel %vm1510, %v2001, 0
      %v2672 = vsel %vm1510, %v2003, 0
      %v2675 = vsel %vm1510, %v2005, 0
      %v2678 = vsel %vm1510, %v2007, 0
      %v2681 = vsel %vm1510, %v2009, 0
      %v2684 = vsel %vm1510, %v2011, 0
      %v2687 = vsel %vm1510, %v2013, 0
      %v2690 = vsel %vm1510, %v2015, 0
      %v2693 = vsel %vm1510, %v2017, 0
      %v2696 = vsel %vm1510, %v2019, 0
      %v2699 = vsel %vm1510, %v2021, 0
      %v2702 = vsel %vm1510, %v2023, 0
      %v2705 = vsel %vm1510, %v2025, 0
      %v2708 = vsel %vm1510, %v2027, 0
      %v2711 = vsel %vm1510, %v2029, 0
      %v2714 = vsel %vm1510, %v2031, 0
      %v2717 = vsel %vm1510, %v2033, 0
      %v2720 = vsel %vm1510, %v2035, 0
      %v2723 = vsel %vm1510, %v2037, 0
      %v2726 = vsel %vm1510, %v2039, 0
      %v2729 = vsel %vm1510, %v2041, 0
      %v2732 = vsel %vm1510, %v2043, 0
      %v2735 = vsel %vm1510, %v2045, 0
      %v2738 = vsel %vm1510, %v2047, 0
      %v2741 = vsel %vm1510, %v2049, 0
      %v2744 = vsel %vm1510, %v2051, 0
      %v2747 = vsel %vm1510, %v2053, 0
      %v2750 = vsel %vm1510, %v2055, 0
      %2752 = vmatprep.subr.mxu0 0.0
      %2753 = vmatpush1.msra.mxu0 %v2633
      %2754 = vmatprep.subr.mxu0 0.0
      %2755 = vmatpush1.msra.mxu0 %v2635
      %2756 = vmatprep.subr.mxu0 0.0
      %2757 = vmatpush1.msra.mxu0 %v2637
      %2758 = vmatprep.subr.mxu0 0.0
      %2759 = vmatpush1.msra.mxu0 %v2639
      %2760 = vmatprep.subr.mxu0 0.0
      %2761 = vmatpush1.msra.mxu0 %v2641
      %2762 = vmatprep.subr.mxu0 0.0
      %2763 = vmatpush1.msra.mxu0 %v2643
      %2764 = vmatprep.subr.mxu0 0.0
      %2765 = vmatpush1.msra.mxu0 %v2645
      %2766 = vmatprep.subr.mxu0 0.0
      %2767 = vmatpush1.msra.mxu0 %v2647
      %2768 = vmatprep.subr.mxu0 0.0
      %2769 = vmatpush1.msra.mxu0 0.0
      %2770 = vmatprep.subr.mxu0 0.0
      %2771 = vmatpush1.msra.mxu0 0.0
      %2772 = vmatprep.subr.mxu0 0.0
      %2773 = vmatpush1.msra.mxu0 0.0
      %2774 = vmatprep.subr.mxu0 0.0
      %2775 = vmatpush1.msra.mxu0 0.0
      %2776 = vmatprep.subr.mxu0 0.0
      %2777 = vmatpush1.msra.mxu0 0.0
      %2778 = vmatprep.subr.mxu0 0.0
      %2779 = vmatpush1.msra.mxu0 0.0
      %2780 = vmatprep.subr.mxu0 0.0
      %2781 = vmatpush1.msra.mxu0 0.0
      %2782 = vmatprep.subr.mxu0 0.0
      %2783 = vmatpush1.msra.mxu0 0.0
      %2784 = vmatprep.subr.mxu0 0.0
      %2785 = vmatpush1.msra.mxu0 0.0
      %2786 = vmatprep.subr.mxu0 0.0
      %2787 = vmatpush1.msra.mxu0 0.0
      %2788 = vmatprep.subr.mxu0 0.0
      %2789 = vmatpush1.msra.mxu0 0.0
      %2790 = vmatprep.subr.mxu0 0.0
      %2791 = vmatpush1.msra.mxu0 0.0
      %2792 = vmatprep.subr.mxu0 0.0
      %2793 = vmatpush1.msra.mxu0 0.0
      %2794 = vmatprep.subr.mxu0 0.0
      %2795 = vmatpush1.msra.mxu0 0.0
      %2796 = vmatprep.subr.mxu0 0.0
      %2797 = vmatpush1.msra.mxu0 0.0
      %2798 = vmatprep.subr.mxu0 0.0
      %2799 = vmatpush1.msra.mxu0 0.0
      %2800 = vmatprep.subr.mxu0 0.0
      %2801 = vmatpush1.msra.mxu0 0.0
      %2802 = vmatprep.subr.mxu0 0.0
      %2803 = vmatpush1.msra.mxu0 0.0
      %2804 = vmatprep.subr.mxu0 0.0
      %2805 = vmatpush1.msra.mxu0 0.0
      %2806 = vmatprep.subr.mxu0 0.0
      %2807 = vmatpush1.msra.mxu0 0.0
      %2808 = vmatprep.subr.mxu0 0.0
      %2809 = vmatpush1.msra.mxu0 0.0
      %2810 = vmatprep.subr.mxu0 0.0
      %2811 = vmatpush1.msra.mxu0 0.0
      %2812 = vmatprep.subr.mxu0 0.0
      %2813 = vmatpush1.msra.mxu0 0.0
      %2814 = vmatprep.subr.mxu0 0.0
      %2815 = vmatpush1.msra.mxu0 0.0
      %2816 = vmatprep.mubr.f32.mxu0 0.0
      %2817 = vmatmul.mubr.f32.gmra.mrb[0].mxu0 %v2657
      %v2818 = vpop.f32.mrb[0].mxu0
      %v2819 = vadd.f32 0.0, %v2818
      %v2820 = vpop.f32.mrb[0].mxu0
      %2821 = vmatprep.mubr.f32.mxu0 0.0
      %2822 = vmatmul.mubr.f32.gmra.mrb[0].mxu0 %v2660
      %v2823 = vpop.f32.mrb[0].mxu0
      %v2824 = vadd.f32 0.0, %v2823
      %v2825 = vpop.f32.mrb[0].mxu0
      %2826 = vmatprep.mubr.f32.mxu0 0.0
      %2827 = vmatmul.mubr.f32.gmra.mrb[0].mxu0 %v2663
      %v2828 = vpop.f32.mrb[0].mxu0
      %v2829 = vadd.f32 0.0, %v2828
      %v2830 = vpop.f32.mrb[0].mxu0
      %2831 = vmatprep.mubr.f32.mxu0 0.0
      %2832 = vmatmul.mubr.f32.gmra.mrb[0].mxu0 %v2666
      %v2833 = vpop.f32.mrb[0].mxu0
      %v2834 = vadd.f32 0.0, %v2833
      %v2835 = vpop.f32.mrb[0].mxu0
      %2836 = vmatprep.mubr.f32.mxu0 0.0
      %2837 = vmatmul.mubr.f32.gmra.mrb[0].mxu0 %v2669
      %v2838 = vpop.f32.mrb[0].mxu0
      %v2839 = vadd.f32 0.0, %v2838
      %v2840 = vpop.f32.mrb[0].mxu0
      %2841 = vmatprep.mubr.f32.mxu0 0.0
      %2842 = vmatmul.mubr.f32.gmra.mrb[0].mxu0 %v2672
      %v2843 = vpop.f32.mrb[0].mxu0
      %v2844 = vadd.f32 0.0, %v2843
      %v2845 = vpop.f32.mrb[0].mxu0
      %2846 = vmatprep.mubr.f32.mxu0 0.0
      %2847 = vmatmul.mubr.f32.gmra.mrb[0].mxu0 %v2675
      %v2848 = vpop.f32.mrb[0].mxu0
      %v2849 = vadd.f32 0.0, %v2848
      %v2850 = vpop.f32.mrb[0].mxu0
      %2851 = vmatprep.mubr.f32.mxu0 0.0
      %2852 = vmatmul.mubr.f32.gmra.mrb[0].mxu0 %v2678
      %v2853 = vpop.f32.mrb[0].mxu0
      %v2854 = vadd.f32 0.0, %v2853
      %v2855 = vpop.f32.mrb[0].mxu0
      %2856 = vmatprep.mubr.f32.mxu0 0.0
      %2857 = vmatmul.mubr.f32.gmra.mrb[0].mxu0 %v2681
      %v2858 = vpop.f32.mrb[0].mxu0
      %v2859 = vadd.f32 0.0, %v2858
      %v2860 = vpop.f32.mrb[0].mxu0
      %2861 = vmatprep.mubr.f32.mxu0 0.0
      %2862 = vmatmul.mubr.f32.gmra.mrb[0].mxu0 %v2684
      %v2863 = vpop.f32.mrb[0].mxu0
      %v2864 = vadd.f32 0.0, %v2863
      %v2865 = vpop.f32.mrb[0].mxu0
      %2866 = vmatprep.mubr.f32.mxu0 0.0
      %2867 = vmatmul.mubr.f32.gmra.mrb[0].mxu0 %v2687
      %v2868 = vpop.f32.mrb[0].mxu0
      %v2869 = vadd.f32 0.0, %v2868
      %v2870 = vpop.f32.mrb[0].mxu0
      %2871 = vmatprep.mubr.f32.mxu0 0.0
      %2872 = vmatmul.mubr.f32.gmra.mrb[0].mxu0 %v2690
      %v2873 = vpop.f32.mrb[0].mxu0
      %v2874 = vadd.f32 0.0, %v2873
      %v2875 = vpop.f32.mrb[0].mxu0
      %2876 = vmatprep.mubr.f32.mxu0 0.0
      %2877 = vmatmul.mubr.f32.gmra.mrb[0].mxu0 %v2693
      %v2878 = vpop.f32.mrb[0].mxu0
      %v2879 = vadd.f32 0.0, %v2878
      %v2880 = vpop.f32.mrb[0].mxu0
      %2881 = vmatprep.mubr.f32.mxu0 0.0
      %2882 = vmatmul.mubr.f32.gmra.mrb[0].mxu0 %v2696
      %v2883 = vpop.f32.mrb[0].mxu0
      %v2884 = vadd.f32 0.0, %v2883
      %v2885 = vpop.f32.mrb[0].mxu0
      %2886 = vmatprep.mubr.f32.mxu0 0.0
      %2887 = vmatmul.mubr.f32.gmra.mrb[0].mxu0 %v2699
      %v2888 = vpop.f32.mrb[0].mxu0
      %v2889 = vadd.f32 0.0, %v2888
      %v2890 = vpop.f32.mrb[0].mxu0
      %2891 = vmatprep.mubr.f32.mxu0 0.0
      %2892 = vmatmul.mubr.f32.gmra.mrb[0].mxu0 %v2702
      %v2893 = vpop.f32.mrb[0].mxu0
      %v2894 = vadd.f32 0.0, %v2893
      %v2895 = vpop.f32.mrb[0].mxu0
      %2896 = vmatprep.mubr.f32.mxu0 0.0
      %2897 = vmatmul.mubr.f32.gmra.mrb[0].mxu0 %v2705
      %v2898 = vpop.f32.mrb[0].mxu0
      %v2899 = vadd.f32 0.0, %v2898
      %v2900 = vpop.f32.mrb[0].mxu0
      %2901 = vmatprep.mubr.f32.mxu0 0.0
      %2902 = vmatmul.mubr.f32.gmra.mrb[0].mxu0 %v2708
      %v2903 = vpop.f32.mrb[0].mxu0
      %v2904 = vadd.f32 0.0, %v2903
      %v2905 = vpop.f32.mrb[0].mxu0
      %2906 = vmatprep.mubr.f32.mxu0 0.0
      %2907 = vmatmul.mubr.f32.gmra.mrb[0].mxu0 %v2711
      %v2908 = vpop.f32.mrb[0].mxu0
      %v2909 = vadd.f32 0.0, %v2908
      %v2910 = vpop.f32.mrb[0].mxu0
      %2911 = vmatprep.mubr.f32.mxu0 0.0
      %2912 = vmatmul.mubr.f32.gmra.mrb[0].mxu0 %v2714
      %v2913 = vpop.f32.mrb[0].mxu0
      %v2914 = vadd.f32 0.0, %v2913
      %v2915 = vpop.f32.mrb[0].mxu0
      %2916 = vmatprep.mubr.f32.mxu0 0.0
      %2917 = vmatmul.mubr.f32.gmra.mrb[0].mxu0 %v2717
      %v2918 = vpop.f32.mrb[0].mxu0
      %v2919 = vadd.f32 0.0, %v2918
      %v2920 = vpop.f32.mrb[0].mxu0
      %2921 = vmatprep.mubr.f32.mxu0 0.0
      %2922 = vmatmul.mubr.f32.gmra.mrb[0].mxu0 %v2720
      %v2923 = vpop.f32.mrb[0].mxu0
      %v2924 = vadd.f32 0.0, %v2923
      %v2925 = vpop.f32.mrb[0].mxu0
      %2926 = vmatprep.mubr.f32.mxu0 0.0
      %2927 = vmatmul.mubr.f32.gmra.mrb[0].mxu0 %v2723
      %v2928 = vpop.f32.mrb[0].mxu0
      %v2929 = vadd.f32 0.0, %v2928
      %v2930 = vpop.f32.mrb[0].mxu0
      %2931 = vmatprep.mubr.f32.mxu0 0.0
      %2932 = vmatmul.mubr.f32.gmra.mrb[0].mxu0 %v2726
      %v2933 = vpop.f32.mrb[0].mxu0
      %v2934 = vadd.f32 0.0, %v2933
      %v2935 = vpop.f32.mrb[0].mxu0
      %2936 = vmatprep.mubr.f32.mxu0 0.0
      %2937 = vmatmul.mubr.f32.gmra.mrb[0].mxu0 %v2729
      %v2938 = vpop.f32.mrb[0].mxu0
      %v2939 = vadd.f32 0.0, %v2938
      %v2940 = vpop.f32.mrb[0].mxu0
      %2941 = vmatprep.mubr.f32.mxu0 0.0
      %2942 = vmatmul.mubr.f32.gmra.mrb[0].mxu0 %v2732
      %v2943 = vpop.f32.mrb[0].mxu0
      %v2944 = vadd.f32 0.0, %v2943
      %v2945 = vpop.f32.mrb[0].mxu0
      %2946 = vmatprep.mubr.f32.mxu0 0.0
      %2947 = vmatmul.mubr.f32.gmra.mrb[0].mxu0 %v2735
      %v2948 = vpop.f32.mrb[0].mxu0
      %v2949 = vadd.f32 0.0, %v2948
      %v2950 = vpop.f32.mrb[0].mxu0
      %2951 = vmatprep.mubr.f32.mxu0 0.0
      %2952 = vmatmul.mubr.f32.gmra.mrb[0].mxu0 %v2738
      %v2953 = vpop.f32.mrb[0].mxu0
      %v2954 = vadd.f32 0.0, %v2953
      %v2955 = vpop.f32.mrb[0].mxu0
      %2956 = vmatprep.mubr.f32.mxu0 0.0
      %2957 = vmatmul.mubr.f32.gmra.mrb[0].mxu0 %v2741
      %v2958 = vpop.f32.mrb[0].mxu0
      %v2959 = vadd.f32 0.0, %v2958
      %v2960 = vpop.f32.mrb[0].mxu0
      %2961 = vmatprep.mubr.f32.mxu0 0.0
      %2962 = vmatmul.mubr.f32.gmra.mrb[0].mxu0 %v2744
      %v2963 = vpop.f32.mrb[0].mxu0
      %v2964 = vadd.f32 0.0, %v2963
      %v2965 = vpop.f32.mrb[0].mxu0
      %2966 = vmatprep.mubr.f32.mxu0 0.0
      %2967 = vmatmul.mubr.f32.gmra.mrb[0].mxu0 %v2747
      %v2968 = vpop.f32.mrb[0].mxu0
      %v2969 = vadd.f32 0.0, %v2968
      %v2970 = vpop.f32.mrb[0].mxu0
      %2971 = vmatprep.mubr.f32.mxu0 0.0
      %2972 = vmatmul.mubr.f32.gmra.mrb[0].mxu0 %v2750
      %v2973 = vpop.f32.mrb[0].mxu0
      %v2974 = vadd.f32 0.0, %v2973
      %v2975 = vpop.f32.mrb[0].mxu0
      %2976 = vdwg.mxu0
      %2977 = vrot.lane.b32.xlu0 %v366, 64
      %v2978 = vpop.permute.xlu0 %2977
      %2979 = vrot.lane.b32.xlu0 %v367, 64
      %v2980 = vpop.permute.xlu0 %2979
      %2981 = vrot.lane.b32.xlu0 %v368, 64
      %v2982 = vpop.permute.xlu0 %2981
      %2983 = vrot.lane.b32.xlu0 %v369, 64
      %v2984 = vpop.permute.xlu0 %2983
      %2985 = vrot.lane.b32.xlu0 %v370, 64
      %v2986 = vpop.permute.xlu0 %2985
      %2987 = vrot.lane.b32.xlu0 %v371, 64
      %v2988 = vpop.permute.xlu0 %2987
      %2989 = vrot.lane.b32.xlu0 %v372, 64
      %v2990 = vpop.permute.xlu0 %2989
      %2991 = vrot.lane.b32.xlu0 %v373, 64
      %v2992 = vpop.permute.xlu0 %2991
      %2993 = vrot.lane.b32.xlu0 %v374, 64
      %v2994 = vpop.permute.xlu0 %2993
      %2995 = vrot.lane.b32.xlu0 %v375, 64
      %v2996 = vpop.permute.xlu0 %2995
      %2997 = vrot.lane.b32.xlu0 %v376, 64
      %v2998 = vpop.permute.xlu0 %2997
      %2999 = vrot.lane.b32.xlu0 %v377, 64
      %v3000 = vpop.permute.xlu0 %2999
      %3001 = vrot.lane.b32.xlu0 %v378, 64
      %v3002 = vpop.permute.xlu0 %3001
      %3003 = vrot.lane.b32.xlu0 %v379, 64
      %v3004 = vpop.permute.xlu0 %3003
      %3005 = vrot.lane.b32.xlu0 %v380, 64
      %v3006 = vpop.permute.xlu0 %3005
      %3007 = vrot.lane.b32.xlu0 %v381, 64
      %v3008 = vpop.permute.xlu0 %3007
      %3009 = vrot.lane.b32.xlu0 %v382, 64
      %v3010 = vpop.permute.xlu0 %3009
      %3011 = vrot.lane.b32.xlu0 %v383, 64
      %v3012 = vpop.permute.xlu0 %3011
      %3013 = vrot.lane.b32.xlu0 %v384, 64
      %v3014 = vpop.permute.xlu0 %3013
      %3015 = vrot.lane.b32.xlu0 %v385, 64
      %v3016 = vpop.permute.xlu0 %3015
      %3017 = vrot.lane.b32.xlu0 %v386, 64
      %v3018 = vpop.permute.xlu0 %3017
      %3019 = vrot.lane.b32.xlu0 %v387, 64
      %v3020 = vpop.permute.xlu0 %3019
      %3021 = vrot.lane.b32.xlu0 %v388, 64
      %v3022 = vpop.permute.xlu0 %3021
      %3023 = vrot.lane.b32.xlu0 %v389, 64
      %v3024 = vpop.permute.xlu0 %3023
      %3025 = vrot.lane.b32.xlu0 %v390, 64
      %v3026 = vpop.permute.xlu0 %3025
      %3027 = vrot.lane.b32.xlu0 %v391, 64
      %v3028 = vpop.permute.xlu0 %3027
      %3029 = vrot.lane.b32.xlu0 %v392, 64
      %v3030 = vpop.permute.xlu0 %3029
      %3031 = vrot.lane.b32.xlu0 %v393, 64
      %v3032 = vpop.permute.xlu0 %3031
      %3033 = vrot.lane.b32.xlu0 %v394, 64
      %v3034 = vpop.permute.xlu0 %3033
      %3035 = vrot.lane.b32.xlu0 %v395, 64
      %v3036 = vpop.permute.xlu0 %3035
      %3037 = vrot.lane.b32.xlu0 %v396, 64
      %v3038 = vpop.permute.xlu0 %3037
      %3039 = vrot.lane.b32.xlu0 %v397, 64
      %v3040 = vpop.permute.xlu0 %3039
      %3073 = vmatprep.subr.mxu0 0.0
      %3074 = vmatpush1.msra.mxu0 %v2978
      %3075 = vmatprep.subr.mxu0 0.0
      %3076 = vmatpush1.msra.mxu0 %v2980
      %3077 = vmatprep.subr.mxu0 0.0
      %3078 = vmatpush1.msra.mxu0 %v2982
      %3079 = vmatprep.subr.mxu0 0.0
      %3080 = vmatpush1.msra.mxu0 %v2984
      %3081 = vmatprep.subr.mxu0 0.0
      %3082 = vmatpush1.msra.mxu0 %v2986
      %3083 = vmatprep.subr.mxu0 0.0
      %3084 = vmatpush1.msra.mxu0 %v2988
      %3085 = vmatprep.subr.mxu0 0.0
      %3086 = vmatpush1.msra.mxu0 %v2990
      %3087 = vmatprep.subr.mxu0 0.0
      %3088 = vmatpush1.msra.mxu0 %v2992
      %3089 = vmatprep.subr.mxu0 0.0
      %3090 = vmatpush1.msra.mxu0 %v2994
      %3091 = vmatprep.subr.mxu0 0.0
      %3092 = vmatpush1.msra.mxu0 %v2996
      %3093 = vmatprep.subr.mxu0 0.0
      %3094 = vmatpush1.msra.mxu0 %v2998
      %3095 = vmatprep.subr.mxu0 0.0
      %3096 = vmatpush1.msra.mxu0 %v3000
      %3097 = vmatprep.subr.mxu0 0.0
      %3098 = vmatpush1.msra.mxu0 %v3002
      %3099 = vmatprep.subr.mxu0 0.0
      %3100 = vmatpush1.msra.mxu0 %v3004
      %3101 = vmatprep.subr.mxu0 0.0
      %3102 = vmatpush1.msra.mxu0 %v3006
      %3103 = vmatprep.subr.mxu0 0.0
      %3104 = vmatpush1.msra.mxu0 %v3008
      %3105 = vmatprep.subr.mxu0 0.0
      %3106 = vmatpush1.msra.mxu0 %v3010
      %3107 = vmatprep.subr.mxu0 0.0
      %3108 = vmatpush1.msra.mxu0 %v3012
      %3109 = vmatprep.subr.mxu0 0.0
      %3110 = vmatpush1.msra.mxu0 %v3014
      %3111 = vmatprep.subr.mxu0 0.0
      %3112 = vmatpush1.msra.mxu0 %v3016
      %3113 = vmatprep.subr.mxu0 0.0
      %3114 = vmatpush1.msra.mxu0 %v3018
      %3115 = vmatprep.subr.mxu0 0.0
      %3116 = vmatpush1.msra.mxu0 %v3020
      %3117 = vmatprep.subr.mxu0 0.0
      %3118 = vmatpush1.msra.mxu0 %v3022
      %3119 = vmatprep.subr.mxu0 0.0
      %3120 = vmatpush1.msra.mxu0 %v3024
      %3121 = vmatprep.subr.mxu0 0.0
      %3122 = vmatpush1.msra.mxu0 %v3026
      %3123 = vmatprep.subr.mxu0 0.0
      %3124 = vmatpush1.msra.mxu0 %v3028
      %3125 = vmatprep.subr.mxu0 0.0
      %3126 = vmatpush1.msra.mxu0 %v3030
      %3127 = vmatprep.subr.mxu0 0.0
      %3128 = vmatpush1.msra.mxu0 %v3032
      %3129 = vmatprep.subr.mxu0 0.0
      %3130 = vmatpush1.msra.mxu0 %v3034
      %3131 = vmatprep.subr.mxu0 0.0
      %3132 = vmatpush1.msra.mxu0 %v3036
      %3133 = vmatprep.subr.mxu0 0.0
      %3134 = vmatpush1.msra.mxu0 %v3038
      %3135 = vmatprep.subr.mxu0 0.0
      %3136 = vmatpush1.msra.mxu0 %v3040
      %3137 = vmatprep.mubr.f32.mxu0 %v1835
      %3138 = vmatmul.mubr.f32.gmra.mrb[0].mxu0 %v1833
      %v3139 = vpop.f32.mrb[0].mxu0
      %v3140 = vadd.f32 %v2819, %v3139
      %v3141 = vpop.f32.mrb[0].mxu0
      %3142 = vmatprep.mubr.f32.mxu0 %v1839
      %3143 = vmatmul.mubr.f32.gmra.mrb[0].mxu0 %v1837
      %v3144 = vpop.f32.mrb[0].mxu0
      %v3145 = vadd.f32 %v2824, %v3144
      %v3146 = vpop.f32.mrb[0].mxu0
      %3147 = vmatprep.mubr.f32.mxu0 %v1843
      %3148 = vmatmul.mubr.f32.gmra.mrb[0].mxu0 %v1841
      %v3149 = vpop.f32.mrb[0].mxu0
      %v3150 = vadd.f32 %v2829, %v3149
      %v3151 = vpop.f32.mrb[0].mxu0
      %3152 = vmatprep.mubr.f32.mxu0 %v1847
      %3153 = vmatmul.mubr.f32.gmra.mrb[0].mxu0 %v1845
      %v3154 = vpop.f32.mrb[0].mxu0
      %v3155 = vadd.f32 %v2834, %v3154
      %v3156 = vpop.f32.mrb[0].mxu0
      %3157 = vmatprep.mubr.f32.mxu0 %v1851
      %3158 = vmatmul.mubr.f32.gmra.mrb[0].mxu0 %v1849
      %v3159 = vpop.f32.mrb[0].mxu0
      %v3160 = vadd.f32 %v2839, %v3159
      %v3161 = vpop.f32.mrb[0].mxu0
      %3162 = vmatprep.mubr.f32.mxu0 %v1855
      %3163 = vmatmul.mubr.f32.gmra.mrb[0].mxu0 %v1853
      %v3164 = vpop.f32.mrb[0].mxu0
      %v3165 = vadd.f32 %v2844, %v3164
      %v3166 = vpop.f32.mrb[0].mxu0
      %3167 = vmatprep.mubr.f32.mxu0 %v1859
      %3168 = vmatmul.mubr.f32.gmra.mrb[0].mxu0 %v1857
      %v3169 = vpop.f32.mrb[0].mxu0
      %v3170 = vadd.f32 %v2849, %v3169
      %v3171 = vpop.f32.mrb[0].mxu0
      %3172 = vmatprep.mubr.f32.mxu0 %v1863
      %3173 = vmatmul.mubr.f32.gmra.mrb[0].mxu0 %v1861
      %v3174 = vpop.f32.mrb[0].mxu0
      %v3175 = vadd.f32 %v2854, %v3174
      %v3176 = vpop.f32.mrb[0].mxu0
      %3177 = vmatprep.mubr.f32.mxu0 %v1867
      %3178 = vmatmul.mubr.f32.gmra.mrb[0].mxu0 %v1865
      %v3179 = vpop.f32.mrb[0].mxu0
      %v3180 = vadd.f32 %v2859, %v3179
      %v3181 = vpop.f32.mrb[0].mxu0
      %3182 = vmatprep.mubr.f32.mxu0 %v1871
      %3183 = vmatmul.mubr.f32.gmra.mrb[0].mxu0 %v1869
      %v3184 = vpop.f32.mrb[0].mxu0
      %v3185 = vadd.f32 %v2864, %v3184
      %v3186 = vpop.f32.mrb[0].mxu0
      %3187 = vmatprep.mubr.f32.mxu0 %v1875
      %3188 = vmatmul.mubr.f32.gmra.mrb[0].mxu0 %v1873
      %v3189 = vpop.f32.mrb[0].mxu0
      %v3190 = vadd.f32 %v2869, %v3189
      %v3191 = vpop.f32.mrb[0].mxu0
      %3192 = vmatprep.mubr.f32.mxu0 %v1879
      %3193 = vmatmul.mubr.f32.gmra.mrb[0].mxu0 %v1877
      %v3194 = vpop.f32.mrb[0].mxu0
      %v3195 = vadd.f32 %v2874, %v3194
      %v3196 = vpop.f32.mrb[0].mxu0
      %3197 = vmatprep.mubr.f32.mxu0 %v1883
      %3198 = vmatmul.mubr.f32.gmra.mrb[0].mxu0 %v1881
      %v3199 = vpop.f32.mrb[0].mxu0
      %v3200 = vadd.f32 %v2879, %v3199
      %v3201 = vpop.f32.mrb[0].mxu0
      %3202 = vmatprep.mubr.f32.mxu0 %v1887
      %3203 = vmatmul.mubr.f32.gmra.mrb[0].mxu0 %v1885
      %v3204 = vpop.f32.mrb[0].mxu0
      %v3205 = vadd.f32 %v2884, %v3204
      %v3206 = vpop.f32.mrb[0].mxu0
      %3207 = vmatprep.mubr.f32.mxu0 %v1891
      %3208 = vmatmul.mubr.f32.gmra.mrb[0].mxu0 %v1889
      %v3209 = vpop.f32.mrb[0].mxu0
      %v3210 = vadd.f32 %v2889, %v3209
      %v3211 = vpop.f32.mrb[0].mxu0
      %3212 = vmatprep.mubr.f32.mxu0 %v1895
      %3213 = vmatmul.mubr.f32.gmra.mrb[0].mxu0 %v1893
      %v3214 = vpop.f32.mrb[0].mxu0
      %v3215 = vadd.f32 %v2894, %v3214
      %v3216 = vpop.f32.mrb[0].mxu0
      %3217 = vmatprep.mubr.f32.mxu0 %v1899
      %3218 = vmatmul.mubr.f32.gmra.mrb[0].mxu0 %v1897
      %v3219 = vpop.f32.mrb[0].mxu0
      %v3220 = vadd.f32 %v2899, %v3219
      %v3221 = vpop.f32.mrb[0].mxu0
      %3222 = vmatprep.mubr.f32.mxu0 %v1903
      %3223 = vmatmul.mubr.f32.gmra.mrb[0].mxu0 %v1901
      %v3224 = vpop.f32.mrb[0].mxu0
      %v3225 = vadd.f32 %v2904, %v3224
      %v3226 = vpop.f32.mrb[0].mxu0
      %3227 = vmatprep.mubr.f32.mxu0 %v1907
      %3228 = vmatmul.mubr.f32.gmra.mrb[0].mxu0 %v1905
      %v3229 = vpop.f32.mrb[0].mxu0
      %v3230 = vadd.f32 %v2909, %v3229
      %v3231 = vpop.f32.mrb[0].mxu0
      %3232 = vmatprep.mubr.f32.mxu0 %v1911
      %3233 = vmatmul.mubr.f32.gmra.mrb[0].mxu0 %v1909
      %v3234 = vpop.f32.mrb[0].mxu0
      %v3235 = vadd.f32 %v2914, %v3234
      %v3236 = vpop.f32.mrb[0].mxu0
      %3237 = vmatprep.mubr.f32.mxu0 %v1915
      %3238 = vmatmul.mubr.f32.gmra.mrb[0].mxu0 %v1913
      %v3239 = vpop.f32.mrb[0].mxu0
      %v3240 = vadd.f32 %v2919, %v3239
      %v3241 = vpop.f32.mrb[0].mxu0
      %3242 = vmatprep.mubr.f32.mxu0 %v1919
      %3243 = vmatmul.mubr.f32.gmra.mrb[0].mxu0 %v1917
      %v3244 = vpop.f32.mrb[0].mxu0
      %v3245 = vadd.f32 %v2924, %v3244
      %v3246 = vpop.f32.mrb[0].mxu0
      %3247 = vmatprep.mubr.f32.mxu0 %v1923
      %3248 = vmatmul.mubr.f32.gmra.mrb[0].mxu0 %v1921
      %v3249 = vpop.f32.mrb[0].mxu0
      %v3250 = vadd.f32 %v2929, %v3249
      %v3251 = vpop.f32.mrb[0].mxu0
      %3252 = vmatprep.mubr.f32.mxu0 %v1927
      %3253 = vmatmul.mubr.f32.gmra.mrb[0].mxu0 %v1925
      %v3254 = vpop.f32.mrb[0].mxu0
      %v3255 = vadd.f32 %v2934, %v3254
      %v3256 = vpop.f32.mrb[0].mxu0
      %3257 = vmatprep.mubr.f32.mxu0 %v1931
      %3258 = vmatmul.mubr.f32.gmra.mrb[0].mxu0 %v1929
      %v3259 = vpop.f32.mrb[0].mxu0
      %v3260 = vadd.f32 %v2939, %v3259
      %v3261 = vpop.f32.mrb[0].mxu0
      %3262 = vmatprep.mubr.f32.mxu0 %v1935
      %3263 = vmatmul.mubr.f32.gmra.mrb[0].mxu0 %v1933
      %v3264 = vpop.f32.mrb[0].mxu0
      %v3265 = vadd.f32 %v2944, %v3264
      %v3266 = vpop.f32.mrb[0].mxu0
      %3267 = vmatprep.mubr.f32.mxu0 %v1939
      %3268 = vmatmul.mubr.f32.gmra.mrb[0].mxu0 %v1937
      %v3269 = vpop.f32.mrb[0].mxu0
      %v3270 = vadd.f32 %v2949, %v3269
      %v3271 = vpop.f32.mrb[0].mxu0
      %3272 = vmatprep.mubr.f32.mxu0 %v1943
      %3273 = vmatmul.mubr.f32.gmra.mrb[0].mxu0 %v1941
      %v3274 = vpop.f32.mrb[0].mxu0
      %v3275 = vadd.f32 %v2954, %v3274
      %v3276 = vpop.f32.mrb[0].mxu0
      %3277 = vmatprep.mubr.f32.mxu0 %v1947
      %3278 = vmatmul.mubr.f32.gmra.mrb[0].mxu0 %v1945
      %v3279 = vpop.f32.mrb[0].mxu0
      %v3280 = vadd.f32 %v2959, %v3279
      %v3281 = vpop.f32.mrb[0].mxu0
      %3282 = vmatprep.mubr.f32.mxu0 %v1951
      %3283 = vmatmul.mubr.f32.gmra.mrb[0].mxu0 %v1949
      %v3284 = vpop.f32.mrb[0].mxu0
      %v3285 = vadd.f32 %v2964, %v3284
      %v3286 = vpop.f32.mrb[0].mxu0
      %3287 = vmatprep.mubr.f32.mxu0 %v1955
      %3288 = vmatmul.mubr.f32.gmra.mrb[0].mxu0 %v1953
      %v3289 = vpop.f32.mrb[0].mxu0
      %v3290 = vadd.f32 %v2969, %v3289
      %v3291 = vpop.f32.mrb[0].mxu0
      %3292 = vmatprep.mubr.f32.mxu0 %v1959
      %3293 = vmatmul.mubr.f32.gmra.mrb[0].mxu0 %v1957
      %v3294 = vpop.f32.mrb[0].mxu0
      %v3295 = vadd.f32 %v2974, %v3294
      %v3296 = vpop.f32.mrb[0].mxu0
      %3297 = vdwg.mxu0
      %3298 = vrot.lane.b32.xlu0 %v406, 96
      %v3299 = vpop.permute.xlu0 %3298
      %3300 = vrot.lane.b32.xlu0 %v407, 96
      %v3301 = vpop.permute.xlu0 %3300
      %3302 = vrot.lane.b32.xlu0 %v408, 96
      %v3303 = vpop.permute.xlu0 %3302
      %3304 = vrot.lane.b32.xlu0 %v409, 96
      %v3305 = vpop.permute.xlu0 %3304
      %3306 = vrot.lane.b32.xlu0 %v410, 96
      %v3307 = vpop.permute.xlu0 %3306
      %v3313 = vsel %vm1639, %v2089, 0
      %v3316 = vsel %vm1639, %v2091, 0
      %v3319 = vsel %vm1639, %v2093, 0
      %v3322 = vsel %vm1639, %v2095, 0
      %v3325 = vsel %vm1639, %v2097, 0
      %v3328 = vsel %vm1639, %v2099, 0
      %v3331 = vsel %vm1639, %v2101, 0
      %v3334 = vsel %vm1639, %v2103, 0
      %v3337 = vsel %vm1639, %v2105, 0
      %v3340 = vsel %vm1639, %v2107, 0
      %v3343 = vsel %vm1639, %v2109, 0
      %v3346 = vsel %vm1639, %v2111, 0
      %v3349 = vsel %vm1639, %v2113, 0
      %v3352 = vsel %vm1639, %v2115, 0
      %v3355 = vsel %vm1639, %v2117, 0
      %v3358 = vsel %vm1639, %v2119, 0
      %v3361 = vsel %vm1639, %v2121, 0
      %v3364 = vsel %vm1639, %v2123, 0
      %v3367 = vsel %vm1639, %v2125, 0
      %v3370 = vsel %vm1639, %v2127, 0
      %v3373 = vsel %vm1639, %v2129, 0
      %v3376 = vsel %vm1639, %v2131, 0
      %v3379 = vsel %vm1639, %v2133, 0
      %v3382 = vsel %vm1639, %v2135, 0
      %v3385 = vsel %vm1639, %v2137, 0
      %v3388 = vsel %vm1639, %v2139, 0
      %v3391 = vsel %vm1639, %v2141, 0
      %v3394 = vsel %vm1639, %v2143, 0
      %v3397 = vsel %vm1639, %v2145, 0
      %v3400 = vsel %vm1639, %v2147, 0
      %v3403 = vsel %vm1639, %v2149, 0
      %v3406 = vsel %vm1639, %v2151, 0
      %vm3408 = vcmask 1043456
      %v3409 = vsel %vm3408, %v3307, 0
      %3411 = vmatprep.subr.mxu0 0.0
      %3412 = vmatpush1.msra.mxu0 %v3299
      %3413 = vmatprep.subr.mxu0 0.0
      %3414 = vmatpush1.msra.mxu0 %v3301
      %3415 = vmatprep.subr.mxu0 0.0
      %3416 = vmatpush1.msra.mxu0 %v3303
      %3417 = vmatprep.subr.mxu0 0.0
      %3418 = vmatpush1.msra.mxu0 %v3305
      %3419 = vmatprep.subr.mxu0 0.0
      %3420 = vmatpush1.msra.mxu0 %v3409
      %3421 = vmatprep.subr.mxu0 0.0
      %3422 = vmatpush1.msra.mxu0 0.0
      %3423 = vmatprep.subr.mxu0 0.0
      %3424 = vmatpush1.msra.mxu0 0.0
      %3425 = vmatprep.subr.mxu0 0.0
      %3426 = vmatpush1.msra.mxu0 0.0
      %3427 = vmatprep.subr.mxu0 0.0
      %3428 = vmatpush1.msra.mxu0 0.0
      %3429 = vmatprep.subr.mxu0 0.0
      %3430 = vmatpush1.msra.mxu0 0.0
      %3431 = vmatprep.subr.mxu0 0.0
      %3432 = vmatpush1.msra.mxu0 0.0
      %3433 = vmatprep.subr.mxu0 0.0
      %3434 = vmatpush1.msra.mxu0 0.0
      %3435 = vmatprep.subr.mxu0 0.0
      %3436 = vmatpush1.msra.mxu0 0.0
      %3437 = vmatprep.subr.mxu0 0.0
      %3438 = vmatpush1.msra.mxu0 0.0
      %3439 = vmatprep.subr.mxu0 0.0
      %3440 = vmatpush1.msra.mxu0 0.0
      %3441 = vmatprep.subr.mxu0 0.0
      %3442 = vmatpush1.msra.mxu0 0.0
      %3443 = vmatprep.subr.mxu0 0.0
      %3444 = vmatpush1.msra.mxu0 0.0
      %3445 = vmatprep.subr.mxu0 0.0
      %3446 = vmatpush1.msra.mxu0 0.0
      %3447 = vmatprep.subr.mxu0 0.0
      %3448 = vmatpush1.msra.mxu0 0.0
      %3449 = vmatprep.subr.mxu0 0.0
      %3450 = vmatpush1.msra.mxu0 0.0
      %3451 = vmatprep.subr.mxu0 0.0
      %3452 = vmatpush1.msra.mxu0 0.0
      %3453 = vmatprep.subr.mxu0 0.0
      %3454 = vmatpush1.msra.mxu0 0.0
      %3455 = vmatprep.subr.mxu0 0.0
      %3456 = vmatpush1.msra.mxu0 0.0
      %3457 = vmatprep.subr.mxu0 0.0
      %3458 = vmatpush1.msra.mxu0 0.0
      %3459 = vmatprep.subr.mxu0 0.0
      %3460 = vmatpush1.msra.mxu0 0.0
      %3461 = vmatprep.subr.mxu0 0.0
      %3462 = vmatpush1.msra.mxu0 0.0
      %3463 = vmatprep.subr.mxu0 0.0
      %3464 = vmatpush1.msra.mxu0 0.0
      %3465 = vmatprep.subr.mxu0 0.0
      %3466 = vmatpush1.msra.mxu0 0.0
      %3467 = vmatprep.subr.mxu0 0.0
      %3468 = vmatpush1.msra.mxu0 0.0
      %3469 = vmatprep.subr.mxu0 0.0
      %3470 = vmatpush1.msra.mxu0 0.0
      %3471 = vmatprep.subr.mxu0 0.0
      %3472 = vmatpush1.msra.mxu0 0.0
      %3473 = vmatprep.subr.mxu0 0.0
      %3474 = vmatpush1.msra.mxu0 0.0
      %3475 = vmatprep.mubr.f32.mxu0 0.0
      %3476 = vmatmul.mubr.f32.gmra.mrb[0].mxu0 %v3313
      %v3477 = vpop.f32.mrb[0].mxu0
      %v3478 = vadd.f32 0.0, %v3477
      %v3479 = vpop.f32.mrb[0].mxu0
      %3480 = vmatprep.mubr.f32.mxu0 0.0
      %3481 = vmatmul.mubr.f32.gmra.mrb[0].mxu0 %v3316
      %v3482 = vpop.f32.mrb[0].mxu0
      %v3483 = vadd.f32 0.0, %v3482
      %v3484 = vpop.f32.mrb[0].mxu0
      %3485 = vmatprep.mubr.f32.mxu0 0.0
      %3486 = vmatmul.mubr.f32.gmra.mrb[0].mxu0 %v3319
      %v3487 = vpop.f32.mrb[0].mxu0
      %v3488 = vadd.f32 0.0, %v3487
      %v3489 = vpop.f32.mrb[0].mxu0
      %3490 = vmatprep.mubr.f32.mxu0 0.0
      %3491 = vmatmul.mubr.f32.gmra.mrb[0].mxu0 %v3322
      %v3492 = vpop.f32.mrb[0].mxu0
      %v3493 = vadd.f32 0.0, %v3492
      %v3494 = vpop.f32.mrb[0].mxu0
      %3495 = vmatprep.mubr.f32.mxu0 0.0
      %3496 = vmatmul.mubr.f32.gmra.mrb[0].mxu0 %v3325
      %v3497 = vpop.f32.mrb[0].mxu0
      %v3498 = vadd.f32 0.0, %v3497
      %v3499 = vpop.f32.mrb[0].mxu0
      %3500 = vmatprep.mubr.f32.mxu0 0.0
      %3501 = vmatmul.mubr.f32.gmra.mrb[0].mxu0 %v3328
      %v3502 = vpop.f32.mrb[0].mxu0
      %v3503 = vadd.f32 0.0, %v3502
      %v3504 = vpop.f32.mrb[0].mxu0
      %3505 = vmatprep.mubr.f32.mxu0 0.0
      %3506 = vmatmul.mubr.f32.gmra.mrb[0].mxu0 %v3331
      %v3507 = vpop.f32.mrb[0].mxu0
      %v3508 = vadd.f32 0.0, %v3507
      %v3509 = vpop.f32.mrb[0].mxu0
      %3510 = vmatprep.mubr.f32.mxu0 0.0
      %3511 = vmatmul.mubr.f32.gmra.mrb[0].mxu0 %v3334
      %v3512 = vpop.f32.mrb[0].mxu0
      %v3513 = vadd.f32 0.0, %v3512
      %v3514 = vpop.f32.mrb[0].mxu0
      %3515 = vmatprep.mubr.f32.mxu0 0.0
      %3516 = vmatmul.mubr.f32.gmra.mrb[0].mxu0 %v3337
      %v3517 = vpop.f32.mrb[0].mxu0
      %v3518 = vadd.f32 0.0, %v3517
      %v3519 = vpop.f32.mrb[0].mxu0
      %3520 = vmatprep.mubr.f32.mxu0 0.0
      %3521 = vmatmul.mubr.f32.gmra.mrb[0].mxu0 %v3340
      %v3522 = vpop.f32.mrb[0].mxu0
      %v3523 = vadd.f32 0.0, %v3522
      %v3524 = vpop.f32.mrb[0].mxu0
      %3525 = vmatprep.mubr.f32.mxu0 0.0
      %3526 = vmatmul.mubr.f32.gmra.mrb[0].mxu0 %v3343
      %v3527 = vpop.f32.mrb[0].mxu0
      %v3528 = vadd.f32 0.0, %v3527
      %v3529 = vpop.f32.mrb[0].mxu0
      %3530 = vmatprep.mubr.f32.mxu0 0.0
      %3531 = vmatmul.mubr.f32.gmra.mrb[0].mxu0 %v3346
      %v3532 = vpop.f32.mrb[0].mxu0
      %v3533 = vadd.f32 0.0, %v3532
      %v3534 = vpop.f32.mrb[0].mxu0
      %3535 = vmatprep.mubr.f32.mxu0 0.0
      %3536 = vmatmul.mubr.f32.gmra.mrb[0].mxu0 %v3349
      %v3537 = vpop.f32.mrb[0].mxu0
      %v3538 = vadd.f32 0.0, %v3537
      %v3539 = vpop.f32.mrb[0].mxu0
      %3540 = vmatprep.mubr.f32.mxu0 0.0
      %3541 = vmatmul.mubr.f32.gmra.mrb[0].mxu0 %v3352
      %v3542 = vpop.f32.mrb[0].mxu0
      %v3543 = vadd.f32 0.0, %v3542
      %v3544 = vpop.f32.mrb[0].mxu0
      %3545 = vmatprep.mubr.f32.mxu0 0.0
      %3546 = vmatmul.mubr.f32.gmra.mrb[0].mxu0 %v3355
      %v3547 = vpop.f32.mrb[0].mxu0
      %v3548 = vadd.f32 0.0, %v3547
      %v3549 = vpop.f32.mrb[0].mxu0
      %3550 = vmatprep.mubr.f32.mxu0 0.0
      %3551 = vmatmul.mubr.f32.gmra.mrb[0].mxu0 %v3358
      %v3552 = vpop.f32.mrb[0].mxu0
      %v3553 = vadd.f32 0.0, %v3552
      %v3554 = vpop.f32.mrb[0].mxu0
      %3555 = vmatprep.mubr.f32.mxu0 0.0
      %3556 = vmatmul.mubr.f32.gmra.mrb[0].mxu0 %v3361
      %v3557 = vpop.f32.mrb[0].mxu0
      %v3558 = vadd.f32 0.0, %v3557
      %v3559 = vpop.f32.mrb[0].mxu0
      %3560 = vmatprep.mubr.f32.mxu0 0.0
      %3561 = vmatmul.mubr.f32.gmra.mrb[0].mxu0 %v3364
      %v3562 = vpop.f32.mrb[0].mxu0
      %v3563 = vadd.f32 0.0, %v3562
      %v3564 = vpop.f32.mrb[0].mxu0
      %3565 = vmatprep.mubr.f32.mxu0 0.0
      %3566 = vmatmul.mubr.f32.gmra.mrb[0].mxu0 %v3367
      %v3567 = vpop.f32.mrb[0].mxu0
      %v3568 = vadd.f32 0.0, %v3567
      %v3569 = vpop.f32.mrb[0].mxu0
      %3570 = vmatprep.mubr.f32.mxu0 0.0
      %3571 = vmatmul.mubr.f32.gmra.mrb[0].mxu0 %v3370
      %v3572 = vpop.f32.mrb[0].mxu0
      %v3573 = vadd.f32 0.0, %v3572
      %v3574 = vpop.f32.mrb[0].mxu0
      %3575 = vmatprep.mubr.f32.mxu0 0.0
      %3576 = vmatmul.mubr.f32.gmra.mrb[0].mxu0 %v3373
      %v3577 = vpop.f32.mrb[0].mxu0
      %v3578 = vadd.f32 0.0, %v3577
      %v3579 = vpop.f32.mrb[0].mxu0
      %3580 = vmatprep.mubr.f32.mxu0 0.0
      %3581 = vmatmul.mubr.f32.gmra.mrb[0].mxu0 %v3376
      %v3582 = vpop.f32.mrb[0].mxu0
      %v3583 = vadd.f32 0.0, %v3582
      %v3584 = vpop.f32.mrb[0].mxu0
      %3585 = vmatprep.mubr.f32.mxu0 0.0
      %3586 = vmatmul.mubr.f32.gmra.mrb[0].mxu0 %v3379
      %v3587 = vpop.f32.mrb[0].mxu0
      %v3588 = vadd.f32 0.0, %v3587
      %v3589 = vpop.f32.mrb[0].mxu0
      %3590 = vmatprep.mubr.f32.mxu0 0.0
      %3591 = vmatmul.mubr.f32.gmra.mrb[0].mxu0 %v3382
      %v3592 = vpop.f32.mrb[0].mxu0
      %v3593 = vadd.f32 0.0, %v3592
      %v3594 = vpop.f32.mrb[0].mxu0
      %3595 = vmatprep.mubr.f32.mxu0 0.0
      %3596 = vmatmul.mubr.f32.gmra.mrb[0].mxu0 %v3385
      %v3597 = vpop.f32.mrb[0].mxu0
      %v3598 = vadd.f32 0.0, %v3597
      %v3599 = vpop.f32.mrb[0].mxu0
      %3600 = vmatprep.mubr.f32.mxu0 0.0
      %3601 = vmatmul.mubr.f32.gmra.mrb[0].mxu0 %v3388
      %v3602 = vpop.f32.mrb[0].mxu0
      %v3603 = vadd.f32 0.0, %v3602
      %v3604 = vpop.f32.mrb[0].mxu0
      %3605 = vmatprep.mubr.f32.mxu0 0.0
      %3606 = vmatmul.mubr.f32.gmra.mrb[0].mxu0 %v3391
      %v3607 = vpop.f32.mrb[0].mxu0
      %v3608 = vadd.f32 0.0, %v3607
      %v3609 = vpop.f32.mrb[0].mxu0
      %3610 = vmatprep.mubr.f32.mxu0 0.0
      %3611 = vmatmul.mubr.f32.gmra.mrb[0].mxu0 %v3394
      %v3612 = vpop.f32.mrb[0].mxu0
      %v3613 = vadd.f32 0.0, %v3612
      %v3614 = vpop.f32.mrb[0].mxu0
      %3615 = vmatprep.mubr.f32.mxu0 0.0
      %3616 = vmatmul.mubr.f32.gmra.mrb[0].mxu0 %v3397
      %v3617 = vpop.f32.mrb[0].mxu0
      %v3618 = vadd.f32 0.0, %v3617
      %v3619 = vpop.f32.mrb[0].mxu0
      %3620 = vmatprep.mubr.f32.mxu0 0.0
      %3621 = vmatmul.mubr.f32.gmra.mrb[0].mxu0 %v3400
      %v3622 = vpop.f32.mrb[0].mxu0
      %v3623 = vadd.f32 0.0, %v3622
      %v3624 = vpop.f32.mrb[0].mxu0
      %3625 = vmatprep.mubr.f32.mxu0 0.0
      %3626 = vmatmul.mubr.f32.gmra.mrb[0].mxu0 %v3403
      %v3627 = vpop.f32.mrb[0].mxu0
      %v3628 = vadd.f32 0.0, %v3627
      %v3629 = vpop.f32.mrb[0].mxu0
      %3630 = vmatprep.mubr.f32.mxu0 0.0
      %3631 = vmatmul.mubr.f32.gmra.mrb[0].mxu0 %v3406
      %v3632 = vpop.f32.mrb[0].mxu0
      %v3633 = vadd.f32 0.0, %v3632
      %v3634 = vpop.f32.mrb[0].mxu0
      %3635 = vdwg.mxu0
      %v3636 = vadd.f32 %v3140, %v3478
      %v3637 = vadd.f32 %v3145, %v3483
      %v3638 = vadd.f32 %v3150, %v3488
      %v3639 = vadd.f32 %v3155, %v3493
      %v3640 = vadd.f32 %v3160, %v3498
      %v3641 = vadd.f32 %v3165, %v3503
      %v3642 = vadd.f32 %v3170, %v3508
      %v3643 = vadd.f32 %v3175, %v3513
      %v3644 = vadd.f32 %v3180, %v3518
      %v3645 = vadd.f32 %v3185, %v3523
      %v3646 = vadd.f32 %v3190, %v3528
      %v3647 = vadd.f32 %v3195, %v3533
      %v3648 = vadd.f32 %v3200, %v3538
      %v3649 = vadd.f32 %v3205, %v3543
      %v3650 = vadd.f32 %v3210, %v3548
      %v3651 = vadd.f32 %v3215, %v3553
      %v3652 = vadd.f32 %v3220, %v3558
      %v3653 = vadd.f32 %v3225, %v3563
      %v3654 = vadd.f32 %v3230, %v3568
      %v3655 = vadd.f32 %v3235, %v3573
      %v3656 = vadd.f32 %v3240, %v3578
      %v3657 = vadd.f32 %v3245, %v3583
      %v3658 = vadd.f32 %v3250, %v3588
      %v3659 = vadd.f32 %v3255, %v3593
      %v3660 = vadd.f32 %v3260, %v3598
      %v3661 = vadd.f32 %v3265, %v3603
      %v3662 = vadd.f32 %v3270, %v3608
      %v3663 = vadd.f32 %v3275, %v3613
      %v3664 = vadd.f32 %v3280, %v3618
      %v3665 = vadd.f32 %v3285, %v3623
      %v3666 = vadd.f32 %v3290, %v3628
      %v3667 = vadd.f32 %v3295, %v3633
      %v3668 = vmul.f32 %v3636, %v2600
      %v3669 = vmul.f32 %v3637, %v2601
      %v3670 = vmul.f32 %v3638, %v2602
      %v3671 = vmul.f32 %v3639, %v2603
      %v3672 = vmul.f32 %v3640, %v2604
      %v3673 = vmul.f32 %v3641, %v2605
      %v3674 = vmul.f32 %v3642, %v2606
      %v3675 = vmul.f32 %v3643, %v2607
      %v3676 = vmul.f32 %v3644, %v2608
      %v3677 = vmul.f32 %v3645, %v2609
      %v3678 = vmul.f32 %v3646, %v2610
      %v3679 = vmul.f32 %v3647, %v2611
      %v3680 = vmul.f32 %v3648, %v2612
      %v3681 = vmul.f32 %v3649, %v2613
      %v3682 = vmul.f32 %v3650, %v2614
      %v3683 = vmul.f32 %v3651, %v2615
      %v3684 = vmul.f32 %v3652, %v2616
      %v3685 = vmul.f32 %v3653, %v2617
      %v3686 = vmul.f32 %v3654, %v2618
      %v3687 = vmul.f32 %v3655, %v2619
      %v3688 = vmul.f32 %v3656, %v2620
      %v3689 = vmul.f32 %v3657, %v2621
      %v3690 = vmul.f32 %v3658, %v2622
      %v3691 = vmul.f32 %v3659, %v2623
      %v3692 = vmul.f32 %v3660, %v2624
      %v3693 = vmul.f32 %v3661, %v2625
      %v3694 = vmul.f32 %v3662, %v2626
      %v3695 = vmul.f32 %v3663, %v2627
      %v3696 = vmul.f32 %v3664, %v2628
      %v3697 = vmul.f32 %v3665, %v2629
      %v3698 = vmul.f32 %v3666, %v2630
      %v3699 = vmul.f32 %v3667, %v2631
      %v3700 = vadd.f32 %v3668, %v411
      %v3701 = vadd.f32 %v3669, %v412
      %v3702 = vadd.f32 %v3670, %v413
      %v3703 = vadd.f32 %v3671, %v414
      %v3704 = vadd.f32 %v3672, %v415
      %v3705 = vadd.f32 %v3673, %v416
      %v3706 = vadd.f32 %v3674, %v417
      %v3707 = vadd.f32 %v3675, %v418
      %v3708 = vadd.f32 %v3676, %v419
      %v3709 = vadd.f32 %v3677, %v420
      %v3710 = vadd.f32 %v3678, %v421
      %v3711 = vadd.f32 %v3679, %v422
      %v3712 = vadd.f32 %v3680, %v423
      %v3713 = vadd.f32 %v3681, %v424
      %v3714 = vadd.f32 %v3682, %v425
      %v3715 = vadd.f32 %v3683, %v426
      %v3716 = vadd.f32 %v3684, %v427
      %v3717 = vadd.f32 %v3685, %v428
      %v3718 = vadd.f32 %v3686, %v429
      %v3719 = vadd.f32 %v3687, %v430
      %v3720 = vadd.f32 %v3688, %v431
      %v3721 = vadd.f32 %v3689, %v432
      %v3722 = vadd.f32 %v3690, %v433
      %v3723 = vadd.f32 %v3691, %v434
      %v3724 = vadd.f32 %v3692, %v435
      %v3725 = vadd.f32 %v3693, %v436
      %v3726 = vadd.f32 %v3694, %v437
      %v3727 = vadd.f32 %v3695, %v438
      %v3728 = vadd.f32 %v3696, %v439
      %v3729 = vadd.f32 %v3697, %v440
      %v3730 = vadd.f32 %v3698, %v441
      %v3731 = vadd.f32 %v3699, %v442
      %v3732 = vld [vmem:[%s4] sm:$0x1]
      %v3734 = vlaneseq
      %v3735 = vshrl.u32 %v3734, 7
      %v3736 = vsub.s32 0, %v3735
      %v3737 = vrot.slane %v3732, %v3736
      %v3739 = vmul.f32 %v3700, %v3737
      %v3740 = vmul.f32 %v3701, %v3737
      %v3741 = vmul.f32 %v3702, %v3737
      %v3742 = vmul.f32 %v3703, %v3737
      %v3743 = vmul.f32 %v3704, %v3737
      %v3744 = vmul.f32 %v3705, %v3737
      %v3745 = vmul.f32 %v3706, %v3737
      %v3746 = vmul.f32 %v3707, %v3737
      %v3747 = vmul.f32 %v3708, %v3737
      %v3748 = vmul.f32 %v3709, %v3737
      %v3749 = vmul.f32 %v3710, %v3737
      %v3750 = vmul.f32 %v3711, %v3737
      %v3751 = vmul.f32 %v3712, %v3737
      %v3752 = vmul.f32 %v3713, %v3737
      %v3753 = vmul.f32 %v3714, %v3737
      %v3754 = vmul.f32 %v3715, %v3737
      %v3755 = vmul.f32 %v3716, %v3737
      %v3756 = vmul.f32 %v3717, %v3737
      %v3757 = vmul.f32 %v3718, %v3737
      %v3758 = vmul.f32 %v3719, %v3737
      %v3759 = vmul.f32 %v3720, %v3737
      %v3760 = vmul.f32 %v3721, %v3737
      %v3761 = vmul.f32 %v3722, %v3737
      %v3762 = vmul.f32 %v3723, %v3737
      %v3763 = vmul.f32 %v3724, %v3737
      %v3764 = vmul.f32 %v3725, %v3737
      %v3765 = vmul.f32 %v3726, %v3737
      %v3766 = vmul.f32 %v3727, %v3737
      %v3767 = vmul.f32 %v3728, %v3737
      %v3768 = vmul.f32 %v3729, %v3737
      %v3769 = vmul.f32 %v3730, %v3737
      %v3770 = vmul.f32 %v3731, %v3737
      %v3771 = vld [vmem:[%s5] sm:$0x1]
      %v3773 = vlaneseq
      %v3774 = vshrl.u32 %v3773, 7
      %v3775 = vsub.s32 0, %v3774
      %v3776 = vrot.slane %v3771, %v3775
      %v3778 = vadd.f32 %v3739, %v3776
      %v3779 = vadd.f32 %v3740, %v3776
      %v3780 = vadd.f32 %v3741, %v3776
      %v3781 = vadd.f32 %v3742, %v3776
      %v3782 = vadd.f32 %v3743, %v3776
      %v3783 = vadd.f32 %v3744, %v3776
      %v3784 = vadd.f32 %v3745, %v3776
      %v3785 = vadd.f32 %v3746, %v3776
      %v3786 = vadd.f32 %v3747, %v3776
      %v3787 = vadd.f32 %v3748, %v3776
      %v3788 = vadd.f32 %v3749, %v3776
      %v3789 = vadd.f32 %v3750, %v3776
      %v3790 = vadd.f32 %v3751, %v3776
      %v3791 = vadd.f32 %v3752, %v3776
      %v3792 = vadd.f32 %v3753, %v3776
      %v3793 = vadd.f32 %v3754, %v3776
      %v3794 = vadd.f32 %v3755, %v3776
      %v3795 = vadd.f32 %v3756, %v3776
      %v3796 = vadd.f32 %v3757, %v3776
      %v3797 = vadd.f32 %v3758, %v3776
      %v3798 = vadd.f32 %v3759, %v3776
      %v3799 = vadd.f32 %v3760, %v3776
      %v3800 = vadd.f32 %v3761, %v3776
      %v3801 = vadd.f32 %v3762, %v3776
      %v3802 = vadd.f32 %v3763, %v3776
      %v3803 = vadd.f32 %v3764, %v3776
      %v3804 = vadd.f32 %v3765, %v3776
      %v3805 = vadd.f32 %v3766, %v3776
      %v3806 = vadd.f32 %v3767, %v3776
      %v3807 = vadd.f32 %v3768, %v3776
      %v3808 = vadd.f32 %v3769, %v3776
      %v3809 = vadd.f32 %v3770, %v3776
      %v3810 = vadd.f32 %v3778, 3.0
      %v3811 = vadd.f32 %v3779, 3.0
      %v3812 = vadd.f32 %v3780, 3.0
      %v3813 = vadd.f32 %v3781, 3.0
      %v3814 = vadd.f32 %v3782, 3.0
      %v3815 = vadd.f32 %v3783, 3.0
      %v3816 = vadd.f32 %v3784, 3.0
      %v3817 = vadd.f32 %v3785, 3.0
      %v3818 = vadd.f32 %v3786, 3.0
      %v3819 = vadd.f32 %v3787, 3.0
      %v3820 = vadd.f32 %v3788, 3.0
      %v3821 = vadd.f32 %v3789, 3.0
      %v3822 = vadd.f32 %v3790, 3.0
      %v3823 = vadd.f32 %v3791, 3.0
      %v3824 = vadd.f32 %v3792, 3.0
      %v3825 = vadd.f32 %v3793, 3.0
      %v3826 = vadd.f32 %v3794, 3.0
      %v3827 = vadd.f32 %v3795, 3.0
      %v3828 = vadd.f32 %v3796, 3.0
      %v3829 = vadd.f32 %v3797, 3.0
      %v3830 = vadd.f32 %v3798, 3.0
      %v3831 = vadd.f32 %v3799, 3.0
      %v3832 = vadd.f32 %v3800, 3.0
      %v3833 = vadd.f32 %v3801, 3.0
      %v3834 = vadd.f32 %v3802, 3.0
      %v3835 = vadd.f32 %v3803, 3.0
      %v3836 = vadd.f32 %v3804, 3.0
      %v3837 = vadd.f32 %v3805, 3.0
      %v3838 = vadd.f32 %v3806, 3.0
      %v3839 = vadd.f32 %v3807, 3.0
      %v3840 = vadd.f32 %v3808, 3.0
      %v3841 = vadd.f32 %v3809, 3.0
      %v3842 = vmax.f32 %v3810, 0.0
      %v3843 = vmax.f32 %v3811, 0.0
      %v3844 = vmax.f32 %v3812, 0.0
      %v3845 = vmax.f32 %v3813, 0.0
      %v3846 = vmax.f32 %v3814, 0.0
      %v3847 = vmax.f32 %v3815, 0.0
      %v3848 = vmax.f32 %v3816, 0.0
      %v3849 = vmax.f32 %v3817, 0.0
      %v3850 = vmax.f32 %v3818, 0.0
      %v3851 = vmax.f32 %v3819, 0.0
      %v3852 = vmax.f32 %v3820, 0.0
      %v3853 = vmax.f32 %v3821, 0.0
      %v3854 = vmax.f32 %v3822, 0.0
      %v3855 = vmax.f32 %v3823, 0.0
      %v3856 = vmax.f32 %v3824, 0.0
      %v3857 = vmax.f32 %v3825, 0.0
      %v3858 = vmax.f32 %v3826, 0.0
      %v3859 = vmax.f32 %v3827, 0.0
      %v3860 = vmax.f32 %v3828, 0.0
      %v3861 = vmax.f32 %v3829, 0.0
      %v3862 = vmax.f32 %v3830, 0.0
      %v3863 = vmax.f32 %v3831, 0.0
      %v3864 = vmax.f32 %v3832, 0.0
      %v3865 = vmax.f32 %v3833, 0.0
      %v3866 = vmax.f32 %v3834, 0.0
      %v3867 = vmax.f32 %v3835, 0.0
      %v3868 = vmax.f32 %v3836, 0.0
      %v3869 = vmax.f32 %v3837, 0.0
      %v3870 = vmax.f32 %v3838, 0.0
      %v3871 = vmax.f32 %v3839, 0.0
      %v3872 = vmax.f32 %v3840, 0.0
      %v3873 = vmax.f32 %v3841, 0.0
      %v3874 = vmin.f32 %v3842, 6.0
      %v3875 = vmin.f32 %v3843, 6.0
      %v3876 = vmin.f32 %v3844, 6.0
      %v3877 = vmin.f32 %v3845, 6.0
      %v3878 = vmin.f32 %v3846, 6.0
      %v3879 = vmin.f32 %v3847, 6.0
      %v3880 = vmin.f32 %v3848, 6.0
      %v3881 = vmin.f32 %v3849, 6.0
      %v3882 = vmin.f32 %v3850, 6.0
      %v3883 = vmin.f32 %v3851, 6.0
      %v3884 = vmin.f32 %v3852, 6.0
      %v3885 = vmin.f32 %v3853, 6.0
      %v3886 = vmin.f32 %v3854, 6.0
      %v3887 = vmin.f32 %v3855, 6.0
      %v3888 = vmin.f32 %v3856, 6.0
      %v3889 = vmin.f32 %v3857, 6.0
      %v3890 = vmin.f32 %v3858, 6.0
      %v3891 = vmin.f32 %v3859, 6.0
      %v3892 = vmin.f32 %v3860, 6.0
      %v3893 = vmin.f32 %v3861, 6.0
      %v3894 = vmin.f32 %v3862, 6.0
      %v3895 = vmin.f32 %v3863, 6.0
      %v3896 = vmin.f32 %v3864, 6.0
      %v3897 = vmin.f32 %v3865, 6.0
      %v3898 = vmin.f32 %v3866, 6.0
      %v3899 = vmin.f32 %v3867, 6.0
      %v3900 = vmin.f32 %v3868, 6.0
      %v3901 = vmin.f32 %v3869, 6.0
      %v3902 = vmin.f32 %v3870, 6.0
      %v3903 = vmin.f32 %v3871, 6.0
      %v3904 = vmin.f32 %v3872, 6.0
      %v3905 = vmin.f32 %v3873, 6.0
      %v3906 = vmul.f32 %v3778, %v3874
      %v3907 = vmul.f32 %v3779, %v3875
      %v3908 = vmul.f32 %v3780, %v3876
      %v3909 = vmul.f32 %v3781, %v3877
      %v3910 = vmul.f32 %v3782, %v3878
      %v3911 = vmul.f32 %v3783, %v3879
      %v3912 = vmul.f32 %v3784, %v3880
      %v3913 = vmul.f32 %v3785, %v3881
      %v3914 = vmul.f32 %v3786, %v3882
      %v3915 = vmul.f32 %v3787, %v3883
      %v3916 = vmul.f32 %v3788, %v3884
      %v3917 = vmul.f32 %v3789, %v3885
      %v3918 = vmul.f32 %v3790, %v3886
      %v3919 = vmul.f32 %v3791, %v3887
      %v3920 = vmul.f32 %v3792, %v3888
      %v3921 = vmul.f32 %v3793, %v3889
      %v3922 = vmul.f32 %v3794, %v3890
      %v3923 = vmul.f32 %v3795, %v3891
      %v3924 = vmul.f32 %v3796, %v3892
      %v3925 = vmul.f32 %v3797, %v3893
      %v3926 = vmul.f32 %v3798, %v3894
      %v3927 = vmul.f32 %v3799, %v3895
      %v3928 = vmul.f32 %v3800, %v3896
      %v3929 = vmul.f32 %v3801, %v3897
      %v3930 = vmul.f32 %v3802, %v3898
      %v3931 = vmul.f32 %v3803, %v3899
      %v3932 = vmul.f32 %v3804, %v3900
      %v3933 = vmul.f32 %v3805, %v3901
      %v3934 = vmul.f32 %v3806, %v3902
      %v3935 = vmul.f32 %v3807, %v3903
      %v3936 = vmul.f32 %v3808, %v3904
      %v3937 = vmul.f32 %v3809, %v3905
      %v3938 = vmul.f32 %v3906, 0.16666667
      %v3939 = vmul.f32 %v3907, 0.16666667
      %v3940 = vmul.f32 %v3908, 0.16666667
      %v3941 = vmul.f32 %v3909, 0.16666667
      %v3942 = vmul.f32 %v3910, 0.16666667
      %v3943 = vmul.f32 %v3911, 0.16666667
      %v3944 = vmul.f32 %v3912, 0.16666667
      %v3945 = vmul.f32 %v3913, 0.16666667
      %v3946 = vmul.f32 %v3914, 0.16666667
      %v3947 = vmul.f32 %v3915, 0.16666667
      %v3948 = vmul.f32 %v3916, 0.16666667
      %v3949 = vmul.f32 %v3917, 0.16666667
      %v3950 = vmul.f32 %v3918, 0.16666667
      %v3951 = vmul.f32 %v3919, 0.16666667
      %v3952 = vmul.f32 %v3920, 0.16666667
      %v3953 = vmul.f32 %v3921, 0.16666667
      %v3954 = vmul.f32 %v3922, 0.16666667
      %v3955 = vmul.f32 %v3923, 0.16666667
      %v3956 = vmul.f32 %v3924, 0.16666667
      %v3957 = vmul.f32 %v3925, 0.16666667
      %v3958 = vmul.f32 %v3926, 0.16666667
      %v3959 = vmul.f32 %v3927, 0.16666667
      %v3960 = vmul.f32 %v3928, 0.16666667
      %v3961 = vmul.f32 %v3929, 0.16666667
      %v3962 = vmul.f32 %v3930, 0.16666667
      %v3963 = vmul.f32 %v3931, 0.16666667
      %v3964 = vmul.f32 %v3932, 0.16666667
      %v3965 = vmul.f32 %v3933, 0.16666667
      %v3966 = vmul.f32 %v3934, 0.16666667
      %v3967 = vmul.f32 %v3935, 0.16666667
      %v3968 = vmul.f32 %v3936, 0.16666667
      %v3969 = vmul.f32 %v3937, 0.16666667
      %v3970 = vld [vmem:[%s6] sm:$0xf]
      %3971 = vrot.lane.b32.xlu0 %v366, 112
      %v3972 = vpop.permute.xlu0 %3971
      %3973 = vrot.lane.b32.xlu0 %v367, 112
      %v3974 = vpop.permute.xlu0 %3973
      %3975 = vrot.lane.b32.xlu0 %v368, 112
      %v3976 = vpop.permute.xlu0 %3975
      %3977 = vrot.lane.b32.xlu0 %v369, 112
      %v3978 = vpop.permute.xlu0 %3977
      %3979 = vrot.lane.b32.xlu0 %v370, 112
      %v3980 = vpop.permute.xlu0 %3979
      %3981 = vrot.lane.b32.xlu0 %v371, 112
      %v3982 = vpop.permute.xlu0 %3981
      %3983 = vrot.lane.b32.xlu0 %v372, 112
      %v3984 = vpop.permute.xlu0 %3983
      %3985 = vrot.lane.b32.xlu0 %v373, 112
      %v3986 = vpop.permute.xlu0 %3985
      %3987 = vrot.lane.b32.xlu0 %v374, 112
      %v3988 = vpop.permute.xlu0 %3987
      %3989 = vrot.lane.b32.xlu0 %v375, 112
      %v3990 = vpop.permute.xlu0 %3989
      %3991 = vrot.lane.b32.xlu0 %v376, 112
      %v3992 = vpop.permute.xlu0 %3991
      %3993 = vrot.lane.b32.xlu0 %v377, 112
      %v3994 = vpop.permute.xlu0 %3993
      %3995 = vrot.lane.b32.xlu0 %v378, 112
      %v3996 = vpop.permute.xlu0 %3995
      %3997 = vrot.lane.b32.xlu0 %v379, 112
      %v3998 = vpop.permute.xlu0 %3997
      %3999 = vrot.lane.b32.xlu0 %v380, 112
      %v4000 = vpop.permute.xlu0 %3999
      %4001 = vrot.lane.b32.xlu0 %v381, 112
      %v4002 = vpop.permute.xlu0 %4001
      %4003 = vrot.lane.b32.xlu0 %v382, 112
      %v4004 = vpop.permute.xlu0 %4003
      %4005 = vrot.lane.b32.xlu0 %v383, 112
      %v4006 = vpop.permute.xlu0 %4005
      %4007 = vrot.lane.b32.xlu0 %v384, 112
      %v4008 = vpop.permute.xlu0 %4007
      %4009 = vrot.lane.b32.xlu0 %v385, 112
      %v4010 = vpop.permute.xlu0 %4009
      %4011 = vrot.lane.b32.xlu0 %v386, 112
      %v4012 = vpop.permute.xlu0 %4011
      %4013 = vrot.lane.b32.xlu0 %v387, 112
      %v4014 = vpop.permute.xlu0 %4013
      %4015 = vrot.lane.b32.xlu0 %v388, 112
      %v4016 = vpop.permute.xlu0 %4015
      %4017 = vrot.lane.b32.xlu0 %v389, 112
      %v4018 = vpop.permute.xlu0 %4017
      %4019 = vrot.lane.b32.xlu0 %v390, 112
      %v4020 = vpop.permute.xlu0 %4019
      %4021 = vrot.lane.b32.xlu0 %v391, 112
      %v4022 = vpop.permute.xlu0 %4021
      %4023 = vrot.lane.b32.xlu0 %v392, 112
      %v4024 = vpop.permute.xlu0 %4023
      %4025 = vrot.lane.b32.xlu0 %v393, 112
      %v4026 = vpop.permute.xlu0 %4025
      %4027 = vrot.lane.b32.xlu0 %v394, 112
      %v4028 = vpop.permute.xlu0 %4027
      %4029 = vrot.lane.b32.xlu0 %v395, 112
      %v4030 = vpop.permute.xlu0 %4029
      %4031 = vrot.lane.b32.xlu0 %v396, 112
      %v4032 = vpop.permute.xlu0 %4031
      %4033 = vrot.lane.b32.xlu0 %v397, 112
      %v4034 = vpop.permute.xlu0 %4033
      %4035 = vrot.lane.b32.xlu0 %v366, 80
      %v4036 = vpop.permute.xlu0 %4035
      %4037 = vrot.lane.b32.xlu0 %v367, 80
      %v4038 = vpop.permute.xlu0 %4037
      %4039 = vrot.lane.b32.xlu0 %v368, 80
      %v4040 = vpop.permute.xlu0 %4039
      %4041 = vrot.lane.b32.xlu0 %v369, 80
      %v4042 = vpop.permute.xlu0 %4041
      %4043 = vrot.lane.b32.xlu0 %v370, 80
      %v4044 = vpop.permute.xlu0 %4043
      %4045 = vrot.lane.b32.xlu0 %v371, 80
      %v4046 = vpop.permute.xlu0 %4045
      %4047 = vrot.lane.b32.xlu0 %v372, 80
      %v4048 = vpop.permute.xlu0 %4047
      %4049 = vrot.lane.b32.xlu0 %v373, 80
      %v4050 = vpop.permute.xlu0 %4049
      %4051 = vrot.lane.b32.xlu0 %v374, 80
      %v4052 = vpop.permute.xlu0 %4051
      %4053 = vrot.lane.b32.xlu0 %v375, 80
      %v4054 = vpop.permute.xlu0 %4053
      %4055 = vrot.lane.b32.xlu0 %v376, 80
      %v4056 = vpop.permute.xlu0 %4055
      %4057 = vrot.lane.b32.xlu0 %v377, 80
      %v4058 = vpop.permute.xlu0 %4057
      %4059 = vrot.lane.b32.xlu0 %v378, 80
      %v4060 = vpop.permute.xlu0 %4059
      %4061 = vrot.lane.b32.xlu0 %v379, 80
      %v4062 = vpop.permute.xlu0 %4061
      %4063 = vrot.lane.b32.xlu0 %v380, 80
      %v4064 = vpop.permute.xlu0 %4063
      %4065 = vrot.lane.b32.xlu0 %v381, 80
      %v4066 = vpop.permute.xlu0 %4065
      %4067 = vrot.lane.b32.xlu0 %v382, 80
      %v4068 = vpop.permute.xlu0 %4067
      %4069 = vrot.lane.b32.xlu0 %v383, 80
      %v4070 = vpop.permute.xlu0 %4069
      %4071 = vrot.lane.b32.xlu0 %v384, 80
      %v4072 = vpop.permute.xlu0 %4071
      %4073 = vrot.lane.b32.xlu0 %v385, 80
      %v4074 = vpop.permute.xlu0 %4073
      %4075 = vrot.lane.b32.xlu0 %v386, 80
      %v4076 = vpop.permute.xlu0 %4075
      %4077 = vrot.lane.b32.xlu0 %v387, 80
      %v4078 = vpop.permute.xlu0 %4077
      %4079 = vrot.lane.b32.xlu0 %v388, 80
      %v4080 = vpop.permute.xlu0 %4079
      %4081 = vrot.lane.b32.xlu0 %v389, 80
      %v4082 = vpop.permute.xlu0 %4081
      %4083 = vrot.lane.b32.xlu0 %v390, 80
      %v4084 = vpop.permute.xlu0 %4083
      %4085 = vrot.lane.b32.xlu0 %v391, 80
      %v4086 = vpop.permute.xlu0 %4085
      %4087 = vrot.lane.b32.xlu0 %v392, 80
      %v4088 = vpop.permute.xlu0 %4087
      %4089 = vrot.lane.b32.xlu0 %v393, 80
      %v4090 = vpop.permute.xlu0 %4089
      %4091 = vrot.lane.b32.xlu0 %v394, 80
      %v4092 = vpop.permute.xlu0 %4091
      %4093 = vrot.lane.b32.xlu0 %v395, 80
      %v4094 = vpop.permute.xlu0 %4093
      %4095 = vrot.lane.b32.xlu0 %v396, 80
      %v4096 = vpop.permute.xlu0 %4095
      %4097 = vrot.lane.b32.xlu0 %v397, 80
      %v4098 = vpop.permute.xlu0 %4097
      %v4099 = vsel %vm539, %v3972, 0
      %v4101 = vsel %vm539, %v3974, 0
      %v4103 = vsel %vm539, %v3976, 0
      %v4105 = vsel %vm539, %v3978, 0
      %v4107 = vsel %vm539, %v3980, 0
      %v4109 = vsel %vm539, %v3982, 0
      %v4111 = vsel %vm539, %v3984, 0
      %v4113 = vsel %vm539, %v3986, 0
      %v4115 = vsel %vm539, %v3988, 0
      %v4117 = vsel %vm539, %v3990, 0
      %v4119 = vsel %vm539, %v3992, 0
      %v4121 = vsel %vm539, %v3994, 0
      %v4123 = vsel %vm539, %v3996, 0
      %v4125 = vsel %vm539, %v3998, 0
      %v4127 = vsel %vm539, %v4000, 0
      %v4129 = vsel %vm539, %v4002, 0
      %v4131 = vsel %vm539, %v4004, 0
      %v4133 = vsel %vm539, %v4006, 0
      %v4135 = vsel %vm539, %v4008, 0
      %v4137 = vsel %vm539, %v4010, 0
      %v4139 = vsel %vm539, %v4012, 0
      %v4141 = vsel %vm539, %v4014, 0
      %v4143 = vsel %vm539, %v4016, 0
      %v4145 = vsel %vm539, %v4018, 0
      %v4147 = vsel %vm539, %v4020, 0
      %v4149 = vsel %vm539, %v4022, 0
      %v4151 = vsel %vm539, %v4024, 0
      %v4153 = vsel %vm539, %v4026, 0
      %v4155 = vsel %vm539, %v4028, 0
      %v4157 = vsel %vm539, %v4030, 0
      %v4159 = vsel %vm539, %v4032, 0
      %v4161 = vsel %vm539, %v4034, 0
      %v4163 = vsel %vm539, %v4036, 0
      %v4165 = vsel %vm539, %v4038, 0
      %v4167 = vsel %vm539, %v4040, 0
      %v4169 = vsel %vm539, %v4042, 0
      %v4171 = vsel %vm539, %v4044, 0
      %v4173 = vsel %vm539, %v4046, 0
      %v4175 = vsel %vm539, %v4048, 0
      %v4177 = vsel %vm539, %v4050, 0
      %v4179 = vsel %vm539, %v4052, 0
      %v4181 = vsel %vm539, %v4054, 0
      %v4183 = vsel %vm539, %v4056, 0
      %v4185 = vsel %vm539, %v4058, 0
      %v4187 = vsel %vm539, %v4060, 0
      %v4189 = vsel %vm539, %v4062, 0
      %v4191 = vsel %vm539, %v4064, 0
      %v4193 = vsel %vm539, %v4066, 0
      %v4195 = vsel %vm539, %v4068, 0
      %v4197 = vsel %vm539, %v4070, 0
      %v4199 = vsel %vm539, %v4072, 0
      %v4201 = vsel %vm539, %v4074, 0
      %v4203 = vsel %vm539, %v4076, 0
      %v4205 = vsel %vm539, %v4078, 0
      %v4207 = vsel %vm539, %v4080, 0
      %v4209 = vsel %vm539, %v4082, 0
      %v4211 = vsel %vm539, %v4084, 0
      %v4213 = vsel %vm539, %v4086, 0
      %v4215 = vsel %vm539, %v4088, 0
      %v4217 = vsel %vm539, %v4090, 0
      %v4219 = vsel %vm539, %v4092, 0
      %v4221 = vsel %vm539, %v4094, 0
      %v4223 = vsel %vm539, %v4096, 0
      %v4225 = vsel %vm539, %v4098, 0
      %4227 = vmatprep.subr.mxu0 0.0
      %4228 = vmatpush1.xpose.msra.mxu0 %v4163
      %4229 = vmatprep.subr.mxu0 0.0
      %4230 = vmatpush1.xpose.msra.mxu0 %v4165
      %4231 = vmatprep.subr.mxu0 0.0
      %4232 = vmatpush1.xpose.msra.mxu0 %v4167
      %4233 = vmatprep.subr.mxu0 0.0
      %4234 = vmatpush1.xpose.msra.mxu0 %v4169
      %4235 = vmatprep.subr.mxu0 0.0
      %4236 = vmatpush1.xpose.msra.mxu0 %v4171
      %4237 = vmatprep.subr.mxu0 0.0
      %4238 = vmatpush1.xpose.msra.mxu0 %v4173
      %4239 = vmatprep.subr.mxu0 0.0
      %4240 = vmatpush1.xpose.msra.mxu0 %v4175
      %4241 = vmatprep.subr.mxu0 0.0
      %4242 = vmatpush1.xpose.msra.mxu0 %v4177
      %4243 = vmatprep.subr.mxu0 0.0
      %4244 = vmatpush1.xpose.msra.mxu0 %v4179
      %4245 = vmatprep.subr.mxu0 0.0
      %4246 = vmatpush1.xpose.msra.mxu0 %v4181
      %4247 = vmatprep.subr.mxu0 0.0
      %4248 = vmatpush1.xpose.msra.mxu0 %v4183
      %4249 = vmatprep.subr.mxu0 0.0
      %4250 = vmatpush1.xpose.msra.mxu0 %v4185
      %4251 = vmatprep.subr.mxu0 0.0
      %4252 = vmatpush1.xpose.msra.mxu0 %v4187
      %4253 = vmatprep.subr.mxu0 0.0
      %4254 = vmatpush1.xpose.msra.mxu0 %v4189
      %4255 = vmatprep.subr.mxu0 0.0
      %4256 = vmatpush1.xpose.msra.mxu0 %v4191
      %4257 = vmatprep.subr.mxu0 0.0
      %4258 = vmatpush1.xpose.msra.mxu0 %v4193
      %4259 = vmatprep.subr.mxu0 0.0
      %4260 = vmatpush1.xpose.msra.mxu0 %v4195
      %4261 = vmatprep.subr.mxu0 0.0
      %4262 = vmatpush1.xpose.msra.mxu0 %v4197
      %4263 = vmatprep.subr.mxu0 0.0
      %4264 = vmatpush1.xpose.msra.mxu0 %v4199
      %4265 = vmatprep.subr.mxu0 0.0
      %4266 = vmatpush1.xpose.msra.mxu0 %v4201
      %4267 = vmatprep.subr.mxu0 0.0
      %4268 = vmatpush1.xpose.msra.mxu0 %v4203
      %4269 = vmatprep.subr.mxu0 0.0
      %4270 = vmatpush1.xpose.msra.mxu0 %v4205
      %4271 = vmatprep.subr.mxu0 0.0
      %4272 = vmatpush1.xpose.msra.mxu0 %v4207
      %4273 = vmatprep.subr.mxu0 0.0
      %4274 = vmatpush1.xpose.msra.mxu0 %v4209
      %4275 = vmatprep.subr.mxu0 0.0
      %4276 = vmatpush1.xpose.msra.mxu0 %v4211
      %4277 = vmatprep.subr.mxu0 0.0
      %4278 = vmatpush1.xpose.msra.mxu0 %v4213
      %4279 = vmatprep.subr.mxu0 0.0
      %4280 = vmatpush1.xpose.msra.mxu0 %v4215
      %4281 = vmatprep.subr.mxu0 0.0
      %4282 = vmatpush1.xpose.msra.mxu0 %v4217
      %4283 = vmatprep.subr.mxu0 0.0
      %4284 = vmatpush1.xpose.msra.mxu0 %v4219
      %4285 = vmatprep.subr.mxu0 0.0
      %4286 = vmatpush1.xpose.msra.mxu0 %v4221
      %4287 = vmatprep.subr.mxu0 0.0
      %4288 = vmatpush1.xpose.msra.mxu0 %v4223
      %4289 = vmatprep.subr.mxu0 0.0
      %4290 = vmatpush1.xpose.msra.mxu0 %v4225
      %4291 = vmatprep.mubr.f32.mxu0 0.0
      %4292 = vmatmul.mubr.f32.gmra.mrb[0].mxu0 %v4099
      %v4293 = vpop.f32.mrb[0].mxu0
      %v4294 = vadd.f32 0.0, %v4293
      %v4295 = vpop.f32.mrb[0].mxu0
      %v4296 = vadd.f32 0.0, %v4295
      %4297 = vmatprep.mubr.f32.mxu0 0.0
      %4298 = vmatmul.mubr.f32.gmra.mrb[0].mxu0 %v4101
      %v4299 = vpop.f32.mrb[0].mxu0
      %v4300 = vadd.f32 0.0, %v4299
      %v4301 = vpop.f32.mrb[0].mxu0
      %v4302 = vadd.f32 0.0, %v4301
      %4303 = vmatprep.mubr.f32.mxu0 0.0
      %4304 = vmatmul.mubr.f32.gmra.mrb[0].mxu0 %v4103
      %v4305 = vpop.f32.mrb[0].mxu0
      %v4306 = vadd.f32 0.0, %v4305
      %v4307 = vpop.f32.mrb[0].mxu0
      %v4308 = vadd.f32 0.0, %v4307
      %4309 = vmatprep.mubr.f32.mxu0 0.0
      %4310 = vmatmul.mubr.f32.gmra.mrb[0].mxu0 %v4105
      %v4311 = vpop.f32.mrb[0].mxu0
      %v4312 = vadd.f32 0.0, %v4311
      %v4313 = vpop.f32.mrb[0].mxu0
      %v4314 = vadd.f32 0.0, %v4313
      %4315 = vmatprep.mubr.f32.mxu0 0.0
      %4316 = vmatmul.mubr.f32.gmra.mrb[0].mxu0 %v4107
      %v4317 = vpop.f32.mrb[0].mxu0
      %v4318 = vadd.f32 0.0, %v4317
      %v4319 = vpop.f32.mrb[0].mxu0
      %v4320 = vadd.f32 0.0, %v4319
      %4321 = vmatprep.mubr.f32.mxu0 0.0
      %4322 = vmatmul.mubr.f32.gmra.mrb[0].mxu0 %v4109
      %v4323 = vpop.f32.mrb[0].mxu0
      %v4324 = vadd.f32 0.0, %v4323
      %v4325 = vpop.f32.mrb[0].mxu0
      %v4326 = vadd.f32 0.0, %v4325
      %4327 = vmatprep.mubr.f32.mxu0 0.0
      %4328 = vmatmul.mubr.f32.gmra.mrb[0].mxu0 %v4111
      %v4329 = vpop.f32.mrb[0].mxu0
      %v4330 = vadd.f32 0.0, %v4329
      %v4331 = vpop.f32.mrb[0].mxu0
      %v4332 = vadd.f32 0.0, %v4331
      %4333 = vmatprep.mubr.f32.mxu0 0.0
      %4334 = vmatmul.mubr.f32.gmra.mrb[0].mxu0 %v4113
      %v4335 = vpop.f32.mrb[0].mxu0
      %v4336 = vadd.f32 0.0, %v4335
      %v4337 = vpop.f32.mrb[0].mxu0
      %v4338 = vadd.f32 0.0, %v4337
      %4339 = vmatprep.mubr.f32.mxu0 0.0
      %4340 = vmatmul.mubr.f32.gmra.mrb[0].mxu0 %v4115
      %v4341 = vpop.f32.mrb[0].mxu0
      %v4342 = vadd.f32 0.0, %v4341
      %v4343 = vpop.f32.mrb[0].mxu0
      %v4344 = vadd.f32 0.0, %v4343
      %4345 = vmatprep.mubr.f32.mxu0 0.0
      %4346 = vmatmul.mubr.f32.gmra.mrb[0].mxu0 %v4117
      %v4347 = vpop.f32.mrb[0].mxu0
      %v4348 = vadd.f32 0.0, %v4347
      %v4349 = vpop.f32.mrb[0].mxu0
      %v4350 = vadd.f32 0.0, %v4349
      %4351 = vmatprep.mubr.f32.mxu0 0.0
      %4352 = vmatmul.mubr.f32.gmra.mrb[0].mxu0 %v4119
      %v4353 = vpop.f32.mrb[0].mxu0
      %v4354 = vadd.f32 0.0, %v4353
      %v4355 = vpop.f32.mrb[0].mxu0
      %v4356 = vadd.f32 0.0, %v4355
      %4357 = vmatprep.mubr.f32.mxu0 0.0
      %4358 = vmatmul.mubr.f32.gmra.mrb[0].mxu0 %v4121
      %v4359 = vpop.f32.mrb[0].mxu0
      %v4360 = vadd.f32 0.0, %v4359
      %v4361 = vpop.f32.mrb[0].mxu0
      %v4362 = vadd.f32 0.0, %v4361
      %4363 = vmatprep.mubr.f32.mxu0 0.0
      %4364 = vmatmul.mubr.f32.gmra.mrb[0].mxu0 %v4123
      %v4365 = vpop.f32.mrb[0].mxu0
      %v4366 = vadd.f32 0.0, %v4365
      %v4367 = vpop.f32.mrb[0].mxu0
      %v4368 = vadd.f32 0.0, %v4367
      %4369 = vmatprep.mubr.f32.mxu0 0.0
      %4370 = vmatmul.mubr.f32.gmra.mrb[0].mxu0 %v4125
      %v4371 = vpop.f32.mrb[0].mxu0
      %v4372 = vadd.f32 0.0, %v4371
      %v4373 = vpop.f32.mrb[0].mxu0
      %v4374 = vadd.f32 0.0, %v4373
      %4375 = vmatprep.mubr.f32.mxu0 0.0
      %4376 = vmatmul.mubr.f32.gmra.mrb[0].mxu0 %v4127
      %v4377 = vpop.f32.mrb[0].mxu0
      %v4378 = vadd.f32 0.0, %v4377
      %v4379 = vpop.f32.mrb[0].mxu0
      %v4380 = vadd.f32 0.0, %v4379
      %4381 = vmatprep.mubr.f32.mxu0 0.0
      %4382 = vmatmul.mubr.f32.gmra.mrb[0].mxu0 %v4129
      %v4383 = vpop.f32.mrb[0].mxu0
      %v4384 = vadd.f32 0.0, %v4383
      %v4385 = vpop.f32.mrb[0].mxu0
      %v4386 = vadd.f32 0.0, %v4385
      %4387 = vmatprep.mubr.f32.mxu0 0.0
      %4388 = vmatmul.mubr.f32.gmra.mrb[0].mxu0 %v4131
      %v4389 = vpop.f32.mrb[0].mxu0
      %v4390 = vadd.f32 0.0, %v4389
      %v4391 = vpop.f32.mrb[0].mxu0
      %v4392 = vadd.f32 0.0, %v4391
      %4393 = vmatprep.mubr.f32.mxu0 0.0
      %4394 = vmatmul.mubr.f32.gmra.mrb[0].mxu0 %v4133
      %v4395 = vpop.f32.mrb[0].mxu0
      %v4396 = vadd.f32 0.0, %v4395
      %v4397 = vpop.f32.mrb[0].mxu0
      %v4398 = vadd.f32 0.0, %v4397
      %4399 = vmatprep.mubr.f32.mxu0 0.0
      %4400 = vmatmul.mubr.f32.gmra.mrb[0].mxu0 %v4135
      %v4401 = vpop.f32.mrb[0].mxu0
      %v4402 = vadd.f32 0.0, %v4401
      %v4403 = vpop.f32.mrb[0].mxu0
      %v4404 = vadd.f32 0.0, %v4403
      %4405 = vmatprep.mubr.f32.mxu0 0.0
      %4406 = vmatmul.mubr.f32.gmra.mrb[0].mxu0 %v4137
      %v4407 = vpop.f32.mrb[0].mxu0
      %v4408 = vadd.f32 0.0, %v4407
      %v4409 = vpop.f32.mrb[0].mxu0
      %v4410 = vadd.f32 0.0, %v4409
      %4411 = vmatprep.mubr.f32.mxu0 0.0
      %4412 = vmatmul.mubr.f32.gmra.mrb[0].mxu0 %v4139
      %v4413 = vpop.f32.mrb[0].mxu0
      %v4414 = vadd.f32 0.0, %v4413
      %v4415 = vpop.f32.mrb[0].mxu0
      %v4416 = vadd.f32 0.0, %v4415
      %4417 = vmatprep.mubr.f32.mxu0 0.0
      %4418 = vmatmul.mubr.f32.gmra.mrb[0].mxu0 %v4141
      %v4419 = vpop.f32.mrb[0].mxu0
      %v4420 = vadd.f32 0.0, %v4419
      %v4421 = vpop.f32.mrb[0].mxu0
      %v4422 = vadd.f32 0.0, %v4421
      %4423 = vmatprep.mubr.f32.mxu0 0.0
      %4424 = vmatmul.mubr.f32.gmra.mrb[0].mxu0 %v4143
      %v4425 = vpop.f32.mrb[0].mxu0
      %v4426 = vadd.f32 0.0, %v4425
      %v4427 = vpop.f32.mrb[0].mxu0
      %v4428 = vadd.f32 0.0, %v4427
      %4429 = vmatprep.mubr.f32.mxu0 0.0
      %4430 = vmatmul.mubr.f32.gmra.mrb[0].mxu0 %v4145
      %v4431 = vpop.f32.mrb[0].mxu0
      %v4432 = vadd.f32 0.0, %v4431
      %v4433 = vpop.f32.mrb[0].mxu0
      %v4434 = vadd.f32 0.0, %v4433
      %4435 = vmatprep.mubr.f32.mxu0 0.0
      %4436 = vmatmul.mubr.f32.gmra.mrb[0].mxu0 %v4147
      %v4437 = vpop.f32.mrb[0].mxu0
      %v4438 = vadd.f32 0.0, %v4437
      %v4439 = vpop.f32.mrb[0].mxu0
      %v4440 = vadd.f32 0.0, %v4439
      %4441 = vmatprep.mubr.f32.mxu0 0.0
      %4442 = vmatmul.mubr.f32.gmra.mrb[0].mxu0 %v4149
      %v4443 = vpop.f32.mrb[0].mxu0
      %v4444 = vadd.f32 0.0, %v4443
      %v4445 = vpop.f32.mrb[0].mxu0
      %v4446 = vadd.f32 0.0, %v4445
      %4447 = vmatprep.mubr.f32.mxu0 0.0
      %4448 = vmatmul.mubr.f32.gmra.mrb[0].mxu0 %v4151
      %v4449 = vpop.f32.mrb[0].mxu0
      %v4450 = vadd.f32 0.0, %v4449
      %v4451 = vpop.f32.mrb[0].mxu0
      %v4452 = vadd.f32 0.0, %v4451
      %4453 = vmatprep.mubr.f32.mxu0 0.0
      %4454 = vmatmul.mubr.f32.gmra.mrb[0].mxu0 %v4153
      %v4455 = vpop.f32.mrb[0].mxu0
      %v4456 = vadd.f32 0.0, %v4455
      %v4457 = vpop.f32.mrb[0].mxu0
      %v4458 = vadd.f32 0.0, %v4457
      %4459 = vmatprep.mubr.f32.mxu0 0.0
      %4460 = vmatmul.mubr.f32.gmra.mrb[0].mxu0 %v4155
      %v4461 = vpop.f32.mrb[0].mxu0
      %v4462 = vadd.f32 0.0, %v4461
      %v4463 = vpop.f32.mrb[0].mxu0
      %v4464 = vadd.f32 0.0, %v4463
      %4465 = vmatprep.mubr.f32.mxu0 0.0
      %4466 = vmatmul.mubr.f32.gmra.mrb[0].mxu0 %v4157
      %v4467 = vpop.f32.mrb[0].mxu0
      %v4468 = vadd.f32 0.0, %v4467
      %v4469 = vpop.f32.mrb[0].mxu0
      %v4470 = vadd.f32 0.0, %v4469
      %4471 = vmatprep.mubr.f32.mxu0 0.0
      %4472 = vmatmul.mubr.f32.gmra.mrb[0].mxu0 %v4159
      %v4473 = vpop.f32.mrb[0].mxu0
      %v4474 = vadd.f32 0.0, %v4473
      %v4475 = vpop.f32.mrb[0].mxu0
      %v4476 = vadd.f32 0.0, %v4475
      %4477 = vmatprep.mubr.f32.mxu0 0.0
      %4478 = vmatmul.mubr.f32.gmra.mrb[0].mxu0 %v4161
      %v4479 = vpop.f32.mrb[0].mxu0
      %v4480 = vadd.f32 0.0, %v4479
      %v4481 = vpop.f32.mrb[0].mxu0
      %v4482 = vadd.f32 0.0, %v4481
      %4483 = vdwg.mxu0
      %4484 = vrot.lane.b32.xlu0 %v398, 112
      %v4485 = vpop.permute.xlu0 %4484
      %4486 = vrot.lane.b32.xlu0 %v399, 112
      %v4487 = vpop.permute.xlu0 %4486
      %4488 = vrot.lane.b32.xlu0 %v400, 112
      %v4489 = vpop.permute.xlu0 %4488
      %4490 = vrot.lane.b32.xlu0 %v401, 112
      %v4491 = vpop.permute.xlu0 %4490
      %4492 = vrot.lane.b32.xlu0 %v402, 112
      %v4493 = vpop.permute.xlu0 %4492
      %4494 = vrot.lane.b32.xlu0 %v403, 112
      %v4495 = vpop.permute.xlu0 %4494
      %4496 = vrot.lane.b32.xlu0 %v404, 112
      %v4497 = vpop.permute.xlu0 %4496
      %4498 = vrot.lane.b32.xlu0 %v405, 112
      %v4499 = vpop.permute.xlu0 %4498
      %v4500 = vsel %vm539, %v4485, 0
      %v4502 = vsel %vm539, %v4487, 0
      %v4504 = vsel %vm539, %v4489, 0
      %v4506 = vsel %vm539, %v4491, 0
      %v4508 = vsel %vm539, %v4493, 0
      %v4510 = vsel %vm539, %v4495, 0
      %v4512 = vsel %vm539, %v4497, 0
      %v4514 = vsel %vm539, %v4499, 0
      %4516 = vmatprep.subr.mxu0 0.0
      %4517 = vmatpush1.xpose.msra.mxu0 %v4500
      %4518 = vmatprep.subr.mxu0 0.0
      %4519 = vmatpush1.xpose.msra.mxu0 %v4502
      %4520 = vmatprep.subr.mxu0 0.0
      %4521 = vmatpush1.xpose.msra.mxu0 %v4504
      %4522 = vmatprep.subr.mxu0 0.0
      %4523 = vmatpush1.xpose.msra.mxu0 %v4506
      %4524 = vmatprep.subr.mxu0 0.0
      %4525 = vmatpush1.xpose.msra.mxu0 %v4508
      %4526 = vmatprep.subr.mxu0 0.0
      %4527 = vmatpush1.xpose.msra.mxu0 %v4510
      %4528 = vmatprep.subr.mxu0 0.0
      %4529 = vmatpush1.xpose.msra.mxu0 %v4512
      %4530 = vmatprep.subr.mxu0 0.0
      %4531 = vmatpush1.xpose.msra.mxu0 %v4514
      %4532 = vmatprep.subr.mxu0 0.0
      %4533 = vmatpush1.xpose.msra.mxu0 0.0
      %4534 = vmatprep.subr.mxu0 0.0
      %4535 = vmatpush1.xpose.msra.mxu0 0.0
      %4536 = vmatprep.subr.mxu0 0.0
      %4537 = vmatpush1.xpose.msra.mxu0 0.0
      %4538 = vmatprep.subr.mxu0 0.0
      %4539 = vmatpush1.xpose.msra.mxu0 0.0
      %4540 = vmatprep.subr.mxu0 0.0
      %4541 = vmatpush1.xpose.msra.mxu0 0.0
      %4542 = vmatprep.subr.mxu0 0.0
      %4543 = vmatpush1.xpose.msra.mxu0 0.0
      %4544 = vmatprep.subr.mxu0 0.0
      %4545 = vmatpush1.xpose.msra.mxu0 0.0
      %4546 = vmatprep.subr.mxu0 0.0
      %4547 = vmatpush1.xpose.msra.mxu0 0.0
      %4548 = vmatprep.subr.mxu0 0.0
      %4549 = vmatpush1.xpose.msra.mxu0 0.0
      %4550 = vmatprep.subr.mxu0 0.0
      %4551 = vmatpush1.xpose.msra.mxu0 0.0
      %4552 = vmatprep.subr.mxu0 0.0
      %4553 = vmatpush1.xpose.msra.mxu0 0.0
      %4554 = vmatprep.subr.mxu0 0.0
      %4555 = vmatpush1.xpose.msra.mxu0 0.0
      %4556 = vmatprep.subr.mxu0 0.0
      %4557 = vmatpush1.xpose.msra.mxu0 0.0
      %4558 = vmatprep.subr.mxu0 0.0
      %4559 = vmatpush1.xpose.msra.mxu0 0.0
      %4560 = vmatprep.subr.mxu0 0.0
      %4561 = vmatpush1.xpose.msra.mxu0 0.0
      %4562 = vmatprep.subr.mxu0 0.0
      %4563 = vmatpush1.xpose.msra.mxu0 0.0
      %4564 = vmatprep.subr.mxu0 0.0
      %4565 = vmatpush1.xpose.msra.mxu0 0.0
      %4566 = vmatprep.subr.mxu0 0.0
      %4567 = vmatpush1.xpose.msra.mxu0 0.0
      %4568 = vmatprep.subr.mxu0 0.0
      %4569 = vmatpush1.xpose.msra.mxu0 0.0
      %4570 = vmatprep.subr.mxu0 0.0
      %4571 = vmatpush1.xpose.msra.mxu0 0.0
      %4572 = vmatprep.subr.mxu0 0.0
      %4573 = vmatpush1.xpose.msra.mxu0 0.0
      %4574 = vmatprep.subr.mxu0 0.0
      %4575 = vmatpush1.xpose.msra.mxu0 0.0
      %4576 = vmatprep.subr.mxu0 0.0
      %4577 = vmatpush1.xpose.msra.mxu0 0.0
      %4578 = vmatprep.subr.mxu0 0.0
      %4579 = vmatpush1.xpose.msra.mxu0 0.0
      %4580 = vmatprep.mubr.f32.mxu0 0.0
      %4581 = vmatmul.mubr.f32.gmra.mrb[0].mxu0 %v4099
      %v4582 = vpop.f32.mrb[0].mxu0
      %v4583 = vadd.f32 0.0, %v4582
      %v4584 = vpop.f32.mrb[0].mxu0
      %4585 = vmatprep.mubr.f32.mxu0 0.0
      %4586 = vmatmul.mubr.f32.gmra.mrb[0].mxu0 %v4101
      %v4587 = vpop.f32.mrb[0].mxu0
      %v4588 = vadd.f32 0.0, %v4587
      %v4589 = vpop.f32.mrb[0].mxu0
      %4590 = vmatprep.mubr.f32.mxu0 0.0
      %4591 = vmatmul.mubr.f32.gmra.mrb[0].mxu0 %v4103
      %v4592 = vpop.f32.mrb[0].mxu0
      %v4593 = vadd.f32 0.0, %v4592
      %v4594 = vpop.f32.mrb[0].mxu0
      %4595 = vmatprep.mubr.f32.mxu0 0.0
      %4596 = vmatmul.mubr.f32.gmra.mrb[0].mxu0 %v4105
      %v4597 = vpop.f32.mrb[0].mxu0
      %v4598 = vadd.f32 0.0, %v4597
      %v4599 = vpop.f32.mrb[0].mxu0
      %4600 = vmatprep.mubr.f32.mxu0 0.0
      %4601 = vmatmul.mubr.f32.gmra.mrb[0].mxu0 %v4107
      %v4602 = vpop.f32.mrb[0].mxu0
      %v4603 = vadd.f32 0.0, %v4602
      %v4604 = vpop.f32.mrb[0].mxu0
      %4605 = vmatprep.mubr.f32.mxu0 0.0
      %4606 = vmatmul.mubr.f32.gmra.mrb[0].mxu0 %v4109
      %v4607 = vpop.f32.mrb[0].mxu0
      %v4608 = vadd.f32 0.0, %v4607
      %v4609 = vpop.f32.mrb[0].mxu0
      %4610 = vmatprep.mubr.f32.mxu0 0.0
      %4611 = vmatmul.mubr.f32.gmra.mrb[0].mxu0 %v4111
      %v4612 = vpop.f32.mrb[0].mxu0
      %v4613 = vadd.f32 0.0, %v4612
      %v4614 = vpop.f32.mrb[0].mxu0
      %4615 = vmatprep.mubr.f32.mxu0 0.0
      %4616 = vmatmul.mubr.f32.gmra.mrb[0].mxu0 %v4113
      %v4617 = vpop.f32.mrb[0].mxu0
      %v4618 = vadd.f32 0.0, %v4617
      %v4619 = vpop.f32.mrb[0].mxu0
      %4620 = vmatprep.mubr.f32.mxu0 0.0
      %4621 = vmatmul.mubr.f32.gmra.mrb[0].mxu0 %v4115
      %v4622 = vpop.f32.mrb[0].mxu0
      %v4623 = vadd.f32 0.0, %v4622
      %v4624 = vpop.f32.mrb[0].mxu0
      %4625 = vmatprep.mubr.f32.mxu0 0.0
      %4626 = vmatmul.mubr.f32.gmra.mrb[0].mxu0 %v4117
      %v4627 = vpop.f32.mrb[0].mxu0
      %v4628 = vadd.f32 0.0, %v4627
      %v4629 = vpop.f32.mrb[0].mxu0
      %4630 = vmatprep.mubr.f32.mxu0 0.0
      %4631 = vmatmul.mubr.f32.gmra.mrb[0].mxu0 %v4119
      %v4632 = vpop.f32.mrb[0].mxu0
      %v4633 = vadd.f32 0.0, %v4632
      %v4634 = vpop.f32.mrb[0].mxu0
      %4635 = vmatprep.mubr.f32.mxu0 0.0
      %4636 = vmatmul.mubr.f32.gmra.mrb[0].mxu0 %v4121
      %v4637 = vpop.f32.mrb[0].mxu0
      %v4638 = vadd.f32 0.0, %v4637
      %v4639 = vpop.f32.mrb[0].mxu0
      %4640 = vmatprep.mubr.f32.mxu0 0.0
      %4641 = vmatmul.mubr.f32.gmra.mrb[0].mxu0 %v4123
      %v4642 = vpop.f32.mrb[0].mxu0
      %v4643 = vadd.f32 0.0, %v4642
      %v4644 = vpop.f32.mrb[0].mxu0
      %4645 = vmatprep.mubr.f32.mxu0 0.0
      %4646 = vmatmul.mubr.f32.gmra.mrb[0].mxu0 %v4125
      %v4647 = vpop.f32.mrb[0].mxu0
      %v4648 = vadd.f32 0.0, %v4647
      %v4649 = vpop.f32.mrb[0].mxu0
      %4650 = vmatprep.mubr.f32.mxu0 0.0
      %4651 = vmatmul.mubr.f32.gmra.mrb[0].mxu0 %v4127
      %v4652 = vpop.f32.mrb[0].mxu0
      %v4653 = vadd.f32 0.0, %v4652
      %v4654 = vpop.f32.mrb[0].mxu0
      %4655 = vmatprep.mubr.f32.mxu0 0.0
      %4656 = vmatmul.mubr.f32.gmra.mrb[0].mxu0 %v4129
      %v4657 = vpop.f32.mrb[0].mxu0
      %v4658 = vadd.f32 0.0, %v4657
      %v4659 = vpop.f32.mrb[0].mxu0
      %4660 = vmatprep.mubr.f32.mxu0 0.0
      %4661 = vmatmul.mubr.f32.gmra.mrb[0].mxu0 %v4131
      %v4662 = vpop.f32.mrb[0].mxu0
      %v4663 = vadd.f32 0.0, %v4662
      %v4664 = vpop.f32.mrb[0].mxu0
      %4665 = vmatprep.mubr.f32.mxu0 0.0
      %4666 = vmatmul.mubr.f32.gmra.mrb[0].mxu0 %v4133
      %v4667 = vpop.f32.mrb[0].mxu0
      %v4668 = vadd.f32 0.0, %v4667
      %v4669 = vpop.f32.mrb[0].mxu0
      %4670 = vmatprep.mubr.f32.mxu0 0.0
      %4671 = vmatmul.mubr.f32.gmra.mrb[0].mxu0 %v4135
      %v4672 = vpop.f32.mrb[0].mxu0
      %v4673 = vadd.f32 0.0, %v4672
      %v4674 = vpop.f32.mrb[0].mxu0
      %4675 = vmatprep.mubr.f32.mxu0 0.0
      %4676 = vmatmul.mubr.f32.gmra.mrb[0].mxu0 %v4137
      %v4677 = vpop.f32.mrb[0].mxu0
      %v4678 = vadd.f32 0.0, %v4677
      %v4679 = vpop.f32.mrb[0].mxu0
      %4680 = vmatprep.mubr.f32.mxu0 0.0
      %4681 = vmatmul.mubr.f32.gmra.mrb[0].mxu0 %v4139
      %v4682 = vpop.f32.mrb[0].mxu0
      %v4683 = vadd.f32 0.0, %v4682
      %v4684 = vpop.f32.mrb[0].mxu0
      %4685 = vmatprep.mubr.f32.mxu0 0.0
      %4686 = vmatmul.mubr.f32.gmra.mrb[0].mxu0 %v4141
      %v4687 = vpop.f32.mrb[0].mxu0
      %v4688 = vadd.f32 0.0, %v4687
      %v4689 = vpop.f32.mrb[0].mxu0
      %4690 = vmatprep.mubr.f32.mxu0 0.0
      %4691 = vmatmul.mubr.f32.gmra.mrb[0].mxu0 %v4143
      %v4692 = vpop.f32.mrb[0].mxu0
      %v4693 = vadd.f32 0.0, %v4692
      %v4694 = vpop.f32.mrb[0].mxu0
      %4695 = vmatprep.mubr.f32.mxu0 0.0
      %4696 = vmatmul.mubr.f32.gmra.mrb[0].mxu0 %v4145
      %v4697 = vpop.f32.mrb[0].mxu0
      %v4698 = vadd.f32 0.0, %v4697
      %v4699 = vpop.f32.mrb[0].mxu0
      %4700 = vmatprep.mubr.f32.mxu0 0.0
      %4701 = vmatmul.mubr.f32.gmra.mrb[0].mxu0 %v4147
      %v4702 = vpop.f32.mrb[0].mxu0
      %v4703 = vadd.f32 0.0, %v4702
      %v4704 = vpop.f32.mrb[0].mxu0
      %4705 = vmatprep.mubr.f32.mxu0 0.0
      %4706 = vmatmul.mubr.f32.gmra.mrb[0].mxu0 %v4149
      %v4707 = vpop.f32.mrb[0].mxu0
      %v4708 = vadd.f32 0.0, %v4707
      %v4709 = vpop.f32.mrb[0].mxu0
      %4710 = vmatprep.mubr.f32.mxu0 0.0
      %4711 = vmatmul.mubr.f32.gmra.mrb[0].mxu0 %v4151
      %v4712 = vpop.f32.mrb[0].mxu0
      %v4713 = vadd.f32 0.0, %v4712
      %v4714 = vpop.f32.mrb[0].mxu0
      %4715 = vmatprep.mubr.f32.mxu0 0.0
      %4716 = vmatmul.mubr.f32.gmra.mrb[0].mxu0 %v4153
      %v4717 = vpop.f32.mrb[0].mxu0
      %v4718 = vadd.f32 0.0, %v4717
      %v4719 = vpop.f32.mrb[0].mxu0
      %4720 = vmatprep.mubr.f32.mxu0 0.0
      %4721 = vmatmul.mubr.f32.gmra.mrb[0].mxu0 %v4155
      %v4722 = vpop.f32.mrb[0].mxu0
      %v4723 = vadd.f32 0.0, %v4722
      %v4724 = vpop.f32.mrb[0].mxu0
      %4725 = vmatprep.mubr.f32.mxu0 0.0
      %4726 = vmatmul.mubr.f32.gmra.mrb[0].mxu0 %v4157
      %v4727 = vpop.f32.mrb[0].mxu0
      %v4728 = vadd.f32 0.0, %v4727
      %v4729 = vpop.f32.mrb[0].mxu0
      %4730 = vmatprep.mubr.f32.mxu0 0.0
      %4731 = vmatmul.mubr.f32.gmra.mrb[0].mxu0 %v4159
      %v4732 = vpop.f32.mrb[0].mxu0
      %v4733 = vadd.f32 0.0, %v4732
      %v4734 = vpop.f32.mrb[0].mxu0
      %4735 = vmatprep.mubr.f32.mxu0 0.0
      %4736 = vmatmul.mubr.f32.gmra.mrb[0].mxu0 %v4161
      %v4737 = vpop.f32.mrb[0].mxu0
      %v4738 = vadd.f32 0.0, %v4737
      %v4739 = vpop.f32.mrb[0].mxu0
      %4740 = vdwg.mxu0
      %4741 = vrot.lane.b32.xlu0 %v406, 112
      %v4742 = vpop.permute.xlu0 %4741
      %4743 = vrot.lane.b32.xlu0 %v407, 112
      %v4744 = vpop.permute.xlu0 %4743
      %4745 = vrot.lane.b32.xlu0 %v408, 112
      %v4746 = vpop.permute.xlu0 %4745
      %4747 = vrot.lane.b32.xlu0 %v409, 112
      %v4748 = vpop.permute.xlu0 %4747
      %4749 = vrot.lane.b32.xlu0 %v410, 112
      %v4750 = vpop.permute.xlu0 %4749
      %v4751 = vsel %vm539, %v4742, 0
      %v4753 = vsel %vm539, %v4744, 0
      %v4755 = vsel %vm539, %v4746, 0
      %v4757 = vsel %vm539, %v4748, 0
      %v4759 = vsel %vm539, %v4750, 0
      %4761 = vmatprep.subr.mxu0 0.0
      %4762 = vmatpush1.xpose.msra.mxu0 %v4751
      %4763 = vmatprep.subr.mxu0 0.0
      %4764 = vmatpush1.xpose.msra.mxu0 %v4753
      %4765 = vmatprep.subr.mxu0 0.0
      %4766 = vmatpush1.xpose.msra.mxu0 %v4755
      %4767 = vmatprep.subr.mxu0 0.0
      %4768 = vmatpush1.xpose.msra.mxu0 %v4757
      %4769 = vmatprep.subr.mxu0 0.0
      %4770 = vmatpush1.xpose.msra.mxu0 %v4759
      %4771 = vmatprep.subr.mxu0 0.0
      %4772 = vmatpush1.xpose.msra.mxu0 0.0
      %4773 = vmatprep.subr.mxu0 0.0
      %4774 = vmatpush1.xpose.msra.mxu0 0.0
      %4775 = vmatprep.subr.mxu0 0.0
      %4776 = vmatpush1.xpose.msra.mxu0 0.0
      %4777 = vmatprep.subr.mxu0 0.0
      %4778 = vmatpush1.xpose.msra.mxu0 0.0
      %4779 = vmatprep.subr.mxu0 0.0
      %4780 = vmatpush1.xpose.msra.mxu0 0.0
      %4781 = vmatprep.subr.mxu0 0.0
      %4782 = vmatpush1.xpose.msra.mxu0 0.0
      %4783 = vmatprep.subr.mxu0 0.0
      %4784 = vmatpush1.xpose.msra.mxu0 0.0
      %4785 = vmatprep.subr.mxu0 0.0
      %4786 = vmatpush1.xpose.msra.mxu0 0.0
      %4787 = vmatprep.subr.mxu0 0.0
      %4788 = vmatpush1.xpose.msra.mxu0 0.0
      %4789 = vmatprep.subr.mxu0 0.0
      %4790 = vmatpush1.xpose.msra.mxu0 0.0
      %4791 = vmatprep.subr.mxu0 0.0
      %4792 = vmatpush1.xpose.msra.mxu0 0.0
      %4793 = vmatprep.subr.mxu0 0.0
      %4794 = vmatpush1.xpose.msra.mxu0 0.0
      %4795 = vmatprep.subr.mxu0 0.0
      %4796 = vmatpush1.xpose.msra.mxu0 0.0
      %4797 = vmatprep.subr.mxu0 0.0
      %4798 = vmatpush1.xpose.msra.mxu0 0.0
      %4799 = vmatprep.subr.mxu0 0.0
      %4800 = vmatpush1.xpose.msra.mxu0 0.0
      %4801 = vmatprep.subr.mxu0 0.0
      %4802 = vmatpush1.xpose.msra.mxu0 0.0
      %4803 = vmatprep.subr.mxu0 0.0
      %4804 = vmatpush1.xpose.msra.mxu0 0.0
      %4805 = vmatprep.subr.mxu0 0.0
      %4806 = vmatpush1.xpose.msra.mxu0 0.0
      %4807 = vmatprep.subr.mxu0 0.0
      %4808 = vmatpush1.xpose.msra.mxu0 0.0
      %4809 = vmatprep.subr.mxu0 0.0
      %4810 = vmatpush1.xpose.msra.mxu0 0.0
      %4811 = vmatprep.subr.mxu0 0.0
      %4812 = vmatpush1.xpose.msra.mxu0 0.0
      %4813 = vmatprep.subr.mxu0 0.0
      %4814 = vmatpush1.xpose.msra.mxu0 0.0
      %4815 = vmatprep.subr.mxu0 0.0
      %4816 = vmatpush1.xpose.msra.mxu0 0.0
      %4817 = vmatprep.subr.mxu0 0.0
      %4818 = vmatpush1.xpose.msra.mxu0 0.0
      %4819 = vmatprep.subr.mxu0 0.0
      %4820 = vmatpush1.xpose.msra.mxu0 0.0
      %4821 = vmatprep.subr.mxu0 0.0
      %4822 = vmatpush1.xpose.msra.mxu0 0.0
      %4823 = vmatprep.subr.mxu0 0.0
      %4824 = vmatpush1.xpose.msra.mxu0 0.0
      %4825 = vmatprep.mubr.f32.mxu0 0.0
      %4826 = vmatmul.mubr.f32.gmra.mrb[0].mxu0 %v4099
      %v4827 = vpop.f32.mrb[0].mxu0
      %v4828 = vadd.f32 0.0, %v4827
      %v4829 = vpop.f32.mrb[0].mxu0
      %4830 = vmatprep.mubr.f32.mxu0 0.0
      %4831 = vmatmul.mubr.f32.gmra.mrb[0].mxu0 %v4101
      %v4832 = vpop.f32.mrb[0].mxu0
      %v4833 = vadd.f32 0.0, %v4832
      %v4834 = vpop.f32.mrb[0].mxu0
      %4835 = vmatprep.mubr.f32.mxu0 0.0
      %4836 = vmatmul.mubr.f32.gmra.mrb[0].mxu0 %v4103
      %v4837 = vpop.f32.mrb[0].mxu0
      %v4838 = vadd.f32 0.0, %v4837
      %v4839 = vpop.f32.mrb[0].mxu0
      %4840 = vmatprep.mubr.f32.mxu0 0.0
      %4841 = vmatmul.mubr.f32.gmra.mrb[0].mxu0 %v4105
      %v4842 = vpop.f32.mrb[0].mxu0
      %v4843 = vadd.f32 0.0, %v4842
      %v4844 = vpop.f32.mrb[0].mxu0
      %4845 = vmatprep.mubr.f32.mxu0 0.0
      %4846 = vmatmul.mubr.f32.gmra.mrb[0].mxu0 %v4107
      %v4847 = vpop.f32.mrb[0].mxu0
      %v4848 = vadd.f32 0.0, %v4847
      %v4849 = vpop.f32.mrb[0].mxu0
      %4850 = vmatprep.mubr.f32.mxu0 0.0
      %4851 = vmatmul.mubr.f32.gmra.mrb[0].mxu0 %v4109
      %v4852 = vpop.f32.mrb[0].mxu0
      %v4853 = vadd.f32 0.0, %v4852
      %v4854 = vpop.f32.mrb[0].mxu0
      %4855 = vmatprep.mubr.f32.mxu0 0.0
      %4856 = vmatmul.mubr.f32.gmra.mrb[0].mxu0 %v4111
      %v4857 = vpop.f32.mrb[0].mxu0
      %v4858 = vadd.f32 0.0, %v4857
      %v4859 = vpop.f32.mrb[0].mxu0
      %4860 = vmatprep.mubr.f32.mxu0 0.0
      %4861 = vmatmul.mubr.f32.gmra.mrb[0].mxu0 %v4113
      %v4862 = vpop.f32.mrb[0].mxu0
      %v4863 = vadd.f32 0.0, %v4862
      %v4864 = vpop.f32.mrb[0].mxu0
      %4865 = vmatprep.mubr.f32.mxu0 0.0
      %4866 = vmatmul.mubr.f32.gmra.mrb[0].mxu0 %v4115
      %v4867 = vpop.f32.mrb[0].mxu0
      %v4868 = vadd.f32 0.0, %v4867
      %v4869 = vpop.f32.mrb[0].mxu0
      %4870 = vmatprep.mubr.f32.mxu0 0.0
      %4871 = vmatmul.mubr.f32.gmra.mrb[0].mxu0 %v4117
      %v4872 = vpop.f32.mrb[0].mxu0
      %v4873 = vadd.f32 0.0, %v4872
      %v4874 = vpop.f32.mrb[0].mxu0
      %4875 = vmatprep.mubr.f32.mxu0 0.0
      %4876 = vmatmul.mubr.f32.gmra.mrb[0].mxu0 %v4119
      %v4877 = vpop.f32.mrb[0].mxu0
      %v4878 = vadd.f32 0.0, %v4877
      %v4879 = vpop.f32.mrb[0].mxu0
      %4880 = vmatprep.mubr.f32.mxu0 0.0
      %4881 = vmatmul.mubr.f32.gmra.mrb[0].mxu0 %v4121
      %v4882 = vpop.f32.mrb[0].mxu0
      %v4883 = vadd.f32 0.0, %v4882
      %v4884 = vpop.f32.mrb[0].mxu0
      %4885 = vmatprep.mubr.f32.mxu0 0.0
      %4886 = vmatmul.mubr.f32.gmra.mrb[0].mxu0 %v4123
      %v4887 = vpop.f32.mrb[0].mxu0
      %v4888 = vadd.f32 0.0, %v4887
      %v4889 = vpop.f32.mrb[0].mxu0
      %4890 = vmatprep.mubr.f32.mxu0 0.0
      %4891 = vmatmul.mubr.f32.gmra.mrb[0].mxu0 %v4125
      %v4892 = vpop.f32.mrb[0].mxu0
      %v4893 = vadd.f32 0.0, %v4892
      %v4894 = vpop.f32.mrb[0].mxu0
      %4895 = vmatprep.mubr.f32.mxu0 0.0
      %4896 = vmatmul.mubr.f32.gmra.mrb[0].mxu0 %v4127
      %v4897 = vpop.f32.mrb[0].mxu0
      %v4898 = vadd.f32 0.0, %v4897
      %v4899 = vpop.f32.mrb[0].mxu0
      %4900 = vmatprep.mubr.f32.mxu0 0.0
      %4901 = vmatmul.mubr.f32.gmra.mrb[0].mxu0 %v4129
      %v4902 = vpop.f32.mrb[0].mxu0
      %v4903 = vadd.f32 0.0, %v4902
      %v4904 = vpop.f32.mrb[0].mxu0
      %4905 = vmatprep.mubr.f32.mxu0 0.0
      %4906 = vmatmul.mubr.f32.gmra.mrb[0].mxu0 %v4131
      %v4907 = vpop.f32.mrb[0].mxu0
      %v4908 = vadd.f32 0.0, %v4907
      %v4909 = vpop.f32.mrb[0].mxu0
      %4910 = vmatprep.mubr.f32.mxu0 0.0
      %4911 = vmatmul.mubr.f32.gmra.mrb[0].mxu0 %v4133
      %v4912 = vpop.f32.mrb[0].mxu0
      %v4913 = vadd.f32 0.0, %v4912
      %v4914 = vpop.f32.mrb[0].mxu0
      %4915 = vmatprep.mubr.f32.mxu0 0.0
      %4916 = vmatmul.mubr.f32.gmra.mrb[0].mxu0 %v4135
      %v4917 = vpop.f32.mrb[0].mxu0
      %v4918 = vadd.f32 0.0, %v4917
      %v4919 = vpop.f32.mrb[0].mxu0
      %4920 = vmatprep.mubr.f32.mxu0 0.0
      %4921 = vmatmul.mubr.f32.gmra.mrb[0].mxu0 %v4137
      %v4922 = vpop.f32.mrb[0].mxu0
      %v4923 = vadd.f32 0.0, %v4922
      %v4924 = vpop.f32.mrb[0].mxu0
      %4925 = vmatprep.mubr.f32.mxu0 0.0
      %4926 = vmatmul.mubr.f32.gmra.mrb[0].mxu0 %v4139
      %v4927 = vpop.f32.mrb[0].mxu0
      %v4928 = vadd.f32 0.0, %v4927
      %v4929 = vpop.f32.mrb[0].mxu0
      %4930 = vmatprep.mubr.f32.mxu0 0.0
      %4931 = vmatmul.mubr.f32.gmra.mrb[0].mxu0 %v4141
      %v4932 = vpop.f32.mrb[0].mxu0
      %v4933 = vadd.f32 0.0, %v4932
      %v4934 = vpop.f32.mrb[0].mxu0
      %4935 = vmatprep.mubr.f32.mxu0 0.0
      %4936 = vmatmul.mubr.f32.gmra.mrb[0].mxu0 %v4143
      %v4937 = vpop.f32.mrb[0].mxu0
      %v4938 = vadd.f32 0.0, %v4937
      %v4939 = vpop.f32.mrb[0].mxu0
      %4940 = vmatprep.mubr.f32.mxu0 0.0
      %4941 = vmatmul.mubr.f32.gmra.mrb[0].mxu0 %v4145
      %v4942 = vpop.f32.mrb[0].mxu0
      %v4943 = vadd.f32 0.0, %v4942
      %v4944 = vpop.f32.mrb[0].mxu0
      %4945 = vmatprep.mubr.f32.mxu0 0.0
      %4946 = vmatmul.mubr.f32.gmra.mrb[0].mxu0 %v4147
      %v4947 = vpop.f32.mrb[0].mxu0
      %v4948 = vadd.f32 0.0, %v4947
      %v4949 = vpop.f32.mrb[0].mxu0
      %4950 = vmatprep.mubr.f32.mxu0 0.0
      %4951 = vmatmul.mubr.f32.gmra.mrb[0].mxu0 %v4149
      %v4952 = vpop.f32.mrb[0].mxu0
      %v4953 = vadd.f32 0.0, %v4952
      %v4954 = vpop.f32.mrb[0].mxu0
      %4955 = vmatprep.mubr.f32.mxu0 0.0
      %4956 = vmatmul.mubr.f32.gmra.mrb[0].mxu0 %v4151
      %v4957 = vpop.f32.mrb[0].mxu0
      %v4958 = vadd.f32 0.0, %v4957
      %v4959 = vpop.f32.mrb[0].mxu0
      %4960 = vmatprep.mubr.f32.mxu0 0.0
      %4961 = vmatmul.mubr.f32.gmra.mrb[0].mxu0 %v4153
      %v4962 = vpop.f32.mrb[0].mxu0
      %v4963 = vadd.f32 0.0, %v4962
      %v4964 = vpop.f32.mrb[0].mxu0
      %4965 = vmatprep.mubr.f32.mxu0 0.0
      %4966 = vmatmul.mubr.f32.gmra.mrb[0].mxu0 %v4155
      %v4967 = vpop.f32.mrb[0].mxu0
      %v4968 = vadd.f32 0.0, %v4967
      %v4969 = vpop.f32.mrb[0].mxu0
      %4970 = vmatprep.mubr.f32.mxu0 0.0
      %4971 = vmatmul.mubr.f32.gmra.mrb[0].mxu0 %v4157
      %v4972 = vpop.f32.mrb[0].mxu0
      %v4973 = vadd.f32 0.0, %v4972
      %v4974 = vpop.f32.mrb[0].mxu0
      %4975 = vmatprep.mubr.f32.mxu0 0.0
      %4976 = vmatmul.mubr.f32.gmra.mrb[0].mxu0 %v4159
      %v4977 = vpop.f32.mrb[0].mxu0
      %v4978 = vadd.f32 0.0, %v4977
      %v4979 = vpop.f32.mrb[0].mxu0
      %4980 = vmatprep.mubr.f32.mxu0 0.0
      %4981 = vmatmul.mubr.f32.gmra.mrb[0].mxu0 %v4161
      %v4982 = vpop.f32.mrb[0].mxu0
      %v4983 = vadd.f32 0.0, %v4982
      %v4984 = vpop.f32.mrb[0].mxu0
      %4985 = vdwg.mxu0
      %v4986 = vmax.f32 %v4294, %v4296
      %4987 = vmax.xlane.f32.xlu0 %v4986
      %v4988 = vpop.xlane.xlu0 %4987
      %v4989 = vmax.f32 %v4300, %v4302
      %4990 = vmax.xlane.f32.xlu0 %v4989
      %v4991 = vpop.xlane.xlu0 %4990
      %v4992 = vmax.f32 %v4306, %v4308
      %4993 = vmax.xlane.f32.xlu0 %v4992
      %v4994 = vpop.xlane.xlu0 %4993
      %v4995 = vmax.f32 %v4312, %v4314
      %4996 = vmax.xlane.f32.xlu0 %v4995
      %v4997 = vpop.xlane.xlu0 %4996
      %v4998 = vmax.f32 %v4318, %v4320
      %4999 = vmax.xlane.f32.xlu0 %v4998
      %v5000 = vpop.xlane.xlu0 %4999
      %v5001 = vmax.f32 %v4324, %v4326
      %5002 = vmax.xlane.f32.xlu0 %v5001
      %v5003 = vpop.xlane.xlu0 %5002
      %v5004 = vmax.f32 %v4330, %v4332
      %5005 = vmax.xlane.f32.xlu0 %v5004
      %v5006 = vpop.xlane.xlu0 %5005
      %v5007 = vmax.f32 %v4336, %v4338
      %5008 = vmax.xlane.f32.xlu0 %v5007
      %v5009 = vpop.xlane.xlu0 %5008
      %v5010 = vmax.f32 %v4342, %v4344
      %5011 = vmax.xlane.f32.xlu0 %v5010
      %v5012 = vpop.xlane.xlu0 %5011
      %v5013 = vmax.f32 %v4348, %v4350
      %5014 = vmax.xlane.f32.xlu0 %v5013
      %v5015 = vpop.xlane.xlu0 %5014
      %v5016 = vmax.f32 %v4354, %v4356
      %5017 = vmax.xlane.f32.xlu0 %v5016
      %v5018 = vpop.xlane.xlu0 %5017
      %v5019 = vmax.f32 %v4360, %v4362
      %5020 = vmax.xlane.f32.xlu0 %v5019
      %v5021 = vpop.xlane.xlu0 %5020
      %v5022 = vmax.f32 %v4366, %v4368
      %5023 = vmax.xlane.f32.xlu0 %v5022
      %v5024 = vpop.xlane.xlu0 %5023
      %v5025 = vmax.f32 %v4372, %v4374
      %5026 = vmax.xlane.f32.xlu0 %v5025
      %v5027 = vpop.xlane.xlu0 %5026
      %v5028 = vmax.f32 %v4378, %v4380
      %5029 = vmax.xlane.f32.xlu0 %v5028
      %v5030 = vpop.xlane.xlu0 %5029
      %v5031 = vmax.f32 %v4384, %v4386
      %5032 = vmax.xlane.f32.xlu0 %v5031
      %v5033 = vpop.xlane.xlu0 %5032
      %v5034 = vmax.f32 %v4390, %v4392
      %5035 = vmax.xlane.f32.xlu0 %v5034
      %v5036 = vpop.xlane.xlu0 %5035
      %v5037 = vmax.f32 %v4396, %v4398
      %5038 = vmax.xlane.f32.xlu0 %v5037
      %v5039 = vpop.xlane.xlu0 %5038
      %v5040 = vmax.f32 %v4402, %v4404
      %5041 = vmax.xlane.f32.xlu0 %v5040
      %v5042 = vpop.xlane.xlu0 %5041
      %v5043 = vmax.f32 %v4408, %v4410
      %5044 = vmax.xlane.f32.xlu0 %v5043
      %v5045 = vpop.xlane.xlu0 %5044
      %v5046 = vmax.f32 %v4414, %v4416
      %5047 = vmax.xlane.f32.xlu0 %v5046
      %v5048 = vpop.xlane.xlu0 %5047
      %v5049 = vmax.f32 %v4420, %v4422
      %5050 = vmax.xlane.f32.xlu0 %v5049
      %v5051 = vpop.xlane.xlu0 %5050
      %v5052 = vmax.f32 %v4426, %v4428
      %5053 = vmax.xlane.f32.xlu0 %v5052
      %v5054 = vpop.xlane.xlu0 %5053
      %v5055 = vmax.f32 %v4432, %v4434
      %5056 = vmax.xlane.f32.xlu0 %v5055
      %v5057 = vpop.xlane.xlu0 %5056
      %v5058 = vmax.f32 %v4438, %v4440
      %5059 = vmax.xlane.f32.xlu0 %v5058
      %v5060 = vpop.xlane.xlu0 %5059
      %v5061 = vmax.f32 %v4444, %v4446
      %5062 = vmax.xlane.f32.xlu0 %v5061
      %v5063 = vpop.xlane.xlu0 %5062
      %v5064 = vmax.f32 %v4450, %v4452
      %5065 = vmax.xlane.f32.xlu0 %v5064
      %v5066 = vpop.xlane.xlu0 %5065
      %v5067 = vmax.f32 %v4456, %v4458
      %5068 = vmax.xlane.f32.xlu0 %v5067
      %v5069 = vpop.xlane.xlu0 %5068
      %v5070 = vmax.f32 %v4462, %v4464
      %5071 = vmax.xlane.f32.xlu0 %v5070
      %v5072 = vpop.xlane.xlu0 %5071
      %v5073 = vmax.f32 %v4468, %v4470
      %5074 = vmax.xlane.f32.xlu0 %v5073
      %v5075 = vpop.xlane.xlu0 %5074
      %v5076 = vmax.f32 %v4474, %v4476
      %5077 = vmax.xlane.f32.xlu0 %v5076
      %v5078 = vpop.xlane.xlu0 %5077
      %v5079 = vmax.f32 %v4480, %v4482
      %5080 = vmax.xlane.f32.xlu0 %v5079
      %v5081 = vpop.xlane.xlu0 %5080
      %v5082 = vsel %vm1510, %v4583, -inf
      %5083 = vmax.xlane.f32.xlu0 %v5082
      %v5084 = vpop.xlane.xlu0 %5083
      %v5085 = vsel %vm1510, %v4588, -inf
      %5086 = vmax.xlane.f32.xlu0 %v5085
      %v5087 = vpop.xlane.xlu0 %5086
      %v5088 = vsel %vm1510, %v4593, -inf
      %5089 = vmax.xlane.f32.xlu0 %v5088
      %v5090 = vpop.xlane.xlu0 %5089
      %v5091 = vsel %vm1510, %v4598, -inf
      %5092 = vmax.xlane.f32.xlu0 %v5091
      %v5093 = vpop.xlane.xlu0 %5092
      %v5094 = vsel %vm1510, %v4603, -inf
      %5095 = vmax.xlane.f32.xlu0 %v5094
      %v5096 = vpop.xlane.xlu0 %5095
      %v5097 = vsel %vm1510, %v4608, -inf
      %5098 = vmax.xlane.f32.xlu0 %v5097
      %v5099 = vpop.xlane.xlu0 %5098
      %v5100 = vsel %vm1510, %v4613, -inf
      %5101 = vmax.xlane.f32.xlu0 %v5100
      %v5102 = vpop.xlane.xlu0 %5101
      %v5103 = vsel %vm1510, %v4618, -inf
      %5104 = vmax.xlane.f32.xlu0 %v5103
      %v5105 = vpop.xlane.xlu0 %5104
      %v5106 = vsel %vm1510, %v4623, -inf
      %5107 = vmax.xlane.f32.xlu0 %v5106
      %v5108 = vpop.xlane.xlu0 %5107
      %v5109 = vsel %vm1510, %v4628, -inf
      %5110 = vmax.xlane.f32.xlu0 %v5109
      %v5111 = vpop.xlane.xlu0 %5110
      %v5112 = vsel %vm1510, %v4633, -inf
      %5113 = vmax.xlane.f32.xlu0 %v5112
      %v5114 = vpop.xlane.xlu0 %5113
      %v5115 = vsel %vm1510, %v4638, -inf
      %5116 = vmax.xlane.f32.xlu0 %v5115
      %v5117 = vpop.xlane.xlu0 %5116
      %v5118 = vsel %vm1510, %v4643, -inf
      %5119 = vmax.xlane.f32.xlu0 %v5118
      %v5120 = vpop.xlane.xlu0 %5119
      %v5121 = vsel %vm1510, %v4648, -inf
      %5122 = vmax.xlane.f32.xlu0 %v5121
      %v5123 = vpop.xlane.xlu0 %5122
      %v5124 = vsel %vm1510, %v4653, -inf
      %5125 = vmax.xlane.f32.xlu0 %v5124
      %v5126 = vpop.xlane.xlu0 %5125
      %v5127 = vsel %vm1510, %v4658, -inf
      %5128 = vmax.xlane.f32.xlu0 %v5127
      %v5129 = vpop.xlane.xlu0 %5128
      %v5130 = vsel %vm1510, %v4663, -inf
      %5131 = vmax.xlane.f32.xlu0 %v5130
      %v5132 = vpop.xlane.xlu0 %5131
      %v5133 = vsel %vm1510, %v4668, -inf
      %5134 = vmax.xlane.f32.xlu0 %v5133
      %v5135 = vpop.xlane.xlu0 %5134
      %v5136 = vsel %vm1510, %v4673, -inf
      %5137 = vmax.xlane.f32.xlu0 %v5136
      %v5138 = vpop.xlane.xlu0 %5137
      %v5139 = vsel %vm1510, %v4678, -inf
      %5140 = vmax.xlane.f32.xlu0 %v5139
      %v5141 = vpop.xlane.xlu0 %5140
      %v5142 = vsel %vm1510, %v4683, -inf
      %5143 = vmax.xlane.f32.xlu0 %v5142
      %v5144 = vpop.xlane.xlu0 %5143
      %v5145 = vsel %vm1510, %v4688, -inf
      %5146 = vmax.xlane.f32.xlu0 %v5145
      %v5147 = vpop.xlane.xlu0 %5146
      %v5148 = vsel %vm1510, %v4693, -inf
      %5149 = vmax.xlane.f32.xlu0 %v5148
      %v5150 = vpop.xlane.xlu0 %5149
      %v5151 = vsel %vm1510, %v4698, -inf
      %5152 = vmax.xlane.f32.xlu0 %v5151
      %v5153 = vpop.xlane.xlu0 %5152
      %v5154 = vsel %vm1510, %v4703, -inf
      %5155 = vmax.xlane.f32.xlu0 %v5154
      %v5156 = vpop.xlane.xlu0 %5155
      %v5157 = vsel %vm1510, %v4708, -inf
      %5158 = vmax.xlane.f32.xlu0 %v5157
      %v5159 = vpop.xlane.xlu0 %5158
      %v5160 = vsel %vm1510, %v4713, -inf
      %5161 = vmax.xlane.f32.xlu0 %v5160
      %v5162 = vpop.xlane.xlu0 %5161
      %v5163 = vsel %vm1510, %v4718, -inf
      %5164 = vmax.xlane.f32.xlu0 %v5163
      %v5165 = vpop.xlane.xlu0 %5164
      %v5166 = vsel %vm1510, %v4723, -inf
      %5167 = vmax.xlane.f32.xlu0 %v5166
      %v5168 = vpop.xlane.xlu0 %5167
      %v5169 = vsel %vm1510, %v4728, -inf
      %5170 = vmax.xlane.f32.xlu0 %v5169
      %v5171 = vpop.xlane.xlu0 %5170
      %v5172 = vsel %vm1510, %v4733, -inf
      %5173 = vmax.xlane.f32.xlu0 %v5172
      %v5174 = vpop.xlane.xlu0 %5173
      %v5175 = vsel %vm1510, %v4738, -inf
      %5176 = vmax.xlane.f32.xlu0 %v5175
      %v5177 = vpop.xlane.xlu0 %5176
      %v5178 = vmax.f32 %v4988, %v5084
      %v5179 = vmax.f32 %v4991, %v5087
      %v5180 = vmax.f32 %v4994, %v5090
      %v5181 = vmax.f32 %v4997, %v5093
      %v5182 = vmax.f32 %v5000, %v5096
      %v5183 = vmax.f32 %v5003, %v5099
      %v5184 = vmax.f32 %v5006, %v5102
      %v5185 = vmax.f32 %v5009, %v5105
      %v5186 = vmax.f32 %v5012, %v5108
      %v5187 = vmax.f32 %v5015, %v5111
      %v5188 = vmax.f32 %v5018, %v5114
      %v5189 = vmax.f32 %v5021, %v5117
      %v5190 = vmax.f32 %v5024, %v5120
      %v5191 = vmax.f32 %v5027, %v5123
      %v5192 = vmax.f32 %v5030, %v5126
      %v5193 = vmax.f32 %v5033, %v5129
      %v5194 = vmax.f32 %v5036, %v5132
      %v5195 = vmax.f32 %v5039, %v5135
      %v5196 = vmax.f32 %v5042, %v5138
      %v5197 = vmax.f32 %v5045, %v5141
      %v5198 = vmax.f32 %v5048, %v5144
      %v5199 = vmax.f32 %v5051, %v5147
      %v5200 = vmax.f32 %v5054, %v5150
      %v5201 = vmax.f32 %v5057, %v5153
      %v5202 = vmax.f32 %v5060, %v5156
      %v5203 = vmax.f32 %v5063, %v5159
      %v5204 = vmax.f32 %v5066, %v5162
      %v5205 = vmax.f32 %v5069, %v5165
      %v5206 = vmax.f32 %v5072, %v5168
      %v5207 = vmax.f32 %v5075, %v5171
      %v5208 = vmax.f32 %v5078, %v5174
      %v5209 = vmax.f32 %v5081, %v5177
      %v5210 = vsel %vm1639, %v4828, -inf
      %5211 = vmax.xlane.f32.xlu0 %v5210
      %v5212 = vpop.xlane.xlu0 %5211
      %v5213 = vsel %vm1639, %v4833, -inf
      %5214 = vmax.xlane.f32.xlu0 %v5213
      %v5215 = vpop.xlane.xlu0 %5214
      %v5216 = vsel %vm1639, %v4838, -inf
      %5217 = vmax.xlane.f32.xlu0 %v5216
      %v5218 = vpop.xlane.xlu0 %5217
      %v5219 = vsel %vm1639, %v4843, -inf
      %5220 = vmax.xlane.f32.xlu0 %v5219
      %v5221 = vpop.xlane.xlu0 %5220
      %v5222 = vsel %vm1639, %v4848, -inf
      %5223 = vmax.xlane.f32.xlu0 %v5222
      %v5224 = vpop.xlane.xlu0 %5223
      %v5225 = vsel %vm1639, %v4853, -inf
      %5226 = vmax.xlane.f32.xlu0 %v5225
      %v5227 = vpop.xlane.xlu0 %5226
      %v5228 = vsel %vm1639, %v4858, -inf
      %5229 = vmax.xlane.f32.xlu0 %v5228
      %v5230 = vpop.xlane.xlu0 %5229
      %v5231 = vsel %vm1639, %v4863, -inf
      %5232 = vmax.xlane.f32.xlu0 %v5231
      %v5233 = vpop.xlane.xlu0 %5232
      %v5234 = vsel %vm1639, %v4868, -inf
      %5235 = vmax.xlane.f32.xlu0 %v5234
      %v5236 = vpop.xlane.xlu0 %5235
      %v5237 = vsel %vm1639, %v4873, -inf
      %5238 = vmax.xlane.f32.xlu0 %v5237
      %v5239 = vpop.xlane.xlu0 %5238
      %v5240 = vsel %vm1639, %v4878, -inf
      %5241 = vmax.xlane.f32.xlu0 %v5240
      %v5242 = vpop.xlane.xlu0 %5241
      %v5243 = vsel %vm1639, %v4883, -inf
      %5244 = vmax.xlane.f32.xlu0 %v5243
      %v5245 = vpop.xlane.xlu0 %5244
      %v5246 = vsel %vm1639, %v4888, -inf
      %5247 = vmax.xlane.f32.xlu0 %v5246
      %v5248 = vpop.xlane.xlu0 %5247
      %v5249 = vsel %vm1639, %v4893, -inf
      %5250 = vmax.xlane.f32.xlu0 %v5249
      %v5251 = vpop.xlane.xlu0 %5250
      %v5252 = vsel %vm1639, %v4898, -inf
      %5253 = vmax.xlane.f32.xlu0 %v5252
      %v5254 = vpop.xlane.xlu0 %5253
      %v5255 = vsel %vm1639, %v4903, -inf
      %5256 = vmax.xlane.f32.xlu0 %v5255
      %v5257 = vpop.xlane.xlu0 %5256
      %v5258 = vsel %vm1639, %v4908, -inf
      %5259 = vmax.xlane.f32.xlu0 %v5258
      %v5260 = vpop.xlane.xlu0 %5259
      %v5261 = vsel %vm1639, %v4913, -inf
      %5262 = vmax.xlane.f32.xlu0 %v5261
      %v5263 = vpop.xlane.xlu0 %5262
      %v5264 = vsel %vm1639, %v4918, -inf
      %5265 = vmax.xlane.f32.xlu0 %v5264
      %v5266 = vpop.xlane.xlu0 %5265
      %v5267 = vsel %vm1639, %v4923, -inf
      %5268 = vmax.xlane.f32.xlu0 %v5267
      %v5269 = vpop.xlane.xlu0 %5268
      %v5270 = vsel %vm1639, %v4928, -inf
      %5271 = vmax.xlane.f32.xlu0 %v5270
      %v5272 = vpop.xlane.xlu0 %5271
      %v5273 = vsel %vm1639, %v4933, -inf
      %5274 = vmax.xlane.f32.xlu0 %v5273
      %v5275 = vpop.xlane.xlu0 %5274
      %v5276 = vsel %vm1639, %v4938, -inf
      %5277 = vmax.xlane.f32.xlu0 %v5276
      %v5278 = vpop.xlane.xlu0 %5277
      %v5279 = vsel %vm1639, %v4943, -inf
      %5280 = vmax.xlane.f32.xlu0 %v5279
      %v5281 = vpop.xlane.xlu0 %5280
      %v5282 = vsel %vm1639, %v4948, -inf
      %5283 = vmax.xlane.f32.xlu0 %v5282
      %v5284 = vpop.xlane.xlu0 %5283
      %v5285 = vsel %vm1639, %v4953, -inf
      %5286 = vmax.xlane.f32.xlu0 %v5285
      %v5287 = vpop.xlane.xlu0 %5286
      %v5288 = vsel %vm1639, %v4958, -inf
      %5289 = vmax.xlane.f32.xlu0 %v5288
      %v5290 = vpop.xlane.xlu0 %5289
      %v5291 = vsel %vm1639, %v4963, -inf
      %5292 = vmax.xlane.f32.xlu0 %v5291
      %v5293 = vpop.xlane.xlu0 %5292
      %v5294 = vsel %vm1639, %v4968, -inf
      %5295 = vmax.xlane.f32.xlu0 %v5294
      %v5296 = vpop.xlane.xlu0 %5295
      %v5297 = vsel %vm1639, %v4973, -inf
      %5298 = vmax.xlane.f32.xlu0 %v5297
      %v5299 = vpop.xlane.xlu0 %5298
      %v5300 = vsel %vm1639, %v4978, -inf
      %5301 = vmax.xlane.f32.xlu0 %v5300
      %v5302 = vpop.xlane.xlu0 %5301
      %v5303 = vsel %vm1639, %v4983, -inf
      %5304 = vmax.xlane.f32.xlu0 %v5303
      %v5305 = vpop.xlane.xlu0 %5304
      %v5306 = vmax.f32 %v5178, %v5212
      %v5307 = vmax.f32 %v5179, %v5215
      %v5308 = vmax.f32 %v5180, %v5218
      %v5309 = vmax.f32 %v5181, %v5221
      %v5310 = vmax.f32 %v5182, %v5224
      %v5311 = vmax.f32 %v5183, %v5227
      %v5312 = vmax.f32 %v5184, %v5230
      %v5313 = vmax.f32 %v5185, %v5233
      %v5314 = vmax.f32 %v5186, %v5236
      %v5315 = vmax.f32 %v5187, %v5239
      %v5316 = vmax.f32 %v5188, %v5242
      %v5317 = vmax.f32 %v5189, %v5245
      %v5318 = vmax.f32 %v5190, %v5248
      %v5319 = vmax.f32 %v5191, %v5251
      %v5320 = vmax.f32 %v5192, %v5254
      %v5321 = vmax.f32 %v5193, %v5257
      %v5322 = vmax.f32 %v5194, %v5260
      %v5323 = vmax.f32 %v5195, %v5263
      %v5324 = vmax.f32 %v5196, %v5266
      %v5325 = vmax.f32 %v5197, %v5269
      %v5326 = vmax.f32 %v5198, %v5272
      %v5327 = vmax.f32 %v5199, %v5275
      %v5328 = vmax.f32 %v5200, %v5278
      %v5329 = vmax.f32 %v5201, %v5281
      %v5330 = vmax.f32 %v5202, %v5284
      %v5331 = vmax.f32 %v5203, %v5287
      %v5332 = vmax.f32 %v5204, %v5290
      %v5333 = vmax.f32 %v5205, %v5293
      %v5334 = vmax.f32 %v5206, %v5296
      %v5335 = vmax.f32 %v5207, %v5299
      %v5336 = vmax.f32 %v5208, %v5302
      %v5337 = vmax.f32 %v5209, %v5305
      %v5338 = vsub.f32 %v4294, %v5306
      %v5339 = vsub.f32 %v4296, %v5306
      %v5340 = vsub.f32 %v4300, %v5307
      %v5341 = vsub.f32 %v4302, %v5307
      %v5342 = vsub.f32 %v4306, %v5308
      %v5343 = vsub.f32 %v4308, %v5308
      %v5344 = vsub.f32 %v4312, %v5309
      %v5345 = vsub.f32 %v4314, %v5309
      %v5346 = vsub.f32 %v4318, %v5310
      %v5347 = vsub.f32 %v4320, %v5310
      %v5348 = vsub.f32 %v4324, %v5311
      %v5349 = vsub.f32 %v4326, %v5311
      %v5350 = vsub.f32 %v4330, %v5312
      %v5351 = vsub.f32 %v4332, %v5312
      %v5352 = vsub.f32 %v4336, %v5313
      %v5353 = vsub.f32 %v4338, %v5313
      %v5354 = vsub.f32 %v4342, %v5314
      %v5355 = vsub.f32 %v4344, %v5314
      %v5356 = vsub.f32 %v4348, %v5315
      %v5357 = vsub.f32 %v4350, %v5315
      %v5358 = vsub.f32 %v4354, %v5316
      %v5359 = vsub.f32 %v4356, %v5316
      %v5360 = vsub.f32 %v4360, %v5317
      %v5361 = vsub.f32 %v4362, %v5317
      %v5362 = vsub.f32 %v4366, %v5318
      %v5363 = vsub.f32 %v4368, %v5318
      %v5364 = vsub.f32 %v4372, %v5319
      %v5365 = vsub.f32 %v4374, %v5319
      %v5366 = vsub.f32 %v4378, %v5320
      %v5367 = vsub.f32 %v4380, %v5320
      %v5368 = vsub.f32 %v4384, %v5321
      %v5369 = vsub.f32 %v4386, %v5321
      %v5370 = vsub.f32 %v4390, %v5322
      %v5371 = vsub.f32 %v4392, %v5322
      %v5372 = vsub.f32 %v4396, %v5323
      %v5373 = vsub.f32 %v4398, %v5323
      %v5374 = vsub.f32 %v4402, %v5324
      %v5375 = vsub.f32 %v4404, %v5324
      %v5376 = vsub.f32 %v4408, %v5325
      %v5377 = vsub.f32 %v4410, %v5325
      %v5378 = vsub.f32 %v4414, %v5326
      %v5379 = vsub.f32 %v4416, %v5326
      %v5380 = vsub.f32 %v4420, %v5327
      %v5381 = vsub.f32 %v4422, %v5327
      %v5382 = vsub.f32 %v4426, %v5328
      %v5383 = vsub.f32 %v4428, %v5328
      %v5384 = vsub.f32 %v4432, %v5329
      %v5385 = vsub.f32 %v4434, %v5329
      %v5386 = vsub.f32 %v4438, %v5330
      %v5387 = vsub.f32 %v4440, %v5330
      %v5388 = vsub.f32 %v4444, %v5331
      %v5389 = vsub.f32 %v4446, %v5331
      %v5390 = vsub.f32 %v4450, %v5332
      %v5391 = vsub.f32 %v4452, %v5332
      %v5392 = vsub.f32 %v4456, %v5333
      %v5393 = vsub.f32 %v4458, %v5333
      %v5394 = vsub.f32 %v4462, %v5334
      %v5395 = vsub.f32 %v4464, %v5334
      %v5396 = vsub.f32 %v4468, %v5335
      %v5397 = vsub.f32 %v4470, %v5335
      %v5398 = vsub.f32 %v4474, %v5336
      %v5399 = vsub.f32 %v4476, %v5336
      %v5400 = vsub.f32 %v4480, %v5337
      %v5401 = vsub.f32 %v4482, %v5337
      %v5402 = vmul.f32 %v5338, 1.442695
      %v5403 = vpow.pop %v5402
      %v5404 = vmul.f32 %v5339, 1.442695
      %v5405 = vpow.pop %v5404
      %v5406 = vmul.f32 %v5340, 1.442695
      %v5407 = vpow.pop %v5406
      %v5408 = vmul.f32 %v5341, 1.442695
      %v5409 = vpow.pop %v5408
      %v5410 = vmul.f32 %v5342, 1.442695
      %v5411 = vpow.pop %v5410
      %v5412 = vmul.f32 %v5343, 1.442695
      %v5413 = vpow.pop %v5412
      %v5414 = vmul.f32 %v5344, 1.442695
      %v5415 = vpow.pop %v5414
      %v5416 = vmul.f32 %v5345, 1.442695
      %v5417 = vpow.pop %v5416
      %v5418 = vmul.f32 %v5346, 1.442695
      %v5419 = vpow.pop %v5418
      %v5420 = vmul.f32 %v5347, 1.442695
      %v5421 = vpow.pop %v5420
      %v5422 = vmul.f32 %v5348, 1.442695
      %v5423 = vpow.pop %v5422
      %v5424 = vmul.f32 %v5349, 1.442695
      %v5425 = vpow.pop %v5424
      %v5426 = vmul.f32 %v5350, 1.442695
      %v5427 = vpow.pop %v5426
      %v5428 = vmul.f32 %v5351, 1.442695
      %v5429 = vpow.pop %v5428
      %v5430 = vmul.f32 %v5352, 1.442695
      %v5431 = vpow.pop %v5430
      %v5432 = vmul.f32 %v5353, 1.442695
      %v5433 = vpow.pop %v5432
      %v5434 = vmul.f32 %v5354, 1.442695
      %v5435 = vpow.pop %v5434
      %v5436 = vmul.f32 %v5355, 1.442695
      %v5437 = vpow.pop %v5436
      %v5438 = vmul.f32 %v5356, 1.442695
      %v5439 = vpow.pop %v5438
      %v5440 = vmul.f32 %v5357, 1.442695
      %v5441 = vpow.pop %v5440
      %v5442 = vmul.f32 %v5358, 1.442695
      %v5443 = vpow.pop %v5442
      %v5444 = vmul.f32 %v5359, 1.442695
      %v5445 = vpow.pop %v5444
      %v5446 = vmul.f32 %v5360, 1.442695
      %v5447 = vpow.pop %v5446
      %v5448 = vmul.f32 %v5361, 1.442695
      %v5449 = vpow.pop %v5448
      %v5450 = vmul.f32 %v5362, 1.442695
      %v5451 = vpow.pop %v5450
      %v5452 = vmul.f32 %v5363, 1.442695
      %v5453 = vpow.pop %v5452
      %v5454 = vmul.f32 %v5364, 1.442695
      %v5455 = vpow.pop %v5454
      %v5456 = vmul.f32 %v5365, 1.442695
      %v5457 = vpow.pop %v5456
      %v5458 = vmul.f32 %v5366, 1.442695
      %v5459 = vpow.pop %v5458
      %v5460 = vmul.f32 %v5367, 1.442695
      %v5461 = vpow.pop %v5460
      %v5462 = vmul.f32 %v5368, 1.442695
      %v5463 = vpow.pop %v5462
      %v5464 = vmul.f32 %v5369, 1.442695
      %v5465 = vpow.pop %v5464
      %v5466 = vmul.f32 %v5370, 1.442695
      %v5467 = vpow.pop %v5466
      %v5468 = vmul.f32 %v5371, 1.442695
      %v5469 = vpow.pop %v5468
      %v5470 = vmul.f32 %v5372, 1.442695
      %v5471 = vpow.pop %v5470
      %v5472 = vmul.f32 %v5373, 1.442695
      %v5473 = vpow.pop %v5472
      %v5474 = vmul.f32 %v5374, 1.442695
      %v5475 = vpow.pop %v5474
      %v5476 = vmul.f32 %v5375, 1.442695
      %v5477 = vpow.pop %v5476
      %v5478 = vmul.f32 %v5376, 1.442695
      %v5479 = vpow.pop %v5478
      %v5480 = vmul.f32 %v5377, 1.442695
      %v5481 = vpow.pop %v5480
      %v5482 = vmul.f32 %v5378, 1.442695
      %v5483 = vpow.pop %v5482
      %v5484 = vmul.f32 %v5379, 1.442695
      %v5485 = vpow.pop %v5484
      %v5486 = vmul.f32 %v5380, 1.442695
      %v5487 = vpow.pop %v5486
      %v5488 = vmul.f32 %v5381, 1.442695
      %v5489 = vpow.pop %v5488
      %v5490 = vmul.f32 %v5382, 1.442695
      %v5491 = vpow.pop %v5490
      %v5492 = vmul.f32 %v5383, 1.442695
      %v5493 = vpow.pop %v5492
      %v5494 = vmul.f32 %v5384, 1.442695
      %v5495 = vpow.pop %v5494
      %v5496 = vmul.f32 %v5385, 1.442695
      %v5497 = vpow.pop %v5496
      %v5498 = vmul.f32 %v5386, 1.442695
      %v5499 = vpow.pop %v5498
      %v5500 = vmul.f32 %v5387, 1.442695
      %v5501 = vpow.pop %v5500
      %v5502 = vmul.f32 %v5388, 1.442695
      %v5503 = vpow.pop %v5502
      %v5504 = vmul.f32 %v5389, 1.442695
      %v5505 = vpow.pop %v5504
      %v5506 = vmul.f32 %v5390, 1.442695
      %v5507 = vpow.pop %v5506
      %v5508 = vmul.f32 %v5391, 1.442695
      %v5509 = vpow.pop %v5508
      %v5510 = vmul.f32 %v5392, 1.442695
      %v5511 = vpow.pop %v5510
      %v5512 = vmul.f32 %v5393, 1.442695
      %v5513 = vpow.pop %v5512
      %v5514 = vmul.f32 %v5394, 1.442695
      %v5515 = vpow.pop %v5514
      %v5516 = vmul.f32 %v5395, 1.442695
      %v5517 = vpow.pop %v5516
      %v5518 = vmul.f32 %v5396, 1.442695
      %v5519 = vpow.pop %v5518
      %v5520 = vmul.f32 %v5397, 1.442695
      %v5521 = vpow.pop %v5520
      %v5522 = vmul.f32 %v5398, 1.442695
      %v5523 = vpow.pop %v5522
      %v5524 = vmul.f32 %v5399, 1.442695
      %v5525 = vpow.pop %v5524
      %v5526 = vmul.f32 %v5400, 1.442695
      %v5527 = vpow.pop %v5526
      %v5528 = vmul.f32 %v5401, 1.442695
      %v5529 = vpow.pop %v5528
      %v5530 = vsub.f32 %v4583, %v5306
      %v5531 = vsub.f32 %v4588, %v5307
      %v5532 = vsub.f32 %v4593, %v5308
      %v5533 = vsub.f32 %v4598, %v5309
      %v5534 = vsub.f32 %v4603, %v5310
      %v5535 = vsub.f32 %v4608, %v5311
      %v5536 = vsub.f32 %v4613, %v5312
      %v5537 = vsub.f32 %v4618, %v5313
      %v5538 = vsub.f32 %v4623, %v5314
      %v5539 = vsub.f32 %v4628, %v5315
      %v5540 = vsub.f32 %v4633, %v5316
      %v5541 = vsub.f32 %v4638, %v5317
      %v5542 = vsub.f32 %v4643, %v5318
      %v5543 = vsub.f32 %v4648, %v5319
      %v5544 = vsub.f32 %v4653, %v5320
      %v5545 = vsub.f32 %v4658, %v5321
      %v5546 = vsub.f32 %v4663, %v5322
      %v5547 = vsub.f32 %v4668, %v5323
      %v5548 = vsub.f32 %v4673, %v5324
      %v5549 = vsub.f32 %v4678, %v5325
      %v5550 = vsub.f32 %v4683, %v5326
      %v5551 = vsub.f32 %v4688, %v5327
      %v5552 = vsub.f32 %v4693, %v5328
      %v5553 = vsub.f32 %v4698, %v5329
      %v5554 = vsub.f32 %v4703, %v5330
      %v5555 = vsub.f32 %v4708, %v5331
      %v5556 = vsub.f32 %v4713, %v5332
      %v5557 = vsub.f32 %v4718, %v5333
      %v5558 = vsub.f32 %v4723, %v5334
      %v5559 = vsub.f32 %v4728, %v5335
      %v5560 = vsub.f32 %v4733, %v5336
      %v5561 = vsub.f32 %v4738, %v5337
      %v5562 = vmul.f32 %v5530, 1.442695
      %v5563 = vpow.pop %v5562
      %v5564 = vmul.f32 %v5531, 1.442695
      %v5565 = vpow.pop %v5564
      %v5566 = vmul.f32 %v5532, 1.442695
      %v5567 = vpow.pop %v5566
      %v5568 = vmul.f32 %v5533, 1.442695
      %v5569 = vpow.pop %v5568
      %v5570 = vmul.f32 %v5534, 1.442695
      %v5571 = vpow.pop %v5570
      %v5572 = vmul.f32 %v5535, 1.442695
      %v5573 = vpow.pop %v5572
      %v5574 = vmul.f32 %v5536, 1.442695
      %v5575 = vpow.pop %v5574
      %v5576 = vmul.f32 %v5537, 1.442695
      %v5577 = vpow.pop %v5576
      %v5578 = vmul.f32 %v5538, 1.442695
      %v5579 = vpow.pop %v5578
      %v5580 = vmul.f32 %v5539, 1.442695
      %v5581 = vpow.pop %v5580
      %v5582 = vmul.f32 %v5540, 1.442695
      %v5583 = vpow.pop %v5582
      %v5584 = vmul.f32 %v5541, 1.442695
      %v5585 = vpow.pop %v5584
      %v5586 = vmul.f32 %v5542, 1.442695
      %v5587 = vpow.pop %v5586
      %v5588 = vmul.f32 %v5543, 1.442695
      %v5589 = vpow.pop %v5588
      %v5590 = vmul.f32 %v5544, 1.442695
      %v5591 = vpow.pop %v5590
      %v5592 = vmul.f32 %v5545, 1.442695
      %v5593 = vpow.pop %v5592
      %v5594 = vmul.f32 %v5546, 1.442695
      %v5595 = vpow.pop %v5594
      %v5596 = vmul.f32 %v5547, 1.442695
      %v5597 = vpow.pop %v5596
      %v5598 = vmul.f32 %v5548, 1.442695
      %v5599 = vpow.pop %v5598
      %v5600 = vmul.f32 %v5549, 1.442695
      %v5601 = vpow.pop %v5600
      %v5602 = vmul.f32 %v5550, 1.442695
      %v5603 = vpow.pop %v5602
      %v5604 = vmul.f32 %v5551, 1.442695
      %v5605 = vpow.pop %v5604
      %v5606 = vmul.f32 %v5552, 1.442695
      %v5607 = vpow.pop %v5606
      %v5608 = vmul.f32 %v5553, 1.442695
      %v5609 = vpow.pop %v5608
      %v5610 = vmul.f32 %v5554, 1.442695
      %v5611 = vpow.pop %v5610
      %v5612 = vmul.f32 %v5555, 1.442695
      %v5613 = vpow.pop %v5612
      %v5614 = vmul.f32 %v5556, 1.442695
      %v5615 = vpow.pop %v5614
      %v5616 = vmul.f32 %v5557, 1.442695
      %v5617 = vpow.pop %v5616
      %v5618 = vmul.f32 %v5558, 1.442695
      %v5619 = vpow.pop %v5618
      %v5620 = vmul.f32 %v5559, 1.442695
      %v5621 = vpow.pop %v5620
      %v5622 = vmul.f32 %v5560, 1.442695
      %v5623 = vpow.pop %v5622
      %v5624 = vmul.f32 %v5561, 1.442695
      %v5625 = vpow.pop %v5624
      %v5626 = vsub.f32 %v4828, %v5306
      %v5627 = vsub.f32 %v4833, %v5307
      %v5628 = vsub.f32 %v4838, %v5308
      %v5629 = vsub.f32 %v4843, %v5309
      %v5630 = vsub.f32 %v4848, %v5310
      %v5631 = vsub.f32 %v4853, %v5311
      %v5632 = vsub.f32 %v4858, %v5312
      %v5633 = vsub.f32 %v4863, %v5313
      %v5634 = vsub.f32 %v4868, %v5314
      %v5635 = vsub.f32 %v4873, %v5315
      %v5636 = vsub.f32 %v4878, %v5316
      %v5637 = vsub.f32 %v4883, %v5317
      %v5638 = vsub.f32 %v4888, %v5318
      %v5639 = vsub.f32 %v4893, %v5319
      %v5640 = vsub.f32 %v4898, %v5320
      %v5641 = vsub.f32 %v4903, %v5321
      %v5642 = vsub.f32 %v4908, %v5322
      %v5643 = vsub.f32 %v4913, %v5323
      %v5644 = vsub.f32 %v4918, %v5324
      %v5645 = vsub.f32 %v4923, %v5325
      %v5646 = vsub.f32 %v4928, %v5326
      %v5647 = vsub.f32 %v4933, %v5327
      %v5648 = vsub.f32 %v4938, %v5328
      %v5649 = vsub.f32 %v4943, %v5329
      %v5650 = vsub.f32 %v4948, %v5330
      %v5651 = vsub.f32 %v4953, %v5331
      %v5652 = vsub.f32 %v4958, %v5332
      %v5653 = vsub.f32 %v4963, %v5333
      %v5654 = vsub.f32 %v4968, %v5334
      %v5655 = vsub.f32 %v4973, %v5335
      %v5656 = vsub.f32 %v4978, %v5336
      %v5657 = vsub.f32 %v4983, %v5337
      %v5658 = vmul.f32 %v5626, 1.442695
      %v5659 = vpow.pop %v5658
      %v5660 = vmul.f32 %v5627, 1.442695
      %v5661 = vpow.pop %v5660
      %v5662 = vmul.f32 %v5628, 1.442695
      %v5663 = vpow.pop %v5662
      %v5664 = vmul.f32 %v5629, 1.442695
      %v5665 = vpow.pop %v5664
      %v5666 = vmul.f32 %v5630, 1.442695
      %v5667 = vpow.pop %v5666
      %v5668 = vmul.f32 %v5631, 1.442695
      %v5669 = vpow.pop %v5668
      %v5670 = vmul.f32 %v5632, 1.442695
      %v5671 = vpow.pop %v5670
      %v5672 = vmul.f32 %v5633, 1.442695
      %v5673 = vpow.pop %v5672
      %v5674 = vmul.f32 %v5634, 1.442695
      %v5675 = vpow.pop %v5674
      %v5676 = vmul.f32 %v5635, 1.442695
      %v5677 = vpow.pop %v5676
      %v5678 = vmul.f32 %v5636, 1.442695
      %v5679 = vpow.pop %v5678
      %v5680 = vmul.f32 %v5637, 1.442695
      %v5681 = vpow.pop %v5680
      %v5682 = vmul.f32 %v5638, 1.442695
      %v5683 = vpow.pop %v5682
      %v5684 = vmul.f32 %v5639, 1.442695
      %v5685 = vpow.pop %v5684
      %v5686 = vmul.f32 %v5640, 1.442695
      %v5687 = vpow.pop %v5686
      %v5688 = vmul.f32 %v5641, 1.442695
      %v5689 = vpow.pop %v5688
      %v5690 = vmul.f32 %v5642, 1.442695
      %v5691 = vpow.pop %v5690
      %v5692 = vmul.f32 %v5643, 1.442695
      %v5693 = vpow.pop %v5692
      %v5694 = vmul.f32 %v5644, 1.442695
      %v5695 = vpow.pop %v5694
      %v5696 = vmul.f32 %v5645, 1.442695
      %v5697 = vpow.pop %v5696
      %v5698 = vmul.f32 %v5646, 1.442695
      %v5699 = vpow.pop %v5698
      %v5700 = vmul.f32 %v5647, 1.442695
      %v5701 = vpow.pop %v5700
      %v5702 = vmul.f32 %v5648, 1.442695
      %v5703 = vpow.pop %v5702
      %v5704 = vmul.f32 %v5649, 1.442695
      %v5705 = vpow.pop %v5704
      %v5706 = vmul.f32 %v5650, 1.442695
      %v5707 = vpow.pop %v5706
      %v5708 = vmul.f32 %v5651, 1.442695
      %v5709 = vpow.pop %v5708
      %v5710 = vmul.f32 %v5652, 1.442695
      %v5711 = vpow.pop %v5710
      %v5712 = vmul.f32 %v5653, 1.442695
      %v5713 = vpow.pop %v5712
      %v5714 = vmul.f32 %v5654, 1.442695
      %v5715 = vpow.pop %v5714
      %v5716 = vmul.f32 %v5655, 1.442695
      %v5717 = vpow.pop %v5716
      %v5718 = vmul.f32 %v5656, 1.442695
      %v5719 = vpow.pop %v5718
      %v5720 = vmul.f32 %v5657, 1.442695
      %v5721 = vpow.pop %v5720
      %v5722 = vadd.f32 %v5403, %v5405
      %5723 = vadd.xlane.f32.xlu0 %v5722
      %v5724 = vpop.xlane.xlu0 %5723
      %v5725 = vadd.f32 %v5407, %v5409
      %5726 = vadd.xlane.f32.xlu0 %v5725
      %v5727 = vpop.xlane.xlu0 %5726
      %v5728 = vadd.f32 %v5411, %v5413
      %5729 = vadd.xlane.f32.xlu0 %v5728
      %v5730 = vpop.xlane.xlu0 %5729
      %v5731 = vadd.f32 %v5415, %v5417
      %5732 = vadd.xlane.f32.xlu0 %v5731
      %v5733 = vpop.xlane.xlu0 %5732
      %v5734 = vadd.f32 %v5419, %v5421
      %5735 = vadd.xlane.f32.xlu0 %v5734
      %v5736 = vpop.xlane.xlu0 %5735
      %v5737 = vadd.f32 %v5423, %v5425
      %5738 = vadd.xlane.f32.xlu0 %v5737
      %v5739 = vpop.xlane.xlu0 %5738
      %v5740 = vadd.f32 %v5427, %v5429
      %5741 = vadd.xlane.f32.xlu0 %v5740
      %v5742 = vpop.xlane.xlu0 %5741
      %v5743 = vadd.f32 %v5431, %v5433
      %5744 = vadd.xlane.f32.xlu0 %v5743
      %v5745 = vpop.xlane.xlu0 %5744
      %v5746 = vadd.f32 %v5435, %v5437
      %5747 = vadd.xlane.f32.xlu0 %v5746
      %v5748 = vpop.xlane.xlu0 %5747
      %v5749 = vadd.f32 %v5439, %v5441
      %5750 = vadd.xlane.f32.xlu0 %v5749
      %v5751 = vpop.xlane.xlu0 %5750
      %v5752 = vadd.f32 %v5443, %v5445
      %5753 = vadd.xlane.f32.xlu0 %v5752
      %v5754 = vpop.xlane.xlu0 %5753
      %v5755 = vadd.f32 %v5447, %v5449
      %5756 = vadd.xlane.f32.xlu0 %v5755
      %v5757 = vpop.xlane.xlu0 %5756
      %v5758 = vadd.f32 %v5451, %v5453
      %5759 = vadd.xlane.f32.xlu0 %v5758
      %v5760 = vpop.xlane.xlu0 %5759
      %v5761 = vadd.f32 %v5455, %v5457
      %5762 = vadd.xlane.f32.xlu0 %v5761
      %v5763 = vpop.xlane.xlu0 %5762
      %v5764 = vadd.f32 %v5459, %v5461
      %5765 = vadd.xlane.f32.xlu0 %v5764
      %v5766 = vpop.xlane.xlu0 %5765
      %v5767 = vadd.f32 %v5463, %v5465
      %5768 = vadd.xlane.f32.xlu0 %v5767
      %v5769 = vpop.xlane.xlu0 %5768
      %v5770 = vadd.f32 %v5467, %v5469
      %5771 = vadd.xlane.f32.xlu0 %v5770
      %v5772 = vpop.xlane.xlu0 %5771
      %v5773 = vadd.f32 %v5471, %v5473
      %5774 = vadd.xlane.f32.xlu0 %v5773
      %v5775 = vpop.xlane.xlu0 %5774
      %v5776 = vadd.f32 %v5475, %v5477
      %5777 = vadd.xlane.f32.xlu0 %v5776
      %v5778 = vpop.xlane.xlu0 %5777
      %v5779 = vadd.f32 %v5479, %v5481
      %5780 = vadd.xlane.f32.xlu0 %v5779
      %v5781 = vpop.xlane.xlu0 %5780
      %v5782 = vadd.f32 %v5483, %v5485
      %5783 = vadd.xlane.f32.xlu0 %v5782
      %v5784 = vpop.xlane.xlu0 %5783
      %v5785 = vadd.f32 %v5487, %v5489
      %5786 = vadd.xlane.f32.xlu0 %v5785
      %v5787 = vpop.xlane.xlu0 %5786
      %v5788 = vadd.f32 %v5491, %v5493
      %5789 = vadd.xlane.f32.xlu0 %v5788
      %v5790 = vpop.xlane.xlu0 %5789
      %v5791 = vadd.f32 %v5495, %v5497
      %5792 = vadd.xlane.f32.xlu0 %v5791
      %v5793 = vpop.xlane.xlu0 %5792
      %v5794 = vadd.f32 %v5499, %v5501
      %5795 = vadd.xlane.f32.xlu0 %v5794
      %v5796 = vpop.xlane.xlu0 %5795
      %v5797 = vadd.f32 %v5503, %v5505
      %5798 = vadd.xlane.f32.xlu0 %v5797
      %v5799 = vpop.xlane.xlu0 %5798
      %v5800 = vadd.f32 %v5507, %v5509
      %5801 = vadd.xlane.f32.xlu0 %v5800
      %v5802 = vpop.xlane.xlu0 %5801
      %v5803 = vadd.f32 %v5511, %v5513
      %5804 = vadd.xlane.f32.xlu0 %v5803
      %v5805 = vpop.xlane.xlu0 %5804
      %v5806 = vadd.f32 %v5515, %v5517
      %5807 = vadd.xlane.f32.xlu0 %v5806
      %v5808 = vpop.xlane.xlu0 %5807
      %v5809 = vadd.f32 %v5519, %v5521
      %5810 = vadd.xlane.f32.xlu0 %v5809
      %v5811 = vpop.xlane.xlu0 %5810
      %v5812 = vadd.f32 %v5523, %v5525
      %5813 = vadd.xlane.f32.xlu0 %v5812
      %v5814 = vpop.xlane.xlu0 %5813
      %v5815 = vadd.f32 %v5527, %v5529
      %5816 = vadd.xlane.f32.xlu0 %v5815
      %v5817 = vpop.xlane.xlu0 %5816
      %v5818 = vsel %vm1510, %v5563, 0.0
      %5819 = vadd.xlane.f32.xlu0 %v5818
      %v5820 = vpop.xlane.xlu0 %5819
      %v5821 = vsel %vm1510, %v5565, 0.0
      %5822 = vadd.xlane.f32.xlu0 %v5821
      %v5823 = vpop.xlane.xlu0 %5822
      %v5824 = vsel %vm1510, %v5567, 0.0
      %5825 = vadd.xlane.f32.xlu0 %v5824
      %v5826 = vpop.xlane.xlu0 %5825
      %v5827 = vsel %vm1510, %v5569, 0.0
      %5828 = vadd.xlane.f32.xlu0 %v5827
      %v5829 = vpop.xlane.xlu0 %5828
      %v5830 = vsel %vm1510, %v5571, 0.0
      %5831 = vadd.xlane.f32.xlu0 %v5830
      %v5832 = vpop.xlane.xlu0 %5831
      %v5833 = vsel %vm1510, %v5573, 0.0
      %5834 = vadd.xlane.f32.xlu0 %v5833
      %v5835 = vpop.xlane.xlu0 %5834
      %v5836 = vsel %vm1510, %v5575, 0.0
      %5837 = vadd.xlane.f32.xlu0 %v5836
      %v5838 = vpop.xlane.xlu0 %5837
      %v5839 = vsel %vm1510, %v5577, 0.0
      %5840 = vadd.xlane.f32.xlu0 %v5839
      %v5841 = vpop.xlane.xlu0 %5840
      %v5842 = vsel %vm1510, %v5579, 0.0
      %5843 = vadd.xlane.f32.xlu0 %v5842
      %v5844 = vpop.xlane.xlu0 %5843
      %v5845 = vsel %vm1510, %v5581, 0.0
      %5846 = vadd.xlane.f32.xlu0 %v5845
      %v5847 = vpop.xlane.xlu0 %5846
      %v5848 = vsel %vm1510, %v5583, 0.0
      %5849 = vadd.xlane.f32.xlu0 %v5848
      %v5850 = vpop.xlane.xlu0 %5849
      %v5851 = vsel %vm1510, %v5585, 0.0
      %5852 = vadd.xlane.f32.xlu0 %v5851
      %v5853 = vpop.xlane.xlu0 %5852
      %v5854 = vsel %vm1510, %v5587, 0.0
      %5855 = vadd.xlane.f32.xlu0 %v5854
      %v5856 = vpop.xlane.xlu0 %5855
      %v5857 = vsel %vm1510, %v5589, 0.0
      %5858 = vadd.xlane.f32.xlu0 %v5857
      %v5859 = vpop.xlane.xlu0 %5858
      %v5860 = vsel %vm1510, %v5591, 0.0
      %5861 = vadd.xlane.f32.xlu0 %v5860
      %v5862 = vpop.xlane.xlu0 %5861
      %v5863 = vsel %vm1510, %v5593, 0.0
      %5864 = vadd.xlane.f32.xlu0 %v5863
      %v5865 = vpop.xlane.xlu0 %5864
      %v5866 = vsel %vm1510, %v5595, 0.0
      %5867 = vadd.xlane.f32.xlu0 %v5866
      %v5868 = vpop.xlane.xlu0 %5867
      %v5869 = vsel %vm1510, %v5597, 0.0
      %5870 = vadd.xlane.f32.xlu0 %v5869
      %v5871 = vpop.xlane.xlu0 %5870
      %v5872 = vsel %vm1510, %v5599, 0.0
      %5873 = vadd.xlane.f32.xlu0 %v5872
      %v5874 = vpop.xlane.xlu0 %5873
      %v5875 = vsel %vm1510, %v5601, 0.0
      %5876 = vadd.xlane.f32.xlu0 %v5875
      %v5877 = vpop.xlane.xlu0 %5876
      %v5878 = vsel %vm1510, %v5603, 0.0
      %5879 = vadd.xlane.f32.xlu0 %v5878
      %v5880 = vpop.xlane.xlu0 %5879
      %v5881 = vsel %vm1510, %v5605, 0.0
      %5882 = vadd.xlane.f32.xlu0 %v5881
      %v5883 = vpop.xlane.xlu0 %5882
      %v5884 = vsel %vm1510, %v5607, 0.0
      %5885 = vadd.xlane.f32.xlu0 %v5884
      %v5886 = vpop.xlane.xlu0 %5885
      %v5887 = vsel %vm1510, %v5609, 0.0
      %5888 = vadd.xlane.f32.xlu0 %v5887
      %v5889 = vpop.xlane.xlu0 %5888
      %v5890 = vsel %vm1510, %v5611, 0.0
      %5891 = vadd.xlane.f32.xlu0 %v5890
      %v5892 = vpop.xlane.xlu0 %5891
      %v5893 = vsel %vm1510, %v5613, 0.0
      %5894 = vadd.xlane.f32.xlu0 %v5893
      %v5895 = vpop.xlane.xlu0 %5894
      %v5896 = vsel %vm1510, %v5615, 0.0
      %5897 = vadd.xlane.f32.xlu0 %v5896
      %v5898 = vpop.xlane.xlu0 %5897
      %v5899 = vsel %vm1510, %v5617, 0.0
      %5900 = vadd.xlane.f32.xlu0 %v5899
      %v5901 = vpop.xlane.xlu0 %5900
      %v5902 = vsel %vm1510, %v5619, 0.0
      %5903 = vadd.xlane.f32.xlu0 %v5902
      %v5904 = vpop.xlane.xlu0 %5903
      %v5905 = vsel %vm1510, %v5621, 0.0
      %5906 = vadd.xlane.f32.xlu0 %v5905
      %v5907 = vpop.xlane.xlu0 %5906
      %v5908 = vsel %vm1510, %v5623, 0.0
      %5909 = vadd.xlane.f32.xlu0 %v5908
      %v5910 = vpop.xlane.xlu0 %5909
      %v5911 = vsel %vm1510, %v5625, 0.0
      %5912 = vadd.xlane.f32.xlu0 %v5911
      %v5913 = vpop.xlane.xlu0 %5912
      %v5914 = vadd.f32 %v5724, %v5820
      %v5915 = vadd.f32 %v5727, %v5823
      %v5916 = vadd.f32 %v5730, %v5826
      %v5917 = vadd.f32 %v5733, %v5829
      %v5918 = vadd.f32 %v5736, %v5832
      %v5919 = vadd.f32 %v5739, %v5835
      %v5920 = vadd.f32 %v5742, %v5838
      %v5921 = vadd.f32 %v5745, %v5841
      %v5922 = vadd.f32 %v5748, %v5844
      %v5923 = vadd.f32 %v5751, %v5847
      %v5924 = vadd.f32 %v5754, %v5850
      %v5925 = vadd.f32 %v5757, %v5853
      %v5926 = vadd.f32 %v5760, %v5856
      %v5927 = vadd.f32 %v5763, %v5859
      %v5928 = vadd.f32 %v5766, %v5862
      %v5929 = vadd.f32 %v5769, %v5865
      %v5930 = vadd.f32 %v5772, %v5868
      %v5931 = vadd.f32 %v5775, %v5871
      %v5932 = vadd.f32 %v5778, %v5874
      %v5933 = vadd.f32 %v5781, %v5877
      %v5934 = vadd.f32 %v5784, %v5880
      %v5935 = vadd.f32 %v5787, %v5883
      %v5936 = vadd.f32 %v5790, %v5886
      %v5937 = vadd.f32 %v5793, %v5889
      %v5938 = vadd.f32 %v5796, %v5892
      %v5939 = vadd.f32 %v5799, %v5895
      %v5940 = vadd.f32 %v5802, %v5898
      %v5941 = vadd.f32 %v5805, %v5901
      %v5942 = vadd.f32 %v5808, %v5904
      %v5943 = vadd.f32 %v5811, %v5907
      %v5944 = vadd.f32 %v5814, %v5910
      %v5945 = vadd.f32 %v5817, %v5913
      %v5946 = vsel %vm1639, %v5659, 0.0
      %5947 = vadd.xlane.f32.xlu0 %v5946
      %v5948 = vpop.xlane.xlu0 %5947
      %v5949 = vsel %vm1639, %v5661, 0.0
      %5950 = vadd.xlane.f32.xlu0 %v5949
      %v5951 = vpop.xlane.xlu0 %5950
      %v5952 = vsel %vm1639, %v5663, 0.0
      %5953 = vadd.xlane.f32.xlu0 %v5952
      %v5954 = vpop.xlane.xlu0 %5953
      %v5955 = vsel %vm1639, %v5665, 0.0
      %5956 = vadd.xlane.f32.xlu0 %v5955
      %v5957 = vpop.xlane.xlu0 %5956
      %v5958 = vsel %vm1639, %v5667, 0.0
      %5959 = vadd.xlane.f32.xlu0 %v5958
      %v5960 = vpop.xlane.xlu0 %5959
      %v5961 = vsel %vm1639, %v5669, 0.0
      %5962 = vadd.xlane.f32.xlu0 %v5961
      %v5963 = vpop.xlane.xlu0 %5962
      %v5964 = vsel %vm1639, %v5671, 0.0
      %5965 = vadd.xlane.f32.xlu0 %v5964
      %v5966 = vpop.xlane.xlu0 %5965
      %v5967 = vsel %vm1639, %v5673, 0.0
      %5968 = vadd.xlane.f32.xlu0 %v5967
      %v5969 = vpop.xlane.xlu0 %5968
      %v5970 = vsel %vm1639, %v5675, 0.0
      %5971 = vadd.xlane.f32.xlu0 %v5970
      %v5972 = vpop.xlane.xlu0 %5971
      %v5973 = vsel %vm1639, %v5677, 0.0
      %5974 = vadd.xlane.f32.xlu0 %v5973
      %v5975 = vpop.xlane.xlu0 %5974
      %v5976 = vsel %vm1639, %v5679, 0.0
      %5977 = vadd.xlane.f32.xlu0 %v5976
      %v5978 = vpop.xlane.xlu0 %5977
      %v5979 = vsel %vm1639, %v5681, 0.0
      %5980 = vadd.xlane.f32.xlu0 %v5979
      %v5981 = vpop.xlane.xlu0 %5980
      %v5982 = vsel %vm1639, %v5683, 0.0
      %5983 = vadd.xlane.f32.xlu0 %v5982
      %v5984 = vpop.xlane.xlu0 %5983
      %v5985 = vsel %vm1639, %v5685, 0.0
      %5986 = vadd.xlane.f32.xlu0 %v5985
      %v5987 = vpop.xlane.xlu0 %5986
      %v5988 = vsel %vm1639, %v5687, 0.0
      %5989 = vadd.xlane.f32.xlu0 %v5988
      %v5990 = vpop.xlane.xlu0 %5989
      %v5991 = vsel %vm1639, %v5689, 0.0
      %5992 = vadd.xlane.f32.xlu0 %v5991
      %v5993 = vpop.xlane.xlu0 %5992
      %v5994 = vsel %vm1639, %v5691, 0.0
      %5995 = vadd.xlane.f32.xlu0 %v5994
      %v5996 = vpop.xlane.xlu0 %5995
      %v5997 = vsel %vm1639, %v5693, 0.0
      %5998 = vadd.xlane.f32.xlu0 %v5997
      %v5999 = vpop.xlane.xlu0 %5998
      %v6000 = vsel %vm1639, %v5695, 0.0
      %6001 = vadd.xlane.f32.xlu0 %v6000
      %v6002 = vpop.xlane.xlu0 %6001
      %v6003 = vsel %vm1639, %v5697, 0.0
      %6004 = vadd.xlane.f32.xlu0 %v6003
      %v6005 = vpop.xlane.xlu0 %6004
      %v6006 = vsel %vm1639, %v5699, 0.0
      %6007 = vadd.xlane.f32.xlu0 %v6006
      %v6008 = vpop.xlane.xlu0 %6007
      %v6009 = vsel %vm1639, %v5701, 0.0
      %6010 = vadd.xlane.f32.xlu0 %v6009
      %v6011 = vpop.xlane.xlu0 %6010
      %v6012 = vsel %vm1639, %v5703, 0.0
      %6013 = vadd.xlane.f32.xlu0 %v6012
      %v6014 = vpop.xlane.xlu0 %6013
      %v6015 = vsel %vm1639, %v5705, 0.0
      %6016 = vadd.xlane.f32.xlu0 %v6015
      %v6017 = vpop.xlane.xlu0 %6016
      %v6018 = vsel %vm1639, %v5707, 0.0
      %6019 = vadd.xlane.f32.xlu0 %v6018
      %v6020 = vpop.xlane.xlu0 %6019
      %v6021 = vsel %vm1639, %v5709, 0.0
      %6022 = vadd.xlane.f32.xlu0 %v6021
      %v6023 = vpop.xlane.xlu0 %6022
      %v6024 = vsel %vm1639, %v5711, 0.0
      %6025 = vadd.xlane.f32.xlu0 %v6024
      %v6026 = vpop.xlane.xlu0 %6025
      %v6027 = vsel %vm1639, %v5713, 0.0
      %6028 = vadd.xlane.f32.xlu0 %v6027
      %v6029 = vpop.xlane.xlu0 %6028
      %v6030 = vsel %vm1639, %v5715, 0.0
      %6031 = vadd.xlane.f32.xlu0 %v6030
      %v6032 = vpop.xlane.xlu0 %6031
      %v6033 = vsel %vm1639, %v5717, 0.0
      %6034 = vadd.xlane.f32.xlu0 %v6033
      %v6035 = vpop.xlane.xlu0 %6034
      %v6036 = vsel %vm1639, %v5719, 0.0
      %6037 = vadd.xlane.f32.xlu0 %v6036
      %v6038 = vpop.xlane.xlu0 %6037
      %v6039 = vsel %vm1639, %v5721, 0.0
      %6040 = vadd.xlane.f32.xlu0 %v6039
      %v6041 = vpop.xlane.xlu0 %6040
      %v6042 = vadd.f32 %v5914, %v5948
      %v6043 = vadd.f32 %v5915, %v5951
      %v6044 = vadd.f32 %v5916, %v5954
      %v6045 = vadd.f32 %v5917, %v5957
      %v6046 = vadd.f32 %v5918, %v5960
      %v6047 = vadd.f32 %v5919, %v5963
      %v6048 = vadd.f32 %v5920, %v5966
      %v6049 = vadd.f32 %v5921, %v5969
      %v6050 = vadd.f32 %v5922, %v5972
      %v6051 = vadd.f32 %v5923, %v5975
      %v6052 = vadd.f32 %v5924, %v5978
      %v6053 = vadd.f32 %v5925, %v5981
      %v6054 = vadd.f32 %v5926, %v5984
      %v6055 = vadd.f32 %v5927, %v5987
      %v6056 = vadd.f32 %v5928, %v5990
      %v6057 = vadd.f32 %v5929, %v5993
      %v6058 = vadd.f32 %v5930, %v5996
      %v6059 = vadd.f32 %v5931, %v5999
      %v6060 = vadd.f32 %v5932, %v6002
      %v6061 = vadd.f32 %v5933, %v6005
      %v6062 = vadd.f32 %v5934, %v6008
      %v6063 = vadd.f32 %v5935, %v6011
      %v6064 = vadd.f32 %v5936, %v6014
      %v6065 = vadd.f32 %v5937, %v6017
      %v6066 = vadd.f32 %v5938, %v6020
      %v6067 = vadd.f32 %v5939, %v6023
      %v6068 = vadd.f32 %v5940, %v6026
      %v6069 = vadd.f32 %v5941, %v6029
      %v6070 = vadd.f32 %v5942, %v6032
      %v6071 = vadd.f32 %v5943, %v6035
      %v6072 = vadd.f32 %v5944, %v6038
      %v6073 = vadd.f32 %v5945, %v6041
      %v6074 = vrcp.pop %v6042
      %v6075 = vrcp.pop %v6043
      %v6076 = vrcp.pop %v6044
      %v6077 = vrcp.pop %v6045
      %v6078 = vrcp.pop %v6046
      %v6079 = vrcp.pop %v6047
      %v6080 = vrcp.pop %v6048
      %v6081 = vrcp.pop %v6049
      %v6082 = vrcp.pop %v6050
      %v6083 = vrcp.pop %v6051
      %v6084 = vrcp.pop %v6052
      %v6085 = vrcp.pop %v6053
      %v6086 = vrcp.pop %v6054
      %v6087 = vrcp.pop %v6055
      %v6088 = vrcp.pop %v6056
      %v6089 = vrcp.pop %v6057
      %v6090 = vrcp.pop %v6058
      %v6091 = vrcp.pop %v6059
      %v6092 = vrcp.pop %v6060
      %v6093 = vrcp.pop %v6061
      %v6094 = vrcp.pop %v6062
      %v6095 = vrcp.pop %v6063
      %v6096 = vrcp.pop %v6064
      %v6097 = vrcp.pop %v6065
      %v6098 = vrcp.pop %v6066
      %v6099 = vrcp.pop %v6067
      %v6100 = vrcp.pop %v6068
      %v6101 = vrcp.pop %v6069
      %v6102 = vrcp.pop %v6070
      %v6103 = vrcp.pop %v6071
      %v6104 = vrcp.pop %v6072
      %v6105 = vrcp.pop %v6073
      %v6106 = vmul.f32 %v6042, %v6074
      %v6107 = vmul.f32 %v6043, %v6075
      %v6108 = vmul.f32 %v6044, %v6076
      %v6109 = vmul.f32 %v6045, %v6077
      %v6110 = vmul.f32 %v6046, %v6078
      %v6111 = vmul.f32 %v6047, %v6079
      %v6112 = vmul.f32 %v6048, %v6080
      %v6113 = vmul.f32 %v6049, %v6081
      %v6114 = vmul.f32 %v6050, %v6082
      %v6115 = vmul.f32 %v6051, %v6083
      %v6116 = vmul.f32 %v6052, %v6084
      %v6117 = vmul.f32 %v6053, %v6085
      %v6118 = vmul.f32 %v6054, %v6086
      %v6119 = vmul.f32 %v6055, %v6087
      %v6120 = vmul.f32 %v6056, %v6088
      %v6121 = vmul.f32 %v6057, %v6089
      %v6122 = vmul.f32 %v6058, %v6090
      %v6123 = vmul.f32 %v6059, %v6091
      %v6124 = vmul.f32 %v6060, %v6092
      %v6125 = vmul.f32 %v6061, %v6093
      %v6126 = vmul.f32 %v6062, %v6094
      %v6127 = vmul.f32 %v6063, %v6095
      %v6128 = vmul.f32 %v6064, %v6096
      %v6129 = vmul.f32 %v6065, %v6097
      %v6130 = vmul.f32 %v6066, %v6098
      %v6131 = vmul.f32 %v6067, %v6099
      %v6132 = vmul.f32 %v6068, %v6100
      %v6133 = vmul.f32 %v6069, %v6101
      %v6134 = vmul.f32 %v6070, %v6102
      %v6135 = vmul.f32 %v6071, %v6103
      %v6136 = vmul.f32 %v6072, %v6104
      %v6137 = vmul.f32 %v6073, %v6105
      %v6138 = vsub.f32 2.0, %v6106
      %v6139 = vsub.f32 2.0, %v6107
      %v6140 = vsub.f32 2.0, %v6108
      %v6141 = vsub.f32 2.0, %v6109
      %v6142 = vsub.f32 2.0, %v6110
      %v6143 = vsub.f32 2.0, %v6111
      %v6144 = vsub.f32 2.0, %v6112
      %v6145 = vsub.f32 2.0, %v6113
      %v6146 = vsub.f32 2.0, %v6114
      %v6147 = vsub.f32 2.0, %v6115
      %v6148 = vsub.f32 2.0, %v6116
      %v6149 = vsub.f32 2.0, %v6117
      %v6150 = vsub.f32 2.0, %v6118
      %v6151 = vsub.f32 2.0, %v6119
      %v6152 = vsub.f32 2.0, %v6120
      %v6153 = vsub.f32 2.0, %v6121
      %v6154 = vsub.f32 2.0, %v6122
      %v6155 = vsub.f32 2.0, %v6123
      %v6156 = vsub.f32 2.0, %v6124
      %v6157 = vsub.f32 2.0, %v6125
      %v6158 = vsub.f32 2.0, %v6126
      %v6159 = vsub.f32 2.0, %v6127
      %v6160 = vsub.f32 2.0, %v6128
      %v6161 = vsub.f32 2.0, %v6129
      %v6162 = vsub.f32 2.0, %v6130
      %v6163 = vsub.f32 2.0, %v6131
      %v6164 = vsub.f32 2.0, %v6132
      %v6165 = vsub.f32 2.0, %v6133
      %v6166 = vsub.f32 2.0, %v6134
      %v6167 = vsub.f32 2.0, %v6135
      %v6168 = vsub.f32 2.0, %v6136
      %v6169 = vsub.f32 2.0, %v6137
      %v6170 = vmul.f32 %v6074, %v6138
      %v6171 = vmul.f32 %v6075, %v6139
      %v6172 = vmul.f32 %v6076, %v6140
      %v6173 = vmul.f32 %v6077, %v6141
      %v6174 = vmul.f32 %v6078, %v6142
      %v6175 = vmul.f32 %v6079, %v6143
      %v6176 = vmul.f32 %v6080, %v6144
      %v6177 = vmul.f32 %v6081, %v6145
      %v6178 = vmul.f32 %v6082, %v6146
      %v6179 = vmul.f32 %v6083, %v6147
      %v6180 = vmul.f32 %v6084, %v6148
      %v6181 = vmul.f32 %v6085, %v6149
      %v6182 = vmul.f32 %v6086, %v6150
      %v6183 = vmul.f32 %v6087, %v6151
      %v6184 = vmul.f32 %v6088, %v6152
      %v6185 = vmul.f32 %v6089, %v6153
      %v6186 = vmul.f32 %v6090, %v6154
      %v6187 = vmul.f32 %v6091, %v6155
      %v6188 = vmul.f32 %v6092, %v6156
      %v6189 = vmul.f32 %v6093, %v6157
      %v6190 = vmul.f32 %v6094, %v6158
      %v6191 = vmul.f32 %v6095, %v6159
      %v6192 = vmul.f32 %v6096, %v6160
      %v6193 = vmul.f32 %v6097, %v6161
      %v6194 = vmul.f32 %v6098, %v6162
      %v6195 = vmul.f32 %v6099, %v6163
      %v6196 = vmul.f32 %v6100, %v6164
      %v6197 = vmul.f32 %v6101, %v6165
      %v6198 = vmul.f32 %v6102, %v6166
      %v6199 = vmul.f32 %v6103, %v6167
      %v6200 = vmul.f32 %v6104, %v6168
      %v6201 = vmul.f32 %v6105, %v6169
      %6202 = vrot.lane.b32.xlu0 %v398, 64
      %v6203 = vpop.permute.xlu0 %6202
      %6204 = vrot.lane.b32.xlu0 %v399, 64
      %v6205 = vpop.permute.xlu0 %6204
      %6206 = vrot.lane.b32.xlu0 %v400, 64
      %v6207 = vpop.permute.xlu0 %6206
      %6208 = vrot.lane.b32.xlu0 %v401, 64
      %v6209 = vpop.permute.xlu0 %6208
      %6210 = vrot.lane.b32.xlu0 %v402, 64
      %v6211 = vpop.permute.xlu0 %6210
      %6212 = vrot.lane.b32.xlu0 %v403, 64
      %v6213 = vpop.permute.xlu0 %6212
      %6214 = vrot.lane.b32.xlu0 %v404, 64
      %v6215 = vpop.permute.xlu0 %6214
      %6216 = vrot.lane.b32.xlu0 %v405, 64
      %v6217 = vpop.permute.xlu0 %6216
      %v6227 = vsel %vm1510, %v5563, 0
      %v6230 = vsel %vm1510, %v5565, 0
      %v6233 = vsel %vm1510, %v5567, 0
      %v6236 = vsel %vm1510, %v5569, 0
      %v6239 = vsel %vm1510, %v5571, 0
      %v6242 = vsel %vm1510, %v5573, 0
      %v6245 = vsel %vm1510, %v5575, 0
      %v6248 = vsel %vm1510, %v5577, 0
      %v6251 = vsel %vm1510, %v5579, 0
      %v6254 = vsel %vm1510, %v5581, 0
      %v6257 = vsel %vm1510, %v5583, 0
      %v6260 = vsel %vm1510, %v5585, 0
      %v6263 = vsel %vm1510, %v5587, 0
      %v6266 = vsel %vm1510, %v5589, 0
      %v6269 = vsel %vm1510, %v5591, 0
      %v6272 = vsel %vm1510, %v5593, 0
      %v6275 = vsel %vm1510, %v5595, 0
      %v6278 = vsel %vm1510, %v5597, 0
      %v6281 = vsel %vm1510, %v5599, 0
      %v6284 = vsel %vm1510, %v5601, 0
      %v6287 = vsel %vm1510, %v5603, 0
      %v6290 = vsel %vm1510, %v5605, 0
      %v6293 = vsel %vm1510, %v5607, 0
      %v6296 = vsel %vm1510, %v5609, 0
      %v6299 = vsel %vm1510, %v5611, 0
      %v6302 = vsel %vm1510, %v5613, 0
      %v6305 = vsel %vm1510, %v5615, 0
      %v6308 = vsel %vm1510, %v5617, 0
      %v6311 = vsel %vm1510, %v5619, 0
      %v6314 = vsel %vm1510, %v5621, 0
      %v6317 = vsel %vm1510, %v5623, 0
      %v6320 = vsel %vm1510, %v5625, 0
      %6322 = vmatprep.subr.mxu0 0.0
      %6323 = vmatpush1.msra.mxu0 %v6203
      %6324 = vmatprep.subr.mxu0 0.0
      %6325 = vmatpush1.msra.mxu0 %v6205
      %6326 = vmatprep.subr.mxu0 0.0
      %6327 = vmatpush1.msra.mxu0 %v6207
      %6328 = vmatprep.subr.mxu0 0.0
      %6329 = vmatpush1.msra.mxu0 %v6209
      %6330 = vmatprep.subr.mxu0 0.0
      %6331 = vmatpush1.msra.mxu0 %v6211
      %6332 = vmatprep.subr.mxu0 0.0
      %6333 = vmatpush1.msra.mxu0 %v6213
      %6334 = vmatprep.subr.mxu0 0.0
      %6335 = vmatpush1.msra.mxu0 %v6215
      %6336 = vmatprep.subr.mxu0 0.0
      %6337 = vmatpush1.msra.mxu0 %v6217
      %6338 = vmatprep.subr.mxu0 0.0
      %6339 = vmatpush1.msra.mxu0 0.0
      %6340 = vmatprep.subr.mxu0 0.0
      %6341 = vmatpush1.msra.mxu0 0.0
      %6342 = vmatprep.subr.mxu0 0.0
      %6343 = vmatpush1.msra.mxu0 0.0
      %6344 = vmatprep.subr.mxu0 0.0
      %6345 = vmatpush1.msra.mxu0 0.0
      %6346 = vmatprep.subr.mxu0 0.0
      %6347 = vmatpush1.msra.mxu0 0.0
      %6348 = vmatprep.subr.mxu0 0.0
      %6349 = vmatpush1.msra.mxu0 0.0
      %6350 = vmatprep.subr.mxu0 0.0
      %6351 = vmatpush1.msra.mxu0 0.0
      %6352 = vmatprep.subr.mxu0 0.0
      %6353 = vmatpush1.msra.mxu0 0.0
      %6354 = vmatprep.subr.mxu0 0.0
      %6355 = vmatpush1.msra.mxu0 0.0
      %6356 = vmatprep.subr.mxu0 0.0
      %6357 = vmatpush1.msra.mxu0 0.0
      %6358 = vmatprep.subr.mxu0 0.0
      %6359 = vmatpush1.msra.mxu0 0.0
      %6360 = vmatprep.subr.mxu0 0.0
      %6361 = vmatpush1.msra.mxu0 0.0
      %6362 = vmatprep.subr.mxu0 0.0
      %6363 = vmatpush1.msra.mxu0 0.0
      %6364 = vmatprep.subr.mxu0 0.0
      %6365 = vmatpush1.msra.mxu0 0.0
      %6366 = vmatprep.subr.mxu0 0.0
      %6367 = vmatpush1.msra.mxu0 0.0
      %6368 = vmatprep.subr.mxu0 0.0
      %6369 = vmatpush1.msra.mxu0 0.0
      %6370 = vmatprep.subr.mxu0 0.0
      %6371 = vmatpush1.msra.mxu0 0.0
      %6372 = vmatprep.subr.mxu0 0.0
      %6373 = vmatpush1.msra.mxu0 0.0
      %6374 = vmatprep.subr.mxu0 0.0
      %6375 = vmatpush1.msra.mxu0 0.0
      %6376 = vmatprep.subr.mxu0 0.0
      %6377 = vmatpush1.msra.mxu0 0.0
      %6378 = vmatprep.subr.mxu0 0.0
      %6379 = vmatpush1.msra.mxu0 0.0
      %6380 = vmatprep.subr.mxu0 0.0
      %6381 = vmatpush1.msra.mxu0 0.0
      %6382 = vmatprep.subr.mxu0 0.0
      %6383 = vmatpush1.msra.mxu0 0.0
      %6384 = vmatprep.subr.mxu0 0.0
      %6385 = vmatpush1.msra.mxu0 0.0
      %6386 = vmatprep.mubr.f32.mxu0 0.0
      %6387 = vmatmul.mubr.f32.gmra.mrb[0].mxu0 %v6227
      %v6388 = vpop.f32.mrb[0].mxu0
      %v6389 = vadd.f32 0.0, %v6388
      %v6390 = vpop.f32.mrb[0].mxu0
      %6391 = vmatprep.mubr.f32.mxu0 0.0
      %6392 = vmatmul.mubr.f32.gmra.mrb[0].mxu0 %v6230
      %v6393 = vpop.f32.mrb[0].mxu0
      %v6394 = vadd.f32 0.0, %v6393
      %v6395 = vpop.f32.mrb[0].mxu0
      %6396 = vmatprep.mubr.f32.mxu0 0.0
      %6397 = vmatmul.mubr.f32.gmra.mrb[0].mxu0 %v6233
      %v6398 = vpop.f32.mrb[0].mxu0
      %v6399 = vadd.f32 0.0, %v6398
      %v6400 = vpop.f32.mrb[0].mxu0
      %6401 = vmatprep.mubr.f32.mxu0 0.0
      %6402 = vmatmul.mubr.f32.gmra.mrb[0].mxu0 %v6236
      %v6403 = vpop.f32.mrb[0].mxu0
      %v6404 = vadd.f32 0.0, %v6403
      %v6405 = vpop.f32.mrb[0].mxu0
      %6406 = vmatprep.mubr.f32.mxu0 0.0
      %6407 = vmatmul.mubr.f32.gmra.mrb[0].mxu0 %v6239
      %v6408 = vpop.f32.mrb[0].mxu0
      %v6409 = vadd.f32 0.0, %v6408
      %v6410 = vpop.f32.mrb[0].mxu0
      %6411 = vmatprep.mubr.f32.mxu0 0.0
      %6412 = vmatmul.mubr.f32.gmra.mrb[0].mxu0 %v6242
      %v6413 = vpop.f32.mrb[0].mxu0
      %v6414 = vadd.f32 0.0, %v6413
      %v6415 = vpop.f32.mrb[0].mxu0
      %6416 = vmatprep.mubr.f32.mxu0 0.0
      %6417 = vmatmul.mubr.f32.gmra.mrb[0].mxu0 %v6245
      %v6418 = vpop.f32.mrb[0].mxu0
      %v6419 = vadd.f32 0.0, %v6418
      %v6420 = vpop.f32.mrb[0].mxu0
      %6421 = vmatprep.mubr.f32.mxu0 0.0
      %6422 = vmatmul.mubr.f32.gmra.mrb[0].mxu0 %v6248
      %v6423 = vpop.f32.mrb[0].mxu0
      %v6424 = vadd.f32 0.0, %v6423
      %v6425 = vpop.f32.mrb[0].mxu0
      %6426 = vmatprep.mubr.f32.mxu0 0.0
      %6427 = vmatmul.mubr.f32.gmra.mrb[0].mxu0 %v6251
      %v6428 = vpop.f32.mrb[0].mxu0
      %v6429 = vadd.f32 0.0, %v6428
      %v6430 = vpop.f32.mrb[0].mxu0
      %6431 = vmatprep.mubr.f32.mxu0 0.0
      %6432 = vmatmul.mubr.f32.gmra.mrb[0].mxu0 %v6254
      %v6433 = vpop.f32.mrb[0].mxu0
      %v6434 = vadd.f32 0.0, %v6433
      %v6435 = vpop.f32.mrb[0].mxu0
      %6436 = vmatprep.mubr.f32.mxu0 0.0
      %6437 = vmatmul.mubr.f32.gmra.mrb[0].mxu0 %v6257
      %v6438 = vpop.f32.mrb[0].mxu0
      %v6439 = vadd.f32 0.0, %v6438
      %v6440 = vpop.f32.mrb[0].mxu0
      %6441 = vmatprep.mubr.f32.mxu0 0.0
      %6442 = vmatmul.mubr.f32.gmra.mrb[0].mxu0 %v6260
      %v6443 = vpop.f32.mrb[0].mxu0
      %v6444 = vadd.f32 0.0, %v6443
      %v6445 = vpop.f32.mrb[0].mxu0
      %6446 = vmatprep.mubr.f32.mxu0 0.0
      %6447 = vmatmul.mubr.f32.gmra.mrb[0].mxu0 %v6263
      %v6448 = vpop.f32.mrb[0].mxu0
      %v6449 = vadd.f32 0.0, %v6448
      %v6450 = vpop.f32.mrb[0].mxu0
      %6451 = vmatprep.mubr.f32.mxu0 0.0
      %6452 = vmatmul.mubr.f32.gmra.mrb[0].mxu0 %v6266
      %v6453 = vpop.f32.mrb[0].mxu0
      %v6454 = vadd.f32 0.0, %v6453
      %v6455 = vpop.f32.mrb[0].mxu0
      %6456 = vmatprep.mubr.f32.mxu0 0.0
      %6457 = vmatmul.mubr.f32.gmra.mrb[0].mxu0 %v6269
      %v6458 = vpop.f32.mrb[0].mxu0
      %v6459 = vadd.f32 0.0, %v6458
      %v6460 = vpop.f32.mrb[0].mxu0
      %6461 = vmatprep.mubr.f32.mxu0 0.0
      %6462 = vmatmul.mubr.f32.gmra.mrb[0].mxu0 %v6272
      %v6463 = vpop.f32.mrb[0].mxu0
      %v6464 = vadd.f32 0.0, %v6463
      %v6465 = vpop.f32.mrb[0].mxu0
      %6466 = vmatprep.mubr.f32.mxu0 0.0
      %6467 = vmatmul.mubr.f32.gmra.mrb[0].mxu0 %v6275
      %v6468 = vpop.f32.mrb[0].mxu0
      %v6469 = vadd.f32 0.0, %v6468
      %v6470 = vpop.f32.mrb[0].mxu0
      %6471 = vmatprep.mubr.f32.mxu0 0.0
      %6472 = vmatmul.mubr.f32.gmra.mrb[0].mxu0 %v6278
      %v6473 = vpop.f32.mrb[0].mxu0
      %v6474 = vadd.f32 0.0, %v6473
      %v6475 = vpop.f32.mrb[0].mxu0
      %6476 = vmatprep.mubr.f32.mxu0 0.0
      %6477 = vmatmul.mubr.f32.gmra.mrb[0].mxu0 %v6281
      %v6478 = vpop.f32.mrb[0].mxu0
      %v6479 = vadd.f32 0.0, %v6478
      %v6480 = vpop.f32.mrb[0].mxu0
      %6481 = vmatprep.mubr.f32.mxu0 0.0
      %6482 = vmatmul.mubr.f32.gmra.mrb[0].mxu0 %v6284
      %v6483 = vpop.f32.mrb[0].mxu0
      %v6484 = vadd.f32 0.0, %v6483
      %v6485 = vpop.f32.mrb[0].mxu0
      %6486 = vmatprep.mubr.f32.mxu0 0.0
      %6487 = vmatmul.mubr.f32.gmra.mrb[0].mxu0 %v6287
      %v6488 = vpop.f32.mrb[0].mxu0
      %v6489 = vadd.f32 0.0, %v6488
      %v6490 = vpop.f32.mrb[0].mxu0
      %6491 = vmatprep.mubr.f32.mxu0 0.0
      %6492 = vmatmul.mubr.f32.gmra.mrb[0].mxu0 %v6290
      %v6493 = vpop.f32.mrb[0].mxu0
      %v6494 = vadd.f32 0.0, %v6493
      %v6495 = vpop.f32.mrb[0].mxu0
      %6496 = vmatprep.mubr.f32.mxu0 0.0
      %6497 = vmatmul.mubr.f32.gmra.mrb[0].mxu0 %v6293
      %v6498 = vpop.f32.mrb[0].mxu0
      %v6499 = vadd.f32 0.0, %v6498
      %v6500 = vpop.f32.mrb[0].mxu0
      %6501 = vmatprep.mubr.f32.mxu0 0.0
      %6502 = vmatmul.mubr.f32.gmra.mrb[0].mxu0 %v6296
      %v6503 = vpop.f32.mrb[0].mxu0
      %v6504 = vadd.f32 0.0, %v6503
      %v6505 = vpop.f32.mrb[0].mxu0
      %6506 = vmatprep.mubr.f32.mxu0 0.0
      %6507 = vmatmul.mubr.f32.gmra.mrb[0].mxu0 %v6299
      %v6508 = vpop.f32.mrb[0].mxu0
      %v6509 = vadd.f32 0.0, %v6508
      %v6510 = vpop.f32.mrb[0].mxu0
      %6511 = vmatprep.mubr.f32.mxu0 0.0
      %6512 = vmatmul.mubr.f32.gmra.mrb[0].mxu0 %v6302
      %v6513 = vpop.f32.mrb[0].mxu0
      %v6514 = vadd.f32 0.0, %v6513
      %v6515 = vpop.f32.mrb[0].mxu0
      %6516 = vmatprep.mubr.f32.mxu0 0.0
      %6517 = vmatmul.mubr.f32.gmra.mrb[0].mxu0 %v6305
      %v6518 = vpop.f32.mrb[0].mxu0
      %v6519 = vadd.f32 0.0, %v6518
      %v6520 = vpop.f32.mrb[0].mxu0
      %6521 = vmatprep.mubr.f32.mxu0 0.0
      %6522 = vmatmul.mubr.f32.gmra.mrb[0].mxu0 %v6308
      %v6523 = vpop.f32.mrb[0].mxu0
      %v6524 = vadd.f32 0.0, %v6523
      %v6525 = vpop.f32.mrb[0].mxu0
      %6526 = vmatprep.mubr.f32.mxu0 0.0
      %6527 = vmatmul.mubr.f32.gmra.mrb[0].mxu0 %v6311
      %v6528 = vpop.f32.mrb[0].mxu0
      %v6529 = vadd.f32 0.0, %v6528
      %v6530 = vpop.f32.mrb[0].mxu0
      %6531 = vmatprep.mubr.f32.mxu0 0.0
      %6532 = vmatmul.mubr.f32.gmra.mrb[0].mxu0 %v6314
      %v6533 = vpop.f32.mrb[0].mxu0
      %v6534 = vadd.f32 0.0, %v6533
      %v6535 = vpop.f32.mrb[0].mxu0
      %6536 = vmatprep.mubr.f32.mxu0 0.0
      %6537 = vmatmul.mubr.f32.gmra.mrb[0].mxu0 %v6317
      %v6538 = vpop.f32.mrb[0].mxu0
      %v6539 = vadd.f32 0.0, %v6538
      %v6540 = vpop.f32.mrb[0].mxu0
      %6541 = vmatprep.mubr.f32.mxu0 0.0
      %6542 = vmatmul.mubr.f32.gmra.mrb[0].mxu0 %v6320
      %v6543 = vpop.f32.mrb[0].mxu0
      %v6544 = vadd.f32 0.0, %v6543
      %v6545 = vpop.f32.mrb[0].mxu0
      %6546 = vdwg.mxu0
      %6547 = vrot.lane.b32.xlu0 %v366, 32
      %v6548 = vpop.permute.xlu0 %6547
      %6549 = vrot.lane.b32.xlu0 %v367, 32
      %v6550 = vpop.permute.xlu0 %6549
      %6551 = vrot.lane.b32.xlu0 %v368, 32
      %v6552 = vpop.permute.xlu0 %6551
      %6553 = vrot.lane.b32.xlu0 %v369, 32
      %v6554 = vpop.permute.xlu0 %6553
      %6555 = vrot.lane.b32.xlu0 %v370, 32
      %v6556 = vpop.permute.xlu0 %6555
      %6557 = vrot.lane.b32.xlu0 %v371, 32
      %v6558 = vpop.permute.xlu0 %6557
      %6559 = vrot.lane.b32.xlu0 %v372, 32
      %v6560 = vpop.permute.xlu0 %6559
      %6561 = vrot.lane.b32.xlu0 %v373, 32
      %v6562 = vpop.permute.xlu0 %6561
      %6563 = vrot.lane.b32.xlu0 %v374, 32
      %v6564 = vpop.permute.xlu0 %6563
      %6565 = vrot.lane.b32.xlu0 %v375, 32
      %v6566 = vpop.permute.xlu0 %6565
      %6567 = vrot.lane.b32.xlu0 %v376, 32
      %v6568 = vpop.permute.xlu0 %6567
      %6569 = vrot.lane.b32.xlu0 %v377, 32
      %v6570 = vpop.permute.xlu0 %6569
      %6571 = vrot.lane.b32.xlu0 %v378, 32
      %v6572 = vpop.permute.xlu0 %6571
      %6573 = vrot.lane.b32.xlu0 %v379, 32
      %v6574 = vpop.permute.xlu0 %6573
      %6575 = vrot.lane.b32.xlu0 %v380, 32
      %v6576 = vpop.permute.xlu0 %6575
      %6577 = vrot.lane.b32.xlu0 %v381, 32
      %v6578 = vpop.permute.xlu0 %6577
      %6579 = vrot.lane.b32.xlu0 %v382, 32
      %v6580 = vpop.permute.xlu0 %6579
      %6581 = vrot.lane.b32.xlu0 %v383, 32
      %v6582 = vpop.permute.xlu0 %6581
      %6583 = vrot.lane.b32.xlu0 %v384, 32
      %v6584 = vpop.permute.xlu0 %6583
      %6585 = vrot.lane.b32.xlu0 %v385, 32
      %v6586 = vpop.permute.xlu0 %6585
      %6587 = vrot.lane.b32.xlu0 %v386, 32
      %v6588 = vpop.permute.xlu0 %6587
      %6589 = vrot.lane.b32.xlu0 %v387, 32
      %v6590 = vpop.permute.xlu0 %6589
      %6591 = vrot.lane.b32.xlu0 %v388, 32
      %v6592 = vpop.permute.xlu0 %6591
      %6593 = vrot.lane.b32.xlu0 %v389, 32
      %v6594 = vpop.permute.xlu0 %6593
      %6595 = vrot.lane.b32.xlu0 %v390, 32
      %v6596 = vpop.permute.xlu0 %6595
      %6597 = vrot.lane.b32.xlu0 %v391, 32
      %v6598 = vpop.permute.xlu0 %6597
      %6599 = vrot.lane.b32.xlu0 %v392, 32
      %v6600 = vpop.permute.xlu0 %6599
      %6601 = vrot.lane.b32.xlu0 %v393, 32
      %v6602 = vpop.permute.xlu0 %6601
      %6603 = vrot.lane.b32.xlu0 %v394, 32
      %v6604 = vpop.permute.xlu0 %6603
      %6605 = vrot.lane.b32.xlu0 %v395, 32
      %v6606 = vpop.permute.xlu0 %6605
      %6607 = vrot.lane.b32.xlu0 %v396, 32
      %v6608 = vpop.permute.xlu0 %6607
      %6609 = vrot.lane.b32.xlu0 %v397, 32
      %v6610 = vpop.permute.xlu0 %6609
      %6643 = vmatprep.subr.mxu0 0.0
      %6644 = vmatpush1.msra.mxu0 %v6548
      %6645 = vmatprep.subr.mxu0 0.0
      %6646 = vmatpush1.msra.mxu0 %v6550
      %6647 = vmatprep.subr.mxu0 0.0
      %6648 = vmatpush1.msra.mxu0 %v6552
      %6649 = vmatprep.subr.mxu0 0.0
      %6650 = vmatpush1.msra.mxu0 %v6554
      %6651 = vmatprep.subr.mxu0 0.0
      %6652 = vmatpush1.msra.mxu0 %v6556
      %6653 = vmatprep.subr.mxu0 0.0
      %6654 = vmatpush1.msra.mxu0 %v6558
      %6655 = vmatprep.subr.mxu0 0.0
      %6656 = vmatpush1.msra.mxu0 %v6560
      %6657 = vmatprep.subr.mxu0 0.0
      %6658 = vmatpush1.msra.mxu0 %v6562
      %6659 = vmatprep.subr.mxu0 0.0
      %6660 = vmatpush1.msra.mxu0 %v6564
      %6661 = vmatprep.subr.mxu0 0.0
      %6662 = vmatpush1.msra.mxu0 %v6566
      %6663 = vmatprep.subr.mxu0 0.0
      %6664 = vmatpush1.msra.mxu0 %v6568
      %6665 = vmatprep.subr.mxu0 0.0
      %6666 = vmatpush1.msra.mxu0 %v6570
      %6667 = vmatprep.subr.mxu0 0.0
      %6668 = vmatpush1.msra.mxu0 %v6572
      %6669 = vmatprep.subr.mxu0 0.0
      %6670 = vmatpush1.msra.mxu0 %v6574
      %6671 = vmatprep.subr.mxu0 0.0
      %6672 = vmatpush1.msra.mxu0 %v6576
      %6673 = vmatprep.subr.mxu0 0.0
      %6674 = vmatpush1.msra.mxu0 %v6578
      %6675 = vmatprep.subr.mxu0 0.0
      %6676 = vmatpush1.msra.mxu0 %v6580
      %6677 = vmatprep.subr.mxu0 0.0
      %6678 = vmatpush1.msra.mxu0 %v6582
      %6679 = vmatprep.subr.mxu0 0.0
      %6680 = vmatpush1.msra.mxu0 %v6584
      %6681 = vmatprep.subr.mxu0 0.0
      %6682 = vmatpush1.msra.mxu0 %v6586
      %6683 = vmatprep.subr.mxu0 0.0
      %6684 = vmatpush1.msra.mxu0 %v6588
      %6685 = vmatprep.subr.mxu0 0.0
      %6686 = vmatpush1.msra.mxu0 %v6590
      %6687 = vmatprep.subr.mxu0 0.0
      %6688 = vmatpush1.msra.mxu0 %v6592
      %6689 = vmatprep.subr.mxu0 0.0
      %6690 = vmatpush1.msra.mxu0 %v6594
      %6691 = vmatprep.subr.mxu0 0.0
      %6692 = vmatpush1.msra.mxu0 %v6596
      %6693 = vmatprep.subr.mxu0 0.0
      %6694 = vmatpush1.msra.mxu0 %v6598
      %6695 = vmatprep.subr.mxu0 0.0
      %6696 = vmatpush1.msra.mxu0 %v6600
      %6697 = vmatprep.subr.mxu0 0.0
      %6698 = vmatpush1.msra.mxu0 %v6602
      %6699 = vmatprep.subr.mxu0 0.0
      %6700 = vmatpush1.msra.mxu0 %v6604
      %6701 = vmatprep.subr.mxu0 0.0
      %6702 = vmatpush1.msra.mxu0 %v6606
      %6703 = vmatprep.subr.mxu0 0.0
      %6704 = vmatpush1.msra.mxu0 %v6608
      %6705 = vmatprep.subr.mxu0 0.0
      %6706 = vmatpush1.msra.mxu0 %v6610
      %6707 = vmatprep.mubr.f32.mxu0 %v5405
      %6708 = vmatmul.mubr.f32.gmra.mrb[0].mxu0 %v5403
      %v6709 = vpop.f32.mrb[0].mxu0
      %v6710 = vadd.f32 %v6389, %v6709
      %v6711 = vpop.f32.mrb[0].mxu0
      %6712 = vmatprep.mubr.f32.mxu0 %v5409
      %6713 = vmatmul.mubr.f32.gmra.mrb[0].mxu0 %v5407
      %v6714 = vpop.f32.mrb[0].mxu0
      %v6715 = vadd.f32 %v6394, %v6714
      %v6716 = vpop.f32.mrb[0].mxu0
      %6717 = vmatprep.mubr.f32.mxu0 %v5413
      %6718 = vmatmul.mubr.f32.gmra.mrb[0].mxu0 %v5411
      %v6719 = vpop.f32.mrb[0].mxu0
      %v6720 = vadd.f32 %v6399, %v6719
      %v6721 = vpop.f32.mrb[0].mxu0
      %6722 = vmatprep.mubr.f32.mxu0 %v5417
      %6723 = vmatmul.mubr.f32.gmra.mrb[0].mxu0 %v5415
      %v6724 = vpop.f32.mrb[0].mxu0
      %v6725 = vadd.f32 %v6404, %v6724
      %v6726 = vpop.f32.mrb[0].mxu0
      %6727 = vmatprep.mubr.f32.mxu0 %v5421
      %6728 = vmatmul.mubr.f32.gmra.mrb[0].mxu0 %v5419
      %v6729 = vpop.f32.mrb[0].mxu0
      %v6730 = vadd.f32 %v6409, %v6729
      %v6731 = vpop.f32.mrb[0].mxu0
      %6732 = vmatprep.mubr.f32.mxu0 %v5425
      %6733 = vmatmul.mubr.f32.gmra.mrb[0].mxu0 %v5423
      %v6734 = vpop.f32.mrb[0].mxu0
      %v6735 = vadd.f32 %v6414, %v6734
      %v6736 = vpop.f32.mrb[0].mxu0
      %6737 = vmatprep.mubr.f32.mxu0 %v5429
      %6738 = vmatmul.mubr.f32.gmra.mrb[0].mxu0 %v5427
      %v6739 = vpop.f32.mrb[0].mxu0
      %v6740 = vadd.f32 %v6419, %v6739
      %v6741 = vpop.f32.mrb[0].mxu0
      %6742 = vmatprep.mubr.f32.mxu0 %v5433
      %6743 = vmatmul.mubr.f32.gmra.mrb[0].mxu0 %v5431
      %v6744 = vpop.f32.mrb[0].mxu0
      %v6745 = vadd.f32 %v6424, %v6744
      %v6746 = vpop.f32.mrb[0].mxu0
      %6747 = vmatprep.mubr.f32.mxu0 %v5437
      %6748 = vmatmul.mubr.f32.gmra.mrb[0].mxu0 %v5435
      %v6749 = vpop.f32.mrb[0].mxu0
      %v6750 = vadd.f32 %v6429, %v6749
      %v6751 = vpop.f32.mrb[0].mxu0
      %6752 = vmatprep.mubr.f32.mxu0 %v5441
      %6753 = vmatmul.mubr.f32.gmra.mrb[0].mxu0 %v5439
      %v6754 = vpop.f32.mrb[0].mxu0
      %v6755 = vadd.f32 %v6434, %v6754
      %v6756 = vpop.f32.mrb[0].mxu0
      %6757 = vmatprep.mubr.f32.mxu0 %v5445
      %6758 = vmatmul.mubr.f32.gmra.mrb[0].mxu0 %v5443
      %v6759 = vpop.f32.mrb[0].mxu0
      %v6760 = vadd.f32 %v6439, %v6759
      %v6761 = vpop.f32.mrb[0].mxu0
      %6762 = vmatprep.mubr.f32.mxu0 %v5449
      %6763 = vmatmul.mubr.f32.gmra.mrb[0].mxu0 %v5447
      %v6764 = vpop.f32.mrb[0].mxu0
      %v6765 = vadd.f32 %v6444, %v6764
      %v6766 = vpop.f32.mrb[0].mxu0
      %6767 = vmatprep.mubr.f32.mxu0 %v5453
      %6768 = vmatmul.mubr.f32.gmra.mrb[0].mxu0 %v5451
      %v6769 = vpop.f32.mrb[0].mxu0
      %v6770 = vadd.f32 %v6449, %v6769
      %v6771 = vpop.f32.mrb[0].mxu0
      %6772 = vmatprep.mubr.f32.mxu0 %v5457
      %6773 = vmatmul.mubr.f32.gmra.mrb[0].mxu0 %v5455
      %v6774 = vpop.f32.mrb[0].mxu0
      %v6775 = vadd.f32 %v6454, %v6774
      %v6776 = vpop.f32.mrb[0].mxu0
      %6777 = vmatprep.mubr.f32.mxu0 %v5461
      %6778 = vmatmul.mubr.f32.gmra.mrb[0].mxu0 %v5459
      %v6779 = vpop.f32.mrb[0].mxu0
      %v6780 = vadd.f32 %v6459, %v6779
      %v6781 = vpop.f32.mrb[0].mxu0
      %6782 = vmatprep.mubr.f32.mxu0 %v5465
      %6783 = vmatmul.mubr.f32.gmra.mrb[0].mxu0 %v5463
      %v6784 = vpop.f32.mrb[0].mxu0
      %v6785 = vadd.f32 %v6464, %v6784
      %v6786 = vpop.f32.mrb[0].mxu0
      %6787 = vmatprep.mubr.f32.mxu0 %v5469
      %6788 = vmatmul.mubr.f32.gmra.mrb[0].mxu0 %v5467
      %v6789 = vpop.f32.mrb[0].mxu0
      %v6790 = vadd.f32 %v6469, %v6789
      %v6791 = vpop.f32.mrb[0].mxu0
      %6792 = vmatprep.mubr.f32.mxu0 %v5473
      %6793 = vmatmul.mubr.f32.gmra.mrb[0].mxu0 %v5471
      %v6794 = vpop.f32.mrb[0].mxu0
      %v6795 = vadd.f32 %v6474, %v6794
      %v6796 = vpop.f32.mrb[0].mxu0
      %6797 = vmatprep.mubr.f32.mxu0 %v5477
      %6798 = vmatmul.mubr.f32.gmra.mrb[0].mxu0 %v5475
      %v6799 = vpop.f32.mrb[0].mxu0
      %v6800 = vadd.f32 %v6479, %v6799
      %v6801 = vpop.f32.mrb[0].mxu0
      %6802 = vmatprep.mubr.f32.mxu0 %v5481
      %6803 = vmatmul.mubr.f32.gmra.mrb[0].mxu0 %v5479
      %v6804 = vpop.f32.mrb[0].mxu0
      %v6805 = vadd.f32 %v6484, %v6804
      %v6806 = vpop.f32.mrb[0].mxu0
      %6807 = vmatprep.mubr.f32.mxu0 %v5485
      %6808 = vmatmul.mubr.f32.gmra.mrb[0].mxu0 %v5483
      %v6809 = vpop.f32.mrb[0].mxu0
      %v6810 = vadd.f32 %v6489, %v6809
      %v6811 = vpop.f32.mrb[0].mxu0
      %6812 = vmatprep.mubr.f32.mxu0 %v5489
      %6813 = vmatmul.mubr.f32.gmra.mrb[0].mxu0 %v5487
      %v6814 = vpop.f32.mrb[0].mxu0
      %v6815 = vadd.f32 %v6494, %v6814
      %v6816 = vpop.f32.mrb[0].mxu0
      %6817 = vmatprep.mubr.f32.mxu0 %v5493
      %6818 = vmatmul.mubr.f32.gmra.mrb[0].mxu0 %v5491
      %v6819 = vpop.f32.mrb[0].mxu0
      %v6820 = vadd.f32 %v6499, %v6819
      %v6821 = vpop.f32.mrb[0].mxu0
      %6822 = vmatprep.mubr.f32.mxu0 %v5497
      %6823 = vmatmul.mubr.f32.gmra.mrb[0].mxu0 %v5495
      %v6824 = vpop.f32.mrb[0].mxu0
      %v6825 = vadd.f32 %v6504, %v6824
      %v6826 = vpop.f32.mrb[0].mxu0
      %6827 = vmatprep.mubr.f32.mxu0 %v5501
      %6828 = vmatmul.mubr.f32.gmra.mrb[0].mxu0 %v5499
      %v6829 = vpop.f32.mrb[0].mxu0
      %v6830 = vadd.f32 %v6509, %v6829
      %v6831 = vpop.f32.mrb[0].mxu0
      %6832 = vmatprep.mubr.f32.mxu0 %v5505
      %6833 = vmatmul.mubr.f32.gmra.mrb[0].mxu0 %v5503
      %v6834 = vpop.f32.mrb[0].mxu0
      %v6835 = vadd.f32 %v6514, %v6834
      %v6836 = vpop.f32.mrb[0].mxu0
      %6837 = vmatprep.mubr.f32.mxu0 %v5509
      %6838 = vmatmul.mubr.f32.gmra.mrb[0].mxu0 %v5507
      %v6839 = vpop.f32.mrb[0].mxu0
      %v6840 = vadd.f32 %v6519, %v6839
      %v6841 = vpop.f32.mrb[0].mxu0
      %6842 = vmatprep.mubr.f32.mxu0 %v5513
      %6843 = vmatmul.mubr.f32.gmra.mrb[0].mxu0 %v5511
      %v6844 = vpop.f32.mrb[0].mxu0
      %v6845 = vadd.f32 %v6524, %v6844
      %v6846 = vpop.f32.mrb[0].mxu0
      %6847 = vmatprep.mubr.f32.mxu0 %v5517
      %6848 = vmatmul.mubr.f32.gmra.mrb[0].mxu0 %v5515
      %v6849 = vpop.f32.mrb[0].mxu0
      %v6850 = vadd.f32 %v6529, %v6849
      %v6851 = vpop.f32.mrb[0].mxu0
      %6852 = vmatprep.mubr.f32.mxu0 %v5521
      %6853 = vmatmul.mubr.f32.gmra.mrb[0].mxu0 %v5519
      %v6854 = vpop.f32.mrb[0].mxu0
      %v6855 = vadd.f32 %v6534, %v6854
      %v6856 = vpop.f32.mrb[0].mxu0
      %6857 = vmatprep.mubr.f32.mxu0 %v5525
      %6858 = vmatmul.mubr.f32.gmra.mrb[0].mxu0 %v5523
      %v6859 = vpop.f32.mrb[0].mxu0
      %v6860 = vadd.f32 %v6539, %v6859
      %v6861 = vpop.f32.mrb[0].mxu0
      %6862 = vmatprep.mubr.f32.mxu0 %v5529
      %6863 = vmatmul.mubr.f32.gmra.mrb[0].mxu0 %v5527
      %v6864 = vpop.f32.mrb[0].mxu0
      %v6865 = vadd.f32 %v6544, %v6864
      %v6866 = vpop.f32.mrb[0].mxu0
      %6867 = vdwg.mxu0
      %6868 = vrot.lane.b32.xlu0 %v406, 64
      %v6869 = vpop.permute.xlu0 %6868
      %6870 = vrot.lane.b32.xlu0 %v407, 64
      %v6871 = vpop.permute.xlu0 %6870
      %6872 = vrot.lane.b32.xlu0 %v408, 64
      %v6873 = vpop.permute.xlu0 %6872
      %6874 = vrot.lane.b32.xlu0 %v409, 64
      %v6875 = vpop.permute.xlu0 %6874
      %6876 = vrot.lane.b32.xlu0 %v410, 64
      %v6877 = vpop.permute.xlu0 %6876
      %v6883 = vsel %vm1639, %v5659, 0
      %v6886 = vsel %vm1639, %v5661, 0
      %v6889 = vsel %vm1639, %v5663, 0
      %v6892 = vsel %vm1639, %v5665, 0
      %v6895 = vsel %vm1639, %v5667, 0
      %v6898 = vsel %vm1639, %v5669, 0
      %v6901 = vsel %vm1639, %v5671, 0
      %v6904 = vsel %vm1639, %v5673, 0
      %v6907 = vsel %vm1639, %v5675, 0
      %v6910 = vsel %vm1639, %v5677, 0
      %v6913 = vsel %vm1639, %v5679, 0
      %v6916 = vsel %vm1639, %v5681, 0
      %v6919 = vsel %vm1639, %v5683, 0
      %v6922 = vsel %vm1639, %v5685, 0
      %v6925 = vsel %vm1639, %v5687, 0
      %v6928 = vsel %vm1639, %v5689, 0
      %v6931 = vsel %vm1639, %v5691, 0
      %v6934 = vsel %vm1639, %v5693, 0
      %v6937 = vsel %vm1639, %v5695, 0
      %v6940 = vsel %vm1639, %v5697, 0
      %v6943 = vsel %vm1639, %v5699, 0
      %v6946 = vsel %vm1639, %v5701, 0
      %v6949 = vsel %vm1639, %v5703, 0
      %v6952 = vsel %vm1639, %v5705, 0
      %v6955 = vsel %vm1639, %v5707, 0
      %v6958 = vsel %vm1639, %v5709, 0
      %v6961 = vsel %vm1639, %v5711, 0
      %v6964 = vsel %vm1639, %v5713, 0
      %v6967 = vsel %vm1639, %v5715, 0
      %v6970 = vsel %vm1639, %v5717, 0
      %v6973 = vsel %vm1639, %v5719, 0
      %v6976 = vsel %vm1639, %v5721, 0
      %v6978 = vsel %vm3408, %v6877, 0
      %6980 = vmatprep.subr.mxu0 0.0
      %6981 = vmatpush1.msra.mxu0 %v6869
      %6982 = vmatprep.subr.mxu0 0.0
      %6983 = vmatpush1.msra.mxu0 %v6871
      %6984 = vmatprep.subr.mxu0 0.0
      %6985 = vmatpush1.msra.mxu0 %v6873
      %6986 = vmatprep.subr.mxu0 0.0
      %6987 = vmatpush1.msra.mxu0 %v6875
      %6988 = vmatprep.subr.mxu0 0.0
      %6989 = vmatpush1.msra.mxu0 %v6978
      %6990 = vmatprep.subr.mxu0 0.0
      %6991 = vmatpush1.msra.mxu0 0.0
      %6992 = vmatprep.subr.mxu0 0.0
      %6993 = vmatpush1.msra.mxu0 0.0
      %6994 = vmatprep.subr.mxu0 0.0
      %6995 = vmatpush1.msra.mxu0 0.0
      %6996 = vmatprep.subr.mxu0 0.0
      %6997 = vmatpush1.msra.mxu0 0.0
      %6998 = vmatprep.subr.mxu0 0.0
      %6999 = vmatpush1.msra.mxu0 0.0
      %7000 = vmatprep.subr.mxu0 0.0
      %7001 = vmatpush1.msra.mxu0 0.0
      %7002 = vmatprep.subr.mxu0 0.0
      %7003 = vmatpush1.msra.mxu0 0.0
      %7004 = vmatprep.subr.mxu0 0.0
      %7005 = vmatpush1.msra.mxu0 0.0
      %7006 = vmatprep.subr.mxu0 0.0
      %7007 = vmatpush1.msra.mxu0 0.0
      %7008 = vmatprep.subr.mxu0 0.0
      %7009 = vmatpush1.msra.mxu0 0.0
      %7010 = vmatprep.subr.mxu0 0.0
      %7011 = vmatpush1.msra.mxu0 0.0
      %7012 = vmatprep.subr.mxu0 0.0
      %7013 = vmatpush1.msra.mxu0 0.0
      %7014 = vmatprep.subr.mxu0 0.0
      %7015 = vmatpush1.msra.mxu0 0.0
      %7016 = vmatprep.subr.mxu0 0.0
      %7017 = vmatpush1.msra.mxu0 0.0
      %7018 = vmatprep.subr.mxu0 0.0
      %7019 = vmatpush1.msra.mxu0 0.0
      %7020 = vmatprep.subr.mxu0 0.0
      %7021 = vmatpush1.msra.mxu0 0.0
      %7022 = vmatprep.subr.mxu0 0.0
      %7023 = vmatpush1.msra.mxu0 0.0
      %7024 = vmatprep.subr.mxu0 0.0
      %7025 = vmatpush1.msra.mxu0 0.0
      %7026 = vmatprep.subr.mxu0 0.0
      %7027 = vmatpush1.msra.mxu0 0.0
      %7028 = vmatprep.subr.mxu0 0.0
      %7029 = vmatpush1.msra.mxu0 0.0
      %7030 = vmatprep.subr.mxu0 0.0
      %7031 = vmatpush1.msra.mxu0 0.0
      %7032 = vmatprep.subr.mxu0 0.0
      %7033 = vmatpush1.msra.mxu0 0.0
      %7034 = vmatprep.subr.mxu0 0.0
      %7035 = vmatpush1.msra.mxu0 0.0
      %7036 = vmatprep.subr.mxu0 0.0
      %7037 = vmatpush1.msra.mxu0 0.0
      %7038 = vmatprep.subr.mxu0 0.0
      %7039 = vmatpush1.msra.mxu0 0.0
      %7040 = vmatprep.subr.mxu0 0.0
      %7041 = vmatpush1.msra.mxu0 0.0
      %7042 = vmatprep.subr.mxu0 0.0
      %7043 = vmatpush1.msra.mxu0 0.0
      %7044 = vmatprep.mubr.f32.mxu0 0.0
      %7045 = vmatmul.mubr.f32.gmra.mrb[0].mxu0 %v6883
      %v7046 = vpop.f32.mrb[0].mxu0
      %v7047 = vadd.f32 0.0, %v7046
      %v7048 = vpop.f32.mrb[0].mxu0
      %7049 = vmatprep.mubr.f32.mxu0 0.0
      %7050 = vmatmul.mubr.f32.gmra.mrb[0].mxu0 %v6886
      %v7051 = vpop.f32.mrb[0].mxu0
      %v7052 = vadd.f32 0.0, %v7051
      %v7053 = vpop.f32.mrb[0].mxu0
      %7054 = vmatprep.mubr.f32.mxu0 0.0
      %7055 = vmatmul.mubr.f32.gmra.mrb[0].mxu0 %v6889
      %v7056 = vpop.f32.mrb[0].mxu0
      %v7057 = vadd.f32 0.0, %v7056
      %v7058 = vpop.f32.mrb[0].mxu0
      %7059 = vmatprep.mubr.f32.mxu0 0.0
      %7060 = vmatmul.mubr.f32.gmra.mrb[0].mxu0 %v6892
      %v7061 = vpop.f32.mrb[0].mxu0
      %v7062 = vadd.f32 0.0, %v7061
      %v7063 = vpop.f32.mrb[0].mxu0
      %7064 = vmatprep.mubr.f32.mxu0 0.0
      %7065 = vmatmul.mubr.f32.gmra.mrb[0].mxu0 %v6895
      %v7066 = vpop.f32.mrb[0].mxu0
      %v7067 = vadd.f32 0.0, %v7066
      %v7068 = vpop.f32.mrb[0].mxu0
      %7069 = vmatprep.mubr.f32.mxu0 0.0
      %7070 = vmatmul.mubr.f32.gmra.mrb[0].mxu0 %v6898
      %v7071 = vpop.f32.mrb[0].mxu0
      %v7072 = vadd.f32 0.0, %v7071
      %v7073 = vpop.f32.mrb[0].mxu0
      %7074 = vmatprep.mubr.f32.mxu0 0.0
      %7075 = vmatmul.mubr.f32.gmra.mrb[0].mxu0 %v6901
      %v7076 = vpop.f32.mrb[0].mxu0
      %v7077 = vadd.f32 0.0, %v7076
      %v7078 = vpop.f32.mrb[0].mxu0
      %7079 = vmatprep.mubr.f32.mxu0 0.0
      %7080 = vmatmul.mubr.f32.gmra.mrb[0].mxu0 %v6904
      %v7081 = vpop.f32.mrb[0].mxu0
      %v7082 = vadd.f32 0.0, %v7081
      %v7083 = vpop.f32.mrb[0].mxu0
      %7084 = vmatprep.mubr.f32.mxu0 0.0
      %7085 = vmatmul.mubr.f32.gmra.mrb[0].mxu0 %v6907
      %v7086 = vpop.f32.mrb[0].mxu0
      %v7087 = vadd.f32 0.0, %v7086
      %v7088 = vpop.f32.mrb[0].mxu0
      %7089 = vmatprep.mubr.f32.mxu0 0.0
      %7090 = vmatmul.mubr.f32.gmra.mrb[0].mxu0 %v6910
      %v7091 = vpop.f32.mrb[0].mxu0
      %v7092 = vadd.f32 0.0, %v7091
      %v7093 = vpop.f32.mrb[0].mxu0
      %7094 = vmatprep.mubr.f32.mxu0 0.0
      %7095 = vmatmul.mubr.f32.gmra.mrb[0].mxu0 %v6913
      %v7096 = vpop.f32.mrb[0].mxu0
      %v7097 = vadd.f32 0.0, %v7096
      %v7098 = vpop.f32.mrb[0].mxu0
      %7099 = vmatprep.mubr.f32.mxu0 0.0
      %7100 = vmatmul.mubr.f32.gmra.mrb[0].mxu0 %v6916
      %v7101 = vpop.f32.mrb[0].mxu0
      %v7102 = vadd.f32 0.0, %v7101
      %v7103 = vpop.f32.mrb[0].mxu0
      %7104 = vmatprep.mubr.f32.mxu0 0.0
      %7105 = vmatmul.mubr.f32.gmra.mrb[0].mxu0 %v6919
      %v7106 = vpop.f32.mrb[0].mxu0
      %v7107 = vadd.f32 0.0, %v7106
      %v7108 = vpop.f32.mrb[0].mxu0
      %7109 = vmatprep.mubr.f32.mxu0 0.0
      %7110 = vmatmul.mubr.f32.gmra.mrb[0].mxu0 %v6922
      %v7111 = vpop.f32.mrb[0].mxu0
      %v7112 = vadd.f32 0.0, %v7111
      %v7113 = vpop.f32.mrb[0].mxu0
      %7114 = vmatprep.mubr.f32.mxu0 0.0
      %7115 = vmatmul.mubr.f32.gmra.mrb[0].mxu0 %v6925
      %v7116 = vpop.f32.mrb[0].mxu0
      %v7117 = vadd.f32 0.0, %v7116
      %v7118 = vpop.f32.mrb[0].mxu0
      %7119 = vmatprep.mubr.f32.mxu0 0.0
      %7120 = vmatmul.mubr.f32.gmra.mrb[0].mxu0 %v6928
      %v7121 = vpop.f32.mrb[0].mxu0
      %v7122 = vadd.f32 0.0, %v7121
      %v7123 = vpop.f32.mrb[0].mxu0
      %7124 = vmatprep.mubr.f32.mxu0 0.0
      %7125 = vmatmul.mubr.f32.gmra.mrb[0].mxu0 %v6931
      %v7126 = vpop.f32.mrb[0].mxu0
      %v7127 = vadd.f32 0.0, %v7126
      %v7128 = vpop.f32.mrb[0].mxu0
      %7129 = vmatprep.mubr.f32.mxu0 0.0
      %7130 = vmatmul.mubr.f32.gmra.mrb[0].mxu0 %v6934
      %v7131 = vpop.f32.mrb[0].mxu0
      %v7132 = vadd.f32 0.0, %v7131
      %v7133 = vpop.f32.mrb[0].mxu0
      %7134 = vmatprep.mubr.f32.mxu0 0.0
      %7135 = vmatmul.mubr.f32.gmra.mrb[0].mxu0 %v6937
      %v7136 = vpop.f32.mrb[0].mxu0
      %v7137 = vadd.f32 0.0, %v7136
      %v7138 = vpop.f32.mrb[0].mxu0
      %7139 = vmatprep.mubr.f32.mxu0 0.0
      %7140 = vmatmul.mubr.f32.gmra.mrb[0].mxu0 %v6940
      %v7141 = vpop.f32.mrb[0].mxu0
      %v7142 = vadd.f32 0.0, %v7141
      %v7143 = vpop.f32.mrb[0].mxu0
      %7144 = vmatprep.mubr.f32.mxu0 0.0
      %7145 = vmatmul.mubr.f32.gmra.mrb[0].mxu0 %v6943
      %v7146 = vpop.f32.mrb[0].mxu0
      %v7147 = vadd.f32 0.0, %v7146
      %v7148 = vpop.f32.mrb[0].mxu0
      %7149 = vmatprep.mubr.f32.mxu0 0.0
      %7150 = vmatmul.mubr.f32.gmra.mrb[0].mxu0 %v6946
      %v7151 = vpop.f32.mrb[0].mxu0
      %v7152 = vadd.f32 0.0, %v7151
      %v7153 = vpop.f32.mrb[0].mxu0
      %7154 = vmatprep.mubr.f32.mxu0 0.0
      %7155 = vmatmul.mubr.f32.gmra.mrb[0].mxu0 %v6949
      %v7156 = vpop.f32.mrb[0].mxu0
      %v7157 = vadd.f32 0.0, %v7156
      %v7158 = vpop.f32.mrb[0].mxu0
      %7159 = vmatprep.mubr.f32.mxu0 0.0
      %7160 = vmatmul.mubr.f32.gmra.mrb[0].mxu0 %v6952
      %v7161 = vpop.f32.mrb[0].mxu0
      %v7162 = vadd.f32 0.0, %v7161
      %v7163 = vpop.f32.mrb[0].mxu0
      %7164 = vmatprep.mubr.f32.mxu0 0.0
      %7165 = vmatmul.mubr.f32.gmra.mrb[0].mxu0 %v6955
      %v7166 = vpop.f32.mrb[0].mxu0
      %v7167 = vadd.f32 0.0, %v7166
      %v7168 = vpop.f32.mrb[0].mxu0
      %7169 = vmatprep.mubr.f32.mxu0 0.0
      %7170 = vmatmul.mubr.f32.gmra.mrb[0].mxu0 %v6958
      %v7171 = vpop.f32.mrb[0].mxu0
      %v7172 = vadd.f32 0.0, %v7171
      %v7173 = vpop.f32.mrb[0].mxu0
      %7174 = vmatprep.mubr.f32.mxu0 0.0
      %7175 = vmatmul.mubr.f32.gmra.mrb[0].mxu0 %v6961
      %v7176 = vpop.f32.mrb[0].mxu0
      %v7177 = vadd.f32 0.0, %v7176
      %v7178 = vpop.f32.mrb[0].mxu0
      %7179 = vmatprep.mubr.f32.mxu0 0.0
      %7180 = vmatmul.mubr.f32.gmra.mrb[0].mxu0 %v6964
      %v7181 = vpop.f32.mrb[0].mxu0
      %v7182 = vadd.f32 0.0, %v7181
      %v7183 = vpop.f32.mrb[0].mxu0
      %7184 = vmatprep.mubr.f32.mxu0 0.0
      %7185 = vmatmul.mubr.f32.gmra.mrb[0].mxu0 %v6967
      %v7186 = vpop.f32.mrb[0].mxu0
      %v7187 = vadd.f32 0.0, %v7186
      %v7188 = vpop.f32.mrb[0].mxu0
      %7189 = vmatprep.mubr.f32.mxu0 0.0
      %7190 = vmatmul.mubr.f32.gmra.mrb[0].mxu0 %v6970
      %v7191 = vpop.f32.mrb[0].mxu0
      %v7192 = vadd.f32 0.0, %v7191
      %v7193 = vpop.f32.mrb[0].mxu0
      %7194 = vmatprep.mubr.f32.mxu0 0.0
      %7195 = vmatmul.mubr.f32.gmra.mrb[0].mxu0 %v6973
      %v7196 = vpop.f32.mrb[0].mxu0
      %v7197 = vadd.f32 0.0, %v7196
      %v7198 = vpop.f32.mrb[0].mxu0
      %7199 = vmatprep.mubr.f32.mxu0 0.0
      %7200 = vmatmul.mubr.f32.gmra.mrb[0].mxu0 %v6976
      %v7201 = vpop.f32.mrb[0].mxu0
      %v7202 = vadd.f32 0.0, %v7201
      %v7203 = vpop.f32.mrb[0].mxu0
      %7204 = vdwg.mxu0
      %v7205 = vadd.f32 %v6710, %v7047
      %v7206 = vadd.f32 %v6715, %v7052
      %v7207 = vadd.f32 %v6720, %v7057
      %v7208 = vadd.f32 %v6725, %v7062
      %v7209 = vadd.f32 %v6730, %v7067
      %v7210 = vadd.f32 %v6735, %v7072
      %v7211 = vadd.f32 %v6740, %v7077
      %v7212 = vadd.f32 %v6745, %v7082
      %v7213 = vadd.f32 %v6750, %v7087
      %v7214 = vadd.f32 %v6755, %v7092
      %v7215 = vadd.f32 %v6760, %v7097
      %v7216 = vadd.f32 %v6765, %v7102
      %v7217 = vadd.f32 %v6770, %v7107
      %v7218 = vadd.f32 %v6775, %v7112
      %v7219 = vadd.f32 %v6780, %v7117
      %v7220 = vadd.f32 %v6785, %v7122
      %v7221 = vadd.f32 %v6790, %v7127
      %v7222 = vadd.f32 %v6795, %v7132
      %v7223 = vadd.f32 %v6800, %v7137
      %v7224 = vadd.f32 %v6805, %v7142
      %v7225 = vadd.f32 %v6810, %v7147
      %v7226 = vadd.f32 %v6815, %v7152
      %v7227 = vadd.f32 %v6820, %v7157
      %v7228 = vadd.f32 %v6825, %v7162
      %v7229 = vadd.f32 %v6830, %v7167
      %v7230 = vadd.f32 %v6835, %v7172
      %v7231 = vadd.f32 %v6840, %v7177
      %v7232 = vadd.f32 %v6845, %v7182
      %v7233 = vadd.f32 %v6850, %v7187
      %v7234 = vadd.f32 %v6855, %v7192
      %v7235 = vadd.f32 %v6860, %v7197
      %v7236 = vadd.f32 %v6865, %v7202
      %v7237 = vmul.f32 %v7205, %v6170
      %v7238 = vmul.f32 %v7206, %v6171
      %v7239 = vmul.f32 %v7207, %v6172
      %v7240 = vmul.f32 %v7208, %v6173
      %v7241 = vmul.f32 %v7209, %v6174
      %v7242 = vmul.f32 %v7210, %v6175
      %v7243 = vmul.f32 %v7211, %v6176
      %v7244 = vmul.f32 %v7212, %v6177
      %v7245 = vmul.f32 %v7213, %v6178
      %v7246 = vmul.f32 %v7214, %v6179
      %v7247 = vmul.f32 %v7215, %v6180
      %v7248 = vmul.f32 %v7216, %v6181
      %v7249 = vmul.f32 %v7217, %v6182
      %v7250 = vmul.f32 %v7218, %v6183
      %v7251 = vmul.f32 %v7219, %v6184
      %v7252 = vmul.f32 %v7220, %v6185
      %v7253 = vmul.f32 %v7221, %v6186
      %v7254 = vmul.f32 %v7222, %v6187
      %v7255 = vmul.f32 %v7223, %v6188
      %v7256 = vmul.f32 %v7224, %v6189
      %v7257 = vmul.f32 %v7225, %v6190
      %v7258 = vmul.f32 %v7226, %v6191
      %v7259 = vmul.f32 %v7227, %v6192
      %v7260 = vmul.f32 %v7228, %v6193
      %v7261 = vmul.f32 %v7229, %v6194
      %v7262 = vmul.f32 %v7230, %v6195
      %v7263 = vmul.f32 %v7231, %v6196
      %v7264 = vmul.f32 %v7232, %v6197
      %v7265 = vmul.f32 %v7233, %v6198
      %v7266 = vmul.f32 %v7234, %v6199
      %v7267 = vmul.f32 %v7235, %v6200
      %v7268 = vmul.f32 %v7236, %v6201
      %7301 = vrot.lane.b32.xlu0 %v411, 96
      %v7302 = vpop.permute.xlu0 %7301
      %7303 = vrot.lane.b32.xlu0 %v412, 96
      %v7304 = vpop.permute.xlu0 %7303
      %7305 = vrot.lane.b32.xlu0 %v413, 96
      %v7306 = vpop.permute.xlu0 %7305
      %7307 = vrot.lane.b32.xlu0 %v414, 96
      %v7308 = vpop.permute.xlu0 %7307
      %7309 = vrot.lane.b32.xlu0 %v415, 96
      %v7310 = vpop.permute.xlu0 %7309
      %7311 = vrot.lane.b32.xlu0 %v416, 96
      %v7312 = vpop.permute.xlu0 %7311
      %7313 = vrot.lane.b32.xlu0 %v417, 96
      %v7314 = vpop.permute.xlu0 %7313
      %7315 = vrot.lane.b32.xlu0 %v418, 96
      %v7316 = vpop.permute.xlu0 %7315
      %7317 = vrot.lane.b32.xlu0 %v419, 96
      %v7318 = vpop.permute.xlu0 %7317
      %7319 = vrot.lane.b32.xlu0 %v420, 96
      %v7320 = vpop.permute.xlu0 %7319
      %7321 = vrot.lane.b32.xlu0 %v421, 96
      %v7322 = vpop.permute.xlu0 %7321
      %7323 = vrot.lane.b32.xlu0 %v422, 96
      %v7324 = vpop.permute.xlu0 %7323
      %7325 = vrot.lane.b32.xlu0 %v423, 96
      %v7326 = vpop.permute.xlu0 %7325
      %7327 = vrot.lane.b32.xlu0 %v424, 96
      %v7328 = vpop.permute.xlu0 %7327
      %7329 = vrot.lane.b32.xlu0 %v425, 96
      %v7330 = vpop.permute.xlu0 %7329
      %7331 = vrot.lane.b32.xlu0 %v426, 96
      %v7332 = vpop.permute.xlu0 %7331
      %7333 = vrot.lane.b32.xlu0 %v427, 96
      %v7334 = vpop.permute.xlu0 %7333
      %7335 = vrot.lane.b32.xlu0 %v428, 96
      %v7336 = vpop.permute.xlu0 %7335
      %7337 = vrot.lane.b32.xlu0 %v429, 96
      %v7338 = vpop.permute.xlu0 %7337
      %7339 = vrot.lane.b32.xlu0 %v430, 96
      %v7340 = vpop.permute.xlu0 %7339
      %7341 = vrot.lane.b32.xlu0 %v431, 96
      %v7342 = vpop.permute.xlu0 %7341
      %7343 = vrot.lane.b32.xlu0 %v432, 96
      %v7344 = vpop.permute.xlu0 %7343
      %7345 = vrot.lane.b32.xlu0 %v433, 96
      %v7346 = vpop.permute.xlu0 %7345
      %7347 = vrot.lane.b32.xlu0 %v434, 96
      %v7348 = vpop.permute.xlu0 %7347
      %7349 = vrot.lane.b32.xlu0 %v435, 96
      %v7350 = vpop.permute.xlu0 %7349
      %7351 = vrot.lane.b32.xlu0 %v436, 96
      %v7352 = vpop.permute.xlu0 %7351
      %7353 = vrot.lane.b32.xlu0 %v437, 96
      %v7354 = vpop.permute.xlu0 %7353
      %7355 = vrot.lane.b32.xlu0 %v438, 96
      %v7356 = vpop.permute.xlu0 %7355
      %7357 = vrot.lane.b32.xlu0 %v439, 96
      %v7358 = vpop.permute.xlu0 %7357
      %7359 = vrot.lane.b32.xlu0 %v440, 96
      %v7360 = vpop.permute.xlu0 %7359
      %7361 = vrot.lane.b32.xlu0 %v441, 96
      %v7362 = vpop.permute.xlu0 %7361
      %7363 = vrot.lane.b32.xlu0 %v442, 96
      %v7364 = vpop.permute.xlu0 %7363
      %v7397 = vadd.f32 %v7237, %v7302
      %v7398 = vadd.f32 %v7238, %v7304
      %v7399 = vadd.f32 %v7239, %v7306
      %v7400 = vadd.f32 %v7240, %v7308
      %v7401 = vadd.f32 %v7241, %v7310
      %v7402 = vadd.f32 %v7242, %v7312
      %v7403 = vadd.f32 %v7243, %v7314
      %v7404 = vadd.f32 %v7244, %v7316
      %v7405 = vadd.f32 %v7245, %v7318
      %v7406 = vadd.f32 %v7246, %v7320
      %v7407 = vadd.f32 %v7247, %v7322
      %v7408 = vadd.f32 %v7248, %v7324
      %v7409 = vadd.f32 %v7249, %v7326
      %v7410 = vadd.f32 %v7250, %v7328
      %v7411 = vadd.f32 %v7251, %v7330
      %v7412 = vadd.f32 %v7252, %v7332
      %v7413 = vadd.f32 %v7253, %v7334
      %v7414 = vadd.f32 %v7254, %v7336
      %v7415 = vadd.f32 %v7255, %v7338
      %v7416 = vadd.f32 %v7256, %v7340
      %v7417 = vadd.f32 %v7257, %v7342
      %v7418 = vadd.f32 %v7258, %v7344
      %v7419 = vadd.f32 %v7259, %v7346
      %v7420 = vadd.f32 %v7260, %v7348
      %v7421 = vadd.f32 %v7261, %v7350
      %v7422 = vadd.f32 %v7262, %v7352
      %v7423 = vadd.f32 %v7263, %v7354
      %v7424 = vadd.f32 %v7264, %v7356
      %v7425 = vadd.f32 %v7265, %v7358
      %v7426 = vadd.f32 %v7266, %v7360
      %v7427 = vadd.f32 %v7267, %v7362
      %v7428 = vadd.f32 %v7268, %v7364
      %7429 = vrot.lane.b32.xlu0 %v3737, 96
      %v7430 = vpop.permute.xlu0 %7429
      %v7432 = vmul.f32 %v7397, %v7430
      %v7433 = vmul.f32 %v7398, %v7430
      %v7434 = vmul.f32 %v7399, %v7430
      %v7435 = vmul.f32 %v7400, %v7430
      %v7436 = vmul.f32 %v7401, %v7430
      %v7437 = vmul.f32 %v7402, %v7430
      %v7438 = vmul.f32 %v7403, %v7430
      %v7439 = vmul.f32 %v7404, %v7430
      %v7440 = vmul.f32 %v7405, %v7430
      %v7441 = vmul.f32 %v7406, %v7430
      %v7442 = vmul.f32 %v7407, %v7430
      %v7443 = vmul.f32 %v7408, %v7430
      %v7444 = vmul.f32 %v7409, %v7430
      %v7445 = vmul.f32 %v7410, %v7430
      %v7446 = vmul.f32 %v7411, %v7430
      %v7447 = vmul.f32 %v7412, %v7430
      %v7448 = vmul.f32 %v7413, %v7430
      %v7449 = vmul.f32 %v7414, %v7430
      %v7450 = vmul.f32 %v7415, %v7430
      %v7451 = vmul.f32 %v7416, %v7430
      %v7452 = vmul.f32 %v7417, %v7430
      %v7453 = vmul.f32 %v7418, %v7430
      %v7454 = vmul.f32 %v7419, %v7430
      %v7455 = vmul.f32 %v7420, %v7430
      %v7456 = vmul.f32 %v7421, %v7430
      %v7457 = vmul.f32 %v7422, %v7430
      %v7458 = vmul.f32 %v7423, %v7430
      %v7459 = vmul.f32 %v7424, %v7430
      %v7460 = vmul.f32 %v7425, %v7430
      %v7461 = vmul.f32 %v7426, %v7430
      %v7462 = vmul.f32 %v7427, %v7430
      %v7463 = vmul.f32 %v7428, %v7430
      %7464 = vrot.lane.b32.xlu0 %v3776, 96
      %v7465 = vpop.permute.xlu0 %7464
      %v7467 = vadd.f32 %v7432, %v7465
      %v7468 = vadd.f32 %v7433, %v7465
      %v7469 = vadd.f32 %v7434, %v7465
      %v7470 = vadd.f32 %v7435, %v7465
      %v7471 = vadd.f32 %v7436, %v7465
      %v7472 = vadd.f32 %v7437, %v7465
      %v7473 = vadd.f32 %v7438, %v7465
      %v7474 = vadd.f32 %v7439, %v7465
      %v7475 = vadd.f32 %v7440, %v7465
      %v7476 = vadd.f32 %v7441, %v7465
      %v7477 = vadd.f32 %v7442, %v7465
      %v7478 = vadd.f32 %v7443, %v7465
      %v7479 = vadd.f32 %v7444, %v7465
      %v7480 = vadd.f32 %v7445, %v7465
      %v7481 = vadd.f32 %v7446, %v7465
      %v7482 = vadd.f32 %v7447, %v7465
      %v7483 = vadd.f32 %v7448, %v7465
      %v7484 = vadd.f32 %v7449, %v7465
      %v7485 = vadd.f32 %v7450, %v7465
      %v7486 = vadd.f32 %v7451, %v7465
      %v7487 = vadd.f32 %v7452, %v7465
      %v7488 = vadd.f32 %v7453, %v7465
      %v7489 = vadd.f32 %v7454, %v7465
      %v7490 = vadd.f32 %v7455, %v7465
      %v7491 = vadd.f32 %v7456, %v7465
      %v7492 = vadd.f32 %v7457, %v7465
      %v7493 = vadd.f32 %v7458, %v7465
      %v7494 = vadd.f32 %v7459, %v7465
      %v7495 = vadd.f32 %v7460, %v7465
      %v7496 = vadd.f32 %v7461, %v7465
      %v7497 = vadd.f32 %v7462, %v7465
      %v7498 = vadd.f32 %v7463, %v7465
      %v7499 = vadd.f32 %v7467, 3.0
      %v7500 = vadd.f32 %v7468, 3.0
      %v7501 = vadd.f32 %v7469, 3.0
      %v7502 = vadd.f32 %v7470, 3.0
      %v7503 = vadd.f32 %v7471, 3.0
      %v7504 = vadd.f32 %v7472, 3.0
      %v7505 = vadd.f32 %v7473, 3.0
      %v7506 = vadd.f32 %v7474, 3.0
      %v7507 = vadd.f32 %v7475, 3.0
      %v7508 = vadd.f32 %v7476, 3.0
      %v7509 = vadd.f32 %v7477, 3.0
      %v7510 = vadd.f32 %v7478, 3.0
      %v7511 = vadd.f32 %v7479, 3.0
      %v7512 = vadd.f32 %v7480, 3.0
      %v7513 = vadd.f32 %v7481, 3.0
      %v7514 = vadd.f32 %v7482, 3.0
      %v7515 = vadd.f32 %v7483, 3.0
      %v7516 = vadd.f32 %v7484, 3.0
      %v7517 = vadd.f32 %v7485, 3.0
      %v7518 = vadd.f32 %v7486, 3.0
      %v7519 = vadd.f32 %v7487, 3.0
      %v7520 = vadd.f32 %v7488, 3.0
      %v7521 = vadd.f32 %v7489, 3.0
      %v7522 = vadd.f32 %v7490, 3.0
      %v7523 = vadd.f32 %v7491, 3.0
      %v7524 = vadd.f32 %v7492, 3.0
      %v7525 = vadd.f32 %v7493, 3.0
      %v7526 = vadd.f32 %v7494, 3.0
      %v7527 = vadd.f32 %v7495, 3.0
      %v7528 = vadd.f32 %v7496, 3.0
      %v7529 = vadd.f32 %v7497, 3.0
      %v7530 = vadd.f32 %v7498, 3.0
      %v7531 = vmax.f32 %v7499, 0.0
      %v7532 = vmax.f32 %v7500, 0.0
      %v7533 = vmax.f32 %v7501, 0.0
      %v7534 = vmax.f32 %v7502, 0.0
      %v7535 = vmax.f32 %v7503, 0.0
      %v7536 = vmax.f32 %v7504, 0.0
      %v7537 = vmax.f32 %v7505, 0.0
      %v7538 = vmax.f32 %v7506, 0.0
      %v7539 = vmax.f32 %v7507, 0.0
      %v7540 = vmax.f32 %v7508, 0.0
      %v7541 = vmax.f32 %v7509, 0.0
      %v7542 = vmax.f32 %v7510, 0.0
      %v7543 = vmax.f32 %v7511, 0.0
      %v7544 = vmax.f32 %v7512, 0.0
      %v7545 = vmax.f32 %v7513, 0.0
      %v7546 = vmax.f32 %v7514, 0.0
      %v7547 = vmax.f32 %v7515, 0.0
      %v7548 = vmax.f32 %v7516, 0.0
      %v7549 = vmax.f32 %v7517, 0.0
      %v7550 = vmax.f32 %v7518, 0.0
      %v7551 = vmax.f32 %v7519, 0.0
      %v7552 = vmax.f32 %v7520, 0.0
      %v7553 = vmax.f32 %v7521, 0.0
      %v7554 = vmax.f32 %v7522, 0.0
      %v7555 = vmax.f32 %v7523, 0.0
      %v7556 = vmax.f32 %v7524, 0.0
      %v7557 = vmax.f32 %v7525, 0.0
      %v7558 = vmax.f32 %v7526, 0.0
      %v7559 = vmax.f32 %v7527, 0.0
      %v7560 = vmax.f32 %v7528, 0.0
      %v7561 = vmax.f32 %v7529, 0.0
      %v7562 = vmax.f32 %v7530, 0.0
      %v7563 = vmin.f32 %v7531, 6.0
      %v7564 = vmin.f32 %v7532, 6.0
      %v7565 = vmin.f32 %v7533, 6.0
      %v7566 = vmin.f32 %v7534, 6.0
      %v7567 = vmin.f32 %v7535, 6.0
      %v7568 = vmin.f32 %v7536, 6.0
      %v7569 = vmin.f32 %v7537, 6.0
      %v7570 = vmin.f32 %v7538, 6.0
      %v7571 = vmin.f32 %v7539, 6.0
      %v7572 = vmin.f32 %v7540, 6.0
      %v7573 = vmin.f32 %v7541, 6.0
      %v7574 = vmin.f32 %v7542, 6.0
      %v7575 = vmin.f32 %v7543, 6.0
      %v7576 = vmin.f32 %v7544, 6.0
      %v7577 = vmin.f32 %v7545, 6.0
      %v7578 = vmin.f32 %v7546, 6.0
      %v7579 = vmin.f32 %v7547, 6.0
      %v7580 = vmin.f32 %v7548, 6.0
      %v7581 = vmin.f32 %v7549, 6.0
      %v7582 = vmin.f32 %v7550, 6.0
      %v7583 = vmin.f32 %v7551, 6.0
      %v7584 = vmin.f32 %v7552, 6.0
      %v7585 = vmin.f32 %v7553, 6.0
      %v7586 = vmin.f32 %v7554, 6.0
      %v7587 = vmin.f32 %v7555, 6.0
      %v7588 = vmin.f32 %v7556, 6.0
      %v7589 = vmin.f32 %v7557, 6.0
      %v7590 = vmin.f32 %v7558, 6.0
      %v7591 = vmin.f32 %v7559, 6.0
      %v7592 = vmin.f32 %v7560, 6.0
      %v7593 = vmin.f32 %v7561, 6.0
      %v7594 = vmin.f32 %v7562, 6.0
      %v7595 = vmul.f32 %v7467, %v7563
      %v7596 = vmul.f32 %v7468, %v7564
      %v7597 = vmul.f32 %v7469, %v7565
      %v7598 = vmul.f32 %v7470, %v7566
      %v7599 = vmul.f32 %v7471, %v7567
      %v7600 = vmul.f32 %v7472, %v7568
      %v7601 = vmul.f32 %v7473, %v7569
      %v7602 = vmul.f32 %v7474, %v7570
      %v7603 = vmul.f32 %v7475, %v7571
      %v7604 = vmul.f32 %v7476, %v7572
      %v7605 = vmul.f32 %v7477, %v7573
      %v7606 = vmul.f32 %v7478, %v7574
      %v7607 = vmul.f32 %v7479, %v7575
      %v7608 = vmul.f32 %v7480, %v7576
      %v7609 = vmul.f32 %v7481, %v7577
      %v7610 = vmul.f32 %v7482, %v7578
      %v7611 = vmul.f32 %v7483, %v7579
      %v7612 = vmul.f32 %v7484, %v7580
      %v7613 = vmul.f32 %v7485, %v7581
      %v7614 = vmul.f32 %v7486, %v7582
      %v7615 = vmul.f32 %v7487, %v7583
      %v7616 = vmul.f32 %v7488, %v7584
      %v7617 = vmul.f32 %v7489, %v7585
      %v7618 = vmul.f32 %v7490, %v7586
      %v7619 = vmul.f32 %v7491, %v7587
      %v7620 = vmul.f32 %v7492, %v7588
      %v7621 = vmul.f32 %v7493, %v7589
      %v7622 = vmul.f32 %v7494, %v7590
      %v7623 = vmul.f32 %v7495, %v7591
      %v7624 = vmul.f32 %v7496, %v7592
      %v7625 = vmul.f32 %v7497, %v7593
      %v7626 = vmul.f32 %v7498, %v7594
      %v7627 = vmul.f32 %v7595, 0.16666667
      %v7628 = vmul.f32 %v7596, 0.16666667
      %v7629 = vmul.f32 %v7597, 0.16666667
      %v7630 = vmul.f32 %v7598, 0.16666667
      %v7631 = vmul.f32 %v7599, 0.16666667
      %v7632 = vmul.f32 %v7600, 0.16666667
      %v7633 = vmul.f32 %v7601, 0.16666667
      %v7634 = vmul.f32 %v7602, 0.16666667
      %v7635 = vmul.f32 %v7603, 0.16666667
      %v7636 = vmul.f32 %v7604, 0.16666667
      %v7637 = vmul.f32 %v7605, 0.16666667
      %v7638 = vmul.f32 %v7606, 0.16666667
      %v7639 = vmul.f32 %v7607, 0.16666667
      %v7640 = vmul.f32 %v7608, 0.16666667
      %v7641 = vmul.f32 %v7609, 0.16666667
      %v7642 = vmul.f32 %v7610, 0.16666667
      %v7643 = vmul.f32 %v7611, 0.16666667
      %v7644 = vmul.f32 %v7612, 0.16666667
      %v7645 = vmul.f32 %v7613, 0.16666667
      %v7646 = vmul.f32 %v7614, 0.16666667
      %v7647 = vmul.f32 %v7615, 0.16666667
      %v7648 = vmul.f32 %v7616, 0.16666667
      %v7649 = vmul.f32 %v7617, 0.16666667
      %v7650 = vmul.f32 %v7618, 0.16666667
      %v7651 = vmul.f32 %v7619, 0.16666667
      %v7652 = vmul.f32 %v7620, 0.16666667
      %v7653 = vmul.f32 %v7621, 0.16666667
      %v7654 = vmul.f32 %v7622, 0.16666667
      %v7655 = vmul.f32 %v7623, 0.16666667
      %v7656 = vmul.f32 %v7624, 0.16666667
      %v7657 = vmul.f32 %v7625, 0.16666667
      %v7658 = vmul.f32 %v7626, 0.16666667
      %7660 = vrot.lane.b32.xlu0 %v3970, 96
      %v7661 = vpop.permute.xlu0 %7660
      %vm7662 = vcmask 261120
      %v7663 = vsel %vm7662, %v7661, 0
      %v7666 = vsel %vm7662, %v7627, 0
      %v7669 = vsel %vm7662, %v7628, 0
      %v7672 = vsel %vm7662, %v7629, 0
      %v7675 = vsel %vm7662, %v7630, 0
      %v7678 = vsel %vm7662, %v7631, 0
      %v7681 = vsel %vm7662, %v7632, 0
      %v7684 = vsel %vm7662, %v7633, 0
      %v7687 = vsel %vm7662, %v7634, 0
      %v7690 = vsel %vm7662, %v7635, 0
      %v7693 = vsel %vm7662, %v7636, 0
      %v7696 = vsel %vm7662, %v7637, 0
      %v7699 = vsel %vm7662, %v7638, 0
      %v7702 = vsel %vm7662, %v7639, 0
      %v7705 = vsel %vm7662, %v7640, 0
      %v7708 = vsel %vm7662, %v7641, 0
      %v7711 = vsel %vm7662, %v7642, 0
      %v7714 = vsel %vm7662, %v7643, 0
      %v7717 = vsel %vm7662, %v7644, 0
      %v7720 = vsel %vm7662, %v7645, 0
      %v7723 = vsel %vm7662, %v7646, 0
      %v7726 = vsel %vm7662, %v7647, 0
      %v7729 = vsel %vm7662, %v7648, 0
      %v7732 = vsel %vm7662, %v7649, 0
      %v7735 = vsel %vm7662, %v7650, 0
      %v7738 = vsel %vm7662, %v7651, 0
      %v7741 = vsel %vm7662, %v7652, 0
      %v7744 = vsel %vm7662, %v7653, 0
      %v7747 = vsel %vm7662, %v7654, 0
      %v7750 = vsel %vm7662, %v7655, 0
      %v7753 = vsel %vm7662, %v7656, 0
      %v7756 = vsel %vm7662, %v7657, 0
      %v7759 = vsel %vm7662, %v7658, 0
      %7761 = vmatprep.subr.mxu0 0.0
      %7762 = vmatpush1.xpose.msra.mxu0 %v7666
      %7763 = vmatprep.subr.mxu0 0.0
      %7764 = vmatpush1.xpose.msra.mxu0 %v7669
      %7765 = vmatprep.subr.mxu0 0.0
      %7766 = vmatpush1.xpose.msra.mxu0 %v7672
      %7767 = vmatprep.subr.mxu0 0.0
      %7768 = vmatpush1.xpose.msra.mxu0 %v7675
      %7769 = vmatprep.subr.mxu0 0.0
      %7770 = vmatpush1.xpose.msra.mxu0 %v7678
      %7771 = vmatprep.subr.mxu0 0.0
      %7772 = vmatpush1.xpose.msra.mxu0 %v7681
      %7773 = vmatprep.subr.mxu0 0.0
      %7774 = vmatpush1.xpose.msra.mxu0 %v7684
      %7775 = vmatprep.subr.mxu0 0.0
      %7776 = vmatpush1.xpose.msra.mxu0 %v7687
      %7777 = vmatprep.subr.mxu0 0.0
      %7778 = vmatpush1.xpose.msra.mxu0 %v7690
      %7779 = vmatprep.subr.mxu0 0.0
      %7780 = vmatpush1.xpose.msra.mxu0 %v7693
      %7781 = vmatprep.subr.mxu0 0.0
      %7782 = vmatpush1.xpose.msra.mxu0 %v7696
      %7783 = vmatprep.subr.mxu0 0.0
      %7784 = vmatpush1.xpose.msra.mxu0 %v7699
      %7785 = vmatprep.subr.mxu0 0.0
      %7786 = vmatpush1.xpose.msra.mxu0 %v7702
      %7787 = vmatprep.subr.mxu0 0.0
      %7788 = vmatpush1.xpose.msra.mxu0 %v7705
      %7789 = vmatprep.subr.mxu0 0.0
      %7790 = vmatpush1.xpose.msra.mxu0 %v7708
      %7791 = vmatprep.subr.mxu0 0.0
      %7792 = vmatpush1.xpose.msra.mxu0 %v7711
      %7793 = vmatprep.subr.mxu0 0.0
      %7794 = vmatpush1.xpose.msra.mxu0 %v7714
      %7795 = vmatprep.subr.mxu0 0.0
      %7796 = vmatpush1.xpose.msra.mxu0 %v7717
      %7797 = vmatprep.subr.mxu0 0.0
      %7798 = vmatpush1.xpose.msra.mxu0 %v7720
      %7799 = vmatprep.subr.mxu0 0.0
      %7800 = vmatpush1.xpose.msra.mxu0 %v7723
      %7801 = vmatprep.subr.mxu0 0.0
      %7802 = vmatpush1.xpose.msra.mxu0 %v7726
      %7803 = vmatprep.subr.mxu0 0.0
      %7804 = vmatpush1.xpose.msra.mxu0 %v7729
      %7805 = vmatprep.subr.mxu0 0.0
      %7806 = vmatpush1.xpose.msra.mxu0 %v7732
      %7807 = vmatprep.subr.mxu0 0.0
      %7808 = vmatpush1.xpose.msra.mxu0 %v7735
      %7809 = vmatprep.subr.mxu0 0.0
      %7810 = vmatpush1.xpose.msra.mxu0 %v7738
      %7811 = vmatprep.subr.mxu0 0.0
      %7812 = vmatpush1.xpose.msra.mxu0 %v7741
      %7813 = vmatprep.subr.mxu0 0.0
      %7814 = vmatpush1.xpose.msra.mxu0 %v7744
      %7815 = vmatprep.subr.mxu0 0.0
      %7816 = vmatpush1.xpose.msra.mxu0 %v7747
      %7817 = vmatprep.subr.mxu0 0.0
      %7818 = vmatpush1.xpose.msra.mxu0 %v7750
      %7819 = vmatprep.subr.mxu0 0.0
      %7820 = vmatpush1.xpose.msra.mxu0 %v7753
      %7821 = vmatprep.subr.mxu0 0.0
      %7822 = vmatpush1.xpose.msra.mxu0 %v7756
      %7823 = vmatprep.subr.mxu0 0.0
      %7824 = vmatpush1.xpose.msra.mxu0 %v7759
      %7825 = vmatprep.mubr.f32.mxu0 0.0
      %7826 = vmatmul.mubr.f32.gmra.mrb[0].mxu0 %v7663
      %v7827 = vpop.f32.mrb[0].mxu0
      %v7828 = vadd.f32 0.0, %v7827
      %v7829 = vpop.f32.mrb[0].mxu0
      %v7830 = vadd.f32 0.0, %v7829
      %7831 = vdwg.mxu0
      %v7832 = vsel %vm7662, %v3970, 0
      %v7835 = vsel %vm7662, %v3938, 0
      %v7838 = vsel %vm7662, %v3939, 0
      %v7841 = vsel %vm7662, %v3940, 0
      %v7844 = vsel %vm7662, %v3941, 0
      %v7847 = vsel %vm7662, %v3942, 0
      %v7850 = vsel %vm7662, %v3943, 0
      %v7853 = vsel %vm7662, %v3944, 0
      %v7856 = vsel %vm7662, %v3945, 0
      %v7859 = vsel %vm7662, %v3946, 0
      %v7862 = vsel %vm7662, %v3947, 0
      %v7865 = vsel %vm7662, %v3948, 0
      %v7868 = vsel %vm7662, %v3949, 0
      %v7871 = vsel %vm7662, %v3950, 0
      %v7874 = vsel %vm7662, %v3951, 0
      %v7877 = vsel %vm7662, %v3952, 0
      %v7880 = vsel %vm7662, %v3953, 0
      %v7883 = vsel %vm7662, %v3954, 0
      %v7886 = vsel %vm7662, %v3955, 0
      %v7889 = vsel %vm7662, %v3956, 0
      %v7892 = vsel %vm7662, %v3957, 0
      %v7895 = vsel %vm7662, %v3958, 0
      %v7898 = vsel %vm7662, %v3959, 0
      %v7901 = vsel %vm7662, %v3960, 0
      %v7904 = vsel %vm7662, %v3961, 0
      %v7907 = vsel %vm7662, %v3962, 0
      %v7910 = vsel %vm7662, %v3963, 0
      %v7913 = vsel %vm7662, %v3964, 0
      %v7916 = vsel %vm7662, %v3965, 0
      %v7919 = vsel %vm7662, %v3966, 0
      %v7922 = vsel %vm7662, %v3967, 0
      %v7925 = vsel %vm7662, %v3968, 0
      %v7928 = vsel %vm7662, %v3969, 0
      %7930 = vmatprep.subr.mxu0 0.0
      %7931 = vmatpush1.xpose.msra.mxu0 %v7835
      %7932 = vmatprep.subr.mxu0 0.0
      %7933 = vmatpush1.xpose.msra.mxu0 %v7838
      %7934 = vmatprep.subr.mxu0 0.0
      %7935 = vmatpush1.xpose.msra.mxu0 %v7841
      %7936 = vmatprep.subr.mxu0 0.0
      %7937 = vmatpush1.xpose.msra.mxu0 %v7844
      %7938 = vmatprep.subr.mxu0 0.0
      %7939 = vmatpush1.xpose.msra.mxu0 %v7847
      %7940 = vmatprep.subr.mxu0 0.0
      %7941 = vmatpush1.xpose.msra.mxu0 %v7850
      %7942 = vmatprep.subr.mxu0 0.0
      %7943 = vmatpush1.xpose.msra.mxu0 %v7853
      %7944 = vmatprep.subr.mxu0 0.0
      %7945 = vmatpush1.xpose.msra.mxu0 %v7856
      %7946 = vmatprep.subr.mxu0 0.0
      %7947 = vmatpush1.xpose.msra.mxu0 %v7859
      %7948 = vmatprep.subr.mxu0 0.0
      %7949 = vmatpush1.xpose.msra.mxu0 %v7862
      %7950 = vmatprep.subr.mxu0 0.0
      %7951 = vmatpush1.xpose.msra.mxu0 %v7865
      %7952 = vmatprep.subr.mxu0 0.0
      %7953 = vmatpush1.xpose.msra.mxu0 %v7868
      %7954 = vmatprep.subr.mxu0 0.0
      %7955 = vmatpush1.xpose.msra.mxu0 %v7871
      %7956 = vmatprep.subr.mxu0 0.0
      %7957 = vmatpush1.xpose.msra.mxu0 %v7874
      %7958 = vmatprep.subr.mxu0 0.0
      %7959 = vmatpush1.xpose.msra.mxu0 %v7877
      %7960 = vmatprep.subr.mxu0 0.0
      %7961 = vmatpush1.xpose.msra.mxu0 %v7880
      %7962 = vmatprep.subr.mxu0 0.0
      %7963 = vmatpush1.xpose.msra.mxu0 %v7883
      %7964 = vmatprep.subr.mxu0 0.0
      %7965 = vmatpush1.xpose.msra.mxu0 %v7886
      %7966 = vmatprep.subr.mxu0 0.0
      %7967 = vmatpush1.xpose.msra.mxu0 %v7889
      %7968 = vmatprep.subr.mxu0 0.0
      %7969 = vmatpush1.xpose.msra.mxu0 %v7892
      %7970 = vmatprep.subr.mxu0 0.0
      %7971 = vmatpush1.xpose.msra.mxu0 %v7895
      %7972 = vmatprep.subr.mxu0 0.0
      %7973 = vmatpush1.xpose.msra.mxu0 %v7898
      %7974 = vmatprep.subr.mxu0 0.0
      %7975 = vmatpush1.xpose.msra.mxu0 %v7901
      %7976 = vmatprep.subr.mxu0 0.0
      %7977 = vmatpush1.xpose.msra.mxu0 %v7904
      %7978 = vmatprep.subr.mxu0 0.0
      %7979 = vmatpush1.xpose.msra.mxu0 %v7907
      %7980 = vmatprep.subr.mxu0 0.0
      %7981 = vmatpush1.xpose.msra.mxu0 %v7910
      %7982 = vmatprep.subr.mxu0 0.0
      %7983 = vmatpush1.xpose.msra.mxu0 %v7913
      %7984 = vmatprep.subr.mxu0 0.0
      %7985 = vmatpush1.xpose.msra.mxu0 %v7916
      %7986 = vmatprep.subr.mxu0 0.0
      %7987 = vmatpush1.xpose.msra.mxu0 %v7919
      %7988 = vmatprep.subr.mxu0 0.0
      %7989 = vmatpush1.xpose.msra.mxu0 %v7922
      %7990 = vmatprep.subr.mxu0 0.0
      %7991 = vmatpush1.xpose.msra.mxu0 %v7925
      %7992 = vmatprep.subr.mxu0 0.0
      %7993 = vmatpush1.xpose.msra.mxu0 %v7928
      %7994 = vmatprep.mubr.f32.mxu0 0.0
      %7995 = vmatmul.mubr.f32.gmra.mrb[0].mxu0 %v7832
      %v7996 = vpop.f32.mrb[0].mxu0
      %v7997 = vadd.f32 %v7828, %v7996
      %v7998 = vpop.f32.mrb[0].mxu0
      %v7999 = vadd.f32 %v7830, %v7998
      %8000 = vdwg.mxu0
      %v8001 = vld [vmem:[%s7] sm:$0xf]
      %8003 = vset.pattern.permute.xlu0 0
      %8004 = vperm.xlu0 %8003, %v8001
      %v8005 = vpop.permute.xlu0 %8004
      %v8007 = vadd.f32 %v7997, %v8005
      %v8008 = vadd.f32 %v7999, %v8005
      %v8011 = vcombine.low %v8007, %v8008
      %8013 = vst [vmem:[%s365] sm:$0xff] %v8011
      %p8014 = scmp.lt.s32.totalorder %s19, 1
      %s8015 = scalar_select %p8014, %s19, 1
      %s8016 = smul.addr %s8015, 2
      %s8017 = smul.addr %s8016, 4
      %s8018 = scalar_lea.vmem %s8, %s8017
      // Predicated region
      $region53: #{forward_pallas.3} parent=51 // pred_check
        %p8019 = pneg %p225
      $region54: #{forward_pallas.3} parent=51 // pred_check_branch
        %8021 = sbr.rel (%p8019) target = $region56
      $region55: #{forward_pallas.3} parent=51 // pred_region
        _
      $region56: #{forward_pallas.3} parent=51 // pred_fallthru
        _
    $region52: #{forward_pallas.3} parent=5 // pred_fallthru
      _
    %p8022 = scmp.le.s32.totalorder 2, %s14
    // Predicated region
    $region57: #{forward_pallas.3} parent=5 // pred_check
      %p8023 = pneg %p8022
    $region58: #{forward_pallas.3} parent=5 // pred_check_branch
      %8025 = sbr.rel (%p8023) target = $region60
    $region59: #{forward_pallas.3} parent=5 // pred_region
      %s8026 = ssub.s32 %s14, 2
      // Predicated region
      $region61: #{forward_pallas.3} parent=59 // pred_check
        %p8027 = pneg %p231
      $region62: #{forward_pallas.3} parent=59 // pred_check_branch
        %8029 = sbr.rel (%p8027) target = $region64
      $region63: #{forward_pallas.3} parent=59 // pred_region
        %p8030 = scmp.lt.s32.totalorder %s20, 1
        %s8031 = scalar_select %p8030, %s20, 1
        %s8032 = smul.addr %s8031, 2
        %s8033 = smul.addr %s8032, 4
        %s8034 = scalar_lea.vmem %s8, %s8033
      $region64: #{forward_pallas.3} parent=59 // pred_fallthru
        _
    $region60: #{forward_pallas.3} parent=5 // pred_fallthru
      _
  $region6: #{forward_pallas.3} parent=0 // loop_footer
    %s18 = sadd.s32 1, %s14
  $region7: #{forward_pallas.3} parent=0 // loop_footer_branch
    %13 = sbr.rel target = $region3
  $region8: #{forward_pallas.3} parent=0 // loop_exit
    _

</llo_original>
